<compile_context>
chip_gen: v5e
topology: v5e:2x2
jax: 0.10.0
libtpu: 0.0.40
codegen_flags: <defaults>
</compile_context>

<pallas_src>
import math

import jax
import jax.numpy as jnp
from jax.experimental import pallas as pl
from jax.experimental.pallas import tpu as pltpu

LANE = 128  # vreg lane width


def _round_up(n, m):
    return ((n + m - 1) // m) * m


# ----------------------------------------------------------------------------
# Kernel
# ----------------------------------------------------------------------------
def _gelu(v):
    # exact GELU (PyTorch nn.GELU default approximate='none')
    return 0.5 * v * (1.0 + jax.lax.erf(v * (1.0 / math.sqrt(2.0))))


def _linear(h, w_ref, b_ref):
    return jnp.dot(h, w_ref[...], preferred_element_type=jnp.float32) + b_ref[...]


def _resblock(h, w1, b1, w2, b2, w3, b3):
    # ResidualBlockFC: h + Linear3(GELU(Linear2(GELU(Linear1(GELU(h))))))
    t = _gelu(h)
    t = _linear(t, w1, b1)
    t = _gelu(t)
    t = _linear(t, w2, b2)
    t = _gelu(t)
    t = _linear(t, w3, b3)
    return h + t


def decoder_fc_kernel(
    xc_ref,                       # fused, padded [x | c] batch tile
    w_xc, b_xc,                   # block-diagonal fused fc_in / fc_cond
    r1w1, r1b1, r1w2, r1b2, r1w3, r1b3,   # residual block 1
    w_mid, b_mid,                 # mid linear
    r2w1, r2b1, r2w2, r2b2, r2w3, r2b3,   # residual block 2
    w_out, b_out,                 # output linear
    o_ref,
):
    # fused fc_in + fc_cond: one MXU-aligned matmul, no in-kernel concatenate
    h = _linear(xc_ref[...], w_xc, b_xc)          # [tb, d_hidden_p]
    h = _resblock(h, r1w1, r1b1, r1w2, r1b2, r1w3, r1b3)
    h = _gelu(h)
    h = _linear(h, w_mid, b_mid)
    h = _resblock(h, r2w1, r2b1, r2w2, r2b2, r2w3, r2b3)
    h = _gelu(h)
    h = _linear(h, w_out, b_out)
    o_ref[...] = h.astype(o_ref.dtype)


# ----------------------------------------------------------------------------
# Wrapper
# ----------------------------------------------------------------------------
def _pad2d(a, rows, cols):
    r, c = a.shape
    return jnp.pad(a, ((0, rows - r), (0, cols - c)))


def decoder_fc_forward(x, c, params, *, tb=128):
    """x: [B, d_in], c: [B, d_cond] -> [B, d_out]."""
    B, d_in = x.shape
    d_cond = c.shape[1]
    d_hidden = params["w_mid"].shape[0]
    d_residual = params["r1w1"].shape[1]
    d_out = params["w_out"].shape[1]

    # lane-dense padded dimensions
    d_xc_p = _round_up(d_in + d_cond, LANE)
    d_h_p = _round_up(d_hidden, LANE)
    d_r_p = _round_up(d_residual, LANE)
    d_out_p = _round_up(d_out, LANE)
    B_p = _round_up(B, tb)

    f32 = jnp.float32

    # fused block-diagonal fc_in / fc_cond weight:  [x | c] @ [[w_in, 0], [0, w_cond]]
    w_xc = jnp.zeros((d_xc_p, d_h_p), f32)
    w_xc = w_xc.at[:d_in, : d_hidden // 2].set(params["w_in"])
    w_xc = w_xc.at[d_in : d_in + d_cond, d_hidden // 2 : d_hidden].set(params["w_cond"])
    b_xc = jnp.zeros((1, d_h_p), f32)
    b_xc = b_xc.at[:, : d_hidden // 2].set(params["b_in"])
    b_xc = b_xc.at[:, d_hidden // 2 : d_hidden].set(params["b_cond"])

    weights = [
        w_xc, b_xc,
        _pad2d(params["r1w1"], d_h_p, d_r_p), _pad2d(params["r1b1"], 1, d_r_p),
        _pad2d(params["r1w2"], d_r_p, d_r_p), _pad2d(params["r1b2"], 1, d_r_p),
        _pad2d(params["r1w3"], d_r_p, d_h_p), _pad2d(params["r1b3"], 1, d_h_p),
        _pad2d(params["w_mid"], d_h_p, d_h_p), _pad2d(params["b_mid"], 1, d_h_p),
        _pad2d(params["r2w1"], d_h_p, d_r_p), _pad2d(params["r2b1"], 1, d_r_p),
        _pad2d(params["r2w2"], d_r_p, d_r_p), _pad2d(params["r2b2"], 1, d_r_p),
        _pad2d(params["r2w3"], d_r_p, d_h_p), _pad2d(params["r2b3"], 1, d_h_p),
        _pad2d(params["w_out"], d_h_p, d_out_p), _pad2d(params["b_out"], 1, d_out_p),
    ]

    # fused, zero-padded [x | c] input (zero rows beyond B are sliced off below)
    xc = jnp.zeros((B_p, d_xc_p), f32)
    xc = xc.at[:B, :d_in].set(x)
    xc = xc.at[:B, d_in : d_in + d_cond].set(c)

    # full-array (untiled, block index constant) specs for all parameters.
    # NOTE: weights could be single-buffered (pipeline_mode=pl.Buffered(1)) as
    # they never change block index; at these KB sizes it is irrelevant so we
    # keep the default to stay on the safest lowering path.
    def full_spec(arr):
        return pl.BlockSpec(arr.shape, lambda i: (0, 0))

    in_specs = [pl.BlockSpec((tb, d_xc_p), lambda i: (i, 0))] + [full_spec(w) for w in weights]
    out_spec = pl.BlockSpec((tb, d_out_p), lambda i: (i, 0))

    # cost estimate (padded sizes)
    mm_dims = [
        (d_xc_p, d_h_p),
        (d_h_p, d_r_p), (d_r_p, d_r_p), (d_r_p, d_h_p),
        (d_h_p, d_h_p),
        (d_h_p, d_r_p), (d_r_p, d_r_p), (d_r_p, d_h_p),
        (d_h_p, d_out_p),
    ]
    flops = 2 * B_p * sum(k * n for k, n in mm_dims)
    transcendentals = B_p * (4 * d_h_p + 4 * d_r_p)          # erf evaluations
    bytes_accessed = 4 * (xc.size + sum(int(w.size) for w in weights) + B_p * d_out_p)

    out_padded = pl.pallas_call(
        decoder_fc_kernel,
        out_shape=jax.ShapeDtypeStruct((B_p, d_out_p), f32),
        grid_spec=pltpu.PrefetchScalarGridSpec(
            num_scalar_prefetch=0,
            grid=(B_p // tb,),
            in_specs=in_specs,
            out_specs=out_spec,
        ),
        compiler_params=pltpu.CompilerParams(
            dimension_semantics=("parallel",),   # lets v7x split batch tiles across its 2 TCs
        ),
        cost_estimate=pl.CostEstimate(
            flops=flops,
            transcendentals=transcendentals,
            bytes_accessed=bytes_accessed,
        ),
    )(xc, *weights)

    return out_padded[:B, :d_out]


# ----------------------------------------------------------------------------
# Deterministic parameter init (PyTorch nn.Linear default: U(-1/sqrt(fan_in), ...))
# ----------------------------------------------------------------------------
def _init_linear(key, fan_in, fan_out):
    kw, kb = jax.random.split(key)
    bound = 1.0 / math.sqrt(fan_in)
    # stored transposed: [in, out]
    w = jax.random.uniform(kw, (fan_in, fan_out), jnp.float32, -bound, bound)
    b = jax.random.uniform(kb, (1, fan_out), jnp.float32, -bound, bound)
    return w, b


def make_params(key, d_in, d_hidden, d_residual, d_out, d_cond):
    keys = jax.random.split(key, 10)
    p = {}
    p["w_in"], p["b_in"] = _init_linear(keys[0], d_in, d_hidden // 2)
    p["w_cond"], p["b_cond"] = _init_linear(keys[1], d_cond, d_hidden // 2)
    # residual block 1
    p["r1w1"], p["r1b1"] = _init_linear(keys[2], d_hidden, d_residual)
    p["r1w2"], p["r1b2"] = _init_linear(keys[3], d_residual, d_residual)
    p["r1w3"], p["r1b3"] = _init_linear(keys[4], d_residual, d_hidden)
    # mid linear
    p["w_mid"], p["b_mid"] = _init_linear(keys[5], d_hidden, d_hidden)
    # residual block 2
    p["r2w1"], p["r2b1"] = _init_linear(keys[6], d_hidden, d_residual)
    p["r2w2"], p["r2b2"] = _init_linear(keys[7], d_residual, d_residual)
    p["r2w3"], p["r2b3"] = _init_linear(keys[8], d_residual, d_hidden)
    # output linear
    p["w_out"], p["b_out"] = _init_linear(keys[9], d_hidden, d_out)
    return p


# ----------------------------------------------------------------------------
# Pure-JAX reference (mirrors PyTorch forward exactly, unpadded)
# ----------------------------------------------------------------------------
def decoder_fc_ref(x, c, p):
    gelu = lambda v: 0.5 * v * (1.0 + jax.lax.erf(v / math.sqrt(2.0)))
    lin = lambda h, w, b: h @ w + b

    def resblock(h, w1, b1, w2, b2, w3, b3):
        t = gelu(h)
        t = lin(t, w1, b1)
        t = gelu(t)
        t = lin(t, w2, b2)
        t = gelu(t)
        t = lin(t, w3, b3)
        return h + t

    hx = lin(x, p["w_in"], p["b_in"])
    hc = lin(c, p["w_cond"], p["b_cond"])
    h = jnp.concatenate([hx, hc], axis=1)
    h = resblock(h, p["r1w1"], p["r1b1"], p["r1w2"], p["r1b2"], p["r1w3"], p["r1b3"])
    h = gelu(h)
    h = lin(h, p["w_mid"], p["b_mid"])
    h = resblock(h, p["r2w1"], p["r2b1"], p["r2w2"], p["r2b2"], p["r2w3"], p["r2b3"])
    h = gelu(h)
    h = lin(h, p["w_out"], p["b_out"])
    return h


# ----------------------------------------------------------------------------
if __name__ == "__main__":
    B, d_in, d_hidden, d_residual, d_out, d_cond = 16, 16, 32, 32, 16, 8

    key = jax.random.PRNGKey(0)
    kx, kc, kp = jax.random.split(key, 3)
    x = jax.random.normal(kx, (B, d_in), jnp.float32)
    c = jax.random.normal(kc, (B, d_cond), jnp.float32)
    params = make_params(kp, d_in, d_hidden, d_residual, d_out, d_cond)

    out = decoder_fc_forward(x, c, params, tb=128)
    out = jax.block_until_ready(out)

    ref = decoder_fc_ref(x, c, params)
    assert out.shape == (B, d_out)
    assert jnp.allclose(out, ref, atol=1e-4, rtol=1e-4), "mismatch vs reference"

    print("KERNEL_OK")
</pallas_src>

<mosaic_0001>
module attributes {stable_mosaic.version = 11 : i64} {
  func.func @decoder_fc_kernel(%arg0: i32, %arg1: memref<128x128xf32, #tpu.memory_space<vmem>>, %arg2: memref<128x128xf32, #tpu.memory_space<vmem>>, %arg3: memref<1x128xf32, #tpu.memory_space<vmem>>, %arg4: memref<128x128xf32, #tpu.memory_space<vmem>>, %arg5: memref<1x128xf32, #tpu.memory_space<vmem>>, %arg6: memref<128x128xf32, #tpu.memory_space<vmem>>, %arg7: memref<1x128xf32, #tpu.memory_space<vmem>>, %arg8: memref<128x128xf32, #tpu.memory_space<vmem>>, %arg9: memref<1x128xf32, #tpu.memory_space<vmem>>, %arg10: memref<128x128xf32, #tpu.memory_space<vmem>>, %arg11: memref<1x128xf32, #tpu.memory_space<vmem>>, %arg12: memref<128x128xf32, #tpu.memory_space<vmem>>, %arg13: memref<1x128xf32, #tpu.memory_space<vmem>>, %arg14: memref<128x128xf32, #tpu.memory_space<vmem>>, %arg15: memref<1x128xf32, #tpu.memory_space<vmem>>, %arg16: memref<128x128xf32, #tpu.memory_space<vmem>>, %arg17: memref<1x128xf32, #tpu.memory_space<vmem>>, %arg18: memref<128x128xf32, #tpu.memory_space<vmem>>, %arg19: memref<1x128xf32, #tpu.memory_space<vmem>>, %arg20: memref<128x128xf32, #tpu.memory_space<vmem>>) attributes {dimension_semantics = [#tpu.dimension_semantics<parallel>], iteration_bounds = array<i64: 1>, scalar_prefetch = 0 : i64, scratch_operands = 0 : i64, tpu.core_type = #tpu.core_type<tc>, window_params = [{transform_indices = @transform_0, window_bounds = array<i64: 128, 128>}, {pipeline_mode = #tpu.pipeline_mode<synchronous>, transform_indices = @transform_1, window_bounds = array<i64: 128, 128>}, {pipeline_mode = #tpu.pipeline_mode<synchronous>, transform_indices = @transform_2, window_bounds = array<i64: 1, 128>}, {pipeline_mode = #tpu.pipeline_mode<synchronous>, transform_indices = @transform_3, window_bounds = array<i64: 128, 128>}, {pipeline_mode = #tpu.pipeline_mode<synchronous>, transform_indices = @transform_4, window_bounds = array<i64: 1, 128>}, {pipeline_mode = #tpu.pipeline_mode<synchronous>, transform_indices = @transform_5, window_bounds = array<i64: 128, 128>}, {pipeline_mode = #tpu.pipeline_mode<synchronous>, transform_indices = @transform_6, window_bounds = array<i64: 1, 128>}, {pipeline_mode = #tpu.pipeline_mode<synchronous>, transform_indices = @transform_7, window_bounds = array<i64: 128, 128>}, {pipeline_mode = #tpu.pipeline_mode<synchronous>, transform_indices = @transform_8, window_bounds = array<i64: 1, 128>}, {pipeline_mode = #tpu.pipeline_mode<synchronous>, transform_indices = @transform_9, window_bounds = array<i64: 128, 128>}, {pipeline_mode = #tpu.pipeline_mode<synchronous>, transform_indices = @transform_10, window_bounds = array<i64: 1, 128>}, {pipeline_mode = #tpu.pipeline_mode<synchronous>, transform_indices = @transform_11, window_bounds = array<i64: 128, 128>}, {pipeline_mode = #tpu.pipeline_mode<synchronous>, transform_indices = @transform_12, window_bounds = array<i64: 1, 128>}, {pipeline_mode = #tpu.pipeline_mode<synchronous>, transform_indices = @transform_13, window_bounds = array<i64: 128, 128>}, {pipeline_mode = #tpu.pipeline_mode<synchronous>, transform_indices = @transform_14, window_bounds = array<i64: 1, 128>}, {pipeline_mode = #tpu.pipeline_mode<synchronous>, transform_indices = @transform_15, window_bounds = array<i64: 128, 128>}, {pipeline_mode = #tpu.pipeline_mode<synchronous>, transform_indices = @transform_16, window_bounds = array<i64: 1, 128>}, {pipeline_mode = #tpu.pipeline_mode<synchronous>, transform_indices = @transform_17, window_bounds = array<i64: 128, 128>}, {pipeline_mode = #tpu.pipeline_mode<synchronous>, transform_indices = @transform_18, window_bounds = array<i64: 1, 128>}, {transform_indices = @transform_19, window_bounds = array<i64: 128, 128>}]} {
    %c0 = arith.constant 0 : index
    %c0_0 = arith.constant 0 : index
    %0 = vector.load %arg1[%c0, %c0_0] : memref<128x128xf32, #tpu.memory_space<vmem>>, vector<128x128xf32>
    %c0_1 = arith.constant 0 : index
    %c0_2 = arith.constant 0 : index
    %1 = vector.load %arg2[%c0_1, %c0_2] : memref<128x128xf32, #tpu.memory_space<vmem>>, vector<128x128xf32>
    %cst = arith.constant dense<0.000000e+00> : vector<128x128xf32>
    %2 = tpu.matmul %0, %1, %cst {dimension_numbers = #tpu.dot_dimension_numbers<[1], [0], [0], [1], [0, 0, 1, 1], [], []>} : vector<128x128xf32>, vector<128x128xf32>, vector<128x128xf32> -> vector<128x128xf32>
    %c0_3 = arith.constant 0 : index
    %c0_4 = arith.constant 0 : index
    %3 = vector.load %arg3[%c0_3, %c0_4] : memref<1x128xf32, #tpu.memory_space<vmem>>, vector<1x128xf32>
    %4 = vector.broadcast %3 : vector<1x128xf32> to vector<128x128xf32>
    %5 = arith.addf %2, %4 : vector<128x128xf32>
    %cst_5 = arith.constant 5.000000e-01 : f32
    %6 = vector.broadcast %cst_5 : f32 to vector<128x128xf32>
    %7 = arith.mulf %6, %5 : vector<128x128xf32>
    %cst_6 = arith.constant 0.707106769 : f32
    %8 = vector.broadcast %cst_6 : f32 to vector<128x128xf32>
    %9 = arith.mulf %5, %8 : vector<128x128xf32>
    %10 = math.erf %9 : vector<128x128xf32>
    %cst_7 = arith.constant 1.000000e+00 : f32
    %11 = vector.broadcast %cst_7 : f32 to vector<128x128xf32>
    %12 = arith.addf %11, %10 : vector<128x128xf32>
    %13 = arith.mulf %7, %12 : vector<128x128xf32>
    %c0_8 = arith.constant 0 : index
    %c0_9 = arith.constant 0 : index
    %14 = vector.load %arg4[%c0_8, %c0_9] : memref<128x128xf32, #tpu.memory_space<vmem>>, vector<128x128xf32>
    %cst_10 = arith.constant dense<0.000000e+00> : vector<128x128xf32>
    %15 = tpu.matmul %13, %14, %cst_10 {dimension_numbers = #tpu.dot_dimension_numbers<[1], [0], [0], [1], [0, 0, 1, 1], [], []>} : vector<128x128xf32>, vector<128x128xf32>, vector<128x128xf32> -> vector<128x128xf32>
    %c0_11 = arith.constant 0 : index
    %c0_12 = arith.constant 0 : index
    %16 = vector.load %arg5[%c0_11, %c0_12] : memref<1x128xf32, #tpu.memory_space<vmem>>, vector<1x128xf32>
    %17 = vector.broadcast %16 : vector<1x128xf32> to vector<128x128xf32>
    %18 = arith.addf %15, %17 : vector<128x128xf32>
    %cst_13 = arith.constant 5.000000e-01 : f32
    %19 = vector.broadcast %cst_13 : f32 to vector<128x128xf32>
    %20 = arith.mulf %19, %18 : vector<128x128xf32>
    %cst_14 = arith.constant 0.707106769 : f32
    %21 = vector.broadcast %cst_14 : f32 to vector<128x128xf32>
    %22 = arith.mulf %18, %21 : vector<128x128xf32>
    %23 = math.erf %22 : vector<128x128xf32>
    %cst_15 = arith.constant 1.000000e+00 : f32
    %24 = vector.broadcast %cst_15 : f32 to vector<128x128xf32>
    %25 = arith.addf %24, %23 : vector<128x128xf32>
    %26 = arith.mulf %20, %25 : vector<128x128xf32>
    %c0_16 = arith.constant 0 : index
    %c0_17 = arith.constant 0 : index
    %27 = vector.load %arg6[%c0_16, %c0_17] : memref<128x128xf32, #tpu.memory_space<vmem>>, vector<128x128xf32>
    %cst_18 = arith.constant dense<0.000000e+00> : vector<128x128xf32>
    %28 = tpu.matmul %26, %27, %cst_18 {dimension_numbers = #tpu.dot_dimension_numbers<[1], [0], [0], [1], [0, 0, 1, 1], [], []>} : vector<128x128xf32>, vector<128x128xf32>, vector<128x128xf32> -> vector<128x128xf32>
    %c0_19 = arith.constant 0 : index
    %c0_20 = arith.constant 0 : index
    %29 = vector.load %arg7[%c0_19, %c0_20] : memref<1x128xf32, #tpu.memory_space<vmem>>, vector<1x128xf32>
    %30 = vector.broadcast %29 : vector<1x128xf32> to vector<128x128xf32>
    %31 = arith.addf %28, %30 : vector<128x128xf32>
    %cst_21 = arith.constant 5.000000e-01 : f32
    %32 = vector.broadcast %cst_21 : f32 to vector<128x128xf32>
    %33 = arith.mulf %32, %31 : vector<128x128xf32>
    %cst_22 = arith.constant 0.707106769 : f32
    %34 = vector.broadcast %cst_22 : f32 to vector<128x128xf32>
    %35 = arith.mulf %31, %34 : vector<128x128xf32>
    %36 = math.erf %35 : vector<128x128xf32>
    %cst_23 = arith.constant 1.000000e+00 : f32
    %37 = vector.broadcast %cst_23 : f32 to vector<128x128xf32>
    %38 = arith.addf %37, %36 : vector<128x128xf32>
    %39 = arith.mulf %33, %38 : vector<128x128xf32>
    %c0_24 = arith.constant 0 : index
    %c0_25 = arith.constant 0 : index
    %40 = vector.load %arg8[%c0_24, %c0_25] : memref<128x128xf32, #tpu.memory_space<vmem>>, vector<128x128xf32>
    %cst_26 = arith.constant dense<0.000000e+00> : vector<128x128xf32>
    %41 = tpu.matmul %39, %40, %cst_26 {dimension_numbers = #tpu.dot_dimension_numbers<[1], [0], [0], [1], [0, 0, 1, 1], [], []>} : vector<128x128xf32>, vector<128x128xf32>, vector<128x128xf32> -> vector<128x128xf32>
    %c0_27 = arith.constant 0 : index
    %c0_28 = arith.constant 0 : index
    %42 = vector.load %arg9[%c0_27, %c0_28] : memref<1x128xf32, #tpu.memory_space<vmem>>, vector<1x128xf32>
    %43 = vector.broadcast %42 : vector<1x128xf32> to vector<128x128xf32>
    %44 = arith.addf %41, %43 : vector<128x128xf32>
    %45 = arith.addf %5, %44 : vector<128x128xf32>
    %cst_29 = arith.constant 5.000000e-01 : f32
    %46 = vector.broadcast %cst_29 : f32 to vector<128x128xf32>
    %47 = arith.mulf %46, %45 : vector<128x128xf32>
    %cst_30 = arith.constant 0.707106769 : f32
    %48 = vector.broadcast %cst_30 : f32 to vector<128x128xf32>
    %49 = arith.mulf %45, %48 : vector<128x128xf32>
    %50 = math.erf %49 : vector<128x128xf32>
    %cst_31 = arith.constant 1.000000e+00 : f32
    %51 = vector.broadcast %cst_31 : f32 to vector<128x128xf32>
    %52 = arith.addf %51, %50 : vector<128x128xf32>
    %53 = arith.mulf %47, %52 : vector<128x128xf32>
    %c0_32 = arith.constant 0 : index
    %c0_33 = arith.constant 0 : index
    %54 = vector.load %arg10[%c0_32, %c0_33] : memref<128x128xf32, #tpu.memory_space<vmem>>, vector<128x128xf32>
    %cst_34 = arith.constant dense<0.000000e+00> : vector<128x128xf32>
    %55 = tpu.matmul %53, %54, %cst_34 {dimension_numbers = #tpu.dot_dimension_numbers<[1], [0], [0], [1], [0, 0, 1, 1], [], []>} : vector<128x128xf32>, vector<128x128xf32>, vector<128x128xf32> -> vector<128x128xf32>
    %c0_35 = arith.constant 0 : index
    %c0_36 = arith.constant 0 : index
    %56 = vector.load %arg11[%c0_35, %c0_36] : memref<1x128xf32, #tpu.memory_space<vmem>>, vector<1x128xf32>
    %57 = vector.broadcast %56 : vector<1x128xf32> to vector<128x128xf32>
    %58 = arith.addf %55, %57 : vector<128x128xf32>
    %cst_37 = arith.constant 5.000000e-01 : f32
    %59 = vector.broadcast %cst_37 : f32 to vector<128x128xf32>
    %60 = arith.mulf %59, %58 : vector<128x128xf32>
    %cst_38 = arith.constant 0.707106769 : f32
    %61 = vector.broadcast %cst_38 : f32 to vector<128x128xf32>
    %62 = arith.mulf %58, %61 : vector<128x128xf32>
    %63 = math.erf %62 : vector<128x128xf32>
    %cst_39 = arith.constant 1.000000e+00 : f32
    %64 = vector.broadcast %cst_39 : f32 to vector<128x128xf32>
    %65 = arith.addf %64, %63 : vector<128x128xf32>
    %66 = arith.mulf %60, %65 : vector<128x128xf32>
    %c0_40 = arith.constant 0 : index
    %c0_41 = arith.constant 0 : index
    %67 = vector.load %arg12[%c0_40, %c0_41] : memref<128x128xf32, #tpu.memory_space<vmem>>, vector<128x128xf32>
    %cst_42 = arith.constant dense<0.000000e+00> : vector<128x128xf32>
    %68 = tpu.matmul %66, %67, %cst_42 {dimension_numbers = #tpu.dot_dimension_numbers<[1], [0], [0], [1], [0, 0, 1, 1], [], []>} : vector<128x128xf32>, vector<128x128xf32>, vector<128x128xf32> -> vector<128x128xf32>
    %c0_43 = arith.constant 0 : index
    %c0_44 = arith.constant 0 : index
    %69 = vector.load %arg13[%c0_43, %c0_44] : memref<1x128xf32, #tpu.memory_space<vmem>>, vector<1x128xf32>
    %70 = vector.broadcast %69 : vector<1x128xf32> to vector<128x128xf32>
    %71 = arith.addf %68, %70 : vector<128x128xf32>
    %cst_45 = arith.constant 5.000000e-01 : f32
    %72 = vector.broadcast %cst_45 : f32 to vector<128x128xf32>
    %73 = arith.mulf %72, %71 : vector<128x128xf32>
    %cst_46 = arith.constant 0.707106769 : f32
    %74 = vector.broadcast %cst_46 : f32 to vector<128x128xf32>
    %75 = arith.mulf %71, %74 : vector<128x128xf32>
    %76 = math.erf %75 : vector<128x128xf32>
    %cst_47 = arith.constant 1.000000e+00 : f32
    %77 = vector.broadcast %cst_47 : f32 to vector<128x128xf32>
    %78 = arith.addf %77, %76 : vector<128x128xf32>
    %79 = arith.mulf %73, %78 : vector<128x128xf32>
    %c0_48 = arith.constant 0 : index
    %c0_49 = arith.constant 0 : index
    %80 = vector.load %arg14[%c0_48, %c0_49] : memref<128x128xf32, #tpu.memory_space<vmem>>, vector<128x128xf32>
    %cst_50 = arith.constant dense<0.000000e+00> : vector<128x128xf32>
    %81 = tpu.matmul %79, %80, %cst_50 {dimension_numbers = #tpu.dot_dimension_numbers<[1], [0], [0], [1], [0, 0, 1, 1], [], []>} : vector<128x128xf32>, vector<128x128xf32>, vector<128x128xf32> -> vector<128x128xf32>
    %c0_51 = arith.constant 0 : index
    %c0_52 = arith.constant 0 : index
    %82 = vector.load %arg15[%c0_51, %c0_52] : memref<1x128xf32, #tpu.memory_space<vmem>>, vector<1x128xf32>
    %83 = vector.broadcast %82 : vector<1x128xf32> to vector<128x128xf32>
    %84 = arith.addf %81, %83 : vector<128x128xf32>
    %cst_53 = arith.constant 5.000000e-01 : f32
    %85 = vector.broadcast %cst_53 : f32 to vector<128x128xf32>
    %86 = arith.mulf %85, %84 : vector<128x128xf32>
    %cst_54 = arith.constant 0.707106769 : f32
    %87 = vector.broadcast %cst_54 : f32 to vector<128x128xf32>
    %88 = arith.mulf %84, %87 : vector<128x128xf32>
    %89 = math.erf %88 : vector<128x128xf32>
    %cst_55 = arith.constant 1.000000e+00 : f32
    %90 = vector.broadcast %cst_55 : f32 to vector<128x128xf32>
    %91 = arith.addf %90, %89 : vector<128x128xf32>
    %92 = arith.mulf %86, %91 : vector<128x128xf32>
    %c0_56 = arith.constant 0 : index
    %c0_57 = arith.constant 0 : index
    %93 = vector.load %arg16[%c0_56, %c0_57] : memref<128x128xf32, #tpu.memory_space<vmem>>, vector<128x128xf32>
    %cst_58 = arith.constant dense<0.000000e+00> : vector<128x128xf32>
    %94 = tpu.matmul %92, %93, %cst_58 {dimension_numbers = #tpu.dot_dimension_numbers<[1], [0], [0], [1], [0, 0, 1, 1], [], []>} : vector<128x128xf32>, vector<128x128xf32>, vector<128x128xf32> -> vector<128x128xf32>
    %c0_59 = arith.constant 0 : index
    %c0_60 = arith.constant 0 : index
    %95 = vector.load %arg17[%c0_59, %c0_60] : memref<1x128xf32, #tpu.memory_space<vmem>>, vector<1x128xf32>
    %96 = vector.broadcast %95 : vector<1x128xf32> to vector<128x128xf32>
    %97 = arith.addf %94, %96 : vector<128x128xf32>
    %98 = arith.addf %58, %97 : vector<128x128xf32>
    %cst_61 = arith.constant 5.000000e-01 : f32
    %99 = vector.broadcast %cst_61 : f32 to vector<128x128xf32>
    %100 = arith.mulf %99, %98 : vector<128x128xf32>
    %cst_62 = arith.constant 0.707106769 : f32
    %101 = vector.broadcast %cst_62 : f32 to vector<128x128xf32>
    %102 = arith.mulf %98, %101 : vector<128x128xf32>
    %103 = math.erf %102 : vector<128x128xf32>
    %cst_63 = arith.constant 1.000000e+00 : f32
    %104 = vector.broadcast %cst_63 : f32 to vector<128x128xf32>
    %105 = arith.addf %104, %103 : vector<128x128xf32>
    %106 = arith.mulf %100, %105 : vector<128x128xf32>
    %c0_64 = arith.constant 0 : index
    %c0_65 = arith.constant 0 : index
    %107 = vector.load %arg18[%c0_64, %c0_65] : memref<128x128xf32, #tpu.memory_space<vmem>>, vector<128x128xf32>
    %cst_66 = arith.constant dense<0.000000e+00> : vector<128x128xf32>
    %108 = tpu.matmul %106, %107, %cst_66 {dimension_numbers = #tpu.dot_dimension_numbers<[1], [0], [0], [1], [0, 0, 1, 1], [], []>} : vector<128x128xf32>, vector<128x128xf32>, vector<128x128xf32> -> vector<128x128xf32>
    %c0_67 = arith.constant 0 : index
    %c0_68 = arith.constant 0 : index
    %109 = vector.load %arg19[%c0_67, %c0_68] : memref<1x128xf32, #tpu.memory_space<vmem>>, vector<1x128xf32>
    %110 = vector.broadcast %109 : vector<1x128xf32> to vector<128x128xf32>
    %111 = arith.addf %108, %110 : vector<128x128xf32>
    %c0_69 = arith.constant 0 : index
    %c0_70 = arith.constant 0 : index
    %112 = vector.load %arg20[%c0_69, %c0_70] : memref<128x128xf32, #tpu.memory_space<vmem>>, vector<128x128xf32>
    tpu.vector_store %arg20[%c0_69, %c0_70], %111 {strides = array<i32>} : memref<128x128xf32, #tpu.memory_space<vmem>>, vector<128x128xf32>,
    return
  }
  func.func @transform_0(%arg0: i32) -> (i32, i32) {
    %c0_i32 = arith.constant 0 : i32
    %c0_i32_0 = arith.constant 0 : i32
    return %arg0, %c0_i32 : i32, i32
  }
  func.func @transform_1(%arg0: i32) -> (i32, i32) {
    %c0_i32 = arith.constant 0 : i32
    %c0_i32_0 = arith.constant 0 : i32
    %c0_i32_1 = arith.constant 0 : i32
    return %c0_i32, %c0_i32_0 : i32, i32
  }
  func.func @transform_2(%arg0: i32) -> (i32, i32) {
    %c0_i32 = arith.constant 0 : i32
    %c0_i32_0 = arith.constant 0 : i32
    %c0_i32_1 = arith.constant 0 : i32
    return %c0_i32, %c0_i32_0 : i32, i32
  }
  func.func @transform_3(%arg0: i32) -> (i32, i32) {
    %c0_i32 = arith.constant 0 : i32
    %c0_i32_0 = arith.constant 0 : i32
    %c0_i32_1 = arith.constant 0 : i32
    return %c0_i32, %c0_i32_0 : i32, i32
  }
  func.func @transform_4(%arg0: i32) -> (i32, i32) {
    %c0_i32 = arith.constant 0 : i32
    %c0_i32_0 = arith.constant 0 : i32
    %c0_i32_1 = arith.constant 0 : i32
    return %c0_i32, %c0_i32_0 : i32, i32
  }
  func.func @transform_5(%arg0: i32) -> (i32, i32) {
    %c0_i32 = arith.constant 0 : i32
    %c0_i32_0 = arith.constant 0 : i32
    %c0_i32_1 = arith.constant 0 : i32
    return %c0_i32, %c0_i32_0 : i32, i32
  }
  func.func @transform_6(%arg0: i32) -> (i32, i32) {
    %c0_i32 = arith.constant 0 : i32
    %c0_i32_0 = arith.constant 0 : i32
    %c0_i32_1 = arith.constant 0 : i32
    return %c0_i32, %c0_i32_0 : i32, i32
  }
  func.func @transform_7(%arg0: i32) -> (i32, i32) {
    %c0_i32 = arith.constant 0 : i32
    %c0_i32_0 = arith.constant 0 : i32
    %c0_i32_1 = arith.constant 0 : i32
    return %c0_i32, %c0_i32_0 : i32, i32
  }
  func.func @transform_8(%arg0: i32) -> (i32, i32) {
    %c0_i32 = arith.constant 0 : i32
    %c0_i32_0 = arith.constant 0 : i32
    %c0_i32_1 = arith.constant 0 : i32
    return %c0_i32, %c0_i32_0 : i32, i32
  }
  func.func @transform_9(%arg0: i32) -> (i32, i32) {
    %c0_i32 = arith.constant 0 : i32
    %c0_i32_0 = arith.constant 0 : i32
    %c0_i32_1 = arith.constant 0 : i32
    return %c0_i32, %c0_i32_0 : i32, i32
  }
  func.func @transform_10(%arg0: i32) -> (i32, i32) {
    %c0_i32 = arith.constant 0 : i32
    %c0_i32_0 = arith.constant 0 : i32
    %c0_i32_1 = arith.constant 0 : i32
    return %c0_i32, %c0_i32_0 : i32, i32
  }
  func.func @transform_11(%arg0: i32) -> (i32, i32) {
    %c0_i32 = arith.constant 0 : i32
    %c0_i32_0 = arith.constant 0 : i32
    %c0_i32_1 = arith.constant 0 : i32
    return %c0_i32, %c0_i32_0 : i32, i32
  }
  func.func @transform_12(%arg0: i32) -> (i32, i32) {
    %c0_i32 = arith.constant 0 : i32
    %c0_i32_0 = arith.constant 0 : i32
    %c0_i32_1 = arith.constant 0 : i32
    return %c0_i32, %c0_i32_0 : i32, i32
  }
  func.func @transform_13(%arg0: i32) -> (i32, i32) {
    %c0_i32 = arith.constant 0 : i32
    %c0_i32_0 = arith.constant 0 : i32
    %c0_i32_1 = arith.constant 0 : i32
    return %c0_i32, %c0_i32_0 : i32, i32
  }
  func.func @transform_14(%arg0: i32) -> (i32, i32) {
    %c0_i32 = arith.constant 0 : i32
    %c0_i32_0 = arith.constant 0 : i32
    %c0_i32_1 = arith.constant 0 : i32
    return %c0_i32, %c0_i32_0 : i32, i32
  }
  func.func @transform_15(%arg0: i32) -> (i32, i32) {
    %c0_i32 = arith.constant 0 : i32
    %c0_i32_0 = arith.constant 0 : i32
    %c0_i32_1 = arith.constant 0 : i32
    return %c0_i32, %c0_i32_0 : i32, i32
  }
  func.func @transform_16(%arg0: i32) -> (i32, i32) {
    %c0_i32 = arith.constant 0 : i32
    %c0_i32_0 = arith.constant 0 : i32
    %c0_i32_1 = arith.constant 0 : i32
    return %c0_i32, %c0_i32_0 : i32, i32
  }
  func.func @transform_17(%arg0: i32) -> (i32, i32) {
    %c0_i32 = arith.constant 0 : i32
    %c0_i32_0 = arith.constant 0 : i32
    %c0_i32_1 = arith.constant 0 : i32
    return %c0_i32, %c0_i32_0 : i32, i32
  }
  func.func @transform_18(%arg0: i32) -> (i32, i32) {
    %c0_i32 = arith.constant 0 : i32
    %c0_i32_0 = arith.constant 0 : i32
    %c0_i32_1 = arith.constant 0 : i32
    return %c0_i32, %c0_i32_0 : i32, i32
  }
  func.func @transform_19(%arg0: i32) -> (i32, i32) {
    %c0_i32 = arith.constant 0 : i32
    %c0_i32_0 = arith.constant 0 : i32
    return %arg0, %c0_i32 : i32, i32
  }
}

</mosaic_0001>

<llo_original>
// kernel: tpu_custom_call.1
$region0: #{tpu_custom_call.1}
  #allocation0 [shape = 'u32[]', space=smem, size = 0x4, offset = 0x4, fixed_abs, tag = 'smem constant byte address 0x4 - core index']
  #allocation1 [shape = 'u32[72,128]{1,0:T(1,128)}', space=vmem, size = 0x9000, scoped, tag = 'internal scratch']
  %s0 = inlined_call_operand.hbm [shape: f32[128,128], index: 0, kind: input, shape index: {}]
  %s1 = inlined_call_operand.hbm [shape: f32[128,128], index: 1, kind: input, shape index: {}]
  %s2 = inlined_call_operand.vmem [shape: f32[1,128], index: 2, kind: input, shape index: {}]
  %s3 = inlined_call_operand.hbm [shape: f32[128,128], index: 3, kind: input, shape index: {}]
  %s4 = inlined_call_operand.vmem [shape: f32[1,128], index: 4, kind: input, shape index: {}]
  %s5 = inlined_call_operand.hbm [shape: f32[128,128], index: 5, kind: input, shape index: {}]
  %s6 = inlined_call_operand.vmem [shape: f32[1,128], index: 6, kind: input, shape index: {}]
  %s7 = inlined_call_operand.hbm [shape: f32[128,128], index: 7, kind: input, shape index: {}]
  %s8 = inlined_call_operand.vmem [shape: f32[1,128], index: 8, kind: input, shape index: {}]
  %s9 = inlined_call_operand.hbm [shape: f32[128,128], index: 9, kind: input, shape index: {}]
  %s10 = inlined_call_operand.vmem [shape: f32[1,128], index: 10, kind: input, shape index: {}]
  %s11 = inlined_call_operand.hbm [shape: f32[128,128], index: 11, kind: input, shape index: {}]
  %s12 = inlined_call_operand.vmem [shape: f32[1,128], index: 12, kind: input, shape index: {}]
  %s13 = inlined_call_operand.hbm [shape: f32[128,128], index: 13, kind: input, shape index: {}]
  %s14 = inlined_call_operand.vmem [shape: f32[1,128], index: 14, kind: input, shape index: {}]
  %s15 = inlined_call_operand.hbm [shape: f32[128,128], index: 15, kind: input, shape index: {}]
  %s16 = inlined_call_operand.vmem [shape: f32[1,128], index: 16, kind: input, shape index: {}]
  %s17 = inlined_call_operand.hbm [shape: f32[128,128], index: 17, kind: input, shape index: {}]
  %s18 = inlined_call_operand.vmem [shape: f32[1,128], index: 18, kind: input, shape index: {}]
  %s19 = inlined_call_operand.hbm [shape: f32[128,128], index: 19, kind: output, shape index: {}]
  %s20 = sld [smem:[#allocation0]]
  $region126: #{tpu_custom_call.1} parent=0
    _
  %s22 = ssub.s32 1, %s20
  %s23 = scalar_select 0, %s22, %s20
  $region1: #{tpu_custom_call.1} parent=0
    #allocation2 [shape = 'u8[65536]{0}', space=vmem, size = 0x10000, scoped, tag = 'input window, operand 0, single buffered']
    #allocation3 [shape = 's32[1]{0}', space=sflag, size = 0x4, scoped, tag = 'scoped memory for tpu_custom_call.1']
    #allocation4 [shape = 's32[1]{0}', space=sflag, size = 0x4, scoped, tag = 'scoped memory for tpu_custom_call.1']
    #allocation5 [shape = 'u8[65536]{0}', space=vmem, size = 0x10000, scoped, tag = 'input window, operand 1, single buffered']
    #allocation6 [shape = 's32[1]{0}', space=sflag, size = 0x4, scoped, tag = 'scoped memory for tpu_custom_call.1']
    #allocation7 [shape = 'u8[65536]{0}', space=vmem, size = 0x10000, scoped, tag = 'input window, operand 3, single buffered']
    #allocation8 [shape = 'u8[65536]{0}', space=vmem, size = 0x10000, scoped, tag = 'input window, operand 5, single buffered']
    #allocation9 [shape = 's32[1]{0}', space=sflag, size = 0x4, scoped, tag = 'scoped memory for tpu_custom_call.1']
    #allocation10 [shape = 'u8[65536]{0}', space=vmem, size = 0x10000, scoped, tag = 'input window, operand 7, single buffered']
    #allocation11 [shape = 'u8[65536]{0}', space=vmem, size = 0x10000, scoped, tag = 'input window, operand 9, single buffered']
    #allocation12 [shape = 's32[1]{0}', space=sflag, size = 0x4, scoped, tag = 'scoped memory for tpu_custom_call.1']
    #allocation13 [shape = 'u8[65536]{0}', space=vmem, size = 0x10000, scoped, tag = 'input window, operand 11, single buffered']
    #allocation14 [shape = 'u8[65536]{0}', space=vmem, size = 0x10000, scoped, tag = 'input window, operand 13, single buffered']
    #allocation15 [shape = 's32[1]{0}', space=sflag, size = 0x4, scoped, tag = 'scoped memory for tpu_custom_call.1']
    #allocation16 [shape = 'u8[65536]{0}', space=vmem, size = 0x10000, scoped, tag = 'input window, operand 15, single buffered']
    #allocation17 [shape = 'u8[65536]{0}', space=vmem, size = 0x10000, scoped, tag = 'input window, operand 17, single buffered']
    #allocation18 [shape = 's32[1]{0}', space=sflag, size = 0x4, scoped, tag = 'scoped memory for tpu_custom_call.1']
    #allocation19 [shape = 'u8[65536]{0}', space=vmem, size = 0x10000, scoped, tag = 'output window, operand 0, single buffered']
    %24 = vsyncpa [#allocation3], 0
    %25 = vsyncpa [#allocation6], 0
    %26 = vsyncpa [#allocation9], 0
    %27 = vsyncpa [#allocation12], 0
    %28 = vsyncpa [#allocation15], 0
    %29 = vsyncpa [#allocation18], 0
    %30 = vsyncpa [#allocation4], 0
    // Predicated region
    $region2: #{tpu_custom_call.1} parent=1 // pred_check
      _
    $region3: #{tpu_custom_call.1} parent=1 // pred_check_branch
      %32 = sbr.rel (0) target = $region5
    $region4: #{tpu_custom_call.1} parent=1 // pred_region
      %34 = vsyncadd [#allocation3], 0
      %s35 = sshll.u32 %s0, 4
      %s36 = int_to_ptr.hbm [resolvable:$true] %s35
      %s37 = sshll.u32 [#allocation2], 4
      %s38 = int_to_ptr.vmem [resolvable:$true] %s37
      %43 = dma.hbm_to_vmem [thread:$0]  %s36, 2048, %s38, [#allocation3], 128, 128, 8
    $region5: #{tpu_custom_call.1} parent=1 // pred_fallthru
      _
    // Predicated region
    $region6: #{tpu_custom_call.1} parent=1 // pred_check
      _
    $region7: #{tpu_custom_call.1} parent=1 // pred_check_branch
      %45 = sbr.rel (0) target = $region9
    $region8: #{tpu_custom_call.1} parent=1 // pred_region
      %47 = vsyncadd [#allocation6], 0
      %s48 = sshll.u32 %s1, 4
      %s49 = int_to_ptr.hbm [resolvable:$true] %s48
      %s50 = sshll.u32 [#allocation5], 4
      %s51 = int_to_ptr.vmem [resolvable:$true] %s50
      %56 = dma.hbm_to_vmem [thread:$0]  %s49, 2048, %s51, [#allocation6], 128, 128, 8
    $region9: #{tpu_custom_call.1} parent=1 // pred_fallthru
      _
    // Predicated region
    $region10: #{tpu_custom_call.1} parent=1 // pred_check
      _
    $region11: #{tpu_custom_call.1} parent=1 // pred_check_branch
      %58 = sbr.rel (0) target = $region13
    $region12: #{tpu_custom_call.1} parent=1 // pred_region
      _
    $region13: #{tpu_custom_call.1} parent=1 // pred_fallthru
      _
    // Predicated region
    $region14: #{tpu_custom_call.1} parent=1 // pred_check
      _
    $region15: #{tpu_custom_call.1} parent=1 // pred_check_branch
      %60 = sbr.rel (0) target = $region17
    $region16: #{tpu_custom_call.1} parent=1 // pred_region
      %62 = vsyncadd [#allocation6], 0
      %s63 = sshll.u32 %s3, 4
      %s64 = int_to_ptr.hbm [resolvable:$true] %s63
      %s65 = sshll.u32 [#allocation7], 4
      %s66 = int_to_ptr.vmem [resolvable:$true] %s65
      %71 = dma.hbm_to_vmem [thread:$0]  %s64, 2048, %s66, [#allocation6], 128, 128, 8
    $region17: #{tpu_custom_call.1} parent=1 // pred_fallthru
      _
    // Predicated region
    $region18: #{tpu_custom_call.1} parent=1 // pred_check
      _
    $region19: #{tpu_custom_call.1} parent=1 // pred_check_branch
      %73 = sbr.rel (0) target = $region21
    $region20: #{tpu_custom_call.1} parent=1 // pred_region
      _
    $region21: #{tpu_custom_call.1} parent=1 // pred_fallthru
      _
    // Predicated region
    $region22: #{tpu_custom_call.1} parent=1 // pred_check
      _
    $region23: #{tpu_custom_call.1} parent=1 // pred_check_branch
      %75 = sbr.rel (0) target = $region25
    $region24: #{tpu_custom_call.1} parent=1 // pred_region
      %77 = vsyncadd [#allocation9], 0
      %s78 = sshll.u32 %s5, 4
      %s79 = int_to_ptr.hbm [resolvable:$true] %s78
      %s80 = sshll.u32 [#allocation8], 4
      %s81 = int_to_ptr.vmem [resolvable:$true] %s80
      %86 = dma.hbm_to_vmem [thread:$0]  %s79, 2048, %s81, [#allocation9], 128, 128, 8
    $region25: #{tpu_custom_call.1} parent=1 // pred_fallthru
      _
    // Predicated region
    $region26: #{tpu_custom_call.1} parent=1 // pred_check
      _
    $region27: #{tpu_custom_call.1} parent=1 // pred_check_branch
      %88 = sbr.rel (0) target = $region29
    $region28: #{tpu_custom_call.1} parent=1 // pred_region
      _
    $region29: #{tpu_custom_call.1} parent=1 // pred_fallthru
      _
    // Predicated region
    $region30: #{tpu_custom_call.1} parent=1 // pred_check
      _
    $region31: #{tpu_custom_call.1} parent=1 // pred_check_branch
      %90 = sbr.rel (0) target = $region33
    $region32: #{tpu_custom_call.1} parent=1 // pred_region
      %92 = vsyncadd [#allocation9], 0
      %s93 = sshll.u32 %s7, 4
      %s94 = int_to_ptr.hbm [resolvable:$true] %s93
      %s95 = sshll.u32 [#allocation10], 4
      %s96 = int_to_ptr.vmem [resolvable:$true] %s95
      %101 = dma.hbm_to_vmem [thread:$0]  %s94, 2048, %s96, [#allocation9], 128, 128, 8
    $region33: #{tpu_custom_call.1} parent=1 // pred_fallthru
      _
    // Predicated region
    $region34: #{tpu_custom_call.1} parent=1 // pred_check
      _
    $region35: #{tpu_custom_call.1} parent=1 // pred_check_branch
      %103 = sbr.rel (0) target = $region37
    $region36: #{tpu_custom_call.1} parent=1 // pred_region
      _
    $region37: #{tpu_custom_call.1} parent=1 // pred_fallthru
      _
    // Predicated region
    $region38: #{tpu_custom_call.1} parent=1 // pred_check
      _
    $region39: #{tpu_custom_call.1} parent=1 // pred_check_branch
      %105 = sbr.rel (0) target = $region41
    $region40: #{tpu_custom_call.1} parent=1 // pred_region
      %107 = vsyncadd [#allocation12], 0
      %s108 = sshll.u32 %s9, 4
      %s109 = int_to_ptr.hbm [resolvable:$true] %s108
      %s110 = sshll.u32 [#allocation11], 4
      %s111 = int_to_ptr.vmem [resolvable:$true] %s110
      %116 = dma.hbm_to_vmem [thread:$0]  %s109, 2048, %s111, [#allocation12], 128, 128, 8
    $region41: #{tpu_custom_call.1} parent=1 // pred_fallthru
      _
    // Predicated region
    $region42: #{tpu_custom_call.1} parent=1 // pred_check
      _
    $region43: #{tpu_custom_call.1} parent=1 // pred_check_branch
      %118 = sbr.rel (0) target = $region45
    $region44: #{tpu_custom_call.1} parent=1 // pred_region
      _
    $region45: #{tpu_custom_call.1} parent=1 // pred_fallthru
      _
    // Predicated region
    $region46: #{tpu_custom_call.1} parent=1 // pred_check
      _
    $region47: #{tpu_custom_call.1} parent=1 // pred_check_branch
      %120 = sbr.rel (0) target = $region49
    $region48: #{tpu_custom_call.1} parent=1 // pred_region
      %122 = vsyncadd [#allocation12], 0
      %s123 = sshll.u32 %s11, 4
      %s124 = int_to_ptr.hbm [resolvable:$true] %s123
      %s125 = sshll.u32 [#allocation13], 4
      %s126 = int_to_ptr.vmem [resolvable:$true] %s125
      %131 = dma.hbm_to_vmem [thread:$0]  %s124, 2048, %s126, [#allocation12], 128, 128, 8
    $region49: #{tpu_custom_call.1} parent=1 // pred_fallthru
      _
    // Predicated region
    $region50: #{tpu_custom_call.1} parent=1 // pred_check
      _
    $region51: #{tpu_custom_call.1} parent=1 // pred_check_branch
      %133 = sbr.rel (0) target = $region53
    $region52: #{tpu_custom_call.1} parent=1 // pred_region
      _
    $region53: #{tpu_custom_call.1} parent=1 // pred_fallthru
      _
    // Predicated region
    $region54: #{tpu_custom_call.1} parent=1 // pred_check
      _
    $region55: #{tpu_custom_call.1} parent=1 // pred_check_branch
      %135 = sbr.rel (0) target = $region57
    $region56: #{tpu_custom_call.1} parent=1 // pred_region
      %137 = vsyncadd [#allocation15], 0
      %s138 = sshll.u32 %s13, 4
      %s139 = int_to_ptr.hbm [resolvable:$true] %s138
      %s140 = sshll.u32 [#allocation14], 4
      %s141 = int_to_ptr.vmem [resolvable:$true] %s140
      %146 = dma.hbm_to_vmem [thread:$0]  %s139, 2048, %s141, [#allocation15], 128, 128, 8
    $region57: #{tpu_custom_call.1} parent=1 // pred_fallthru
      _
    // Predicated region
    $region58: #{tpu_custom_call.1} parent=1 // pred_check
      _
    $region59: #{tpu_custom_call.1} parent=1 // pred_check_branch
      %148 = sbr.rel (0) target = $region61
    $region60: #{tpu_custom_call.1} parent=1 // pred_region
      _
    $region61: #{tpu_custom_call.1} parent=1 // pred_fallthru
      _
    // Predicated region
    $region62: #{tpu_custom_call.1} parent=1 // pred_check
      _
    $region63: #{tpu_custom_call.1} parent=1 // pred_check_branch
      %150 = sbr.rel (0) target = $region65
    $region64: #{tpu_custom_call.1} parent=1 // pred_region
      %152 = vsyncadd [#allocation15], 0
      %s153 = sshll.u32 %s15, 4
      %s154 = int_to_ptr.hbm [resolvable:$true] %s153
      %s155 = sshll.u32 [#allocation16], 4
      %s156 = int_to_ptr.vmem [resolvable:$true] %s155
      %161 = dma.hbm_to_vmem [thread:$0]  %s154, 2048, %s156, [#allocation15], 128, 128, 8
    $region65: #{tpu_custom_call.1} parent=1 // pred_fallthru
      _
    // Predicated region
    $region66: #{tpu_custom_call.1} parent=1 // pred_check
      _
    $region67: #{tpu_custom_call.1} parent=1 // pred_check_branch
      %163 = sbr.rel (0) target = $region69
    $region68: #{tpu_custom_call.1} parent=1 // pred_region
      _
    $region69: #{tpu_custom_call.1} parent=1 // pred_fallthru
      _
    // Predicated region
    $region70: #{tpu_custom_call.1} parent=1 // pred_check
      _
    $region71: #{tpu_custom_call.1} parent=1 // pred_check_branch
      %165 = sbr.rel (0) target = $region73
    $region72: #{tpu_custom_call.1} parent=1 // pred_region
      %167 = vsyncadd [#allocation18], 0
      %s168 = sshll.u32 %s17, 4
      %s169 = int_to_ptr.hbm [resolvable:$true] %s168
      %s170 = sshll.u32 [#allocation17], 4
      %s171 = int_to_ptr.vmem [resolvable:$true] %s170
      %176 = dma.hbm_to_vmem [thread:$0]  %s169, 2048, %s171, [#allocation18], 128, 128, 8
    $region73: #{tpu_custom_call.1} parent=1 // pred_fallthru
      _
    // Predicated region
    $region74: #{tpu_custom_call.1} parent=1 // pred_check
      _
    $region75: #{tpu_custom_call.1} parent=1 // pred_check_branch
      %178 = sbr.rel (0) target = $region77
    $region76: #{tpu_custom_call.1} parent=1 // pred_region
      _
    $region77: #{tpu_custom_call.1} parent=1 // pred_fallthru
      _
    // Predicated region
    $region78: #{tpu_custom_call.1} parent=1 // pred_check
      _
    $region79: #{tpu_custom_call.1} parent=1 // pred_check_branch
      %180 = sbr.rel (0) target = $region81
    $region80: #{tpu_custom_call.1} parent=1 // pred_region
      %182 = dma.done [#allocation3], 2048
    $region81: #{tpu_custom_call.1} parent=1 // pred_fallthru
      _
    // Predicated region
    $region82: #{tpu_custom_call.1} parent=1 // pred_check
      _
    $region83: #{tpu_custom_call.1} parent=1 // pred_check_branch
      %184 = sbr.rel (0) target = $region85
    $region84: #{tpu_custom_call.1} parent=1 // pred_region
      %186 = dma.done [#allocation6], 2048
    $region85: #{tpu_custom_call.1} parent=1 // pred_fallthru
      _
    // Predicated region
    $region86: #{tpu_custom_call.1} parent=1 // pred_check
      _
    $region87: #{tpu_custom_call.1} parent=1 // pred_check_branch
      %188 = sbr.rel (0) target = $region89
    $region88: #{tpu_custom_call.1} parent=1 // pred_region
      %190 = dma.done [#allocation6], 2048
    $region89: #{tpu_custom_call.1} parent=1 // pred_fallthru
      _
    // Predicated region
    $region90: #{tpu_custom_call.1} parent=1 // pred_check
      _
    $region91: #{tpu_custom_call.1} parent=1 // pred_check_branch
      %192 = sbr.rel (0) target = $region93
    $region92: #{tpu_custom_call.1} parent=1 // pred_region
      %194 = dma.done [#allocation9], 2048
    $region93: #{tpu_custom_call.1} parent=1 // pred_fallthru
      _
    // Predicated region
    $region94: #{tpu_custom_call.1} parent=1 // pred_check
      _
    $region95: #{tpu_custom_call.1} parent=1 // pred_check_branch
      %196 = sbr.rel (0) target = $region97
    $region96: #{tpu_custom_call.1} parent=1 // pred_region
      %198 = dma.done [#allocation9], 2048
    $region97: #{tpu_custom_call.1} parent=1 // pred_fallthru
      _
    // Predicated region
    $region98: #{tpu_custom_call.1} parent=1 // pred_check
      _
    $region99: #{tpu_custom_call.1} parent=1 // pred_check_branch
      %200 = sbr.rel (0) target = $region101
    $region100: #{tpu_custom_call.1} parent=1 // pred_region
      %202 = dma.done [#allocation12], 2048
    $region101: #{tpu_custom_call.1} parent=1 // pred_fallthru
      _
    // Predicated region
    $region102: #{tpu_custom_call.1} parent=1 // pred_check
      _
    $region103: #{tpu_custom_call.1} parent=1 // pred_check_branch
      %204 = sbr.rel (0) target = $region105
    $region104: #{tpu_custom_call.1} parent=1 // pred_region
      %206 = dma.done [#allocation12], 2048
    $region105: #{tpu_custom_call.1} parent=1 // pred_fallthru
      _
    // Predicated region
    $region106: #{tpu_custom_call.1} parent=1 // pred_check
      _
    $region107: #{tpu_custom_call.1} parent=1 // pred_check_branch
      %208 = sbr.rel (0) target = $region109
    $region108: #{tpu_custom_call.1} parent=1 // pred_region
      %210 = dma.done [#allocation15], 2048
    $region109: #{tpu_custom_call.1} parent=1 // pred_fallthru
      _
    // Predicated region
    $region110: #{tpu_custom_call.1} parent=1 // pred_check
      _
    $region111: #{tpu_custom_call.1} parent=1 // pred_check_branch
      %212 = sbr.rel (0) target = $region113
    $region112: #{tpu_custom_call.1} parent=1 // pred_region
      %214 = dma.done [#allocation15], 2048
    $region113: #{tpu_custom_call.1} parent=1 // pred_fallthru
      _
    // Predicated region
    $region114: #{tpu_custom_call.1} parent=1 // pred_check
      _
    $region115: #{tpu_custom_call.1} parent=1 // pred_check_branch
      %216 = sbr.rel (0) target = $region117
    $region116: #{tpu_custom_call.1} parent=1 // pred_region
      %218 = dma.done [#allocation18], 2048
    $region117: #{tpu_custom_call.1} parent=1 // pred_fallthru
      _
    %v219 = vld [vmem:[#allocation2] sm:$0xff]
    %v220 = vld [vmem:[#allocation2 + $0x8] sm:$0xff]
    %v221 = vld [vmem:[#allocation2 + $0x10] sm:$0xff]
    %v222 = vld [vmem:[#allocation2 + $0x18] sm:$0xff]
    %v223 = vld [vmem:[#allocation2 + $0x20] sm:$0xff]
    %v224 = vld [vmem:[#allocation2 + $0x28] sm:$0xff]
    %v225 = vld [vmem:[#allocation2 + $0x30] sm:$0xff]
    %v226 = vld [vmem:[#allocation2 + $0x38] sm:$0xff]
    %v227 = vld [vmem:[#allocation2 + $0x40] sm:$0xff]
    %v228 = vld [vmem:[#allocation2 + $0x48] sm:$0xff]
    %v229 = vld [vmem:[#allocation2 + $0x50] sm:$0xff]
    %v230 = vld [vmem:[#allocation2 + $0x58] sm:$0xff]
    %v231 = vld [vmem:[#allocation2 + $0x60] sm:$0xff]
    %v232 = vld [vmem:[#allocation2 + $0x68] sm:$0xff]
    %v233 = vld [vmem:[#allocation2 + $0x70] sm:$0xff]
    %v234 = vld [vmem:[#allocation2 + $0x78] sm:$0xff]
    %v235 = vld [vmem:[#allocation5] sm:$0xff]
    %v236 = vld [vmem:[#allocation5 + $0x8] sm:$0xff]
    %v237 = vld [vmem:[#allocation5 + $0x10] sm:$0xff]
    %v238 = vld [vmem:[#allocation5 + $0x18] sm:$0xff]
    %v239 = vld [vmem:[#allocation5 + $0x20] sm:$0xff]
    %v240 = vld [vmem:[#allocation5 + $0x28] sm:$0xff]
    %v241 = vld [vmem:[#allocation5 + $0x30] sm:$0xff]
    %v242 = vld [vmem:[#allocation5 + $0x38] sm:$0xff]
    %v243 = vld [vmem:[#allocation5 + $0x40] sm:$0xff]
    %v244 = vld [vmem:[#allocation5 + $0x48] sm:$0xff]
    %v245 = vld [vmem:[#allocation5 + $0x50] sm:$0xff]
    %v246 = vld [vmem:[#allocation5 + $0x58] sm:$0xff]
    %v247 = vld [vmem:[#allocation5 + $0x60] sm:$0xff]
    %v248 = vld [vmem:[#allocation5 + $0x68] sm:$0xff]
    %v249 = vld [vmem:[#allocation5 + $0x70] sm:$0xff]
    %v250 = vld [vmem:[#allocation5 + $0x78] sm:$0xff]
    %v251 = vld [vmem:[%s2] sm:$0x1]
    %v253 = vperm.slane %v251, 0
    %255 = vmatpush.msra.mxu0 %v250
    %256 = vmatpush.msra.mxu0 %v249
    %257 = vmatpush.msra.mxu0 %v248
    %258 = vmatpush.msra.mxu0 %v247
    %259 = vmatpush.msra.mxu0 %v246
    %260 = vmatpush.msra.mxu0 %v245
    %261 = vmatpush.msra.mxu0 %v244
    %262 = vmatpush.msra.mxu0 %v243
    %263 = vmatpush.msra.mxu0 %v242
    %264 = vmatpush.msra.mxu0 %v241
    %265 = vmatpush.msra.mxu0 %v240
    %266 = vmatpush.msra.mxu0 %v239
    %267 = vmatpush.msra.mxu0 %v238
    %268 = vmatpush.msra.mxu0 %v237
    %269 = vmatpush.msra.mxu0 %v236
    %270 = vmatpush.msra.mxu0 %v235
    %271 = vmatmul.f32.gmra.mxu0 %v219
    %v272 = vpop.f32.mrf.mxu0
    %v273 = vadd.f32 %v253, %v272
    %274 = vmatmul.f32.gmra.mxu0 %v220
    %v275 = vpop.f32.mrf.mxu0
    %v276 = vadd.f32 %v253, %v275
    %277 = vmatmul.f32.gmra.mxu0 %v221
    %v278 = vpop.f32.mrf.mxu0
    %v279 = vadd.f32 %v253, %v278
    %280 = vmatmul.f32.gmra.mxu0 %v222
    %v281 = vpop.f32.mrf.mxu0
    %v282 = vadd.f32 %v253, %v281
    %283 = vmatmul.f32.gmra.mxu0 %v223
    %v284 = vpop.f32.mrf.mxu0
    %v285 = vadd.f32 %v253, %v284
    %286 = vmatmul.f32.gmra.mxu0 %v224
    %v287 = vpop.f32.mrf.mxu0
    %v288 = vadd.f32 %v253, %v287
    %289 = vmatmul.f32.gmra.mxu0 %v225
    %v290 = vpop.f32.mrf.mxu0
    %v291 = vadd.f32 %v253, %v290
    %292 = vmatmul.f32.gmra.mxu0 %v226
    %v293 = vpop.f32.mrf.mxu0
    %v294 = vadd.f32 %v253, %v293
    %295 = vmatmul.f32.gmra.mxu0 %v227
    %v296 = vpop.f32.mrf.mxu0
    %v297 = vadd.f32 %v253, %v296
    %298 = vmatmul.f32.gmra.mxu0 %v228
    %v299 = vpop.f32.mrf.mxu0
    %v300 = vadd.f32 %v253, %v299
    %301 = vmatmul.f32.gmra.mxu0 %v229
    %v302 = vpop.f32.mrf.mxu0
    %v303 = vadd.f32 %v253, %v302
    %304 = vmatmul.f32.gmra.mxu0 %v230
    %v305 = vpop.f32.mrf.mxu0
    %v306 = vadd.f32 %v253, %v305
    %307 = vmatmul.f32.gmra.mxu0 %v231
    %v308 = vpop.f32.mrf.mxu0
    %v309 = vadd.f32 %v253, %v308
    %310 = vmatmul.f32.gmra.mxu0 %v232
    %v311 = vpop.f32.mrf.mxu0
    %v312 = vadd.f32 %v253, %v311
    %313 = vmatmul.f32.gmra.mxu0 %v233
    %v314 = vpop.f32.mrf.mxu0
    %v315 = vadd.f32 %v253, %v314
    %316 = vmatmul.f32.gmra.mxu0 %v234
    %v317 = vpop.f32.mrf.mxu0
    %v318 = vadd.f32 %v253, %v317
    %319 = vdwg.mxu0
    %v320 = vmul.f32 %v273, 0.5
    %v321 = vmul.f32 %v276, 0.5
    %v322 = vmul.f32 %v279, 0.5
    %v323 = vmul.f32 %v282, 0.5
    %v324 = vmul.f32 %v285, 0.5
    %v325 = vmul.f32 %v288, 0.5
    %v326 = vmul.f32 %v291, 0.5
    %v327 = vmul.f32 %v294, 0.5
    %v328 = vmul.f32 %v297, 0.5
    %v329 = vmul.f32 %v300, 0.5
    %v330 = vmul.f32 %v303, 0.5
    %v331 = vmul.f32 %v306, 0.5
    %v332 = vmul.f32 %v309, 0.5
    %v333 = vmul.f32 %v312, 0.5
    %v334 = vmul.f32 %v315, 0.5
    %v335 = vmul.f32 %v318, 0.5
    %v336 = vmul.f32 %v273, 0.70710677
    %v337 = vmul.f32 %v276, 0.70710677
    %v338 = vmul.f32 %v279, 0.70710677
    %v339 = vmul.f32 %v282, 0.70710677
    %v340 = vmul.f32 %v285, 0.70710677
    %v341 = vmul.f32 %v288, 0.70710677
    %v342 = vmul.f32 %v291, 0.70710677
    %v343 = vmul.f32 %v294, 0.70710677
    %v344 = vmul.f32 %v297, 0.70710677
    %v345 = vmul.f32 %v300, 0.70710677
    %v346 = vmul.f32 %v303, 0.70710677
    %v347 = vmul.f32 %v306, 0.70710677
    %v348 = vmul.f32 %v309, 0.70710677
    %v349 = vmul.f32 %v312, 0.70710677
    %v350 = vmul.f32 %v315, 0.70710677
    %v351 = vmul.f32 %v318, 0.70710677
    %v352 = vmul.f32 %v336, %v336
    %v353 = vmin.f32 16.0, %v352
    %v354 = vmul.f32 %v353, 2.1237322e-06
    %v355 = vadd.f32 %v354, 0.00028619796
    %v356 = vmul.f32 %v353, %v355
    %v357 = vadd.f32 %v356, 0.0036580483
    %v358 = vmul.f32 %v353, %v357
    %v359 = vadd.f32 %v358, 0.05243302
    %v360 = vmul.f32 %v353, %v359
    %v361 = vadd.f32 %v360, 0.18741608
    %v362 = vmul.f32 %v353, %v361
    %v363 = vadd.f32 %v362, 1.1283791
    %v364 = vmul.f32 %v336, %v363
    %v365 = vmul.f32 %v353, 3.8918573e-05
    %v366 = vadd.f32 %v365, 0.001143296
    %v367 = vmul.f32 %v353, %v366
    %v368 = vadd.f32 %v367, 0.014752088
    %v369 = vmul.f32 %v353, %v368
    %v370 = vadd.f32 %v369, 0.112945676
    %v371 = vmul.f32 %v353, %v370
    %v372 = vadd.f32 %v371, 0.4994258
    %v373 = vmul.f32 %v353, %v372
    %v374 = vadd.f32 %v373, 1.0
    %v375 = vrcp.pop %v374
    %v376 = vmul.f32 %v374, %v375
    %v377 = vsub.f32 1.0, %v376
    %v378 = vmul.f32 %v375, %v377
    %v379 = vadd.f32 %v375, %v378
    %vm380 = vweird.f32 %v374
    %vm381 = vweird.f32 %v375
    %vm382 = vmor %vm380, %vm381
    %v383 = vsel %vm382, %v375, %v379
    %v384 = vand.u32 2147483647, %v374
    %vm385 = vcmp.eq.f32.partialorder %v384, 8.507059e+37
    %v386 = vand.u32 %v374, 2147483648
    %v387 = vor.u32 1.1754944e-38, %v386
    %v388 = vsel %vm385, %v387, %v383
    %v389 = vmul.f32 %v364, %v388
    %v390 = vmin.f32 %v389, 1.0
    %v391 = vmax.f32 %v390, -1.0
    %v392 = vmul.f32 %v337, %v337
    %v393 = vmin.f32 16.0, %v392
    %v394 = vmul.f32 %v393, 2.1237322e-06
    %v395 = vadd.f32 %v394, 0.00028619796
    %v396 = vmul.f32 %v393, %v395
    %v397 = vadd.f32 %v396, 0.0036580483
    %v398 = vmul.f32 %v393, %v397
    %v399 = vadd.f32 %v398, 0.05243302
    %v400 = vmul.f32 %v393, %v399
    %v401 = vadd.f32 %v400, 0.18741608
    %v402 = vmul.f32 %v393, %v401
    %v403 = vadd.f32 %v402, 1.1283791
    %v404 = vmul.f32 %v337, %v403
    %v405 = vmul.f32 %v393, 3.8918573e-05
    %v406 = vadd.f32 %v405, 0.001143296
    %v407 = vmul.f32 %v393, %v406
    %v408 = vadd.f32 %v407, 0.014752088
    %v409 = vmul.f32 %v393, %v408
    %v410 = vadd.f32 %v409, 0.112945676
    %v411 = vmul.f32 %v393, %v410
    %v412 = vadd.f32 %v411, 0.4994258
    %v413 = vmul.f32 %v393, %v412
    %v414 = vadd.f32 %v413, 1.0
    %v415 = vrcp.pop %v414
    %v416 = vmul.f32 %v414, %v415
    %v417 = vsub.f32 1.0, %v416
    %v418 = vmul.f32 %v415, %v417
    %v419 = vadd.f32 %v415, %v418
    %vm420 = vweird.f32 %v414
    %vm421 = vweird.f32 %v415
    %vm422 = vmor %vm420, %vm421
    %v423 = vsel %vm422, %v415, %v419
    %v424 = vand.u32 2147483647, %v414
    %vm425 = vcmp.eq.f32.partialorder %v424, 8.507059e+37
    %v426 = vand.u32 %v414, 2147483648
    %v427 = vor.u32 1.1754944e-38, %v426
    %v428 = vsel %vm425, %v427, %v423
    %v429 = vmul.f32 %v404, %v428
    %v430 = vmin.f32 %v429, 1.0
    %v431 = vmax.f32 %v430, -1.0
    %v432 = vmul.f32 %v338, %v338
    %v433 = vmin.f32 16.0, %v432
    %v434 = vmul.f32 %v433, 2.1237322e-06
    %v435 = vadd.f32 %v434, 0.00028619796
    %v436 = vmul.f32 %v433, %v435
    %v437 = vadd.f32 %v436, 0.0036580483
    %v438 = vmul.f32 %v433, %v437
    %v439 = vadd.f32 %v438, 0.05243302
    %v440 = vmul.f32 %v433, %v439
    %v441 = vadd.f32 %v440, 0.18741608
    %v442 = vmul.f32 %v433, %v441
    %v443 = vadd.f32 %v442, 1.1283791
    %v444 = vmul.f32 %v338, %v443
    %v445 = vmul.f32 %v433, 3.8918573e-05
    %v446 = vadd.f32 %v445, 0.001143296
    %v447 = vmul.f32 %v433, %v446
    %v448 = vadd.f32 %v447, 0.014752088
    %v449 = vmul.f32 %v433, %v448
    %v450 = vadd.f32 %v449, 0.112945676
    %v451 = vmul.f32 %v433, %v450
    %v452 = vadd.f32 %v451, 0.4994258
    %v453 = vmul.f32 %v433, %v452
    %v454 = vadd.f32 %v453, 1.0
    %v455 = vrcp.pop %v454
    %v456 = vmul.f32 %v454, %v455
    %v457 = vsub.f32 1.0, %v456
    %v458 = vmul.f32 %v455, %v457
    %v459 = vadd.f32 %v455, %v458
    %vm460 = vweird.f32 %v454
    %vm461 = vweird.f32 %v455
    %vm462 = vmor %vm460, %vm461
    %v463 = vsel %vm462, %v455, %v459
    %v464 = vand.u32 2147483647, %v454
    %vm465 = vcmp.eq.f32.partialorder %v464, 8.507059e+37
    %v466 = vand.u32 %v454, 2147483648
    %v467 = vor.u32 1.1754944e-38, %v466
    %v468 = vsel %vm465, %v467, %v463
    %v469 = vmul.f32 %v444, %v468
    %v470 = vmin.f32 %v469, 1.0
    %v471 = vmax.f32 %v470, -1.0
    %v472 = vmul.f32 %v339, %v339
    %v473 = vmin.f32 16.0, %v472
    %v474 = vmul.f32 %v473, 2.1237322e-06
    %v475 = vadd.f32 %v474, 0.00028619796
    %v476 = vmul.f32 %v473, %v475
    %v477 = vadd.f32 %v476, 0.0036580483
    %v478 = vmul.f32 %v473, %v477
    %v479 = vadd.f32 %v478, 0.05243302
    %v480 = vmul.f32 %v473, %v479
    %v481 = vadd.f32 %v480, 0.18741608
    %v482 = vmul.f32 %v473, %v481
    %v483 = vadd.f32 %v482, 1.1283791
    %v484 = vmul.f32 %v339, %v483
    %v485 = vmul.f32 %v473, 3.8918573e-05
    %v486 = vadd.f32 %v485, 0.001143296
    %v487 = vmul.f32 %v473, %v486
    %v488 = vadd.f32 %v487, 0.014752088
    %v489 = vmul.f32 %v473, %v488
    %v490 = vadd.f32 %v489, 0.112945676
    %v491 = vmul.f32 %v473, %v490
    %v492 = vadd.f32 %v491, 0.4994258
    %v493 = vmul.f32 %v473, %v492
    %v494 = vadd.f32 %v493, 1.0
    %v495 = vrcp.pop %v494
    %v496 = vmul.f32 %v494, %v495
    %v497 = vsub.f32 1.0, %v496
    %v498 = vmul.f32 %v495, %v497
    %v499 = vadd.f32 %v495, %v498
    %vm500 = vweird.f32 %v494
    %vm501 = vweird.f32 %v495
    %vm502 = vmor %vm500, %vm501
    %v503 = vsel %vm502, %v495, %v499
    %v504 = vand.u32 2147483647, %v494
    %vm505 = vcmp.eq.f32.partialorder %v504, 8.507059e+37
    %v506 = vand.u32 %v494, 2147483648
    %v507 = vor.u32 1.1754944e-38, %v506
    %v508 = vsel %vm505, %v507, %v503
    %v509 = vmul.f32 %v484, %v508
    %v510 = vmin.f32 %v509, 1.0
    %v511 = vmax.f32 %v510, -1.0
    %v512 = vmul.f32 %v340, %v340
    %v513 = vmin.f32 16.0, %v512
    %v514 = vmul.f32 %v513, 2.1237322e-06
    %v515 = vadd.f32 %v514, 0.00028619796
    %v516 = vmul.f32 %v513, %v515
    %v517 = vadd.f32 %v516, 0.0036580483
    %v518 = vmul.f32 %v513, %v517
    %v519 = vadd.f32 %v518, 0.05243302
    %v520 = vmul.f32 %v513, %v519
    %v521 = vadd.f32 %v520, 0.18741608
    %v522 = vmul.f32 %v513, %v521
    %v523 = vadd.f32 %v522, 1.1283791
    %v524 = vmul.f32 %v340, %v523
    %v525 = vmul.f32 %v513, 3.8918573e-05
    %v526 = vadd.f32 %v525, 0.001143296
    %v527 = vmul.f32 %v513, %v526
    %v528 = vadd.f32 %v527, 0.014752088
    %v529 = vmul.f32 %v513, %v528
    %v530 = vadd.f32 %v529, 0.112945676
    %v531 = vmul.f32 %v513, %v530
    %v532 = vadd.f32 %v531, 0.4994258
    %v533 = vmul.f32 %v513, %v532
    %v534 = vadd.f32 %v533, 1.0
    %v535 = vrcp.pop %v534
    %v536 = vmul.f32 %v534, %v535
    %v537 = vsub.f32 1.0, %v536
    %v538 = vmul.f32 %v535, %v537
    %v539 = vadd.f32 %v535, %v538
    %vm540 = vweird.f32 %v534
    %vm541 = vweird.f32 %v535
    %vm542 = vmor %vm540, %vm541
    %v543 = vsel %vm542, %v535, %v539
    %v544 = vand.u32 2147483647, %v534
    %vm545 = vcmp.eq.f32.partialorder %v544, 8.507059e+37
    %v546 = vand.u32 %v534, 2147483648
    %v547 = vor.u32 1.1754944e-38, %v546
    %v548 = vsel %vm545, %v547, %v543
    %v549 = vmul.f32 %v524, %v548
    %v550 = vmin.f32 %v549, 1.0
    %v551 = vmax.f32 %v550, -1.0
    %v552 = vmul.f32 %v341, %v341
    %v553 = vmin.f32 16.0, %v552
    %v554 = vmul.f32 %v553, 2.1237322e-06
    %v555 = vadd.f32 %v554, 0.00028619796
    %v556 = vmul.f32 %v553, %v555
    %v557 = vadd.f32 %v556, 0.0036580483
    %v558 = vmul.f32 %v553, %v557
    %v559 = vadd.f32 %v558, 0.05243302
    %v560 = vmul.f32 %v553, %v559
    %v561 = vadd.f32 %v560, 0.18741608
    %v562 = vmul.f32 %v553, %v561
    %v563 = vadd.f32 %v562, 1.1283791
    %v564 = vmul.f32 %v341, %v563
    %v565 = vmul.f32 %v553, 3.8918573e-05
    %v566 = vadd.f32 %v565, 0.001143296
    %v567 = vmul.f32 %v553, %v566
    %v568 = vadd.f32 %v567, 0.014752088
    %v569 = vmul.f32 %v553, %v568
    %v570 = vadd.f32 %v569, 0.112945676
    %v571 = vmul.f32 %v553, %v570
    %v572 = vadd.f32 %v571, 0.4994258
    %v573 = vmul.f32 %v553, %v572
    %v574 = vadd.f32 %v573, 1.0
    %v575 = vrcp.pop %v574
    %v576 = vmul.f32 %v574, %v575
    %v577 = vsub.f32 1.0, %v576
    %v578 = vmul.f32 %v575, %v577
    %v579 = vadd.f32 %v575, %v578
    %vm580 = vweird.f32 %v574
    %vm581 = vweird.f32 %v575
    %vm582 = vmor %vm580, %vm581
    %v583 = vsel %vm582, %v575, %v579
    %v584 = vand.u32 2147483647, %v574
    %vm585 = vcmp.eq.f32.partialorder %v584, 8.507059e+37
    %v586 = vand.u32 %v574, 2147483648
    %v587 = vor.u32 1.1754944e-38, %v586
    %v588 = vsel %vm585, %v587, %v583
    %v589 = vmul.f32 %v564, %v588
    %v590 = vmin.f32 %v589, 1.0
    %v591 = vmax.f32 %v590, -1.0
    %v592 = vmul.f32 %v342, %v342
    %v593 = vmin.f32 16.0, %v592
    %v594 = vmul.f32 %v593, 2.1237322e-06
    %v595 = vadd.f32 %v594, 0.00028619796
    %v596 = vmul.f32 %v593, %v595
    %v597 = vadd.f32 %v596, 0.0036580483
    %v598 = vmul.f32 %v593, %v597
    %v599 = vadd.f32 %v598, 0.05243302
    %v600 = vmul.f32 %v593, %v599
    %v601 = vadd.f32 %v600, 0.18741608
    %v602 = vmul.f32 %v593, %v601
    %v603 = vadd.f32 %v602, 1.1283791
    %v604 = vmul.f32 %v342, %v603
    %v605 = vmul.f32 %v593, 3.8918573e-05
    %v606 = vadd.f32 %v605, 0.001143296
    %v607 = vmul.f32 %v593, %v606
    %v608 = vadd.f32 %v607, 0.014752088
    %v609 = vmul.f32 %v593, %v608
    %v610 = vadd.f32 %v609, 0.112945676
    %v611 = vmul.f32 %v593, %v610
    %v612 = vadd.f32 %v611, 0.4994258
    %v613 = vmul.f32 %v593, %v612
    %v614 = vadd.f32 %v613, 1.0
    %v615 = vrcp.pop %v614
    %v616 = vmul.f32 %v614, %v615
    %v617 = vsub.f32 1.0, %v616
    %v618 = vmul.f32 %v615, %v617
    %v619 = vadd.f32 %v615, %v618
    %vm620 = vweird.f32 %v614
    %vm621 = vweird.f32 %v615
    %vm622 = vmor %vm620, %vm621
    %v623 = vsel %vm622, %v615, %v619
    %v624 = vand.u32 2147483647, %v614
    %vm625 = vcmp.eq.f32.partialorder %v624, 8.507059e+37
    %v626 = vand.u32 %v614, 2147483648
    %v627 = vor.u32 1.1754944e-38, %v626
    %v628 = vsel %vm625, %v627, %v623
    %v629 = vmul.f32 %v604, %v628
    %v630 = vmin.f32 %v629, 1.0
    %v631 = vmax.f32 %v630, -1.0
    %v632 = vmul.f32 %v343, %v343
    %v633 = vmin.f32 16.0, %v632
    %v634 = vmul.f32 %v633, 2.1237322e-06
    %v635 = vadd.f32 %v634, 0.00028619796
    %v636 = vmul.f32 %v633, %v635
    %v637 = vadd.f32 %v636, 0.0036580483
    %v638 = vmul.f32 %v633, %v637
    %v639 = vadd.f32 %v638, 0.05243302
    %v640 = vmul.f32 %v633, %v639
    %v641 = vadd.f32 %v640, 0.18741608
    %v642 = vmul.f32 %v633, %v641
    %v643 = vadd.f32 %v642, 1.1283791
    %v644 = vmul.f32 %v343, %v643
    %v645 = vmul.f32 %v633, 3.8918573e-05
    %v646 = vadd.f32 %v645, 0.001143296
    %v647 = vmul.f32 %v633, %v646
    %v648 = vadd.f32 %v647, 0.014752088
    %v649 = vmul.f32 %v633, %v648
    %v650 = vadd.f32 %v649, 0.112945676
    %v651 = vmul.f32 %v633, %v650
    %v652 = vadd.f32 %v651, 0.4994258
    %v653 = vmul.f32 %v633, %v652
    %v654 = vadd.f32 %v653, 1.0
    %v655 = vrcp.pop %v654
    %v656 = vmul.f32 %v654, %v655
    %v657 = vsub.f32 1.0, %v656
    %v658 = vmul.f32 %v655, %v657
    %v659 = vadd.f32 %v655, %v658
    %vm660 = vweird.f32 %v654
    %vm661 = vweird.f32 %v655
    %vm662 = vmor %vm660, %vm661
    %v663 = vsel %vm662, %v655, %v659
    %v664 = vand.u32 2147483647, %v654
    %vm665 = vcmp.eq.f32.partialorder %v664, 8.507059e+37
    %v666 = vand.u32 %v654, 2147483648
    %v667 = vor.u32 1.1754944e-38, %v666
    %v668 = vsel %vm665, %v667, %v663
    %v669 = vmul.f32 %v644, %v668
    %v670 = vmin.f32 %v669, 1.0
    %v671 = vmax.f32 %v670, -1.0
    %v672 = vmul.f32 %v344, %v344
    %v673 = vmin.f32 16.0, %v672
    %v674 = vmul.f32 %v673, 2.1237322e-06
    %v675 = vadd.f32 %v674, 0.00028619796
    %v676 = vmul.f32 %v673, %v675
    %v677 = vadd.f32 %v676, 0.0036580483
    %v678 = vmul.f32 %v673, %v677
    %v679 = vadd.f32 %v678, 0.05243302
    %v680 = vmul.f32 %v673, %v679
    %v681 = vadd.f32 %v680, 0.18741608
    %v682 = vmul.f32 %v673, %v681
    %v683 = vadd.f32 %v682, 1.1283791
    %v684 = vmul.f32 %v344, %v683
    %v685 = vmul.f32 %v673, 3.8918573e-05
    %v686 = vadd.f32 %v685, 0.001143296
    %v687 = vmul.f32 %v673, %v686
    %v688 = vadd.f32 %v687, 0.014752088
    %v689 = vmul.f32 %v673, %v688
    %v690 = vadd.f32 %v689, 0.112945676
    %v691 = vmul.f32 %v673, %v690
    %v692 = vadd.f32 %v691, 0.4994258
    %v693 = vmul.f32 %v673, %v692
    %v694 = vadd.f32 %v693, 1.0
    %v695 = vrcp.pop %v694
    %v696 = vmul.f32 %v694, %v695
    %v697 = vsub.f32 1.0, %v696
    %v698 = vmul.f32 %v695, %v697
    %v699 = vadd.f32 %v695, %v698
    %vm700 = vweird.f32 %v694
    %vm701 = vweird.f32 %v695
    %vm702 = vmor %vm700, %vm701
    %v703 = vsel %vm702, %v695, %v699
    %v704 = vand.u32 2147483647, %v694
    %vm705 = vcmp.eq.f32.partialorder %v704, 8.507059e+37
    %v706 = vand.u32 %v694, 2147483648
    %v707 = vor.u32 1.1754944e-38, %v706
    %v708 = vsel %vm705, %v707, %v703
    %v709 = vmul.f32 %v684, %v708
    %v710 = vmin.f32 %v709, 1.0
    %v711 = vmax.f32 %v710, -1.0
    %v712 = vmul.f32 %v345, %v345
    %v713 = vmin.f32 16.0, %v712
    %v714 = vmul.f32 %v713, 2.1237322e-06
    %v715 = vadd.f32 %v714, 0.00028619796
    %v716 = vmul.f32 %v713, %v715
    %v717 = vadd.f32 %v716, 0.0036580483
    %v718 = vmul.f32 %v713, %v717
    %v719 = vadd.f32 %v718, 0.05243302
    %v720 = vmul.f32 %v713, %v719
    %v721 = vadd.f32 %v720, 0.18741608
    %v722 = vmul.f32 %v713, %v721
    %v723 = vadd.f32 %v722, 1.1283791
    %v724 = vmul.f32 %v345, %v723
    %v725 = vmul.f32 %v713, 3.8918573e-05
    %v726 = vadd.f32 %v725, 0.001143296
    %v727 = vmul.f32 %v713, %v726
    %v728 = vadd.f32 %v727, 0.014752088
    %v729 = vmul.f32 %v713, %v728
    %v730 = vadd.f32 %v729, 0.112945676
    %v731 = vmul.f32 %v713, %v730
    %v732 = vadd.f32 %v731, 0.4994258
    %v733 = vmul.f32 %v713, %v732
    %v734 = vadd.f32 %v733, 1.0
    %v735 = vrcp.pop %v734
    %v736 = vmul.f32 %v734, %v735
    %v737 = vsub.f32 1.0, %v736
    %v738 = vmul.f32 %v735, %v737
    %v739 = vadd.f32 %v735, %v738
    %vm740 = vweird.f32 %v734
    %vm741 = vweird.f32 %v735
    %vm742 = vmor %vm740, %vm741
    %v743 = vsel %vm742, %v735, %v739
    %v744 = vand.u32 2147483647, %v734
    %vm745 = vcmp.eq.f32.partialorder %v744, 8.507059e+37
    %v746 = vand.u32 %v734, 2147483648
    %v747 = vor.u32 1.1754944e-38, %v746
    %v748 = vsel %vm745, %v747, %v743
    %v749 = vmul.f32 %v724, %v748
    %v750 = vmin.f32 %v749, 1.0
    %v751 = vmax.f32 %v750, -1.0
    %v752 = vmul.f32 %v346, %v346
    %v753 = vmin.f32 16.0, %v752
    %v754 = vmul.f32 %v753, 2.1237322e-06
    %v755 = vadd.f32 %v754, 0.00028619796
    %v756 = vmul.f32 %v753, %v755
    %v757 = vadd.f32 %v756, 0.0036580483
    %v758 = vmul.f32 %v753, %v757
    %v759 = vadd.f32 %v758, 0.05243302
    %v760 = vmul.f32 %v753, %v759
    %v761 = vadd.f32 %v760, 0.18741608
    %v762 = vmul.f32 %v753, %v761
    %v763 = vadd.f32 %v762, 1.1283791
    %v764 = vmul.f32 %v346, %v763
    %v765 = vmul.f32 %v753, 3.8918573e-05
    %v766 = vadd.f32 %v765, 0.001143296
    %v767 = vmul.f32 %v753, %v766
    %v768 = vadd.f32 %v767, 0.014752088
    %v769 = vmul.f32 %v753, %v768
    %v770 = vadd.f32 %v769, 0.112945676
    %v771 = vmul.f32 %v753, %v770
    %v772 = vadd.f32 %v771, 0.4994258
    %v773 = vmul.f32 %v753, %v772
    %v774 = vadd.f32 %v773, 1.0
    %v775 = vrcp.pop %v774
    %v776 = vmul.f32 %v774, %v775
    %v777 = vsub.f32 1.0, %v776
    %v778 = vmul.f32 %v775, %v777
    %v779 = vadd.f32 %v775, %v778
    %vm780 = vweird.f32 %v774
    %vm781 = vweird.f32 %v775
    %vm782 = vmor %vm780, %vm781
    %v783 = vsel %vm782, %v775, %v779
    %v784 = vand.u32 2147483647, %v774
    %vm785 = vcmp.eq.f32.partialorder %v784, 8.507059e+37
    %v786 = vand.u32 %v774, 2147483648
    %v787 = vor.u32 1.1754944e-38, %v786
    %v788 = vsel %vm785, %v787, %v783
    %v789 = vmul.f32 %v764, %v788
    %v790 = vmin.f32 %v789, 1.0
    %v791 = vmax.f32 %v790, -1.0
    %v792 = vmul.f32 %v347, %v347
    %v793 = vmin.f32 16.0, %v792
    %v794 = vmul.f32 %v793, 2.1237322e-06
    %v795 = vadd.f32 %v794, 0.00028619796
    %v796 = vmul.f32 %v793, %v795
    %v797 = vadd.f32 %v796, 0.0036580483
    %v798 = vmul.f32 %v793, %v797
    %v799 = vadd.f32 %v798, 0.05243302
    %v800 = vmul.f32 %v793, %v799
    %v801 = vadd.f32 %v800, 0.18741608
    %v802 = vmul.f32 %v793, %v801
    %v803 = vadd.f32 %v802, 1.1283791
    %v804 = vmul.f32 %v347, %v803
    %v805 = vmul.f32 %v793, 3.8918573e-05
    %v806 = vadd.f32 %v805, 0.001143296
    %v807 = vmul.f32 %v793, %v806
    %v808 = vadd.f32 %v807, 0.014752088
    %v809 = vmul.f32 %v793, %v808
    %v810 = vadd.f32 %v809, 0.112945676
    %v811 = vmul.f32 %v793, %v810
    %v812 = vadd.f32 %v811, 0.4994258
    %v813 = vmul.f32 %v793, %v812
    %v814 = vadd.f32 %v813, 1.0
    %v815 = vrcp.pop %v814
    %v816 = vmul.f32 %v814, %v815
    %v817 = vsub.f32 1.0, %v816
    %v818 = vmul.f32 %v815, %v817
    %v819 = vadd.f32 %v815, %v818
    %vm820 = vweird.f32 %v814
    %vm821 = vweird.f32 %v815
    %vm822 = vmor %vm820, %vm821
    %v823 = vsel %vm822, %v815, %v819
    %v824 = vand.u32 2147483647, %v814
    %vm825 = vcmp.eq.f32.partialorder %v824, 8.507059e+37
    %v826 = vand.u32 %v814, 2147483648
    %v827 = vor.u32 1.1754944e-38, %v826
    %v828 = vsel %vm825, %v827, %v823
    %v829 = vmul.f32 %v804, %v828
    %v830 = vmin.f32 %v829, 1.0
    %v831 = vmax.f32 %v830, -1.0
    %v832 = vmul.f32 %v348, %v348
    %v833 = vmin.f32 16.0, %v832
    %v834 = vmul.f32 %v833, 2.1237322e-06
    %v835 = vadd.f32 %v834, 0.00028619796
    %v836 = vmul.f32 %v833, %v835
    %v837 = vadd.f32 %v836, 0.0036580483
    %v838 = vmul.f32 %v833, %v837
    %v839 = vadd.f32 %v838, 0.05243302
    %v840 = vmul.f32 %v833, %v839
    %v841 = vadd.f32 %v840, 0.18741608
    %v842 = vmul.f32 %v833, %v841
    %v843 = vadd.f32 %v842, 1.1283791
    %v844 = vmul.f32 %v348, %v843
    %v845 = vmul.f32 %v833, 3.8918573e-05
    %v846 = vadd.f32 %v845, 0.001143296
    %v847 = vmul.f32 %v833, %v846
    %v848 = vadd.f32 %v847, 0.014752088
    %v849 = vmul.f32 %v833, %v848
    %v850 = vadd.f32 %v849, 0.112945676
    %v851 = vmul.f32 %v833, %v850
    %v852 = vadd.f32 %v851, 0.4994258
    %v853 = vmul.f32 %v833, %v852
    %v854 = vadd.f32 %v853, 1.0
    %v855 = vrcp.pop %v854
    %v856 = vmul.f32 %v854, %v855
    %v857 = vsub.f32 1.0, %v856
    %v858 = vmul.f32 %v855, %v857
    %v859 = vadd.f32 %v855, %v858
    %vm860 = vweird.f32 %v854
    %vm861 = vweird.f32 %v855
    %vm862 = vmor %vm860, %vm861
    %v863 = vsel %vm862, %v855, %v859
    %v864 = vand.u32 2147483647, %v854
    %vm865 = vcmp.eq.f32.partialorder %v864, 8.507059e+37
    %v866 = vand.u32 %v854, 2147483648
    %v867 = vor.u32 1.1754944e-38, %v866
    %v868 = vsel %vm865, %v867, %v863
    %v869 = vmul.f32 %v844, %v868
    %v870 = vmin.f32 %v869, 1.0
    %v871 = vmax.f32 %v870, -1.0
    %v872 = vmul.f32 %v349, %v349
    %v873 = vmin.f32 16.0, %v872
    %v874 = vmul.f32 %v873, 2.1237322e-06
    %v875 = vadd.f32 %v874, 0.00028619796
    %v876 = vmul.f32 %v873, %v875
    %v877 = vadd.f32 %v876, 0.0036580483
    %v878 = vmul.f32 %v873, %v877
    %v879 = vadd.f32 %v878, 0.05243302
    %v880 = vmul.f32 %v873, %v879
    %v881 = vadd.f32 %v880, 0.18741608
    %v882 = vmul.f32 %v873, %v881
    %v883 = vadd.f32 %v882, 1.1283791
    %v884 = vmul.f32 %v349, %v883
    %v885 = vmul.f32 %v873, 3.8918573e-05
    %v886 = vadd.f32 %v885, 0.001143296
    %v887 = vmul.f32 %v873, %v886
    %v888 = vadd.f32 %v887, 0.014752088
    %v889 = vmul.f32 %v873, %v888
    %v890 = vadd.f32 %v889, 0.112945676
    %v891 = vmul.f32 %v873, %v890
    %v892 = vadd.f32 %v891, 0.4994258
    %v893 = vmul.f32 %v873, %v892
    %v894 = vadd.f32 %v893, 1.0
    %v895 = vrcp.pop %v894
    %v896 = vmul.f32 %v894, %v895
    %v897 = vsub.f32 1.0, %v896
    %v898 = vmul.f32 %v895, %v897
    %v899 = vadd.f32 %v895, %v898
    %vm900 = vweird.f32 %v894
    %vm901 = vweird.f32 %v895
    %vm902 = vmor %vm900, %vm901
    %v903 = vsel %vm902, %v895, %v899
    %v904 = vand.u32 2147483647, %v894
    %vm905 = vcmp.eq.f32.partialorder %v904, 8.507059e+37
    %v906 = vand.u32 %v894, 2147483648
    %v907 = vor.u32 1.1754944e-38, %v906
    %v908 = vsel %vm905, %v907, %v903
    %v909 = vmul.f32 %v884, %v908
    %v910 = vmin.f32 %v909, 1.0
    %v911 = vmax.f32 %v910, -1.0
    %v912 = vmul.f32 %v350, %v350
    %v913 = vmin.f32 16.0, %v912
    %v914 = vmul.f32 %v913, 2.1237322e-06
    %v915 = vadd.f32 %v914, 0.00028619796
    %v916 = vmul.f32 %v913, %v915
    %v917 = vadd.f32 %v916, 0.0036580483
    %v918 = vmul.f32 %v913, %v917
    %v919 = vadd.f32 %v918, 0.05243302
    %v920 = vmul.f32 %v913, %v919
    %v921 = vadd.f32 %v920, 0.18741608
    %v922 = vmul.f32 %v913, %v921
    %v923 = vadd.f32 %v922, 1.1283791
    %v924 = vmul.f32 %v350, %v923
    %v925 = vmul.f32 %v913, 3.8918573e-05
    %v926 = vadd.f32 %v925, 0.001143296
    %v927 = vmul.f32 %v913, %v926
    %v928 = vadd.f32 %v927, 0.014752088
    %v929 = vmul.f32 %v913, %v928
    %v930 = vadd.f32 %v929, 0.112945676
    %v931 = vmul.f32 %v913, %v930
    %v932 = vadd.f32 %v931, 0.4994258
    %v933 = vmul.f32 %v913, %v932
    %v934 = vadd.f32 %v933, 1.0
    %v935 = vrcp.pop %v934
    %v936 = vmul.f32 %v934, %v935
    %v937 = vsub.f32 1.0, %v936
    %v938 = vmul.f32 %v935, %v937
    %v939 = vadd.f32 %v935, %v938
    %vm940 = vweird.f32 %v934
    %vm941 = vweird.f32 %v935
    %vm942 = vmor %vm940, %vm941
    %v943 = vsel %vm942, %v935, %v939
    %v944 = vand.u32 2147483647, %v934
    %vm945 = vcmp.eq.f32.partialorder %v944, 8.507059e+37
    %v946 = vand.u32 %v934, 2147483648
    %v947 = vor.u32 1.1754944e-38, %v946
    %v948 = vsel %vm945, %v947, %v943
    %v949 = vmul.f32 %v924, %v948
    %v950 = vmin.f32 %v949, 1.0
    %v951 = vmax.f32 %v950, -1.0
    %v952 = vmul.f32 %v351, %v351
    %v953 = vmin.f32 16.0, %v952
    %v954 = vmul.f32 %v953, 2.1237322e-06
    %v955 = vadd.f32 %v954, 0.00028619796
    %v956 = vmul.f32 %v953, %v955
    %v957 = vadd.f32 %v956, 0.0036580483
    %v958 = vmul.f32 %v953, %v957
    %v959 = vadd.f32 %v958, 0.05243302
    %v960 = vmul.f32 %v953, %v959
    %v961 = vadd.f32 %v960, 0.18741608
    %v962 = vmul.f32 %v953, %v961
    %v963 = vadd.f32 %v962, 1.1283791
    %v964 = vmul.f32 %v351, %v963
    %v965 = vmul.f32 %v953, 3.8918573e-05
    %v966 = vadd.f32 %v965, 0.001143296
    %v967 = vmul.f32 %v953, %v966
    %v968 = vadd.f32 %v967, 0.014752088
    %v969 = vmul.f32 %v953, %v968
    %v970 = vadd.f32 %v969, 0.112945676
    %v971 = vmul.f32 %v953, %v970
    %v972 = vadd.f32 %v971, 0.4994258
    %v973 = vmul.f32 %v953, %v972
    %v974 = vadd.f32 %v973, 1.0
    %v975 = vrcp.pop %v974
    %v976 = vmul.f32 %v974, %v975
    %v977 = vsub.f32 1.0, %v976
    %v978 = vmul.f32 %v975, %v977
    %v979 = vadd.f32 %v975, %v978
    %vm980 = vweird.f32 %v974
    %vm981 = vweird.f32 %v975
    %vm982 = vmor %vm980, %vm981
    %v983 = vsel %vm982, %v975, %v979
    %v984 = vand.u32 2147483647, %v974
    %vm985 = vcmp.eq.f32.partialorder %v984, 8.507059e+37
    %v986 = vand.u32 %v974, 2147483648
    %v987 = vor.u32 1.1754944e-38, %v986
    %v988 = vsel %vm985, %v987, %v983
    %v989 = vmul.f32 %v964, %v988
    %v990 = vmin.f32 %v989, 1.0
    %v991 = vmax.f32 %v990, -1.0
    %v992 = vadd.f32 %v391, 1.0
    %v993 = vadd.f32 %v431, 1.0
    %v994 = vadd.f32 %v471, 1.0
    %v995 = vadd.f32 %v511, 1.0
    %v996 = vadd.f32 %v551, 1.0
    %v997 = vadd.f32 %v591, 1.0
    %v998 = vadd.f32 %v631, 1.0
    %v999 = vadd.f32 %v671, 1.0
    %v1000 = vadd.f32 %v711, 1.0
    %v1001 = vadd.f32 %v751, 1.0
    %v1002 = vadd.f32 %v791, 1.0
    %v1003 = vadd.f32 %v831, 1.0
    %v1004 = vadd.f32 %v871, 1.0
    %v1005 = vadd.f32 %v911, 1.0
    %v1006 = vadd.f32 %v951, 1.0
    %v1007 = vadd.f32 %v991, 1.0
    %v1008 = vmul.f32 %v320, %v992
    %v1009 = vmul.f32 %v321, %v993
    %v1010 = vmul.f32 %v322, %v994
    %v1011 = vmul.f32 %v323, %v995
    %v1012 = vmul.f32 %v324, %v996
    %v1013 = vmul.f32 %v325, %v997
    %v1014 = vmul.f32 %v326, %v998
    %v1015 = vmul.f32 %v327, %v999
    %v1016 = vmul.f32 %v328, %v1000
    %v1017 = vmul.f32 %v329, %v1001
    %v1018 = vmul.f32 %v330, %v1002
    %v1019 = vmul.f32 %v331, %v1003
    %v1020 = vmul.f32 %v332, %v1004
    %v1021 = vmul.f32 %v333, %v1005
    %v1022 = vmul.f32 %v334, %v1006
    %v1023 = vmul.f32 %v335, %v1007
    %v1024 = vld [vmem:[#allocation7] sm:$0xff]
    %v1025 = vld [vmem:[#allocation7 + $0x8] sm:$0xff]
    %v1026 = vld [vmem:[#allocation7 + $0x10] sm:$0xff]
    %v1027 = vld [vmem:[#allocation7 + $0x18] sm:$0xff]
    %v1028 = vld [vmem:[#allocation7 + $0x20] sm:$0xff]
    %v1029 = vld [vmem:[#allocation7 + $0x28] sm:$0xff]
    %v1030 = vld [vmem:[#allocation7 + $0x30] sm:$0xff]
    %v1031 = vld [vmem:[#allocation7 + $0x38] sm:$0xff]
    %v1032 = vld [vmem:[#allocation7 + $0x40] sm:$0xff]
    %v1033 = vld [vmem:[#allocation7 + $0x48] sm:$0xff]
    %v1034 = vld [vmem:[#allocation7 + $0x50] sm:$0xff]
    %v1035 = vld [vmem:[#allocation7 + $0x58] sm:$0xff]
    %v1036 = vld [vmem:[#allocation7 + $0x60] sm:$0xff]
    %v1037 = vld [vmem:[#allocation7 + $0x68] sm:$0xff]
    %v1038 = vld [vmem:[#allocation7 + $0x70] sm:$0xff]
    %v1039 = vld [vmem:[#allocation7 + $0x78] sm:$0xff]
    %v1040 = vld [vmem:[%s4] sm:$0x1]
    %v1042 = vperm.slane %v1040, 0
    %1044 = vmatpush.msra.mxu0 %v1039
    %1045 = vmatpush.msra.mxu0 %v1038
    %1046 = vmatpush.msra.mxu0 %v1037
    %1047 = vmatpush.msra.mxu0 %v1036
    %1048 = vmatpush.msra.mxu0 %v1035
    %1049 = vmatpush.msra.mxu0 %v1034
    %1050 = vmatpush.msra.mxu0 %v1033
    %1051 = vmatpush.msra.mxu0 %v1032
    %1052 = vmatpush.msra.mxu0 %v1031
    %1053 = vmatpush.msra.mxu0 %v1030
    %1054 = vmatpush.msra.mxu0 %v1029
    %1055 = vmatpush.msra.mxu0 %v1028
    %1056 = vmatpush.msra.mxu0 %v1027
    %1057 = vmatpush.msra.mxu0 %v1026
    %1058 = vmatpush.msra.mxu0 %v1025
    %1059 = vmatpush.msra.mxu0 %v1024
    %1060 = vmatmul.f32.gmra.mxu0 %v1008
    %v1061 = vpop.f32.mrf.mxu0
    %v1062 = vadd.f32 %v1042, %v1061
    %1063 = vmatmul.f32.gmra.mxu0 %v1009
    %v1064 = vpop.f32.mrf.mxu0
    %v1065 = vadd.f32 %v1042, %v1064
    %1066 = vmatmul.f32.gmra.mxu0 %v1010
    %v1067 = vpop.f32.mrf.mxu0
    %v1068 = vadd.f32 %v1042, %v1067
    %1069 = vmatmul.f32.gmra.mxu0 %v1011
    %v1070 = vpop.f32.mrf.mxu0
    %v1071 = vadd.f32 %v1042, %v1070
    %1072 = vmatmul.f32.gmra.mxu0 %v1012
    %v1073 = vpop.f32.mrf.mxu0
    %v1074 = vadd.f32 %v1042, %v1073
    %1075 = vmatmul.f32.gmra.mxu0 %v1013
    %v1076 = vpop.f32.mrf.mxu0
    %v1077 = vadd.f32 %v1042, %v1076
    %1078 = vmatmul.f32.gmra.mxu0 %v1014
    %v1079 = vpop.f32.mrf.mxu0
    %v1080 = vadd.f32 %v1042, %v1079
    %1081 = vmatmul.f32.gmra.mxu0 %v1015
    %v1082 = vpop.f32.mrf.mxu0
    %v1083 = vadd.f32 %v1042, %v1082
    %1084 = vmatmul.f32.gmra.mxu0 %v1016
    %v1085 = vpop.f32.mrf.mxu0
    %v1086 = vadd.f32 %v1042, %v1085
    %1087 = vmatmul.f32.gmra.mxu0 %v1017
    %v1088 = vpop.f32.mrf.mxu0
    %v1089 = vadd.f32 %v1042, %v1088
    %1090 = vmatmul.f32.gmra.mxu0 %v1018
    %v1091 = vpop.f32.mrf.mxu0
    %v1092 = vadd.f32 %v1042, %v1091
    %1093 = vmatmul.f32.gmra.mxu0 %v1019
    %v1094 = vpop.f32.mrf.mxu0
    %v1095 = vadd.f32 %v1042, %v1094
    %1096 = vmatmul.f32.gmra.mxu0 %v1020
    %v1097 = vpop.f32.mrf.mxu0
    %v1098 = vadd.f32 %v1042, %v1097
    %1099 = vmatmul.f32.gmra.mxu0 %v1021
    %v1100 = vpop.f32.mrf.mxu0
    %v1101 = vadd.f32 %v1042, %v1100
    %1102 = vmatmul.f32.gmra.mxu0 %v1022
    %v1103 = vpop.f32.mrf.mxu0
    %v1104 = vadd.f32 %v1042, %v1103
    %1105 = vmatmul.f32.gmra.mxu0 %v1023
    %v1106 = vpop.f32.mrf.mxu0
    %v1107 = vadd.f32 %v1042, %v1106
    %1108 = vdwg.mxu0
    %v1109 = vmul.f32 %v1062, 0.5
    %v1110 = vmul.f32 %v1065, 0.5
    %v1111 = vmul.f32 %v1068, 0.5
    %v1112 = vmul.f32 %v1071, 0.5
    %v1113 = vmul.f32 %v1074, 0.5
    %v1114 = vmul.f32 %v1077, 0.5
    %v1115 = vmul.f32 %v1080, 0.5
    %v1116 = vmul.f32 %v1083, 0.5
    %v1117 = vmul.f32 %v1086, 0.5
    %v1118 = vmul.f32 %v1089, 0.5
    %v1119 = vmul.f32 %v1092, 0.5
    %v1120 = vmul.f32 %v1095, 0.5
    %v1121 = vmul.f32 %v1098, 0.5
    %v1122 = vmul.f32 %v1101, 0.5
    %v1123 = vmul.f32 %v1104, 0.5
    %v1124 = vmul.f32 %v1107, 0.5
    %v1125 = vmul.f32 %v1062, 0.70710677
    %v1126 = vmul.f32 %v1065, 0.70710677
    %v1127 = vmul.f32 %v1068, 0.70710677
    %v1128 = vmul.f32 %v1071, 0.70710677
    %v1129 = vmul.f32 %v1074, 0.70710677
    %v1130 = vmul.f32 %v1077, 0.70710677
    %v1131 = vmul.f32 %v1080, 0.70710677
    %v1132 = vmul.f32 %v1083, 0.70710677
    %v1133 = vmul.f32 %v1086, 0.70710677
    %v1134 = vmul.f32 %v1089, 0.70710677
    %v1135 = vmul.f32 %v1092, 0.70710677
    %v1136 = vmul.f32 %v1095, 0.70710677
    %v1137 = vmul.f32 %v1098, 0.70710677
    %v1138 = vmul.f32 %v1101, 0.70710677
    %v1139 = vmul.f32 %v1104, 0.70710677
    %v1140 = vmul.f32 %v1107, 0.70710677
    %v1141 = vmul.f32 %v1125, %v1125
    %v1142 = vmin.f32 16.0, %v1141
    %v1143 = vmul.f32 %v1142, 2.1237322e-06
    %v1144 = vadd.f32 %v1143, 0.00028619796
    %v1145 = vmul.f32 %v1142, %v1144
    %v1146 = vadd.f32 %v1145, 0.0036580483
    %v1147 = vmul.f32 %v1142, %v1146
    %v1148 = vadd.f32 %v1147, 0.05243302
    %v1149 = vmul.f32 %v1142, %v1148
    %v1150 = vadd.f32 %v1149, 0.18741608
    %v1151 = vmul.f32 %v1142, %v1150
    %v1152 = vadd.f32 %v1151, 1.1283791
    %v1153 = vmul.f32 %v1125, %v1152
    %v1154 = vmul.f32 %v1142, 3.8918573e-05
    %v1155 = vadd.f32 %v1154, 0.001143296
    %v1156 = vmul.f32 %v1142, %v1155
    %v1157 = vadd.f32 %v1156, 0.014752088
    %v1158 = vmul.f32 %v1142, %v1157
    %v1159 = vadd.f32 %v1158, 0.112945676
    %v1160 = vmul.f32 %v1142, %v1159
    %v1161 = vadd.f32 %v1160, 0.4994258
    %v1162 = vmul.f32 %v1142, %v1161
    %v1163 = vadd.f32 %v1162, 1.0
    %v1164 = vrcp.pop %v1163
    %v1165 = vmul.f32 %v1163, %v1164
    %v1166 = vsub.f32 1.0, %v1165
    %v1167 = vmul.f32 %v1164, %v1166
    %v1168 = vadd.f32 %v1164, %v1167
    %vm1169 = vweird.f32 %v1163
    %vm1170 = vweird.f32 %v1164
    %vm1171 = vmor %vm1169, %vm1170
    %v1172 = vsel %vm1171, %v1164, %v1168
    %v1173 = vand.u32 2147483647, %v1163
    %vm1174 = vcmp.eq.f32.partialorder %v1173, 8.507059e+37
    %v1175 = vand.u32 %v1163, 2147483648
    %v1176 = vor.u32 1.1754944e-38, %v1175
    %v1177 = vsel %vm1174, %v1176, %v1172
    %v1178 = vmul.f32 %v1153, %v1177
    %v1179 = vmin.f32 %v1178, 1.0
    %v1180 = vmax.f32 %v1179, -1.0
    %v1181 = vmul.f32 %v1126, %v1126
    %v1182 = vmin.f32 16.0, %v1181
    %v1183 = vmul.f32 %v1182, 2.1237322e-06
    %v1184 = vadd.f32 %v1183, 0.00028619796
    %v1185 = vmul.f32 %v1182, %v1184
    %v1186 = vadd.f32 %v1185, 0.0036580483
    %v1187 = vmul.f32 %v1182, %v1186
    %v1188 = vadd.f32 %v1187, 0.05243302
    %v1189 = vmul.f32 %v1182, %v1188
    %v1190 = vadd.f32 %v1189, 0.18741608
    %v1191 = vmul.f32 %v1182, %v1190
    %v1192 = vadd.f32 %v1191, 1.1283791
    %v1193 = vmul.f32 %v1126, %v1192
    %v1194 = vmul.f32 %v1182, 3.8918573e-05
    %v1195 = vadd.f32 %v1194, 0.001143296
    %v1196 = vmul.f32 %v1182, %v1195
    %v1197 = vadd.f32 %v1196, 0.014752088
    %v1198 = vmul.f32 %v1182, %v1197
    %v1199 = vadd.f32 %v1198, 0.112945676
    %v1200 = vmul.f32 %v1182, %v1199
    %v1201 = vadd.f32 %v1200, 0.4994258
    %v1202 = vmul.f32 %v1182, %v1201
    %v1203 = vadd.f32 %v1202, 1.0
    %v1204 = vrcp.pop %v1203
    %v1205 = vmul.f32 %v1203, %v1204
    %v1206 = vsub.f32 1.0, %v1205
    %v1207 = vmul.f32 %v1204, %v1206
    %v1208 = vadd.f32 %v1204, %v1207
    %vm1209 = vweird.f32 %v1203
    %vm1210 = vweird.f32 %v1204
    %vm1211 = vmor %vm1209, %vm1210
    %v1212 = vsel %vm1211, %v1204, %v1208
    %v1213 = vand.u32 2147483647, %v1203
    %vm1214 = vcmp.eq.f32.partialorder %v1213, 8.507059e+37
    %v1215 = vand.u32 %v1203, 2147483648
    %v1216 = vor.u32 1.1754944e-38, %v1215
    %v1217 = vsel %vm1214, %v1216, %v1212
    %v1218 = vmul.f32 %v1193, %v1217
    %v1219 = vmin.f32 %v1218, 1.0
    %v1220 = vmax.f32 %v1219, -1.0
    %v1221 = vmul.f32 %v1127, %v1127
    %v1222 = vmin.f32 16.0, %v1221
    %v1223 = vmul.f32 %v1222, 2.1237322e-06
    %v1224 = vadd.f32 %v1223, 0.00028619796
    %v1225 = vmul.f32 %v1222, %v1224
    %v1226 = vadd.f32 %v1225, 0.0036580483
    %v1227 = vmul.f32 %v1222, %v1226
    %v1228 = vadd.f32 %v1227, 0.05243302
    %v1229 = vmul.f32 %v1222, %v1228
    %v1230 = vadd.f32 %v1229, 0.18741608
    %v1231 = vmul.f32 %v1222, %v1230
    %v1232 = vadd.f32 %v1231, 1.1283791
    %v1233 = vmul.f32 %v1127, %v1232
    %v1234 = vmul.f32 %v1222, 3.8918573e-05
    %v1235 = vadd.f32 %v1234, 0.001143296
    %v1236 = vmul.f32 %v1222, %v1235
    %v1237 = vadd.f32 %v1236, 0.014752088
    %v1238 = vmul.f32 %v1222, %v1237
    %v1239 = vadd.f32 %v1238, 0.112945676
    %v1240 = vmul.f32 %v1222, %v1239
    %v1241 = vadd.f32 %v1240, 0.4994258
    %v1242 = vmul.f32 %v1222, %v1241
    %v1243 = vadd.f32 %v1242, 1.0
    %v1244 = vrcp.pop %v1243
    %v1245 = vmul.f32 %v1243, %v1244
    %v1246 = vsub.f32 1.0, %v1245
    %v1247 = vmul.f32 %v1244, %v1246
    %v1248 = vadd.f32 %v1244, %v1247
    %vm1249 = vweird.f32 %v1243
    %vm1250 = vweird.f32 %v1244
    %vm1251 = vmor %vm1249, %vm1250
    %v1252 = vsel %vm1251, %v1244, %v1248
    %v1253 = vand.u32 2147483647, %v1243
    %vm1254 = vcmp.eq.f32.partialorder %v1253, 8.507059e+37
    %v1255 = vand.u32 %v1243, 2147483648
    %v1256 = vor.u32 1.1754944e-38, %v1255
    %v1257 = vsel %vm1254, %v1256, %v1252
    %v1258 = vmul.f32 %v1233, %v1257
    %v1259 = vmin.f32 %v1258, 1.0
    %v1260 = vmax.f32 %v1259, -1.0
    %v1261 = vmul.f32 %v1128, %v1128
    %v1262 = vmin.f32 16.0, %v1261
    %v1263 = vmul.f32 %v1262, 2.1237322e-06
    %v1264 = vadd.f32 %v1263, 0.00028619796
    %v1265 = vmul.f32 %v1262, %v1264
    %v1266 = vadd.f32 %v1265, 0.0036580483
    %v1267 = vmul.f32 %v1262, %v1266
    %v1268 = vadd.f32 %v1267, 0.05243302
    %v1269 = vmul.f32 %v1262, %v1268
    %v1270 = vadd.f32 %v1269, 0.18741608
    %v1271 = vmul.f32 %v1262, %v1270
    %v1272 = vadd.f32 %v1271, 1.1283791
    %v1273 = vmul.f32 %v1128, %v1272
    %v1274 = vmul.f32 %v1262, 3.8918573e-05
    %v1275 = vadd.f32 %v1274, 0.001143296
    %v1276 = vmul.f32 %v1262, %v1275
    %v1277 = vadd.f32 %v1276, 0.014752088
    %v1278 = vmul.f32 %v1262, %v1277
    %v1279 = vadd.f32 %v1278, 0.112945676
    %v1280 = vmul.f32 %v1262, %v1279
    %v1281 = vadd.f32 %v1280, 0.4994258
    %v1282 = vmul.f32 %v1262, %v1281
    %v1283 = vadd.f32 %v1282, 1.0
    %v1284 = vrcp.pop %v1283
    %v1285 = vmul.f32 %v1283, %v1284
    %v1286 = vsub.f32 1.0, %v1285
    %v1287 = vmul.f32 %v1284, %v1286
    %v1288 = vadd.f32 %v1284, %v1287
    %vm1289 = vweird.f32 %v1283
    %vm1290 = vweird.f32 %v1284
    %vm1291 = vmor %vm1289, %vm1290
    %v1292 = vsel %vm1291, %v1284, %v1288
    %v1293 = vand.u32 2147483647, %v1283
    %vm1294 = vcmp.eq.f32.partialorder %v1293, 8.507059e+37
    %v1295 = vand.u32 %v1283, 2147483648
    %v1296 = vor.u32 1.1754944e-38, %v1295
    %v1297 = vsel %vm1294, %v1296, %v1292
    %v1298 = vmul.f32 %v1273, %v1297
    %v1299 = vmin.f32 %v1298, 1.0
    %v1300 = vmax.f32 %v1299, -1.0
    %v1301 = vmul.f32 %v1129, %v1129
    %v1302 = vmin.f32 16.0, %v1301
    %v1303 = vmul.f32 %v1302, 2.1237322e-06
    %v1304 = vadd.f32 %v1303, 0.00028619796
    %v1305 = vmul.f32 %v1302, %v1304
    %v1306 = vadd.f32 %v1305, 0.0036580483
    %v1307 = vmul.f32 %v1302, %v1306
    %v1308 = vadd.f32 %v1307, 0.05243302
    %v1309 = vmul.f32 %v1302, %v1308
    %v1310 = vadd.f32 %v1309, 0.18741608
    %v1311 = vmul.f32 %v1302, %v1310
    %v1312 = vadd.f32 %v1311, 1.1283791
    %v1313 = vmul.f32 %v1129, %v1312
    %v1314 = vmul.f32 %v1302, 3.8918573e-05
    %v1315 = vadd.f32 %v1314, 0.001143296
    %v1316 = vmul.f32 %v1302, %v1315
    %v1317 = vadd.f32 %v1316, 0.014752088
    %v1318 = vmul.f32 %v1302, %v1317
    %v1319 = vadd.f32 %v1318, 0.112945676
    %v1320 = vmul.f32 %v1302, %v1319
    %v1321 = vadd.f32 %v1320, 0.4994258
    %v1322 = vmul.f32 %v1302, %v1321
    %v1323 = vadd.f32 %v1322, 1.0
    %v1324 = vrcp.pop %v1323
    %v1325 = vmul.f32 %v1323, %v1324
    %v1326 = vsub.f32 1.0, %v1325
    %v1327 = vmul.f32 %v1324, %v1326
    %v1328 = vadd.f32 %v1324, %v1327
    %vm1329 = vweird.f32 %v1323
    %vm1330 = vweird.f32 %v1324
    %vm1331 = vmor %vm1329, %vm1330
    %v1332 = vsel %vm1331, %v1324, %v1328
    %v1333 = vand.u32 2147483647, %v1323
    %vm1334 = vcmp.eq.f32.partialorder %v1333, 8.507059e+37
    %v1335 = vand.u32 %v1323, 2147483648
    %v1336 = vor.u32 1.1754944e-38, %v1335
    %v1337 = vsel %vm1334, %v1336, %v1332
    %v1338 = vmul.f32 %v1313, %v1337
    %v1339 = vmin.f32 %v1338, 1.0
    %v1340 = vmax.f32 %v1339, -1.0
    %v1341 = vmul.f32 %v1130, %v1130
    %v1342 = vmin.f32 16.0, %v1341
    %v1343 = vmul.f32 %v1342, 2.1237322e-06
    %v1344 = vadd.f32 %v1343, 0.00028619796
    %v1345 = vmul.f32 %v1342, %v1344
    %v1346 = vadd.f32 %v1345, 0.0036580483
    %v1347 = vmul.f32 %v1342, %v1346
    %v1348 = vadd.f32 %v1347, 0.05243302
    %v1349 = vmul.f32 %v1342, %v1348
    %v1350 = vadd.f32 %v1349, 0.18741608
    %v1351 = vmul.f32 %v1342, %v1350
    %v1352 = vadd.f32 %v1351, 1.1283791
    %v1353 = vmul.f32 %v1130, %v1352
    %v1354 = vmul.f32 %v1342, 3.8918573e-05
    %v1355 = vadd.f32 %v1354, 0.001143296
    %v1356 = vmul.f32 %v1342, %v1355
    %v1357 = vadd.f32 %v1356, 0.014752088
    %v1358 = vmul.f32 %v1342, %v1357
    %v1359 = vadd.f32 %v1358, 0.112945676
    %v1360 = vmul.f32 %v1342, %v1359
    %v1361 = vadd.f32 %v1360, 0.4994258
    %v1362 = vmul.f32 %v1342, %v1361
    %v1363 = vadd.f32 %v1362, 1.0
    %v1364 = vrcp.pop %v1363
    %v1365 = vmul.f32 %v1363, %v1364
    %v1366 = vsub.f32 1.0, %v1365
    %v1367 = vmul.f32 %v1364, %v1366
    %v1368 = vadd.f32 %v1364, %v1367
    %vm1369 = vweird.f32 %v1363
    %vm1370 = vweird.f32 %v1364
    %vm1371 = vmor %vm1369, %vm1370
    %v1372 = vsel %vm1371, %v1364, %v1368
    %v1373 = vand.u32 2147483647, %v1363
    %vm1374 = vcmp.eq.f32.partialorder %v1373, 8.507059e+37
    %v1375 = vand.u32 %v1363, 2147483648
    %v1376 = vor.u32 1.1754944e-38, %v1375
    %v1377 = vsel %vm1374, %v1376, %v1372
    %v1378 = vmul.f32 %v1353, %v1377
    %v1379 = vmin.f32 %v1378, 1.0
    %v1380 = vmax.f32 %v1379, -1.0
    %v1381 = vmul.f32 %v1131, %v1131
    %v1382 = vmin.f32 16.0, %v1381
    %v1383 = vmul.f32 %v1382, 2.1237322e-06
    %v1384 = vadd.f32 %v1383, 0.00028619796
    %v1385 = vmul.f32 %v1382, %v1384
    %v1386 = vadd.f32 %v1385, 0.0036580483
    %v1387 = vmul.f32 %v1382, %v1386
    %v1388 = vadd.f32 %v1387, 0.05243302
    %v1389 = vmul.f32 %v1382, %v1388
    %v1390 = vadd.f32 %v1389, 0.18741608
    %v1391 = vmul.f32 %v1382, %v1390
    %v1392 = vadd.f32 %v1391, 1.1283791
    %v1393 = vmul.f32 %v1131, %v1392
    %v1394 = vmul.f32 %v1382, 3.8918573e-05
    %v1395 = vadd.f32 %v1394, 0.001143296
    %v1396 = vmul.f32 %v1382, %v1395
    %v1397 = vadd.f32 %v1396, 0.014752088
    %v1398 = vmul.f32 %v1382, %v1397
    %v1399 = vadd.f32 %v1398, 0.112945676
    %v1400 = vmul.f32 %v1382, %v1399
    %v1401 = vadd.f32 %v1400, 0.4994258
    %v1402 = vmul.f32 %v1382, %v1401
    %v1403 = vadd.f32 %v1402, 1.0
    %v1404 = vrcp.pop %v1403
    %v1405 = vmul.f32 %v1403, %v1404
    %v1406 = vsub.f32 1.0, %v1405
    %v1407 = vmul.f32 %v1404, %v1406
    %v1408 = vadd.f32 %v1404, %v1407
    %vm1409 = vweird.f32 %v1403
    %vm1410 = vweird.f32 %v1404
    %vm1411 = vmor %vm1409, %vm1410
    %v1412 = vsel %vm1411, %v1404, %v1408
    %v1413 = vand.u32 2147483647, %v1403
    %vm1414 = vcmp.eq.f32.partialorder %v1413, 8.507059e+37
    %v1415 = vand.u32 %v1403, 2147483648
    %v1416 = vor.u32 1.1754944e-38, %v1415
    %v1417 = vsel %vm1414, %v1416, %v1412
    %v1418 = vmul.f32 %v1393, %v1417
    %v1419 = vmin.f32 %v1418, 1.0
    %v1420 = vmax.f32 %v1419, -1.0
    %v1421 = vmul.f32 %v1132, %v1132
    %v1422 = vmin.f32 16.0, %v1421
    %v1423 = vmul.f32 %v1422, 2.1237322e-06
    %v1424 = vadd.f32 %v1423, 0.00028619796
    %v1425 = vmul.f32 %v1422, %v1424
    %v1426 = vadd.f32 %v1425, 0.0036580483
    %v1427 = vmul.f32 %v1422, %v1426
    %v1428 = vadd.f32 %v1427, 0.05243302
    %v1429 = vmul.f32 %v1422, %v1428
    %v1430 = vadd.f32 %v1429, 0.18741608
    %v1431 = vmul.f32 %v1422, %v1430
    %v1432 = vadd.f32 %v1431, 1.1283791
    %v1433 = vmul.f32 %v1132, %v1432
    %v1434 = vmul.f32 %v1422, 3.8918573e-05
    %v1435 = vadd.f32 %v1434, 0.001143296
    %v1436 = vmul.f32 %v1422, %v1435
    %v1437 = vadd.f32 %v1436, 0.014752088
    %v1438 = vmul.f32 %v1422, %v1437
    %v1439 = vadd.f32 %v1438, 0.112945676
    %v1440 = vmul.f32 %v1422, %v1439
    %v1441 = vadd.f32 %v1440, 0.4994258
    %v1442 = vmul.f32 %v1422, %v1441
    %v1443 = vadd.f32 %v1442, 1.0
    %v1444 = vrcp.pop %v1443
    %v1445 = vmul.f32 %v1443, %v1444
    %v1446 = vsub.f32 1.0, %v1445
    %v1447 = vmul.f32 %v1444, %v1446
    %v1448 = vadd.f32 %v1444, %v1447
    %vm1449 = vweird.f32 %v1443
    %vm1450 = vweird.f32 %v1444
    %vm1451 = vmor %vm1449, %vm1450
    %v1452 = vsel %vm1451, %v1444, %v1448
    %v1453 = vand.u32 2147483647, %v1443
    %vm1454 = vcmp.eq.f32.partialorder %v1453, 8.507059e+37
    %v1455 = vand.u32 %v1443, 2147483648
    %v1456 = vor.u32 1.1754944e-38, %v1455
    %v1457 = vsel %vm1454, %v1456, %v1452
    %v1458 = vmul.f32 %v1433, %v1457
    %v1459 = vmin.f32 %v1458, 1.0
    %v1460 = vmax.f32 %v1459, -1.0
    %v1461 = vmul.f32 %v1133, %v1133
    %v1462 = vmin.f32 16.0, %v1461
    %v1463 = vmul.f32 %v1462, 2.1237322e-06
    %v1464 = vadd.f32 %v1463, 0.00028619796
    %v1465 = vmul.f32 %v1462, %v1464
    %v1466 = vadd.f32 %v1465, 0.0036580483
    %v1467 = vmul.f32 %v1462, %v1466
    %v1468 = vadd.f32 %v1467, 0.05243302
    %v1469 = vmul.f32 %v1462, %v1468
    %v1470 = vadd.f32 %v1469, 0.18741608
    %v1471 = vmul.f32 %v1462, %v1470
    %v1472 = vadd.f32 %v1471, 1.1283791
    %v1473 = vmul.f32 %v1133, %v1472
    %v1474 = vmul.f32 %v1462, 3.8918573e-05
    %v1475 = vadd.f32 %v1474, 0.001143296
    %v1476 = vmul.f32 %v1462, %v1475
    %v1477 = vadd.f32 %v1476, 0.014752088
    %v1478 = vmul.f32 %v1462, %v1477
    %v1479 = vadd.f32 %v1478, 0.112945676
    %v1480 = vmul.f32 %v1462, %v1479
    %v1481 = vadd.f32 %v1480, 0.4994258
    %v1482 = vmul.f32 %v1462, %v1481
    %v1483 = vadd.f32 %v1482, 1.0
    %v1484 = vrcp.pop %v1483
    %v1485 = vmul.f32 %v1483, %v1484
    %v1486 = vsub.f32 1.0, %v1485
    %v1487 = vmul.f32 %v1484, %v1486
    %v1488 = vadd.f32 %v1484, %v1487
    %vm1489 = vweird.f32 %v1483
    %vm1490 = vweird.f32 %v1484
    %vm1491 = vmor %vm1489, %vm1490
    %v1492 = vsel %vm1491, %v1484, %v1488
    %v1493 = vand.u32 2147483647, %v1483
    %vm1494 = vcmp.eq.f32.partialorder %v1493, 8.507059e+37
    %v1495 = vand.u32 %v1483, 2147483648
    %v1496 = vor.u32 1.1754944e-38, %v1495
    %v1497 = vsel %vm1494, %v1496, %v1492
    %v1498 = vmul.f32 %v1473, %v1497
    %v1499 = vmin.f32 %v1498, 1.0
    %v1500 = vmax.f32 %v1499, -1.0
    %v1501 = vmul.f32 %v1134, %v1134
    %v1502 = vmin.f32 16.0, %v1501
    %v1503 = vmul.f32 %v1502, 2.1237322e-06
    %v1504 = vadd.f32 %v1503, 0.00028619796
    %v1505 = vmul.f32 %v1502, %v1504
    %v1506 = vadd.f32 %v1505, 0.0036580483
    %v1507 = vmul.f32 %v1502, %v1506
    %v1508 = vadd.f32 %v1507, 0.05243302
    %v1509 = vmul.f32 %v1502, %v1508
    %v1510 = vadd.f32 %v1509, 0.18741608
    %v1511 = vmul.f32 %v1502, %v1510
    %v1512 = vadd.f32 %v1511, 1.1283791
    %v1513 = vmul.f32 %v1134, %v1512
    %v1514 = vmul.f32 %v1502, 3.8918573e-05
    %v1515 = vadd.f32 %v1514, 0.001143296
    %v1516 = vmul.f32 %v1502, %v1515
    %v1517 = vadd.f32 %v1516, 0.014752088
    %v1518 = vmul.f32 %v1502, %v1517
    %v1519 = vadd.f32 %v1518, 0.112945676
    %v1520 = vmul.f32 %v1502, %v1519
    %v1521 = vadd.f32 %v1520, 0.4994258
    %v1522 = vmul.f32 %v1502, %v1521
    %v1523 = vadd.f32 %v1522, 1.0
    %v1524 = vrcp.pop %v1523
    %v1525 = vmul.f32 %v1523, %v1524
    %v1526 = vsub.f32 1.0, %v1525
    %v1527 = vmul.f32 %v1524, %v1526
    %v1528 = vadd.f32 %v1524, %v1527
    %vm1529 = vweird.f32 %v1523
    %vm1530 = vweird.f32 %v1524
    %vm1531 = vmor %vm1529, %vm1530
    %v1532 = vsel %vm1531, %v1524, %v1528
    %v1533 = vand.u32 2147483647, %v1523
    %vm1534 = vcmp.eq.f32.partialorder %v1533, 8.507059e+37
    %v1535 = vand.u32 %v1523, 2147483648
    %v1536 = vor.u32 1.1754944e-38, %v1535
    %v1537 = vsel %vm1534, %v1536, %v1532
    %v1538 = vmul.f32 %v1513, %v1537
    %v1539 = vmin.f32 %v1538, 1.0
    %v1540 = vmax.f32 %v1539, -1.0
    %v1541 = vmul.f32 %v1135, %v1135
    %v1542 = vmin.f32 16.0, %v1541
    %v1543 = vmul.f32 %v1542, 2.1237322e-06
    %v1544 = vadd.f32 %v1543, 0.00028619796
    %v1545 = vmul.f32 %v1542, %v1544
    %v1546 = vadd.f32 %v1545, 0.0036580483
    %v1547 = vmul.f32 %v1542, %v1546
    %v1548 = vadd.f32 %v1547, 0.05243302
    %v1549 = vmul.f32 %v1542, %v1548
    %v1550 = vadd.f32 %v1549, 0.18741608
    %v1551 = vmul.f32 %v1542, %v1550
    %v1552 = vadd.f32 %v1551, 1.1283791
    %v1553 = vmul.f32 %v1135, %v1552
    %v1554 = vmul.f32 %v1542, 3.8918573e-05
    %v1555 = vadd.f32 %v1554, 0.001143296
    %v1556 = vmul.f32 %v1542, %v1555
    %v1557 = vadd.f32 %v1556, 0.014752088
    %v1558 = vmul.f32 %v1542, %v1557
    %v1559 = vadd.f32 %v1558, 0.112945676
    %v1560 = vmul.f32 %v1542, %v1559
    %v1561 = vadd.f32 %v1560, 0.4994258
    %v1562 = vmul.f32 %v1542, %v1561
    %v1563 = vadd.f32 %v1562, 1.0
    %v1564 = vrcp.pop %v1563
    %v1565 = vmul.f32 %v1563, %v1564
    %v1566 = vsub.f32 1.0, %v1565
    %v1567 = vmul.f32 %v1564, %v1566
    %v1568 = vadd.f32 %v1564, %v1567
    %vm1569 = vweird.f32 %v1563
    %vm1570 = vweird.f32 %v1564
    %vm1571 = vmor %vm1569, %vm1570
    %v1572 = vsel %vm1571, %v1564, %v1568
    %v1573 = vand.u32 2147483647, %v1563
    %vm1574 = vcmp.eq.f32.partialorder %v1573, 8.507059e+37
    %v1575 = vand.u32 %v1563, 2147483648
    %v1576 = vor.u32 1.1754944e-38, %v1575
    %v1577 = vsel %vm1574, %v1576, %v1572
    %v1578 = vmul.f32 %v1553, %v1577
    %v1579 = vmin.f32 %v1578, 1.0
    %v1580 = vmax.f32 %v1579, -1.0
    %v1581 = vmul.f32 %v1136, %v1136
    %v1582 = vmin.f32 16.0, %v1581
    %v1583 = vmul.f32 %v1582, 2.1237322e-06
    %v1584 = vadd.f32 %v1583, 0.00028619796
    %v1585 = vmul.f32 %v1582, %v1584
    %v1586 = vadd.f32 %v1585, 0.0036580483
    %v1587 = vmul.f32 %v1582, %v1586
    %v1588 = vadd.f32 %v1587, 0.05243302
    %v1589 = vmul.f32 %v1582, %v1588
    %v1590 = vadd.f32 %v1589, 0.18741608
    %v1591 = vmul.f32 %v1582, %v1590
    %v1592 = vadd.f32 %v1591, 1.1283791
    %v1593 = vmul.f32 %v1136, %v1592
    %v1594 = vmul.f32 %v1582, 3.8918573e-05
    %v1595 = vadd.f32 %v1594, 0.001143296
    %v1596 = vmul.f32 %v1582, %v1595
    %v1597 = vadd.f32 %v1596, 0.014752088
    %v1598 = vmul.f32 %v1582, %v1597
    %v1599 = vadd.f32 %v1598, 0.112945676
    %v1600 = vmul.f32 %v1582, %v1599
    %v1601 = vadd.f32 %v1600, 0.4994258
    %v1602 = vmul.f32 %v1582, %v1601
    %v1603 = vadd.f32 %v1602, 1.0
    %v1604 = vrcp.pop %v1603
    %v1605 = vmul.f32 %v1603, %v1604
    %v1606 = vsub.f32 1.0, %v1605
    %v1607 = vmul.f32 %v1604, %v1606
    %v1608 = vadd.f32 %v1604, %v1607
    %vm1609 = vweird.f32 %v1603
    %vm1610 = vweird.f32 %v1604
    %vm1611 = vmor %vm1609, %vm1610
    %v1612 = vsel %vm1611, %v1604, %v1608
    %v1613 = vand.u32 2147483647, %v1603
    %vm1614 = vcmp.eq.f32.partialorder %v1613, 8.507059e+37
    %v1615 = vand.u32 %v1603, 2147483648
    %v1616 = vor.u32 1.1754944e-38, %v1615
    %v1617 = vsel %vm1614, %v1616, %v1612
    %v1618 = vmul.f32 %v1593, %v1617
    %v1619 = vmin.f32 %v1618, 1.0
    %v1620 = vmax.f32 %v1619, -1.0
    %v1621 = vmul.f32 %v1137, %v1137
    %v1622 = vmin.f32 16.0, %v1621
    %v1623 = vmul.f32 %v1622, 2.1237322e-06
    %v1624 = vadd.f32 %v1623, 0.00028619796
    %v1625 = vmul.f32 %v1622, %v1624
    %v1626 = vadd.f32 %v1625, 0.0036580483
    %v1627 = vmul.f32 %v1622, %v1626
    %v1628 = vadd.f32 %v1627, 0.05243302
    %v1629 = vmul.f32 %v1622, %v1628
    %v1630 = vadd.f32 %v1629, 0.18741608
    %v1631 = vmul.f32 %v1622, %v1630
    %v1632 = vadd.f32 %v1631, 1.1283791
    %v1633 = vmul.f32 %v1137, %v1632
    %v1634 = vmul.f32 %v1622, 3.8918573e-05
    %v1635 = vadd.f32 %v1634, 0.001143296
    %v1636 = vmul.f32 %v1622, %v1635
    %v1637 = vadd.f32 %v1636, 0.014752088
    %v1638 = vmul.f32 %v1622, %v1637
    %v1639 = vadd.f32 %v1638, 0.112945676
    %v1640 = vmul.f32 %v1622, %v1639
    %v1641 = vadd.f32 %v1640, 0.4994258
    %v1642 = vmul.f32 %v1622, %v1641
    %v1643 = vadd.f32 %v1642, 1.0
    %v1644 = vrcp.pop %v1643
    %v1645 = vmul.f32 %v1643, %v1644
    %v1646 = vsub.f32 1.0, %v1645
    %v1647 = vmul.f32 %v1644, %v1646
    %v1648 = vadd.f32 %v1644, %v1647
    %vm1649 = vweird.f32 %v1643
    %vm1650 = vweird.f32 %v1644
    %vm1651 = vmor %vm1649, %vm1650
    %v1652 = vsel %vm1651, %v1644, %v1648
    %v1653 = vand.u32 2147483647, %v1643
    %vm1654 = vcmp.eq.f32.partialorder %v1653, 8.507059e+37
    %v1655 = vand.u32 %v1643, 2147483648
    %v1656 = vor.u32 1.1754944e-38, %v1655
    %v1657 = vsel %vm1654, %v1656, %v1652
    %v1658 = vmul.f32 %v1633, %v1657
    %v1659 = vmin.f32 %v1658, 1.0
    %v1660 = vmax.f32 %v1659, -1.0
    %v1661 = vmul.f32 %v1138, %v1138
    %v1662 = vmin.f32 16.0, %v1661
    %v1663 = vmul.f32 %v1662, 2.1237322e-06
    %v1664 = vadd.f32 %v1663, 0.00028619796
    %v1665 = vmul.f32 %v1662, %v1664
    %v1666 = vadd.f32 %v1665, 0.0036580483
    %v1667 = vmul.f32 %v1662, %v1666
    %v1668 = vadd.f32 %v1667, 0.05243302
    %v1669 = vmul.f32 %v1662, %v1668
    %v1670 = vadd.f32 %v1669, 0.18741608
    %v1671 = vmul.f32 %v1662, %v1670
    %v1672 = vadd.f32 %v1671, 1.1283791
    %v1673 = vmul.f32 %v1138, %v1672
    %v1674 = vmul.f32 %v1662, 3.8918573e-05
    %v1675 = vadd.f32 %v1674, 0.001143296
    %v1676 = vmul.f32 %v1662, %v1675
    %v1677 = vadd.f32 %v1676, 0.014752088
    %v1678 = vmul.f32 %v1662, %v1677
    %v1679 = vadd.f32 %v1678, 0.112945676
    %v1680 = vmul.f32 %v1662, %v1679
    %v1681 = vadd.f32 %v1680, 0.4994258
    %v1682 = vmul.f32 %v1662, %v1681
    %v1683 = vadd.f32 %v1682, 1.0
    %v1684 = vrcp.pop %v1683
    %v1685 = vmul.f32 %v1683, %v1684
    %v1686 = vsub.f32 1.0, %v1685
    %v1687 = vmul.f32 %v1684, %v1686
    %v1688 = vadd.f32 %v1684, %v1687
    %vm1689 = vweird.f32 %v1683
    %vm1690 = vweird.f32 %v1684
    %vm1691 = vmor %vm1689, %vm1690
    %v1692 = vsel %vm1691, %v1684, %v1688
    %v1693 = vand.u32 2147483647, %v1683
    %vm1694 = vcmp.eq.f32.partialorder %v1693, 8.507059e+37
    %v1695 = vand.u32 %v1683, 2147483648
    %v1696 = vor.u32 1.1754944e-38, %v1695
    %v1697 = vsel %vm1694, %v1696, %v1692
    %v1698 = vmul.f32 %v1673, %v1697
    %v1699 = vmin.f32 %v1698, 1.0
    %v1700 = vmax.f32 %v1699, -1.0
    %v1701 = vmul.f32 %v1139, %v1139
    %v1702 = vmin.f32 16.0, %v1701
    %v1703 = vmul.f32 %v1702, 2.1237322e-06
    %v1704 = vadd.f32 %v1703, 0.00028619796
    %v1705 = vmul.f32 %v1702, %v1704
    %v1706 = vadd.f32 %v1705, 0.0036580483
    %v1707 = vmul.f32 %v1702, %v1706
    %v1708 = vadd.f32 %v1707, 0.05243302
    %v1709 = vmul.f32 %v1702, %v1708
    %v1710 = vadd.f32 %v1709, 0.18741608
    %v1711 = vmul.f32 %v1702, %v1710
    %v1712 = vadd.f32 %v1711, 1.1283791
    %v1713 = vmul.f32 %v1139, %v1712
    %v1714 = vmul.f32 %v1702, 3.8918573e-05
    %v1715 = vadd.f32 %v1714, 0.001143296
    %v1716 = vmul.f32 %v1702, %v1715
    %v1717 = vadd.f32 %v1716, 0.014752088
    %v1718 = vmul.f32 %v1702, %v1717
    %v1719 = vadd.f32 %v1718, 0.112945676
    %v1720 = vmul.f32 %v1702, %v1719
    %v1721 = vadd.f32 %v1720, 0.4994258
    %v1722 = vmul.f32 %v1702, %v1721
    %v1723 = vadd.f32 %v1722, 1.0
    %v1724 = vrcp.pop %v1723
    %v1725 = vmul.f32 %v1723, %v1724
    %v1726 = vsub.f32 1.0, %v1725
    %v1727 = vmul.f32 %v1724, %v1726
    %v1728 = vadd.f32 %v1724, %v1727
    %vm1729 = vweird.f32 %v1723
    %vm1730 = vweird.f32 %v1724
    %vm1731 = vmor %vm1729, %vm1730
    %v1732 = vsel %vm1731, %v1724, %v1728
    %v1733 = vand.u32 2147483647, %v1723
    %vm1734 = vcmp.eq.f32.partialorder %v1733, 8.507059e+37
    %v1735 = vand.u32 %v1723, 2147483648
    %v1736 = vor.u32 1.1754944e-38, %v1735
    %v1737 = vsel %vm1734, %v1736, %v1732
    %v1738 = vmul.f32 %v1713, %v1737
    %v1739 = vmin.f32 %v1738, 1.0
    %v1740 = vmax.f32 %v1739, -1.0
    %v1741 = vmul.f32 %v1140, %v1140
    %v1742 = vmin.f32 16.0, %v1741
    %v1743 = vmul.f32 %v1742, 2.1237322e-06
    %v1744 = vadd.f32 %v1743, 0.00028619796
    %v1745 = vmul.f32 %v1742, %v1744
    %v1746 = vadd.f32 %v1745, 0.0036580483
    %v1747 = vmul.f32 %v1742, %v1746
    %v1748 = vadd.f32 %v1747, 0.05243302
    %v1749 = vmul.f32 %v1742, %v1748
    %v1750 = vadd.f32 %v1749, 0.18741608
    %v1751 = vmul.f32 %v1742, %v1750
    %v1752 = vadd.f32 %v1751, 1.1283791
    %v1753 = vmul.f32 %v1140, %v1752
    %v1754 = vmul.f32 %v1742, 3.8918573e-05
    %v1755 = vadd.f32 %v1754, 0.001143296
    %v1756 = vmul.f32 %v1742, %v1755
    %v1757 = vadd.f32 %v1756, 0.014752088
    %v1758 = vmul.f32 %v1742, %v1757
    %v1759 = vadd.f32 %v1758, 0.112945676
    %v1760 = vmul.f32 %v1742, %v1759
    %v1761 = vadd.f32 %v1760, 0.4994258
    %v1762 = vmul.f32 %v1742, %v1761
    %v1763 = vadd.f32 %v1762, 1.0
    %v1764 = vrcp.pop %v1763
    %v1765 = vmul.f32 %v1763, %v1764
    %v1766 = vsub.f32 1.0, %v1765
    %v1767 = vmul.f32 %v1764, %v1766
    %v1768 = vadd.f32 %v1764, %v1767
    %vm1769 = vweird.f32 %v1763
    %vm1770 = vweird.f32 %v1764
    %vm1771 = vmor %vm1769, %vm1770
    %v1772 = vsel %vm1771, %v1764, %v1768
    %v1773 = vand.u32 2147483647, %v1763
    %vm1774 = vcmp.eq.f32.partialorder %v1773, 8.507059e+37
    %v1775 = vand.u32 %v1763, 2147483648
    %v1776 = vor.u32 1.1754944e-38, %v1775
    %v1777 = vsel %vm1774, %v1776, %v1772
    %v1778 = vmul.f32 %v1753, %v1777
    %v1779 = vmin.f32 %v1778, 1.0
    %v1780 = vmax.f32 %v1779, -1.0
    %v1781 = vadd.f32 %v1180, 1.0
    %v1782 = vadd.f32 %v1220, 1.0
    %v1783 = vadd.f32 %v1260, 1.0
    %v1784 = vadd.f32 %v1300, 1.0
    %v1785 = vadd.f32 %v1340, 1.0
    %v1786 = vadd.f32 %v1380, 1.0
    %v1787 = vadd.f32 %v1420, 1.0
    %v1788 = vadd.f32 %v1460, 1.0
    %v1789 = vadd.f32 %v1500, 1.0
    %v1790 = vadd.f32 %v1540, 1.0
    %v1791 = vadd.f32 %v1580, 1.0
    %v1792 = vadd.f32 %v1620, 1.0
    %v1793 = vadd.f32 %v1660, 1.0
    %v1794 = vadd.f32 %v1700, 1.0
    %v1795 = vadd.f32 %v1740, 1.0
    %v1796 = vadd.f32 %v1780, 1.0
    %v1797 = vmul.f32 %v1109, %v1781
    %v1798 = vmul.f32 %v1110, %v1782
    %v1799 = vmul.f32 %v1111, %v1783
    %v1800 = vmul.f32 %v1112, %v1784
    %v1801 = vmul.f32 %v1113, %v1785
    %v1802 = vmul.f32 %v1114, %v1786
    %v1803 = vmul.f32 %v1115, %v1787
    %v1804 = vmul.f32 %v1116, %v1788
    %v1805 = vmul.f32 %v1117, %v1789
    %v1806 = vmul.f32 %v1118, %v1790
    %v1807 = vmul.f32 %v1119, %v1791
    %v1808 = vmul.f32 %v1120, %v1792
    %v1809 = vmul.f32 %v1121, %v1793
    %v1810 = vmul.f32 %v1122, %v1794
    %v1811 = vmul.f32 %v1123, %v1795
    %v1812 = vmul.f32 %v1124, %v1796
    %v1813 = vld [vmem:[#allocation8] sm:$0xff]
    %v1814 = vld [vmem:[#allocation8 + $0x8] sm:$0xff]
    %v1815 = vld [vmem:[#allocation8 + $0x10] sm:$0xff]
    %v1816 = vld [vmem:[#allocation8 + $0x18] sm:$0xff]
    %v1817 = vld [vmem:[#allocation8 + $0x20] sm:$0xff]
    %v1818 = vld [vmem:[#allocation8 + $0x28] sm:$0xff]
    %v1819 = vld [vmem:[#allocation8 + $0x30] sm:$0xff]
    %v1820 = vld [vmem:[#allocation8 + $0x38] sm:$0xff]
    %v1821 = vld [vmem:[#allocation8 + $0x40] sm:$0xff]
    %v1822 = vld [vmem:[#allocation8 + $0x48] sm:$0xff]
    %v1823 = vld [vmem:[#allocation8 + $0x50] sm:$0xff]
    %v1824 = vld [vmem:[#allocation8 + $0x58] sm:$0xff]
    %v1825 = vld [vmem:[#allocation8 + $0x60] sm:$0xff]
    %v1826 = vld [vmem:[#allocation8 + $0x68] sm:$0xff]
    %v1827 = vld [vmem:[#allocation8 + $0x70] sm:$0xff]
    %v1828 = vld [vmem:[#allocation8 + $0x78] sm:$0xff]
    %v1829 = vld [vmem:[%s6] sm:$0x1]
    %v1831 = vperm.slane %v1829, 0
    %1833 = vmatpush.msra.mxu0 %v1828
    %1834 = vmatpush.msra.mxu0 %v1827
    %1835 = vmatpush.msra.mxu0 %v1826
    %1836 = vmatpush.msra.mxu0 %v1825
    %1837 = vmatpush.msra.mxu0 %v1824
    %1838 = vmatpush.msra.mxu0 %v1823
    %1839 = vmatpush.msra.mxu0 %v1822
    %1840 = vmatpush.msra.mxu0 %v1821
    %1841 = vmatpush.msra.mxu0 %v1820
    %1842 = vmatpush.msra.mxu0 %v1819
    %1843 = vmatpush.msra.mxu0 %v1818
    %1844 = vmatpush.msra.mxu0 %v1817
    %1845 = vmatpush.msra.mxu0 %v1816
    %1846 = vmatpush.msra.mxu0 %v1815
    %1847 = vmatpush.msra.mxu0 %v1814
    %1848 = vmatpush.msra.mxu0 %v1813
    %1849 = vmatmul.f32.gmra.mxu0 %v1797
    %v1850 = vpop.f32.mrf.mxu0
    %v1851 = vadd.f32 %v1831, %v1850
    %1852 = vmatmul.f32.gmra.mxu0 %v1798
    %v1853 = vpop.f32.mrf.mxu0
    %v1854 = vadd.f32 %v1831, %v1853
    %1855 = vmatmul.f32.gmra.mxu0 %v1799
    %v1856 = vpop.f32.mrf.mxu0
    %v1857 = vadd.f32 %v1831, %v1856
    %1858 = vmatmul.f32.gmra.mxu0 %v1800
    %v1859 = vpop.f32.mrf.mxu0
    %v1860 = vadd.f32 %v1831, %v1859
    %1861 = vmatmul.f32.gmra.mxu0 %v1801
    %v1862 = vpop.f32.mrf.mxu0
    %v1863 = vadd.f32 %v1831, %v1862
    %1864 = vmatmul.f32.gmra.mxu0 %v1802
    %v1865 = vpop.f32.mrf.mxu0
    %v1866 = vadd.f32 %v1831, %v1865
    %1867 = vmatmul.f32.gmra.mxu0 %v1803
    %v1868 = vpop.f32.mrf.mxu0
    %v1869 = vadd.f32 %v1831, %v1868
    %1870 = vmatmul.f32.gmra.mxu0 %v1804
    %v1871 = vpop.f32.mrf.mxu0
    %v1872 = vadd.f32 %v1831, %v1871
    %1873 = vmatmul.f32.gmra.mxu0 %v1805
    %v1874 = vpop.f32.mrf.mxu0
    %v1875 = vadd.f32 %v1831, %v1874
    %1876 = vmatmul.f32.gmra.mxu0 %v1806
    %v1877 = vpop.f32.mrf.mxu0
    %v1878 = vadd.f32 %v1831, %v1877
    %1879 = vmatmul.f32.gmra.mxu0 %v1807
    %v1880 = vpop.f32.mrf.mxu0
    %v1881 = vadd.f32 %v1831, %v1880
    %1882 = vmatmul.f32.gmra.mxu0 %v1808
    %v1883 = vpop.f32.mrf.mxu0
    %v1884 = vadd.f32 %v1831, %v1883
    %1885 = vmatmul.f32.gmra.mxu0 %v1809
    %v1886 = vpop.f32.mrf.mxu0
    %v1887 = vadd.f32 %v1831, %v1886
    %1888 = vmatmul.f32.gmra.mxu0 %v1810
    %v1889 = vpop.f32.mrf.mxu0
    %v1890 = vadd.f32 %v1831, %v1889
    %1891 = vmatmul.f32.gmra.mxu0 %v1811
    %v1892 = vpop.f32.mrf.mxu0
    %v1893 = vadd.f32 %v1831, %v1892
    %1894 = vmatmul.f32.gmra.mxu0 %v1812
    %v1895 = vpop.f32.mrf.mxu0
    %v1896 = vadd.f32 %v1831, %v1895
    %1897 = vdwg.mxu0
    %v1898 = vmul.f32 %v1851, 0.5
    %v1899 = vmul.f32 %v1854, 0.5
    %v1900 = vmul.f32 %v1857, 0.5
    %v1901 = vmul.f32 %v1860, 0.5
    %v1902 = vmul.f32 %v1863, 0.5
    %v1903 = vmul.f32 %v1866, 0.5
    %v1904 = vmul.f32 %v1869, 0.5
    %v1905 = vmul.f32 %v1872, 0.5
    %v1906 = vmul.f32 %v1875, 0.5
    %v1907 = vmul.f32 %v1878, 0.5
    %v1908 = vmul.f32 %v1881, 0.5
    %v1909 = vmul.f32 %v1884, 0.5
    %v1910 = vmul.f32 %v1887, 0.5
    %v1911 = vmul.f32 %v1890, 0.5
    %v1912 = vmul.f32 %v1893, 0.5
    %v1913 = vmul.f32 %v1896, 0.5
    %v1914 = vmul.f32 %v1851, 0.70710677
    %v1915 = vmul.f32 %v1854, 0.70710677
    %v1916 = vmul.f32 %v1857, 0.70710677
    %v1917 = vmul.f32 %v1860, 0.70710677
    %v1918 = vmul.f32 %v1863, 0.70710677
    %v1919 = vmul.f32 %v1866, 0.70710677
    %v1920 = vmul.f32 %v1869, 0.70710677
    %v1921 = vmul.f32 %v1872, 0.70710677
    %v1922 = vmul.f32 %v1875, 0.70710677
    %v1923 = vmul.f32 %v1878, 0.70710677
    %v1924 = vmul.f32 %v1881, 0.70710677
    %v1925 = vmul.f32 %v1884, 0.70710677
    %v1926 = vmul.f32 %v1887, 0.70710677
    %v1927 = vmul.f32 %v1890, 0.70710677
    %v1928 = vmul.f32 %v1893, 0.70710677
    %v1929 = vmul.f32 %v1896, 0.70710677
    %v1930 = vmul.f32 %v1914, %v1914
    %v1931 = vmin.f32 16.0, %v1930
    %v1932 = vmul.f32 %v1931, 2.1237322e-06
    %v1933 = vadd.f32 %v1932, 0.00028619796
    %v1934 = vmul.f32 %v1931, %v1933
    %v1935 = vadd.f32 %v1934, 0.0036580483
    %v1936 = vmul.f32 %v1931, %v1935
    %v1937 = vadd.f32 %v1936, 0.05243302
    %v1938 = vmul.f32 %v1931, %v1937
    %v1939 = vadd.f32 %v1938, 0.18741608
    %v1940 = vmul.f32 %v1931, %v1939
    %v1941 = vadd.f32 %v1940, 1.1283791
    %v1942 = vmul.f32 %v1914, %v1941
    %v1943 = vmul.f32 %v1931, 3.8918573e-05
    %v1944 = vadd.f32 %v1943, 0.001143296
    %v1945 = vmul.f32 %v1931, %v1944
    %v1946 = vadd.f32 %v1945, 0.014752088
    %v1947 = vmul.f32 %v1931, %v1946
    %v1948 = vadd.f32 %v1947, 0.112945676
    %v1949 = vmul.f32 %v1931, %v1948
    %v1950 = vadd.f32 %v1949, 0.4994258
    %v1951 = vmul.f32 %v1931, %v1950
    %v1952 = vadd.f32 %v1951, 1.0
    %v1953 = vrcp.pop %v1952
    %v1954 = vmul.f32 %v1952, %v1953
    %v1955 = vsub.f32 1.0, %v1954
    %v1956 = vmul.f32 %v1953, %v1955
    %v1957 = vadd.f32 %v1953, %v1956
    %vm1958 = vweird.f32 %v1952
    %vm1959 = vweird.f32 %v1953
    %vm1960 = vmor %vm1958, %vm1959
    %v1961 = vsel %vm1960, %v1953, %v1957
    %v1962 = vand.u32 2147483647, %v1952
    %vm1963 = vcmp.eq.f32.partialorder %v1962, 8.507059e+37
    %v1964 = vand.u32 %v1952, 2147483648
    %v1965 = vor.u32 1.1754944e-38, %v1964
    %v1966 = vsel %vm1963, %v1965, %v1961
    %v1967 = vmul.f32 %v1942, %v1966
    %v1968 = vmin.f32 %v1967, 1.0
    %v1969 = vmax.f32 %v1968, -1.0
    %v1970 = vmul.f32 %v1915, %v1915
    %v1971 = vmin.f32 16.0, %v1970
    %v1972 = vmul.f32 %v1971, 2.1237322e-06
    %v1973 = vadd.f32 %v1972, 0.00028619796
    %v1974 = vmul.f32 %v1971, %v1973
    %v1975 = vadd.f32 %v1974, 0.0036580483
    %v1976 = vmul.f32 %v1971, %v1975
    %v1977 = vadd.f32 %v1976, 0.05243302
    %v1978 = vmul.f32 %v1971, %v1977
    %v1979 = vadd.f32 %v1978, 0.18741608
    %v1980 = vmul.f32 %v1971, %v1979
    %v1981 = vadd.f32 %v1980, 1.1283791
    %v1982 = vmul.f32 %v1915, %v1981
    %v1983 = vmul.f32 %v1971, 3.8918573e-05
    %v1984 = vadd.f32 %v1983, 0.001143296
    %v1985 = vmul.f32 %v1971, %v1984
    %v1986 = vadd.f32 %v1985, 0.014752088
    %v1987 = vmul.f32 %v1971, %v1986
    %v1988 = vadd.f32 %v1987, 0.112945676
    %v1989 = vmul.f32 %v1971, %v1988
    %v1990 = vadd.f32 %v1989, 0.4994258
    %v1991 = vmul.f32 %v1971, %v1990
    %v1992 = vadd.f32 %v1991, 1.0
    %v1993 = vrcp.pop %v1992
    %v1994 = vmul.f32 %v1992, %v1993
    %v1995 = vsub.f32 1.0, %v1994
    %v1996 = vmul.f32 %v1993, %v1995
    %v1997 = vadd.f32 %v1993, %v1996
    %vm1998 = vweird.f32 %v1992
    %vm1999 = vweird.f32 %v1993
    %vm2000 = vmor %vm1998, %vm1999
    %v2001 = vsel %vm2000, %v1993, %v1997
    %v2002 = vand.u32 2147483647, %v1992
    %vm2003 = vcmp.eq.f32.partialorder %v2002, 8.507059e+37
    %v2004 = vand.u32 %v1992, 2147483648
    %v2005 = vor.u32 1.1754944e-38, %v2004
    %v2006 = vsel %vm2003, %v2005, %v2001
    %v2007 = vmul.f32 %v1982, %v2006
    %v2008 = vmin.f32 %v2007, 1.0
    %v2009 = vmax.f32 %v2008, -1.0
    %v2010 = vmul.f32 %v1916, %v1916
    %v2011 = vmin.f32 16.0, %v2010
    %v2012 = vmul.f32 %v2011, 2.1237322e-06
    %v2013 = vadd.f32 %v2012, 0.00028619796
    %v2014 = vmul.f32 %v2011, %v2013
    %v2015 = vadd.f32 %v2014, 0.0036580483
    %v2016 = vmul.f32 %v2011, %v2015
    %v2017 = vadd.f32 %v2016, 0.05243302
    %v2018 = vmul.f32 %v2011, %v2017
    %v2019 = vadd.f32 %v2018, 0.18741608
    %v2020 = vmul.f32 %v2011, %v2019
    %v2021 = vadd.f32 %v2020, 1.1283791
    %v2022 = vmul.f32 %v1916, %v2021
    %v2023 = vmul.f32 %v2011, 3.8918573e-05
    %v2024 = vadd.f32 %v2023, 0.001143296
    %v2025 = vmul.f32 %v2011, %v2024
    %v2026 = vadd.f32 %v2025, 0.014752088
    %v2027 = vmul.f32 %v2011, %v2026
    %v2028 = vadd.f32 %v2027, 0.112945676
    %v2029 = vmul.f32 %v2011, %v2028
    %v2030 = vadd.f32 %v2029, 0.4994258
    %v2031 = vmul.f32 %v2011, %v2030
    %v2032 = vadd.f32 %v2031, 1.0
    %v2033 = vrcp.pop %v2032
    %v2034 = vmul.f32 %v2032, %v2033
    %v2035 = vsub.f32 1.0, %v2034
    %v2036 = vmul.f32 %v2033, %v2035
    %v2037 = vadd.f32 %v2033, %v2036
    %vm2038 = vweird.f32 %v2032
    %vm2039 = vweird.f32 %v2033
    %vm2040 = vmor %vm2038, %vm2039
    %v2041 = vsel %vm2040, %v2033, %v2037
    %v2042 = vand.u32 2147483647, %v2032
    %vm2043 = vcmp.eq.f32.partialorder %v2042, 8.507059e+37
    %v2044 = vand.u32 %v2032, 2147483648
    %v2045 = vor.u32 1.1754944e-38, %v2044
    %v2046 = vsel %vm2043, %v2045, %v2041
    %v2047 = vmul.f32 %v2022, %v2046
    %v2048 = vmin.f32 %v2047, 1.0
    %v2049 = vmax.f32 %v2048, -1.0
    %v2050 = vmul.f32 %v1917, %v1917
    %v2051 = vmin.f32 16.0, %v2050
    %v2052 = vmul.f32 %v2051, 2.1237322e-06
    %v2053 = vadd.f32 %v2052, 0.00028619796
    %v2054 = vmul.f32 %v2051, %v2053
    %v2055 = vadd.f32 %v2054, 0.0036580483
    %v2056 = vmul.f32 %v2051, %v2055
    %v2057 = vadd.f32 %v2056, 0.05243302
    %v2058 = vmul.f32 %v2051, %v2057
    %v2059 = vadd.f32 %v2058, 0.18741608
    %v2060 = vmul.f32 %v2051, %v2059
    %v2061 = vadd.f32 %v2060, 1.1283791
    %v2062 = vmul.f32 %v1917, %v2061
    %v2063 = vmul.f32 %v2051, 3.8918573e-05
    %v2064 = vadd.f32 %v2063, 0.001143296
    %v2065 = vmul.f32 %v2051, %v2064
    %v2066 = vadd.f32 %v2065, 0.014752088
    %v2067 = vmul.f32 %v2051, %v2066
    %v2068 = vadd.f32 %v2067, 0.112945676
    %v2069 = vmul.f32 %v2051, %v2068
    %v2070 = vadd.f32 %v2069, 0.4994258
    %v2071 = vmul.f32 %v2051, %v2070
    %v2072 = vadd.f32 %v2071, 1.0
    %v2073 = vrcp.pop %v2072
    %v2074 = vmul.f32 %v2072, %v2073
    %v2075 = vsub.f32 1.0, %v2074
    %v2076 = vmul.f32 %v2073, %v2075
    %v2077 = vadd.f32 %v2073, %v2076
    %vm2078 = vweird.f32 %v2072
    %vm2079 = vweird.f32 %v2073
    %vm2080 = vmor %vm2078, %vm2079
    %v2081 = vsel %vm2080, %v2073, %v2077
    %v2082 = vand.u32 2147483647, %v2072
    %vm2083 = vcmp.eq.f32.partialorder %v2082, 8.507059e+37
    %v2084 = vand.u32 %v2072, 2147483648
    %v2085 = vor.u32 1.1754944e-38, %v2084
    %v2086 = vsel %vm2083, %v2085, %v2081
    %v2087 = vmul.f32 %v2062, %v2086
    %v2088 = vmin.f32 %v2087, 1.0
    %v2089 = vmax.f32 %v2088, -1.0
    %v2090 = vmul.f32 %v1918, %v1918
    %v2091 = vmin.f32 16.0, %v2090
    %v2092 = vmul.f32 %v2091, 2.1237322e-06
    %v2093 = vadd.f32 %v2092, 0.00028619796
    %v2094 = vmul.f32 %v2091, %v2093
    %v2095 = vadd.f32 %v2094, 0.0036580483
    %v2096 = vmul.f32 %v2091, %v2095
    %v2097 = vadd.f32 %v2096, 0.05243302
    %v2098 = vmul.f32 %v2091, %v2097
    %v2099 = vadd.f32 %v2098, 0.18741608
    %v2100 = vmul.f32 %v2091, %v2099
    %v2101 = vadd.f32 %v2100, 1.1283791
    %v2102 = vmul.f32 %v1918, %v2101
    %v2103 = vmul.f32 %v2091, 3.8918573e-05
    %v2104 = vadd.f32 %v2103, 0.001143296
    %v2105 = vmul.f32 %v2091, %v2104
    %v2106 = vadd.f32 %v2105, 0.014752088
    %v2107 = vmul.f32 %v2091, %v2106
    %v2108 = vadd.f32 %v2107, 0.112945676
    %v2109 = vmul.f32 %v2091, %v2108
    %v2110 = vadd.f32 %v2109, 0.4994258
    %v2111 = vmul.f32 %v2091, %v2110
    %v2112 = vadd.f32 %v2111, 1.0
    %v2113 = vrcp.pop %v2112
    %v2114 = vmul.f32 %v2112, %v2113
    %v2115 = vsub.f32 1.0, %v2114
    %v2116 = vmul.f32 %v2113, %v2115
    %v2117 = vadd.f32 %v2113, %v2116
    %vm2118 = vweird.f32 %v2112
    %vm2119 = vweird.f32 %v2113
    %vm2120 = vmor %vm2118, %vm2119
    %v2121 = vsel %vm2120, %v2113, %v2117
    %v2122 = vand.u32 2147483647, %v2112
    %vm2123 = vcmp.eq.f32.partialorder %v2122, 8.507059e+37
    %v2124 = vand.u32 %v2112, 2147483648
    %v2125 = vor.u32 1.1754944e-38, %v2124
    %v2126 = vsel %vm2123, %v2125, %v2121
    %v2127 = vmul.f32 %v2102, %v2126
    %v2128 = vmin.f32 %v2127, 1.0
    %v2129 = vmax.f32 %v2128, -1.0
    %v2130 = vmul.f32 %v1919, %v1919
    %v2131 = vmin.f32 16.0, %v2130
    %v2132 = vmul.f32 %v2131, 2.1237322e-06
    %v2133 = vadd.f32 %v2132, 0.00028619796
    %v2134 = vmul.f32 %v2131, %v2133
    %v2135 = vadd.f32 %v2134, 0.0036580483
    %v2136 = vmul.f32 %v2131, %v2135
    %v2137 = vadd.f32 %v2136, 0.05243302
    %v2138 = vmul.f32 %v2131, %v2137
    %v2139 = vadd.f32 %v2138, 0.18741608
    %v2140 = vmul.f32 %v2131, %v2139
    %v2141 = vadd.f32 %v2140, 1.1283791
    %v2142 = vmul.f32 %v1919, %v2141
    %v2143 = vmul.f32 %v2131, 3.8918573e-05
    %v2144 = vadd.f32 %v2143, 0.001143296
    %v2145 = vmul.f32 %v2131, %v2144
    %v2146 = vadd.f32 %v2145, 0.014752088
    %v2147 = vmul.f32 %v2131, %v2146
    %v2148 = vadd.f32 %v2147, 0.112945676
    %v2149 = vmul.f32 %v2131, %v2148
    %v2150 = vadd.f32 %v2149, 0.4994258
    %v2151 = vmul.f32 %v2131, %v2150
    %v2152 = vadd.f32 %v2151, 1.0
    %v2153 = vrcp.pop %v2152
    %v2154 = vmul.f32 %v2152, %v2153
    %v2155 = vsub.f32 1.0, %v2154
    %v2156 = vmul.f32 %v2153, %v2155
    %v2157 = vadd.f32 %v2153, %v2156
    %vm2158 = vweird.f32 %v2152
    %vm2159 = vweird.f32 %v2153
    %vm2160 = vmor %vm2158, %vm2159
    %v2161 = vsel %vm2160, %v2153, %v2157
    %v2162 = vand.u32 2147483647, %v2152
    %vm2163 = vcmp.eq.f32.partialorder %v2162, 8.507059e+37
    %v2164 = vand.u32 %v2152, 2147483648
    %v2165 = vor.u32 1.1754944e-38, %v2164
    %v2166 = vsel %vm2163, %v2165, %v2161
    %v2167 = vmul.f32 %v2142, %v2166
    %v2168 = vmin.f32 %v2167, 1.0
    %v2169 = vmax.f32 %v2168, -1.0
    %v2170 = vmul.f32 %v1920, %v1920
    %v2171 = vmin.f32 16.0, %v2170
    %v2172 = vmul.f32 %v2171, 2.1237322e-06
    %v2173 = vadd.f32 %v2172, 0.00028619796
    %v2174 = vmul.f32 %v2171, %v2173
    %v2175 = vadd.f32 %v2174, 0.0036580483
    %v2176 = vmul.f32 %v2171, %v2175
    %v2177 = vadd.f32 %v2176, 0.05243302
    %v2178 = vmul.f32 %v2171, %v2177
    %v2179 = vadd.f32 %v2178, 0.18741608
    %v2180 = vmul.f32 %v2171, %v2179
    %v2181 = vadd.f32 %v2180, 1.1283791
    %v2182 = vmul.f32 %v1920, %v2181
    %v2183 = vmul.f32 %v2171, 3.8918573e-05
    %v2184 = vadd.f32 %v2183, 0.001143296
    %v2185 = vmul.f32 %v2171, %v2184
    %v2186 = vadd.f32 %v2185, 0.014752088
    %v2187 = vmul.f32 %v2171, %v2186
    %v2188 = vadd.f32 %v2187, 0.112945676
    %v2189 = vmul.f32 %v2171, %v2188
    %v2190 = vadd.f32 %v2189, 0.4994258
    %v2191 = vmul.f32 %v2171, %v2190
    %v2192 = vadd.f32 %v2191, 1.0
    %v2193 = vrcp.pop %v2192
    %v2194 = vmul.f32 %v2192, %v2193
    %v2195 = vsub.f32 1.0, %v2194
    %v2196 = vmul.f32 %v2193, %v2195
    %v2197 = vadd.f32 %v2193, %v2196
    %vm2198 = vweird.f32 %v2192
    %vm2199 = vweird.f32 %v2193
    %vm2200 = vmor %vm2198, %vm2199
    %v2201 = vsel %vm2200, %v2193, %v2197
    %v2202 = vand.u32 2147483647, %v2192
    %vm2203 = vcmp.eq.f32.partialorder %v2202, 8.507059e+37
    %v2204 = vand.u32 %v2192, 2147483648
    %v2205 = vor.u32 1.1754944e-38, %v2204
    %v2206 = vsel %vm2203, %v2205, %v2201
    %v2207 = vmul.f32 %v2182, %v2206
    %v2208 = vmin.f32 %v2207, 1.0
    %v2209 = vmax.f32 %v2208, -1.0
    %v2210 = vmul.f32 %v1921, %v1921
    %v2211 = vmin.f32 16.0, %v2210
    %v2212 = vmul.f32 %v2211, 2.1237322e-06
    %v2213 = vadd.f32 %v2212, 0.00028619796
    %v2214 = vmul.f32 %v2211, %v2213
    %v2215 = vadd.f32 %v2214, 0.0036580483
    %v2216 = vmul.f32 %v2211, %v2215
    %v2217 = vadd.f32 %v2216, 0.05243302
    %v2218 = vmul.f32 %v2211, %v2217
    %v2219 = vadd.f32 %v2218, 0.18741608
    %v2220 = vmul.f32 %v2211, %v2219
    %v2221 = vadd.f32 %v2220, 1.1283791
    %v2222 = vmul.f32 %v1921, %v2221
    %v2223 = vmul.f32 %v2211, 3.8918573e-05
    %v2224 = vadd.f32 %v2223, 0.001143296
    %v2225 = vmul.f32 %v2211, %v2224
    %v2226 = vadd.f32 %v2225, 0.014752088
    %v2227 = vmul.f32 %v2211, %v2226
    %v2228 = vadd.f32 %v2227, 0.112945676
    %v2229 = vmul.f32 %v2211, %v2228
    %v2230 = vadd.f32 %v2229, 0.4994258
    %v2231 = vmul.f32 %v2211, %v2230
    %v2232 = vadd.f32 %v2231, 1.0
    %v2233 = vrcp.pop %v2232
    %v2234 = vmul.f32 %v2232, %v2233
    %v2235 = vsub.f32 1.0, %v2234
    %v2236 = vmul.f32 %v2233, %v2235
    %v2237 = vadd.f32 %v2233, %v2236
    %vm2238 = vweird.f32 %v2232
    %vm2239 = vweird.f32 %v2233
    %vm2240 = vmor %vm2238, %vm2239
    %v2241 = vsel %vm2240, %v2233, %v2237
    %v2242 = vand.u32 2147483647, %v2232
    %vm2243 = vcmp.eq.f32.partialorder %v2242, 8.507059e+37
    %v2244 = vand.u32 %v2232, 2147483648
    %v2245 = vor.u32 1.1754944e-38, %v2244
    %v2246 = vsel %vm2243, %v2245, %v2241
    %v2247 = vmul.f32 %v2222, %v2246
    %v2248 = vmin.f32 %v2247, 1.0
    %v2249 = vmax.f32 %v2248, -1.0
    %v2250 = vmul.f32 %v1922, %v1922
    %v2251 = vmin.f32 16.0, %v2250
    %v2252 = vmul.f32 %v2251, 2.1237322e-06
    %v2253 = vadd.f32 %v2252, 0.00028619796
    %v2254 = vmul.f32 %v2251, %v2253
    %v2255 = vadd.f32 %v2254, 0.0036580483
    %v2256 = vmul.f32 %v2251, %v2255
    %v2257 = vadd.f32 %v2256, 0.05243302
    %v2258 = vmul.f32 %v2251, %v2257
    %v2259 = vadd.f32 %v2258, 0.18741608
    %v2260 = vmul.f32 %v2251, %v2259
    %v2261 = vadd.f32 %v2260, 1.1283791
    %v2262 = vmul.f32 %v1922, %v2261
    %v2263 = vmul.f32 %v2251, 3.8918573e-05
    %v2264 = vadd.f32 %v2263, 0.001143296
    %v2265 = vmul.f32 %v2251, %v2264
    %v2266 = vadd.f32 %v2265, 0.014752088
    %v2267 = vmul.f32 %v2251, %v2266
    %v2268 = vadd.f32 %v2267, 0.112945676
    %v2269 = vmul.f32 %v2251, %v2268
    %v2270 = vadd.f32 %v2269, 0.4994258
    %v2271 = vmul.f32 %v2251, %v2270
    %v2272 = vadd.f32 %v2271, 1.0
    %v2273 = vrcp.pop %v2272
    %v2274 = vmul.f32 %v2272, %v2273
    %v2275 = vsub.f32 1.0, %v2274
    %v2276 = vmul.f32 %v2273, %v2275
    %v2277 = vadd.f32 %v2273, %v2276
    %vm2278 = vweird.f32 %v2272
    %vm2279 = vweird.f32 %v2273
    %vm2280 = vmor %vm2278, %vm2279
    %v2281 = vsel %vm2280, %v2273, %v2277
    %v2282 = vand.u32 2147483647, %v2272
    %vm2283 = vcmp.eq.f32.partialorder %v2282, 8.507059e+37
    %v2284 = vand.u32 %v2272, 2147483648
    %v2285 = vor.u32 1.1754944e-38, %v2284
    %v2286 = vsel %vm2283, %v2285, %v2281
    %v2287 = vmul.f32 %v2262, %v2286
    %v2288 = vmin.f32 %v2287, 1.0
    %v2289 = vmax.f32 %v2288, -1.0
    %v2290 = vmul.f32 %v1923, %v1923
    %v2291 = vmin.f32 16.0, %v2290
    %v2292 = vmul.f32 %v2291, 2.1237322e-06
    %v2293 = vadd.f32 %v2292, 0.00028619796
    %v2294 = vmul.f32 %v2291, %v2293
    %v2295 = vadd.f32 %v2294, 0.0036580483
    %v2296 = vmul.f32 %v2291, %v2295
    %v2297 = vadd.f32 %v2296, 0.05243302
    %v2298 = vmul.f32 %v2291, %v2297
    %v2299 = vadd.f32 %v2298, 0.18741608
    %v2300 = vmul.f32 %v2291, %v2299
    %v2301 = vadd.f32 %v2300, 1.1283791
    %v2302 = vmul.f32 %v1923, %v2301
    %v2303 = vmul.f32 %v2291, 3.8918573e-05
    %v2304 = vadd.f32 %v2303, 0.001143296
    %v2305 = vmul.f32 %v2291, %v2304
    %v2306 = vadd.f32 %v2305, 0.014752088
    %v2307 = vmul.f32 %v2291, %v2306
    %v2308 = vadd.f32 %v2307, 0.112945676
    %v2309 = vmul.f32 %v2291, %v2308
    %v2310 = vadd.f32 %v2309, 0.4994258
    %v2311 = vmul.f32 %v2291, %v2310
    %v2312 = vadd.f32 %v2311, 1.0
    %v2313 = vrcp.pop %v2312
    %v2314 = vmul.f32 %v2312, %v2313
    %v2315 = vsub.f32 1.0, %v2314
    %v2316 = vmul.f32 %v2313, %v2315
    %v2317 = vadd.f32 %v2313, %v2316
    %vm2318 = vweird.f32 %v2312
    %vm2319 = vweird.f32 %v2313
    %vm2320 = vmor %vm2318, %vm2319
    %v2321 = vsel %vm2320, %v2313, %v2317
    %v2322 = vand.u32 2147483647, %v2312
    %vm2323 = vcmp.eq.f32.partialorder %v2322, 8.507059e+37
    %v2324 = vand.u32 %v2312, 2147483648
    %v2325 = vor.u32 1.1754944e-38, %v2324
    %v2326 = vsel %vm2323, %v2325, %v2321
    %v2327 = vmul.f32 %v2302, %v2326
    %v2328 = vmin.f32 %v2327, 1.0
    %v2329 = vmax.f32 %v2328, -1.0
    %v2330 = vmul.f32 %v1924, %v1924
    %v2331 = vmin.f32 16.0, %v2330
    %v2332 = vmul.f32 %v2331, 2.1237322e-06
    %v2333 = vadd.f32 %v2332, 0.00028619796
    %v2334 = vmul.f32 %v2331, %v2333
    %v2335 = vadd.f32 %v2334, 0.0036580483
    %v2336 = vmul.f32 %v2331, %v2335
    %v2337 = vadd.f32 %v2336, 0.05243302
    %v2338 = vmul.f32 %v2331, %v2337
    %v2339 = vadd.f32 %v2338, 0.18741608
    %v2340 = vmul.f32 %v2331, %v2339
    %v2341 = vadd.f32 %v2340, 1.1283791
    %v2342 = vmul.f32 %v1924, %v2341
    %v2343 = vmul.f32 %v2331, 3.8918573e-05
    %v2344 = vadd.f32 %v2343, 0.001143296
    %v2345 = vmul.f32 %v2331, %v2344
    %v2346 = vadd.f32 %v2345, 0.014752088
    %v2347 = vmul.f32 %v2331, %v2346
    %v2348 = vadd.f32 %v2347, 0.112945676
    %v2349 = vmul.f32 %v2331, %v2348
    %v2350 = vadd.f32 %v2349, 0.4994258
    %v2351 = vmul.f32 %v2331, %v2350
    %v2352 = vadd.f32 %v2351, 1.0
    %v2353 = vrcp.pop %v2352
    %v2354 = vmul.f32 %v2352, %v2353
    %v2355 = vsub.f32 1.0, %v2354
    %v2356 = vmul.f32 %v2353, %v2355
    %v2357 = vadd.f32 %v2353, %v2356
    %vm2358 = vweird.f32 %v2352
    %vm2359 = vweird.f32 %v2353
    %vm2360 = vmor %vm2358, %vm2359
    %v2361 = vsel %vm2360, %v2353, %v2357
    %v2362 = vand.u32 2147483647, %v2352
    %vm2363 = vcmp.eq.f32.partialorder %v2362, 8.507059e+37
    %v2364 = vand.u32 %v2352, 2147483648
    %v2365 = vor.u32 1.1754944e-38, %v2364
    %v2366 = vsel %vm2363, %v2365, %v2361
    %v2367 = vmul.f32 %v2342, %v2366
    %v2368 = vmin.f32 %v2367, 1.0
    %v2369 = vmax.f32 %v2368, -1.0
    %v2370 = vmul.f32 %v1925, %v1925
    %v2371 = vmin.f32 16.0, %v2370
    %v2372 = vmul.f32 %v2371, 2.1237322e-06
    %v2373 = vadd.f32 %v2372, 0.00028619796
    %v2374 = vmul.f32 %v2371, %v2373
    %v2375 = vadd.f32 %v2374, 0.0036580483
    %v2376 = vmul.f32 %v2371, %v2375
    %v2377 = vadd.f32 %v2376, 0.05243302
    %v2378 = vmul.f32 %v2371, %v2377
    %v2379 = vadd.f32 %v2378, 0.18741608
    %v2380 = vmul.f32 %v2371, %v2379
    %v2381 = vadd.f32 %v2380, 1.1283791
    %v2382 = vmul.f32 %v1925, %v2381
    %v2383 = vmul.f32 %v2371, 3.8918573e-05
    %v2384 = vadd.f32 %v2383, 0.001143296
    %v2385 = vmul.f32 %v2371, %v2384
    %v2386 = vadd.f32 %v2385, 0.014752088
    %v2387 = vmul.f32 %v2371, %v2386
    %v2388 = vadd.f32 %v2387, 0.112945676
    %v2389 = vmul.f32 %v2371, %v2388
    %v2390 = vadd.f32 %v2389, 0.4994258
    %v2391 = vmul.f32 %v2371, %v2390
    %v2392 = vadd.f32 %v2391, 1.0
    %v2393 = vrcp.pop %v2392
    %v2394 = vmul.f32 %v2392, %v2393
    %v2395 = vsub.f32 1.0, %v2394
    %v2396 = vmul.f32 %v2393, %v2395
    %v2397 = vadd.f32 %v2393, %v2396
    %vm2398 = vweird.f32 %v2392
    %vm2399 = vweird.f32 %v2393
    %vm2400 = vmor %vm2398, %vm2399
    %v2401 = vsel %vm2400, %v2393, %v2397
    %v2402 = vand.u32 2147483647, %v2392
    %vm2403 = vcmp.eq.f32.partialorder %v2402, 8.507059e+37
    %v2404 = vand.u32 %v2392, 2147483648
    %v2405 = vor.u32 1.1754944e-38, %v2404
    %v2406 = vsel %vm2403, %v2405, %v2401
    %v2407 = vmul.f32 %v2382, %v2406
    %v2408 = vmin.f32 %v2407, 1.0
    %v2409 = vmax.f32 %v2408, -1.0
    %v2410 = vmul.f32 %v1926, %v1926
    %v2411 = vmin.f32 16.0, %v2410
    %v2412 = vmul.f32 %v2411, 2.1237322e-06
    %v2413 = vadd.f32 %v2412, 0.00028619796
    %v2414 = vmul.f32 %v2411, %v2413
    %v2415 = vadd.f32 %v2414, 0.0036580483
    %v2416 = vmul.f32 %v2411, %v2415
    %v2417 = vadd.f32 %v2416, 0.05243302
    %v2418 = vmul.f32 %v2411, %v2417
    %v2419 = vadd.f32 %v2418, 0.18741608
    %v2420 = vmul.f32 %v2411, %v2419
    %v2421 = vadd.f32 %v2420, 1.1283791
    %v2422 = vmul.f32 %v1926, %v2421
    %v2423 = vmul.f32 %v2411, 3.8918573e-05
    %v2424 = vadd.f32 %v2423, 0.001143296
    %v2425 = vmul.f32 %v2411, %v2424
    %v2426 = vadd.f32 %v2425, 0.014752088
    %v2427 = vmul.f32 %v2411, %v2426
    %v2428 = vadd.f32 %v2427, 0.112945676
    %v2429 = vmul.f32 %v2411, %v2428
    %v2430 = vadd.f32 %v2429, 0.4994258
    %v2431 = vmul.f32 %v2411, %v2430
    %v2432 = vadd.f32 %v2431, 1.0
    %v2433 = vrcp.pop %v2432
    %v2434 = vmul.f32 %v2432, %v2433
    %v2435 = vsub.f32 1.0, %v2434
    %v2436 = vmul.f32 %v2433, %v2435
    %v2437 = vadd.f32 %v2433, %v2436
    %vm2438 = vweird.f32 %v2432
    %vm2439 = vweird.f32 %v2433
    %vm2440 = vmor %vm2438, %vm2439
    %v2441 = vsel %vm2440, %v2433, %v2437
    %v2442 = vand.u32 2147483647, %v2432
    %vm2443 = vcmp.eq.f32.partialorder %v2442, 8.507059e+37
    %v2444 = vand.u32 %v2432, 2147483648
    %v2445 = vor.u32 1.1754944e-38, %v2444
    %v2446 = vsel %vm2443, %v2445, %v2441
    %v2447 = vmul.f32 %v2422, %v2446
    %v2448 = vmin.f32 %v2447, 1.0
    %v2449 = vmax.f32 %v2448, -1.0
    %v2450 = vmul.f32 %v1927, %v1927
    %v2451 = vmin.f32 16.0, %v2450
    %v2452 = vmul.f32 %v2451, 2.1237322e-06
    %v2453 = vadd.f32 %v2452, 0.00028619796
    %v2454 = vmul.f32 %v2451, %v2453
    %v2455 = vadd.f32 %v2454, 0.0036580483
    %v2456 = vmul.f32 %v2451, %v2455
    %v2457 = vadd.f32 %v2456, 0.05243302
    %v2458 = vmul.f32 %v2451, %v2457
    %v2459 = vadd.f32 %v2458, 0.18741608
    %v2460 = vmul.f32 %v2451, %v2459
    %v2461 = vadd.f32 %v2460, 1.1283791
    %v2462 = vmul.f32 %v1927, %v2461
    %v2463 = vmul.f32 %v2451, 3.8918573e-05
    %v2464 = vadd.f32 %v2463, 0.001143296
    %v2465 = vmul.f32 %v2451, %v2464
    %v2466 = vadd.f32 %v2465, 0.014752088
    %v2467 = vmul.f32 %v2451, %v2466
    %v2468 = vadd.f32 %v2467, 0.112945676
    %v2469 = vmul.f32 %v2451, %v2468
    %v2470 = vadd.f32 %v2469, 0.4994258
    %v2471 = vmul.f32 %v2451, %v2470
    %v2472 = vadd.f32 %v2471, 1.0
    %v2473 = vrcp.pop %v2472
    %v2474 = vmul.f32 %v2472, %v2473
    %v2475 = vsub.f32 1.0, %v2474
    %v2476 = vmul.f32 %v2473, %v2475
    %v2477 = vadd.f32 %v2473, %v2476
    %vm2478 = vweird.f32 %v2472
    %vm2479 = vweird.f32 %v2473
    %vm2480 = vmor %vm2478, %vm2479
    %v2481 = vsel %vm2480, %v2473, %v2477
    %v2482 = vand.u32 2147483647, %v2472
    %vm2483 = vcmp.eq.f32.partialorder %v2482, 8.507059e+37
    %v2484 = vand.u32 %v2472, 2147483648
    %v2485 = vor.u32 1.1754944e-38, %v2484
    %v2486 = vsel %vm2483, %v2485, %v2481
    %v2487 = vmul.f32 %v2462, %v2486
    %v2488 = vmin.f32 %v2487, 1.0
    %v2489 = vmax.f32 %v2488, -1.0
    %v2490 = vmul.f32 %v1928, %v1928
    %v2491 = vmin.f32 16.0, %v2490
    %v2492 = vmul.f32 %v2491, 2.1237322e-06
    %v2493 = vadd.f32 %v2492, 0.00028619796
    %v2494 = vmul.f32 %v2491, %v2493
    %v2495 = vadd.f32 %v2494, 0.0036580483
    %v2496 = vmul.f32 %v2491, %v2495
    %v2497 = vadd.f32 %v2496, 0.05243302
    %v2498 = vmul.f32 %v2491, %v2497
    %v2499 = vadd.f32 %v2498, 0.18741608
    %v2500 = vmul.f32 %v2491, %v2499
    %v2501 = vadd.f32 %v2500, 1.1283791
    %v2502 = vmul.f32 %v1928, %v2501
    %v2503 = vmul.f32 %v2491, 3.8918573e-05
    %v2504 = vadd.f32 %v2503, 0.001143296
    %v2505 = vmul.f32 %v2491, %v2504
    %v2506 = vadd.f32 %v2505, 0.014752088
    %v2507 = vmul.f32 %v2491, %v2506
    %v2508 = vadd.f32 %v2507, 0.112945676
    %v2509 = vmul.f32 %v2491, %v2508
    %v2510 = vadd.f32 %v2509, 0.4994258
    %v2511 = vmul.f32 %v2491, %v2510
    %v2512 = vadd.f32 %v2511, 1.0
    %v2513 = vrcp.pop %v2512
    %v2514 = vmul.f32 %v2512, %v2513
    %v2515 = vsub.f32 1.0, %v2514
    %v2516 = vmul.f32 %v2513, %v2515
    %v2517 = vadd.f32 %v2513, %v2516
    %vm2518 = vweird.f32 %v2512
    %vm2519 = vweird.f32 %v2513
    %vm2520 = vmor %vm2518, %vm2519
    %v2521 = vsel %vm2520, %v2513, %v2517
    %v2522 = vand.u32 2147483647, %v2512
    %vm2523 = vcmp.eq.f32.partialorder %v2522, 8.507059e+37
    %v2524 = vand.u32 %v2512, 2147483648
    %v2525 = vor.u32 1.1754944e-38, %v2524
    %v2526 = vsel %vm2523, %v2525, %v2521
    %v2527 = vmul.f32 %v2502, %v2526
    %v2528 = vmin.f32 %v2527, 1.0
    %v2529 = vmax.f32 %v2528, -1.0
    %v2530 = vmul.f32 %v1929, %v1929
    %v2531 = vmin.f32 16.0, %v2530
    %v2532 = vmul.f32 %v2531, 2.1237322e-06
    %v2533 = vadd.f32 %v2532, 0.00028619796
    %v2534 = vmul.f32 %v2531, %v2533
    %v2535 = vadd.f32 %v2534, 0.0036580483
    %v2536 = vmul.f32 %v2531, %v2535
    %v2537 = vadd.f32 %v2536, 0.05243302
    %v2538 = vmul.f32 %v2531, %v2537
    %v2539 = vadd.f32 %v2538, 0.18741608
    %v2540 = vmul.f32 %v2531, %v2539
    %v2541 = vadd.f32 %v2540, 1.1283791
    %v2542 = vmul.f32 %v1929, %v2541
    %v2543 = vmul.f32 %v2531, 3.8918573e-05
    %v2544 = vadd.f32 %v2543, 0.001143296
    %v2545 = vmul.f32 %v2531, %v2544
    %v2546 = vadd.f32 %v2545, 0.014752088
    %v2547 = vmul.f32 %v2531, %v2546
    %v2548 = vadd.f32 %v2547, 0.112945676
    %v2549 = vmul.f32 %v2531, %v2548
    %v2550 = vadd.f32 %v2549, 0.4994258
    %v2551 = vmul.f32 %v2531, %v2550
    %v2552 = vadd.f32 %v2551, 1.0
    %v2553 = vrcp.pop %v2552
    %v2554 = vmul.f32 %v2552, %v2553
    %v2555 = vsub.f32 1.0, %v2554
    %v2556 = vmul.f32 %v2553, %v2555
    %v2557 = vadd.f32 %v2553, %v2556
    %vm2558 = vweird.f32 %v2552
    %vm2559 = vweird.f32 %v2553
    %vm2560 = vmor %vm2558, %vm2559
    %v2561 = vsel %vm2560, %v2553, %v2557
    %v2562 = vand.u32 2147483647, %v2552
    %vm2563 = vcmp.eq.f32.partialorder %v2562, 8.507059e+37
    %v2564 = vand.u32 %v2552, 2147483648
    %v2565 = vor.u32 1.1754944e-38, %v2564
    %v2566 = vsel %vm2563, %v2565, %v2561
    %v2567 = vmul.f32 %v2542, %v2566
    %v2568 = vmin.f32 %v2567, 1.0
    %v2569 = vmax.f32 %v2568, -1.0
    %v2570 = vadd.f32 %v1969, 1.0
    %v2571 = vadd.f32 %v2009, 1.0
    %v2572 = vadd.f32 %v2049, 1.0
    %v2573 = vadd.f32 %v2089, 1.0
    %v2574 = vadd.f32 %v2129, 1.0
    %v2575 = vadd.f32 %v2169, 1.0
    %v2576 = vadd.f32 %v2209, 1.0
    %v2577 = vadd.f32 %v2249, 1.0
    %v2578 = vadd.f32 %v2289, 1.0
    %v2579 = vadd.f32 %v2329, 1.0
    %v2580 = vadd.f32 %v2369, 1.0
    %v2581 = vadd.f32 %v2409, 1.0
    %v2582 = vadd.f32 %v2449, 1.0
    %v2583 = vadd.f32 %v2489, 1.0
    %v2584 = vadd.f32 %v2529, 1.0
    %v2585 = vadd.f32 %v2569, 1.0
    %v2586 = vmul.f32 %v1898, %v2570
    %v2587 = vmul.f32 %v1899, %v2571
    %v2588 = vmul.f32 %v1900, %v2572
    %v2589 = vmul.f32 %v1901, %v2573
    %v2590 = vmul.f32 %v1902, %v2574
    %v2591 = vmul.f32 %v1903, %v2575
    %v2592 = vmul.f32 %v1904, %v2576
    %v2593 = vmul.f32 %v1905, %v2577
    %v2594 = vmul.f32 %v1906, %v2578
    %v2595 = vmul.f32 %v1907, %v2579
    %v2596 = vmul.f32 %v1908, %v2580
    %v2597 = vmul.f32 %v1909, %v2581
    %v2598 = vmul.f32 %v1910, %v2582
    %v2599 = vmul.f32 %v1911, %v2583
    %v2600 = vmul.f32 %v1912, %v2584
    %v2601 = vmul.f32 %v1913, %v2585
    %v2602 = vld [vmem:[#allocation10] sm:$0xff]
    %v2603 = vld [vmem:[#allocation10 + $0x8] sm:$0xff]
    %v2604 = vld [vmem:[#allocation10 + $0x10] sm:$0xff]
    %v2605 = vld [vmem:[#allocation10 + $0x18] sm:$0xff]
    %v2606 = vld [vmem:[#allocation10 + $0x20] sm:$0xff]
    %v2607 = vld [vmem:[#allocation10 + $0x28] sm:$0xff]
    %v2608 = vld [vmem:[#allocation10 + $0x30] sm:$0xff]
    %v2609 = vld [vmem:[#allocation10 + $0x38] sm:$0xff]
    %v2610 = vld [vmem:[#allocation10 + $0x40] sm:$0xff]
    %v2611 = vld [vmem:[#allocation10 + $0x48] sm:$0xff]
    %v2612 = vld [vmem:[#allocation10 + $0x50] sm:$0xff]
    %v2613 = vld [vmem:[#allocation10 + $0x58] sm:$0xff]
    %v2614 = vld [vmem:[#allocation10 + $0x60] sm:$0xff]
    %v2615 = vld [vmem:[#allocation10 + $0x68] sm:$0xff]
    %v2616 = vld [vmem:[#allocation10 + $0x70] sm:$0xff]
    %v2617 = vld [vmem:[#allocation10 + $0x78] sm:$0xff]
    %v2618 = vld [vmem:[%s8] sm:$0x1]
    %v2620 = vperm.slane %v2618, 0
    %2622 = vmatpush.msra.mxu0 %v2617
    %2623 = vmatpush.msra.mxu0 %v2616
    %2624 = vmatpush.msra.mxu0 %v2615
    %2625 = vmatpush.msra.mxu0 %v2614
    %2626 = vmatpush.msra.mxu0 %v2613
    %2627 = vmatpush.msra.mxu0 %v2612
    %2628 = vmatpush.msra.mxu0 %v2611
    %2629 = vmatpush.msra.mxu0 %v2610
    %2630 = vmatpush.msra.mxu0 %v2609
    %2631 = vmatpush.msra.mxu0 %v2608
    %2632 = vmatpush.msra.mxu0 %v2607
    %2633 = vmatpush.msra.mxu0 %v2606
    %2634 = vmatpush.msra.mxu0 %v2605
    %2635 = vmatpush.msra.mxu0 %v2604
    %2636 = vmatpush.msra.mxu0 %v2603
    %2637 = vmatpush.msra.mxu0 %v2602
    %2638 = vmatmul.f32.gmra.mxu0 %v2586
    %v2639 = vpop.f32.mrf.mxu0
    %v2640 = vadd.f32 %v2620, %v2639
    %2641 = vmatmul.f32.gmra.mxu0 %v2587
    %v2642 = vpop.f32.mrf.mxu0
    %v2643 = vadd.f32 %v2620, %v2642
    %2644 = vmatmul.f32.gmra.mxu0 %v2588
    %v2645 = vpop.f32.mrf.mxu0
    %v2646 = vadd.f32 %v2620, %v2645
    %2647 = vmatmul.f32.gmra.mxu0 %v2589
    %v2648 = vpop.f32.mrf.mxu0
    %v2649 = vadd.f32 %v2620, %v2648
    %2650 = vmatmul.f32.gmra.mxu0 %v2590
    %v2651 = vpop.f32.mrf.mxu0
    %v2652 = vadd.f32 %v2620, %v2651
    %2653 = vmatmul.f32.gmra.mxu0 %v2591
    %v2654 = vpop.f32.mrf.mxu0
    %v2655 = vadd.f32 %v2620, %v2654
    %2656 = vmatmul.f32.gmra.mxu0 %v2592
    %v2657 = vpop.f32.mrf.mxu0
    %v2658 = vadd.f32 %v2620, %v2657
    %2659 = vmatmul.f32.gmra.mxu0 %v2593
    %v2660 = vpop.f32.mrf.mxu0
    %v2661 = vadd.f32 %v2620, %v2660
    %2662 = vmatmul.f32.gmra.mxu0 %v2594
    %v2663 = vpop.f32.mrf.mxu0
    %v2664 = vadd.f32 %v2620, %v2663
    %2665 = vmatmul.f32.gmra.mxu0 %v2595
    %v2666 = vpop.f32.mrf.mxu0
    %v2667 = vadd.f32 %v2620, %v2666
    %2668 = vmatmul.f32.gmra.mxu0 %v2596
    %v2669 = vpop.f32.mrf.mxu0
    %v2670 = vadd.f32 %v2620, %v2669
    %2671 = vmatmul.f32.gmra.mxu0 %v2597
    %v2672 = vpop.f32.mrf.mxu0
    %v2673 = vadd.f32 %v2620, %v2672
    %2674 = vmatmul.f32.gmra.mxu0 %v2598
    %v2675 = vpop.f32.mrf.mxu0
    %v2676 = vadd.f32 %v2620, %v2675
    %2677 = vmatmul.f32.gmra.mxu0 %v2599
    %v2678 = vpop.f32.mrf.mxu0
    %v2679 = vadd.f32 %v2620, %v2678
    %2680 = vmatmul.f32.gmra.mxu0 %v2600
    %v2681 = vpop.f32.mrf.mxu0
    %v2682 = vadd.f32 %v2620, %v2681
    %2683 = vmatmul.f32.gmra.mxu0 %v2601
    %v2684 = vpop.f32.mrf.mxu0
    %v2685 = vadd.f32 %v2620, %v2684
    %2686 = vdwg.mxu0
    %v2687 = vadd.f32 %v273, %v2640
    %v2688 = vadd.f32 %v276, %v2643
    %v2689 = vadd.f32 %v279, %v2646
    %v2690 = vadd.f32 %v282, %v2649
    %v2691 = vadd.f32 %v285, %v2652
    %v2692 = vadd.f32 %v288, %v2655
    %v2693 = vadd.f32 %v291, %v2658
    %v2694 = vadd.f32 %v294, %v2661
    %v2695 = vadd.f32 %v297, %v2664
    %v2696 = vadd.f32 %v300, %v2667
    %v2697 = vadd.f32 %v303, %v2670
    %v2698 = vadd.f32 %v306, %v2673
    %v2699 = vadd.f32 %v309, %v2676
    %v2700 = vadd.f32 %v312, %v2679
    %v2701 = vadd.f32 %v315, %v2682
    %v2702 = vadd.f32 %v318, %v2685
    %v2703 = vmul.f32 %v2687, 0.5
    %v2704 = vmul.f32 %v2688, 0.5
    %v2705 = vmul.f32 %v2689, 0.5
    %v2706 = vmul.f32 %v2690, 0.5
    %v2707 = vmul.f32 %v2691, 0.5
    %v2708 = vmul.f32 %v2692, 0.5
    %v2709 = vmul.f32 %v2693, 0.5
    %v2710 = vmul.f32 %v2694, 0.5
    %v2711 = vmul.f32 %v2695, 0.5
    %v2712 = vmul.f32 %v2696, 0.5
    %v2713 = vmul.f32 %v2697, 0.5
    %v2714 = vmul.f32 %v2698, 0.5
    %v2715 = vmul.f32 %v2699, 0.5
    %v2716 = vmul.f32 %v2700, 0.5
    %v2717 = vmul.f32 %v2701, 0.5
    %v2718 = vmul.f32 %v2702, 0.5
    %v2719 = vmul.f32 %v2687, 0.70710677
    %v2720 = vmul.f32 %v2688, 0.70710677
    %v2721 = vmul.f32 %v2689, 0.70710677
    %v2722 = vmul.f32 %v2690, 0.70710677
    %v2723 = vmul.f32 %v2691, 0.70710677
    %v2724 = vmul.f32 %v2692, 0.70710677
    %v2725 = vmul.f32 %v2693, 0.70710677
    %v2726 = vmul.f32 %v2694, 0.70710677
    %v2727 = vmul.f32 %v2695, 0.70710677
    %v2728 = vmul.f32 %v2696, 0.70710677
    %v2729 = vmul.f32 %v2697, 0.70710677
    %v2730 = vmul.f32 %v2698, 0.70710677
    %v2731 = vmul.f32 %v2699, 0.70710677
    %v2732 = vmul.f32 %v2700, 0.70710677
    %v2733 = vmul.f32 %v2701, 0.70710677
    %v2734 = vmul.f32 %v2702, 0.70710677
    %v2735 = vmul.f32 %v2719, %v2719
    %v2736 = vmin.f32 16.0, %v2735
    %v2737 = vmul.f32 %v2736, 2.1237322e-06
    %v2738 = vadd.f32 %v2737, 0.00028619796
    %v2739 = vmul.f32 %v2736, %v2738
    %v2740 = vadd.f32 %v2739, 0.0036580483
    %v2741 = vmul.f32 %v2736, %v2740
    %v2742 = vadd.f32 %v2741, 0.05243302
    %v2743 = vmul.f32 %v2736, %v2742
    %v2744 = vadd.f32 %v2743, 0.18741608
    %v2745 = vmul.f32 %v2736, %v2744
    %v2746 = vadd.f32 %v2745, 1.1283791
    %v2747 = vmul.f32 %v2719, %v2746
    %v2748 = vmul.f32 %v2736, 3.8918573e-05
    %v2749 = vadd.f32 %v2748, 0.001143296
    %v2750 = vmul.f32 %v2736, %v2749
    %v2751 = vadd.f32 %v2750, 0.014752088
    %v2752 = vmul.f32 %v2736, %v2751
    %v2753 = vadd.f32 %v2752, 0.112945676
    %v2754 = vmul.f32 %v2736, %v2753
    %v2755 = vadd.f32 %v2754, 0.4994258
    %v2756 = vmul.f32 %v2736, %v2755
    %v2757 = vadd.f32 %v2756, 1.0
    %v2758 = vrcp.pop %v2757
    %v2759 = vmul.f32 %v2757, %v2758
    %v2760 = vsub.f32 1.0, %v2759
    %v2761 = vmul.f32 %v2758, %v2760
    %v2762 = vadd.f32 %v2758, %v2761
    %vm2763 = vweird.f32 %v2757
    %vm2764 = vweird.f32 %v2758
    %vm2765 = vmor %vm2763, %vm2764
    %v2766 = vsel %vm2765, %v2758, %v2762
    %v2767 = vand.u32 2147483647, %v2757
    %vm2768 = vcmp.eq.f32.partialorder %v2767, 8.507059e+37
    %v2769 = vand.u32 %v2757, 2147483648
    %v2770 = vor.u32 1.1754944e-38, %v2769
    %v2771 = vsel %vm2768, %v2770, %v2766
    %v2772 = vmul.f32 %v2747, %v2771
    %v2773 = vmin.f32 %v2772, 1.0
    %v2774 = vmax.f32 %v2773, -1.0
    %v2775 = vmul.f32 %v2720, %v2720
    %v2776 = vmin.f32 16.0, %v2775
    %v2777 = vmul.f32 %v2776, 2.1237322e-06
    %v2778 = vadd.f32 %v2777, 0.00028619796
    %v2779 = vmul.f32 %v2776, %v2778
    %v2780 = vadd.f32 %v2779, 0.0036580483
    %v2781 = vmul.f32 %v2776, %v2780
    %v2782 = vadd.f32 %v2781, 0.05243302
    %v2783 = vmul.f32 %v2776, %v2782
    %v2784 = vadd.f32 %v2783, 0.18741608
    %v2785 = vmul.f32 %v2776, %v2784
    %v2786 = vadd.f32 %v2785, 1.1283791
    %v2787 = vmul.f32 %v2720, %v2786
    %v2788 = vmul.f32 %v2776, 3.8918573e-05
    %v2789 = vadd.f32 %v2788, 0.001143296
    %v2790 = vmul.f32 %v2776, %v2789
    %v2791 = vadd.f32 %v2790, 0.014752088
    %v2792 = vmul.f32 %v2776, %v2791
    %v2793 = vadd.f32 %v2792, 0.112945676
    %v2794 = vmul.f32 %v2776, %v2793
    %v2795 = vadd.f32 %v2794, 0.4994258
    %v2796 = vmul.f32 %v2776, %v2795
    %v2797 = vadd.f32 %v2796, 1.0
    %v2798 = vrcp.pop %v2797
    %v2799 = vmul.f32 %v2797, %v2798
    %v2800 = vsub.f32 1.0, %v2799
    %v2801 = vmul.f32 %v2798, %v2800
    %v2802 = vadd.f32 %v2798, %v2801
    %vm2803 = vweird.f32 %v2797
    %vm2804 = vweird.f32 %v2798
    %vm2805 = vmor %vm2803, %vm2804
    %v2806 = vsel %vm2805, %v2798, %v2802
    %v2807 = vand.u32 2147483647, %v2797
    %vm2808 = vcmp.eq.f32.partialorder %v2807, 8.507059e+37
    %v2809 = vand.u32 %v2797, 2147483648
    %v2810 = vor.u32 1.1754944e-38, %v2809
    %v2811 = vsel %vm2808, %v2810, %v2806
    %v2812 = vmul.f32 %v2787, %v2811
    %v2813 = vmin.f32 %v2812, 1.0
    %v2814 = vmax.f32 %v2813, -1.0
    %v2815 = vmul.f32 %v2721, %v2721
    %v2816 = vmin.f32 16.0, %v2815
    %v2817 = vmul.f32 %v2816, 2.1237322e-06
    %v2818 = vadd.f32 %v2817, 0.00028619796
    %v2819 = vmul.f32 %v2816, %v2818
    %v2820 = vadd.f32 %v2819, 0.0036580483
    %v2821 = vmul.f32 %v2816, %v2820
    %v2822 = vadd.f32 %v2821, 0.05243302
    %v2823 = vmul.f32 %v2816, %v2822
    %v2824 = vadd.f32 %v2823, 0.18741608
    %v2825 = vmul.f32 %v2816, %v2824
    %v2826 = vadd.f32 %v2825, 1.1283791
    %v2827 = vmul.f32 %v2721, %v2826
    %v2828 = vmul.f32 %v2816, 3.8918573e-05
    %v2829 = vadd.f32 %v2828, 0.001143296
    %v2830 = vmul.f32 %v2816, %v2829
    %v2831 = vadd.f32 %v2830, 0.014752088
    %v2832 = vmul.f32 %v2816, %v2831
    %v2833 = vadd.f32 %v2832, 0.112945676
    %v2834 = vmul.f32 %v2816, %v2833
    %v2835 = vadd.f32 %v2834, 0.4994258
    %v2836 = vmul.f32 %v2816, %v2835
    %v2837 = vadd.f32 %v2836, 1.0
    %v2838 = vrcp.pop %v2837
    %v2839 = vmul.f32 %v2837, %v2838
    %v2840 = vsub.f32 1.0, %v2839
    %v2841 = vmul.f32 %v2838, %v2840
    %v2842 = vadd.f32 %v2838, %v2841
    %vm2843 = vweird.f32 %v2837
    %vm2844 = vweird.f32 %v2838
    %vm2845 = vmor %vm2843, %vm2844
    %v2846 = vsel %vm2845, %v2838, %v2842
    %v2847 = vand.u32 2147483647, %v2837
    %vm2848 = vcmp.eq.f32.partialorder %v2847, 8.507059e+37
    %v2849 = vand.u32 %v2837, 2147483648
    %v2850 = vor.u32 1.1754944e-38, %v2849
    %v2851 = vsel %vm2848, %v2850, %v2846
    %v2852 = vmul.f32 %v2827, %v2851
    %v2853 = vmin.f32 %v2852, 1.0
    %v2854 = vmax.f32 %v2853, -1.0
    %v2855 = vmul.f32 %v2722, %v2722
    %v2856 = vmin.f32 16.0, %v2855
    %v2857 = vmul.f32 %v2856, 2.1237322e-06
    %v2858 = vadd.f32 %v2857, 0.00028619796
    %v2859 = vmul.f32 %v2856, %v2858
    %v2860 = vadd.f32 %v2859, 0.0036580483
    %v2861 = vmul.f32 %v2856, %v2860
    %v2862 = vadd.f32 %v2861, 0.05243302
    %v2863 = vmul.f32 %v2856, %v2862
    %v2864 = vadd.f32 %v2863, 0.18741608
    %v2865 = vmul.f32 %v2856, %v2864
    %v2866 = vadd.f32 %v2865, 1.1283791
    %v2867 = vmul.f32 %v2722, %v2866
    %v2868 = vmul.f32 %v2856, 3.8918573e-05
    %v2869 = vadd.f32 %v2868, 0.001143296
    %v2870 = vmul.f32 %v2856, %v2869
    %v2871 = vadd.f32 %v2870, 0.014752088
    %v2872 = vmul.f32 %v2856, %v2871
    %v2873 = vadd.f32 %v2872, 0.112945676
    %v2874 = vmul.f32 %v2856, %v2873
    %v2875 = vadd.f32 %v2874, 0.4994258
    %v2876 = vmul.f32 %v2856, %v2875
    %v2877 = vadd.f32 %v2876, 1.0
    %v2878 = vrcp.pop %v2877
    %v2879 = vmul.f32 %v2877, %v2878
    %v2880 = vsub.f32 1.0, %v2879
    %v2881 = vmul.f32 %v2878, %v2880
    %v2882 = vadd.f32 %v2878, %v2881
    %vm2883 = vweird.f32 %v2877
    %vm2884 = vweird.f32 %v2878
    %vm2885 = vmor %vm2883, %vm2884
    %v2886 = vsel %vm2885, %v2878, %v2882
    %v2887 = vand.u32 2147483647, %v2877
    %vm2888 = vcmp.eq.f32.partialorder %v2887, 8.507059e+37
    %v2889 = vand.u32 %v2877, 2147483648
    %v2890 = vor.u32 1.1754944e-38, %v2889
    %v2891 = vsel %vm2888, %v2890, %v2886
    %v2892 = vmul.f32 %v2867, %v2891
    %v2893 = vmin.f32 %v2892, 1.0
    %v2894 = vmax.f32 %v2893, -1.0
    %v2895 = vmul.f32 %v2723, %v2723
    %v2896 = vmin.f32 16.0, %v2895
    %v2897 = vmul.f32 %v2896, 2.1237322e-06
    %v2898 = vadd.f32 %v2897, 0.00028619796
    %v2899 = vmul.f32 %v2896, %v2898
    %v2900 = vadd.f32 %v2899, 0.0036580483
    %v2901 = vmul.f32 %v2896, %v2900
    %v2902 = vadd.f32 %v2901, 0.05243302
    %v2903 = vmul.f32 %v2896, %v2902
    %v2904 = vadd.f32 %v2903, 0.18741608
    %v2905 = vmul.f32 %v2896, %v2904
    %v2906 = vadd.f32 %v2905, 1.1283791
    %v2907 = vmul.f32 %v2723, %v2906
    %v2908 = vmul.f32 %v2896, 3.8918573e-05
    %v2909 = vadd.f32 %v2908, 0.001143296
    %v2910 = vmul.f32 %v2896, %v2909
    %v2911 = vadd.f32 %v2910, 0.014752088
    %v2912 = vmul.f32 %v2896, %v2911
    %v2913 = vadd.f32 %v2912, 0.112945676
    %v2914 = vmul.f32 %v2896, %v2913
    %v2915 = vadd.f32 %v2914, 0.4994258
    %v2916 = vmul.f32 %v2896, %v2915
    %v2917 = vadd.f32 %v2916, 1.0
    %v2918 = vrcp.pop %v2917
    %v2919 = vmul.f32 %v2917, %v2918
    %v2920 = vsub.f32 1.0, %v2919
    %v2921 = vmul.f32 %v2918, %v2920
    %v2922 = vadd.f32 %v2918, %v2921
    %vm2923 = vweird.f32 %v2917
    %vm2924 = vweird.f32 %v2918
    %vm2925 = vmor %vm2923, %vm2924
    %v2926 = vsel %vm2925, %v2918, %v2922
    %v2927 = vand.u32 2147483647, %v2917
    %vm2928 = vcmp.eq.f32.partialorder %v2927, 8.507059e+37
    %v2929 = vand.u32 %v2917, 2147483648
    %v2930 = vor.u32 1.1754944e-38, %v2929
    %v2931 = vsel %vm2928, %v2930, %v2926
    %v2932 = vmul.f32 %v2907, %v2931
    %v2933 = vmin.f32 %v2932, 1.0
    %v2934 = vmax.f32 %v2933, -1.0
    %v2935 = vmul.f32 %v2724, %v2724
    %v2936 = vmin.f32 16.0, %v2935
    %v2937 = vmul.f32 %v2936, 2.1237322e-06
    %v2938 = vadd.f32 %v2937, 0.00028619796
    %v2939 = vmul.f32 %v2936, %v2938
    %v2940 = vadd.f32 %v2939, 0.0036580483
    %v2941 = vmul.f32 %v2936, %v2940
    %v2942 = vadd.f32 %v2941, 0.05243302
    %v2943 = vmul.f32 %v2936, %v2942
    %v2944 = vadd.f32 %v2943, 0.18741608
    %v2945 = vmul.f32 %v2936, %v2944
    %v2946 = vadd.f32 %v2945, 1.1283791
    %v2947 = vmul.f32 %v2724, %v2946
    %v2948 = vmul.f32 %v2936, 3.8918573e-05
    %v2949 = vadd.f32 %v2948, 0.001143296
    %v2950 = vmul.f32 %v2936, %v2949
    %v2951 = vadd.f32 %v2950, 0.014752088
    %v2952 = vmul.f32 %v2936, %v2951
    %v2953 = vadd.f32 %v2952, 0.112945676
    %v2954 = vmul.f32 %v2936, %v2953
    %v2955 = vadd.f32 %v2954, 0.4994258
    %v2956 = vmul.f32 %v2936, %v2955
    %v2957 = vadd.f32 %v2956, 1.0
    %v2958 = vrcp.pop %v2957
    %v2959 = vmul.f32 %v2957, %v2958
    %v2960 = vsub.f32 1.0, %v2959
    %v2961 = vmul.f32 %v2958, %v2960
    %v2962 = vadd.f32 %v2958, %v2961
    %vm2963 = vweird.f32 %v2957
    %vm2964 = vweird.f32 %v2958
    %vm2965 = vmor %vm2963, %vm2964
    %v2966 = vsel %vm2965, %v2958, %v2962
    %v2967 = vand.u32 2147483647, %v2957
    %vm2968 = vcmp.eq.f32.partialorder %v2967, 8.507059e+37
    %v2969 = vand.u32 %v2957, 2147483648
    %v2970 = vor.u32 1.1754944e-38, %v2969
    %v2971 = vsel %vm2968, %v2970, %v2966
    %v2972 = vmul.f32 %v2947, %v2971
    %v2973 = vmin.f32 %v2972, 1.0
    %v2974 = vmax.f32 %v2973, -1.0
    %v2975 = vmul.f32 %v2725, %v2725
    %v2976 = vmin.f32 16.0, %v2975
    %v2977 = vmul.f32 %v2976, 2.1237322e-06
    %v2978 = vadd.f32 %v2977, 0.00028619796
    %v2979 = vmul.f32 %v2976, %v2978
    %v2980 = vadd.f32 %v2979, 0.0036580483
    %v2981 = vmul.f32 %v2976, %v2980
    %v2982 = vadd.f32 %v2981, 0.05243302
    %v2983 = vmul.f32 %v2976, %v2982
    %v2984 = vadd.f32 %v2983, 0.18741608
    %v2985 = vmul.f32 %v2976, %v2984
    %v2986 = vadd.f32 %v2985, 1.1283791
    %v2987 = vmul.f32 %v2725, %v2986
    %v2988 = vmul.f32 %v2976, 3.8918573e-05
    %v2989 = vadd.f32 %v2988, 0.001143296
    %v2990 = vmul.f32 %v2976, %v2989
    %v2991 = vadd.f32 %v2990, 0.014752088
    %v2992 = vmul.f32 %v2976, %v2991
    %v2993 = vadd.f32 %v2992, 0.112945676
    %v2994 = vmul.f32 %v2976, %v2993
    %v2995 = vadd.f32 %v2994, 0.4994258
    %v2996 = vmul.f32 %v2976, %v2995
    %v2997 = vadd.f32 %v2996, 1.0
    %v2998 = vrcp.pop %v2997
    %v2999 = vmul.f32 %v2997, %v2998
    %v3000 = vsub.f32 1.0, %v2999
    %v3001 = vmul.f32 %v2998, %v3000
    %v3002 = vadd.f32 %v2998, %v3001
    %vm3003 = vweird.f32 %v2997
    %vm3004 = vweird.f32 %v2998
    %vm3005 = vmor %vm3003, %vm3004
    %v3006 = vsel %vm3005, %v2998, %v3002
    %v3007 = vand.u32 2147483647, %v2997
    %vm3008 = vcmp.eq.f32.partialorder %v3007, 8.507059e+37
    %v3009 = vand.u32 %v2997, 2147483648
    %v3010 = vor.u32 1.1754944e-38, %v3009
    %v3011 = vsel %vm3008, %v3010, %v3006
    %v3012 = vmul.f32 %v2987, %v3011
    %v3013 = vmin.f32 %v3012, 1.0
    %v3014 = vmax.f32 %v3013, -1.0
    %v3015 = vmul.f32 %v2726, %v2726
    %v3016 = vmin.f32 16.0, %v3015
    %v3017 = vmul.f32 %v3016, 2.1237322e-06
    %v3018 = vadd.f32 %v3017, 0.00028619796
    %v3019 = vmul.f32 %v3016, %v3018
    %v3020 = vadd.f32 %v3019, 0.0036580483
    %v3021 = vmul.f32 %v3016, %v3020
    %v3022 = vadd.f32 %v3021, 0.05243302
    %v3023 = vmul.f32 %v3016, %v3022
    %v3024 = vadd.f32 %v3023, 0.18741608
    %v3025 = vmul.f32 %v3016, %v3024
    %v3026 = vadd.f32 %v3025, 1.1283791
    %v3027 = vmul.f32 %v2726, %v3026
    %v3028 = vmul.f32 %v3016, 3.8918573e-05
    %v3029 = vadd.f32 %v3028, 0.001143296
    %v3030 = vmul.f32 %v3016, %v3029
    %v3031 = vadd.f32 %v3030, 0.014752088
    %v3032 = vmul.f32 %v3016, %v3031
    %v3033 = vadd.f32 %v3032, 0.112945676
    %v3034 = vmul.f32 %v3016, %v3033
    %v3035 = vadd.f32 %v3034, 0.4994258
    %v3036 = vmul.f32 %v3016, %v3035
    %v3037 = vadd.f32 %v3036, 1.0
    %v3038 = vrcp.pop %v3037
    %v3039 = vmul.f32 %v3037, %v3038
    %v3040 = vsub.f32 1.0, %v3039
    %v3041 = vmul.f32 %v3038, %v3040
    %v3042 = vadd.f32 %v3038, %v3041
    %vm3043 = vweird.f32 %v3037
    %vm3044 = vweird.f32 %v3038
    %vm3045 = vmor %vm3043, %vm3044
    %v3046 = vsel %vm3045, %v3038, %v3042
    %v3047 = vand.u32 2147483647, %v3037
    %vm3048 = vcmp.eq.f32.partialorder %v3047, 8.507059e+37
    %v3049 = vand.u32 %v3037, 2147483648
    %v3050 = vor.u32 1.1754944e-38, %v3049
    %v3051 = vsel %vm3048, %v3050, %v3046
    %v3052 = vmul.f32 %v3027, %v3051
    %v3053 = vmin.f32 %v3052, 1.0
    %v3054 = vmax.f32 %v3053, -1.0
    %v3055 = vmul.f32 %v2727, %v2727
    %v3056 = vmin.f32 16.0, %v3055
    %v3057 = vmul.f32 %v3056, 2.1237322e-06
    %v3058 = vadd.f32 %v3057, 0.00028619796
    %v3059 = vmul.f32 %v3056, %v3058
    %v3060 = vadd.f32 %v3059, 0.0036580483
    %v3061 = vmul.f32 %v3056, %v3060
    %v3062 = vadd.f32 %v3061, 0.05243302
    %v3063 = vmul.f32 %v3056, %v3062
    %v3064 = vadd.f32 %v3063, 0.18741608
    %v3065 = vmul.f32 %v3056, %v3064
    %v3066 = vadd.f32 %v3065, 1.1283791
    %v3067 = vmul.f32 %v2727, %v3066
    %v3068 = vmul.f32 %v3056, 3.8918573e-05
    %v3069 = vadd.f32 %v3068, 0.001143296
    %v3070 = vmul.f32 %v3056, %v3069
    %v3071 = vadd.f32 %v3070, 0.014752088
    %v3072 = vmul.f32 %v3056, %v3071
    %v3073 = vadd.f32 %v3072, 0.112945676
    %v3074 = vmul.f32 %v3056, %v3073
    %v3075 = vadd.f32 %v3074, 0.4994258
    %v3076 = vmul.f32 %v3056, %v3075
    %v3077 = vadd.f32 %v3076, 1.0
    %v3078 = vrcp.pop %v3077
    %v3079 = vmul.f32 %v3077, %v3078
    %v3080 = vsub.f32 1.0, %v3079
    %v3081 = vmul.f32 %v3078, %v3080
    %v3082 = vadd.f32 %v3078, %v3081
    %vm3083 = vweird.f32 %v3077
    %vm3084 = vweird.f32 %v3078
    %vm3085 = vmor %vm3083, %vm3084
    %v3086 = vsel %vm3085, %v3078, %v3082
    %v3087 = vand.u32 2147483647, %v3077
    %vm3088 = vcmp.eq.f32.partialorder %v3087, 8.507059e+37
    %v3089 = vand.u32 %v3077, 2147483648
    %v3090 = vor.u32 1.1754944e-38, %v3089
    %v3091 = vsel %vm3088, %v3090, %v3086
    %v3092 = vmul.f32 %v3067, %v3091
    %v3093 = vmin.f32 %v3092, 1.0
    %v3094 = vmax.f32 %v3093, -1.0
    %v3095 = vmul.f32 %v2728, %v2728
    %v3096 = vmin.f32 16.0, %v3095
    %v3097 = vmul.f32 %v3096, 2.1237322e-06
    %v3098 = vadd.f32 %v3097, 0.00028619796
    %v3099 = vmul.f32 %v3096, %v3098
    %v3100 = vadd.f32 %v3099, 0.0036580483
    %v3101 = vmul.f32 %v3096, %v3100
    %v3102 = vadd.f32 %v3101, 0.05243302
    %v3103 = vmul.f32 %v3096, %v3102
    %v3104 = vadd.f32 %v3103, 0.18741608
    %v3105 = vmul.f32 %v3096, %v3104
    %v3106 = vadd.f32 %v3105, 1.1283791
    %v3107 = vmul.f32 %v2728, %v3106
    %v3108 = vmul.f32 %v3096, 3.8918573e-05
    %v3109 = vadd.f32 %v3108, 0.001143296
    %v3110 = vmul.f32 %v3096, %v3109
    %v3111 = vadd.f32 %v3110, 0.014752088
    %v3112 = vmul.f32 %v3096, %v3111
    %v3113 = vadd.f32 %v3112, 0.112945676
    %v3114 = vmul.f32 %v3096, %v3113
    %v3115 = vadd.f32 %v3114, 0.4994258
    %v3116 = vmul.f32 %v3096, %v3115
    %v3117 = vadd.f32 %v3116, 1.0
    %v3118 = vrcp.pop %v3117
    %v3119 = vmul.f32 %v3117, %v3118
    %v3120 = vsub.f32 1.0, %v3119
    %v3121 = vmul.f32 %v3118, %v3120
    %v3122 = vadd.f32 %v3118, %v3121
    %vm3123 = vweird.f32 %v3117
    %vm3124 = vweird.f32 %v3118
    %vm3125 = vmor %vm3123, %vm3124
    %v3126 = vsel %vm3125, %v3118, %v3122
    %v3127 = vand.u32 2147483647, %v3117
    %vm3128 = vcmp.eq.f32.partialorder %v3127, 8.507059e+37
    %v3129 = vand.u32 %v3117, 2147483648
    %v3130 = vor.u32 1.1754944e-38, %v3129
    %v3131 = vsel %vm3128, %v3130, %v3126
    %v3132 = vmul.f32 %v3107, %v3131
    %v3133 = vmin.f32 %v3132, 1.0
    %v3134 = vmax.f32 %v3133, -1.0
    %v3135 = vmul.f32 %v2729, %v2729
    %v3136 = vmin.f32 16.0, %v3135
    %v3137 = vmul.f32 %v3136, 2.1237322e-06
    %v3138 = vadd.f32 %v3137, 0.00028619796
    %v3139 = vmul.f32 %v3136, %v3138
    %v3140 = vadd.f32 %v3139, 0.0036580483
    %v3141 = vmul.f32 %v3136, %v3140
    %v3142 = vadd.f32 %v3141, 0.05243302
    %v3143 = vmul.f32 %v3136, %v3142
    %v3144 = vadd.f32 %v3143, 0.18741608
    %v3145 = vmul.f32 %v3136, %v3144
    %v3146 = vadd.f32 %v3145, 1.1283791
    %v3147 = vmul.f32 %v2729, %v3146
    %v3148 = vmul.f32 %v3136, 3.8918573e-05
    %v3149 = vadd.f32 %v3148, 0.001143296
    %v3150 = vmul.f32 %v3136, %v3149
    %v3151 = vadd.f32 %v3150, 0.014752088
    %v3152 = vmul.f32 %v3136, %v3151
    %v3153 = vadd.f32 %v3152, 0.112945676
    %v3154 = vmul.f32 %v3136, %v3153
    %v3155 = vadd.f32 %v3154, 0.4994258
    %v3156 = vmul.f32 %v3136, %v3155
    %v3157 = vadd.f32 %v3156, 1.0
    %v3158 = vrcp.pop %v3157
    %v3159 = vmul.f32 %v3157, %v3158
    %v3160 = vsub.f32 1.0, %v3159
    %v3161 = vmul.f32 %v3158, %v3160
    %v3162 = vadd.f32 %v3158, %v3161
    %vm3163 = vweird.f32 %v3157
    %vm3164 = vweird.f32 %v3158
    %vm3165 = vmor %vm3163, %vm3164
    %v3166 = vsel %vm3165, %v3158, %v3162
    %v3167 = vand.u32 2147483647, %v3157
    %vm3168 = vcmp.eq.f32.partialorder %v3167, 8.507059e+37
    %v3169 = vand.u32 %v3157, 2147483648
    %v3170 = vor.u32 1.1754944e-38, %v3169
    %v3171 = vsel %vm3168, %v3170, %v3166
    %v3172 = vmul.f32 %v3147, %v3171
    %v3173 = vmin.f32 %v3172, 1.0
    %v3174 = vmax.f32 %v3173, -1.0
    %v3175 = vmul.f32 %v2730, %v2730
    %v3176 = vmin.f32 16.0, %v3175
    %v3177 = vmul.f32 %v3176, 2.1237322e-06
    %v3178 = vadd.f32 %v3177, 0.00028619796
    %v3179 = vmul.f32 %v3176, %v3178
    %v3180 = vadd.f32 %v3179, 0.0036580483
    %v3181 = vmul.f32 %v3176, %v3180
    %v3182 = vadd.f32 %v3181, 0.05243302
    %v3183 = vmul.f32 %v3176, %v3182
    %v3184 = vadd.f32 %v3183, 0.18741608
    %v3185 = vmul.f32 %v3176, %v3184
    %v3186 = vadd.f32 %v3185, 1.1283791
    %v3187 = vmul.f32 %v2730, %v3186
    %v3188 = vmul.f32 %v3176, 3.8918573e-05
    %v3189 = vadd.f32 %v3188, 0.001143296
    %v3190 = vmul.f32 %v3176, %v3189
    %v3191 = vadd.f32 %v3190, 0.014752088
    %v3192 = vmul.f32 %v3176, %v3191
    %v3193 = vadd.f32 %v3192, 0.112945676
    %v3194 = vmul.f32 %v3176, %v3193
    %v3195 = vadd.f32 %v3194, 0.4994258
    %v3196 = vmul.f32 %v3176, %v3195
    %v3197 = vadd.f32 %v3196, 1.0
    %v3198 = vrcp.pop %v3197
    %v3199 = vmul.f32 %v3197, %v3198
    %v3200 = vsub.f32 1.0, %v3199
    %v3201 = vmul.f32 %v3198, %v3200
    %v3202 = vadd.f32 %v3198, %v3201
    %vm3203 = vweird.f32 %v3197
    %vm3204 = vweird.f32 %v3198
    %vm3205 = vmor %vm3203, %vm3204
    %v3206 = vsel %vm3205, %v3198, %v3202
    %v3207 = vand.u32 2147483647, %v3197
    %vm3208 = vcmp.eq.f32.partialorder %v3207, 8.507059e+37
    %v3209 = vand.u32 %v3197, 2147483648
    %v3210 = vor.u32 1.1754944e-38, %v3209
    %v3211 = vsel %vm3208, %v3210, %v3206
    %v3212 = vmul.f32 %v3187, %v3211
    %v3213 = vmin.f32 %v3212, 1.0
    %v3214 = vmax.f32 %v3213, -1.0
    %v3215 = vmul.f32 %v2731, %v2731
    %v3216 = vmin.f32 16.0, %v3215
    %v3217 = vmul.f32 %v3216, 2.1237322e-06
    %v3218 = vadd.f32 %v3217, 0.00028619796
    %v3219 = vmul.f32 %v3216, %v3218
    %v3220 = vadd.f32 %v3219, 0.0036580483
    %v3221 = vmul.f32 %v3216, %v3220
    %v3222 = vadd.f32 %v3221, 0.05243302
    %v3223 = vmul.f32 %v3216, %v3222
    %v3224 = vadd.f32 %v3223, 0.18741608
    %v3225 = vmul.f32 %v3216, %v3224
    %v3226 = vadd.f32 %v3225, 1.1283791
    %v3227 = vmul.f32 %v2731, %v3226
    %v3228 = vmul.f32 %v3216, 3.8918573e-05
    %v3229 = vadd.f32 %v3228, 0.001143296
    %v3230 = vmul.f32 %v3216, %v3229
    %v3231 = vadd.f32 %v3230, 0.014752088
    %v3232 = vmul.f32 %v3216, %v3231
    %v3233 = vadd.f32 %v3232, 0.112945676
    %v3234 = vmul.f32 %v3216, %v3233
    %v3235 = vadd.f32 %v3234, 0.4994258
    %v3236 = vmul.f32 %v3216, %v3235
    %v3237 = vadd.f32 %v3236, 1.0
    %v3238 = vrcp.pop %v3237
    %v3239 = vmul.f32 %v3237, %v3238
    %v3240 = vsub.f32 1.0, %v3239
    %v3241 = vmul.f32 %v3238, %v3240
    %v3242 = vadd.f32 %v3238, %v3241
    %vm3243 = vweird.f32 %v3237
    %vm3244 = vweird.f32 %v3238
    %vm3245 = vmor %vm3243, %vm3244
    %v3246 = vsel %vm3245, %v3238, %v3242
    %v3247 = vand.u32 2147483647, %v3237
    %vm3248 = vcmp.eq.f32.partialorder %v3247, 8.507059e+37
    %v3249 = vand.u32 %v3237, 2147483648
    %v3250 = vor.u32 1.1754944e-38, %v3249
    %v3251 = vsel %vm3248, %v3250, %v3246
    %v3252 = vmul.f32 %v3227, %v3251
    %v3253 = vmin.f32 %v3252, 1.0
    %v3254 = vmax.f32 %v3253, -1.0
    %v3255 = vmul.f32 %v2732, %v2732
    %v3256 = vmin.f32 16.0, %v3255
    %v3257 = vmul.f32 %v3256, 2.1237322e-06
    %v3258 = vadd.f32 %v3257, 0.00028619796
    %v3259 = vmul.f32 %v3256, %v3258
    %v3260 = vadd.f32 %v3259, 0.0036580483
    %v3261 = vmul.f32 %v3256, %v3260
    %v3262 = vadd.f32 %v3261, 0.05243302
    %v3263 = vmul.f32 %v3256, %v3262
    %v3264 = vadd.f32 %v3263, 0.18741608
    %v3265 = vmul.f32 %v3256, %v3264
    %v3266 = vadd.f32 %v3265, 1.1283791
    %v3267 = vmul.f32 %v2732, %v3266
    %v3268 = vmul.f32 %v3256, 3.8918573e-05
    %v3269 = vadd.f32 %v3268, 0.001143296
    %v3270 = vmul.f32 %v3256, %v3269
    %v3271 = vadd.f32 %v3270, 0.014752088
    %v3272 = vmul.f32 %v3256, %v3271
    %v3273 = vadd.f32 %v3272, 0.112945676
    %v3274 = vmul.f32 %v3256, %v3273
    %v3275 = vadd.f32 %v3274, 0.4994258
    %v3276 = vmul.f32 %v3256, %v3275
    %v3277 = vadd.f32 %v3276, 1.0
    %v3278 = vrcp.pop %v3277
    %v3279 = vmul.f32 %v3277, %v3278
    %v3280 = vsub.f32 1.0, %v3279
    %v3281 = vmul.f32 %v3278, %v3280
    %v3282 = vadd.f32 %v3278, %v3281
    %vm3283 = vweird.f32 %v3277
    %vm3284 = vweird.f32 %v3278
    %vm3285 = vmor %vm3283, %vm3284
    %v3286 = vsel %vm3285, %v3278, %v3282
    %v3287 = vand.u32 2147483647, %v3277
    %vm3288 = vcmp.eq.f32.partialorder %v3287, 8.507059e+37
    %v3289 = vand.u32 %v3277, 2147483648
    %v3290 = vor.u32 1.1754944e-38, %v3289
    %v3291 = vsel %vm3288, %v3290, %v3286
    %v3292 = vmul.f32 %v3267, %v3291
    %v3293 = vmin.f32 %v3292, 1.0
    %v3294 = vmax.f32 %v3293, -1.0
    %v3295 = vmul.f32 %v2733, %v2733
    %v3296 = vmin.f32 16.0, %v3295
    %v3297 = vmul.f32 %v3296, 2.1237322e-06
    %v3298 = vadd.f32 %v3297, 0.00028619796
    %v3299 = vmul.f32 %v3296, %v3298
    %v3300 = vadd.f32 %v3299, 0.0036580483
    %v3301 = vmul.f32 %v3296, %v3300
    %v3302 = vadd.f32 %v3301, 0.05243302
    %v3303 = vmul.f32 %v3296, %v3302
    %v3304 = vadd.f32 %v3303, 0.18741608
    %v3305 = vmul.f32 %v3296, %v3304
    %v3306 = vadd.f32 %v3305, 1.1283791
    %v3307 = vmul.f32 %v2733, %v3306
    %v3308 = vmul.f32 %v3296, 3.8918573e-05
    %v3309 = vadd.f32 %v3308, 0.001143296
    %v3310 = vmul.f32 %v3296, %v3309
    %v3311 = vadd.f32 %v3310, 0.014752088
    %v3312 = vmul.f32 %v3296, %v3311
    %v3313 = vadd.f32 %v3312, 0.112945676
    %v3314 = vmul.f32 %v3296, %v3313
    %v3315 = vadd.f32 %v3314, 0.4994258
    %v3316 = vmul.f32 %v3296, %v3315
    %v3317 = vadd.f32 %v3316, 1.0
    %v3318 = vrcp.pop %v3317
    %v3319 = vmul.f32 %v3317, %v3318
    %v3320 = vsub.f32 1.0, %v3319
    %v3321 = vmul.f32 %v3318, %v3320
    %v3322 = vadd.f32 %v3318, %v3321
    %vm3323 = vweird.f32 %v3317
    %vm3324 = vweird.f32 %v3318
    %vm3325 = vmor %vm3323, %vm3324
    %v3326 = vsel %vm3325, %v3318, %v3322
    %v3327 = vand.u32 2147483647, %v3317
    %vm3328 = vcmp.eq.f32.partialorder %v3327, 8.507059e+37
    %v3329 = vand.u32 %v3317, 2147483648
    %v3330 = vor.u32 1.1754944e-38, %v3329
    %v3331 = vsel %vm3328, %v3330, %v3326
    %v3332 = vmul.f32 %v3307, %v3331
    %v3333 = vmin.f32 %v3332, 1.0
    %v3334 = vmax.f32 %v3333, -1.0
    %v3335 = vmul.f32 %v2734, %v2734
    %v3336 = vmin.f32 16.0, %v3335
    %v3337 = vmul.f32 %v3336, 2.1237322e-06
    %v3338 = vadd.f32 %v3337, 0.00028619796
    %v3339 = vmul.f32 %v3336, %v3338
    %v3340 = vadd.f32 %v3339, 0.0036580483
    %v3341 = vmul.f32 %v3336, %v3340
    %v3342 = vadd.f32 %v3341, 0.05243302
    %v3343 = vmul.f32 %v3336, %v3342
    %v3344 = vadd.f32 %v3343, 0.18741608
    %v3345 = vmul.f32 %v3336, %v3344
    %v3346 = vadd.f32 %v3345, 1.1283791
    %v3347 = vmul.f32 %v2734, %v3346
    %v3348 = vmul.f32 %v3336, 3.8918573e-05
    %v3349 = vadd.f32 %v3348, 0.001143296
    %v3350 = vmul.f32 %v3336, %v3349
    %v3351 = vadd.f32 %v3350, 0.014752088
    %v3352 = vmul.f32 %v3336, %v3351
    %v3353 = vadd.f32 %v3352, 0.112945676
    %v3354 = vmul.f32 %v3336, %v3353
    %v3355 = vadd.f32 %v3354, 0.4994258
    %v3356 = vmul.f32 %v3336, %v3355
    %v3357 = vadd.f32 %v3356, 1.0
    %v3358 = vrcp.pop %v3357
    %v3359 = vmul.f32 %v3357, %v3358
    %v3360 = vsub.f32 1.0, %v3359
    %v3361 = vmul.f32 %v3358, %v3360
    %v3362 = vadd.f32 %v3358, %v3361
    %vm3363 = vweird.f32 %v3357
    %vm3364 = vweird.f32 %v3358
    %vm3365 = vmor %vm3363, %vm3364
    %v3366 = vsel %vm3365, %v3358, %v3362
    %v3367 = vand.u32 2147483647, %v3357
    %vm3368 = vcmp.eq.f32.partialorder %v3367, 8.507059e+37
    %v3369 = vand.u32 %v3357, 2147483648
    %v3370 = vor.u32 1.1754944e-38, %v3369
    %v3371 = vsel %vm3368, %v3370, %v3366
    %v3372 = vmul.f32 %v3347, %v3371
    %v3373 = vmin.f32 %v3372, 1.0
    %v3374 = vmax.f32 %v3373, -1.0
    %v3375 = vadd.f32 %v2774, 1.0
    %v3376 = vadd.f32 %v2814, 1.0
    %v3377 = vadd.f32 %v2854, 1.0
    %v3378 = vadd.f32 %v2894, 1.0
    %v3379 = vadd.f32 %v2934, 1.0
    %v3380 = vadd.f32 %v2974, 1.0
    %v3381 = vadd.f32 %v3014, 1.0
    %v3382 = vadd.f32 %v3054, 1.0
    %v3383 = vadd.f32 %v3094, 1.0
    %v3384 = vadd.f32 %v3134, 1.0
    %v3385 = vadd.f32 %v3174, 1.0
    %v3386 = vadd.f32 %v3214, 1.0
    %v3387 = vadd.f32 %v3254, 1.0
    %v3388 = vadd.f32 %v3294, 1.0
    %v3389 = vadd.f32 %v3334, 1.0
    %v3390 = vadd.f32 %v3374, 1.0
    %v3391 = vmul.f32 %v2703, %v3375
    %v3392 = vmul.f32 %v2704, %v3376
    %v3393 = vmul.f32 %v2705, %v3377
    %v3394 = vmul.f32 %v2706, %v3378
    %v3395 = vmul.f32 %v2707, %v3379
    %v3396 = vmul.f32 %v2708, %v3380
    %v3397 = vmul.f32 %v2709, %v3381
    %v3398 = vmul.f32 %v2710, %v3382
    %v3399 = vmul.f32 %v2711, %v3383
    %v3400 = vmul.f32 %v2712, %v3384
    %v3401 = vmul.f32 %v2713, %v3385
    %v3402 = vmul.f32 %v2714, %v3386
    %v3403 = vmul.f32 %v2715, %v3387
    %v3404 = vmul.f32 %v2716, %v3388
    %v3405 = vmul.f32 %v2717, %v3389
    %v3406 = vmul.f32 %v2718, %v3390
    %v3407 = vld [vmem:[#allocation11] sm:$0xff]
    %v3408 = vld [vmem:[#allocation11 + $0x8] sm:$0xff]
    %v3409 = vld [vmem:[#allocation11 + $0x10] sm:$0xff]
    %v3410 = vld [vmem:[#allocation11 + $0x18] sm:$0xff]
    %v3411 = vld [vmem:[#allocation11 + $0x20] sm:$0xff]
    %v3412 = vld [vmem:[#allocation11 + $0x28] sm:$0xff]
    %v3413 = vld [vmem:[#allocation11 + $0x30] sm:$0xff]
    %v3414 = vld [vmem:[#allocation11 + $0x38] sm:$0xff]
    %v3415 = vld [vmem:[#allocation11 + $0x40] sm:$0xff]
    %v3416 = vld [vmem:[#allocation11 + $0x48] sm:$0xff]
    %v3417 = vld [vmem:[#allocation11 + $0x50] sm:$0xff]
    %v3418 = vld [vmem:[#allocation11 + $0x58] sm:$0xff]
    %v3419 = vld [vmem:[#allocation11 + $0x60] sm:$0xff]
    %v3420 = vld [vmem:[#allocation11 + $0x68] sm:$0xff]
    %v3421 = vld [vmem:[#allocation11 + $0x70] sm:$0xff]
    %v3422 = vld [vmem:[#allocation11 + $0x78] sm:$0xff]
    %v3423 = vld [vmem:[%s10] sm:$0x1]
    %v3425 = vperm.slane %v3423, 0
    %3427 = vmatpush.msra.mxu0 %v3422
    %3428 = vmatpush.msra.mxu0 %v3421
    %3429 = vmatpush.msra.mxu0 %v3420
    %3430 = vmatpush.msra.mxu0 %v3419
    %3431 = vmatpush.msra.mxu0 %v3418
    %3432 = vmatpush.msra.mxu0 %v3417
    %3433 = vmatpush.msra.mxu0 %v3416
    %3434 = vmatpush.msra.mxu0 %v3415
    %3435 = vmatpush.msra.mxu0 %v3414
    %3436 = vmatpush.msra.mxu0 %v3413
    %3437 = vmatpush.msra.mxu0 %v3412
    %3438 = vmatpush.msra.mxu0 %v3411
    %3439 = vmatpush.msra.mxu0 %v3410
    %3440 = vmatpush.msra.mxu0 %v3409
    %3441 = vmatpush.msra.mxu0 %v3408
    %3442 = vmatpush.msra.mxu0 %v3407
    %3443 = vmatmul.f32.gmra.mxu0 %v3391
    %v3444 = vpop.f32.mrf.mxu0
    %v3445 = vadd.f32 %v3425, %v3444
    %3446 = vmatmul.f32.gmra.mxu0 %v3392
    %v3447 = vpop.f32.mrf.mxu0
    %v3448 = vadd.f32 %v3425, %v3447
    %3449 = vmatmul.f32.gmra.mxu0 %v3393
    %v3450 = vpop.f32.mrf.mxu0
    %v3451 = vadd.f32 %v3425, %v3450
    %3452 = vmatmul.f32.gmra.mxu0 %v3394
    %v3453 = vpop.f32.mrf.mxu0
    %v3454 = vadd.f32 %v3425, %v3453
    %3455 = vmatmul.f32.gmra.mxu0 %v3395
    %v3456 = vpop.f32.mrf.mxu0
    %v3457 = vadd.f32 %v3425, %v3456
    %3458 = vmatmul.f32.gmra.mxu0 %v3396
    %v3459 = vpop.f32.mrf.mxu0
    %v3460 = vadd.f32 %v3425, %v3459
    %3461 = vmatmul.f32.gmra.mxu0 %v3397
    %v3462 = vpop.f32.mrf.mxu0
    %v3463 = vadd.f32 %v3425, %v3462
    %3464 = vmatmul.f32.gmra.mxu0 %v3398
    %v3465 = vpop.f32.mrf.mxu0
    %v3466 = vadd.f32 %v3425, %v3465
    %3467 = vmatmul.f32.gmra.mxu0 %v3399
    %v3468 = vpop.f32.mrf.mxu0
    %v3469 = vadd.f32 %v3425, %v3468
    %3470 = vmatmul.f32.gmra.mxu0 %v3400
    %v3471 = vpop.f32.mrf.mxu0
    %v3472 = vadd.f32 %v3425, %v3471
    %3473 = vmatmul.f32.gmra.mxu0 %v3401
    %v3474 = vpop.f32.mrf.mxu0
    %v3475 = vadd.f32 %v3425, %v3474
    %3476 = vmatmul.f32.gmra.mxu0 %v3402
    %v3477 = vpop.f32.mrf.mxu0
    %v3478 = vadd.f32 %v3425, %v3477
    %3479 = vmatmul.f32.gmra.mxu0 %v3403
    %v3480 = vpop.f32.mrf.mxu0
    %v3481 = vadd.f32 %v3425, %v3480
    %3482 = vmatmul.f32.gmra.mxu0 %v3404
    %v3483 = vpop.f32.mrf.mxu0
    %v3484 = vadd.f32 %v3425, %v3483
    %3485 = vmatmul.f32.gmra.mxu0 %v3405
    %v3486 = vpop.f32.mrf.mxu0
    %v3487 = vadd.f32 %v3425, %v3486
    %3488 = vmatmul.f32.gmra.mxu0 %v3406
    %v3489 = vpop.f32.mrf.mxu0
    %v3490 = vadd.f32 %v3425, %v3489
    %3491 = vdwg.mxu0
    %v3492 = vmul.f32 %v3445, 0.5
    %v3493 = vmul.f32 %v3448, 0.5
    %v3494 = vmul.f32 %v3451, 0.5
    %v3495 = vmul.f32 %v3454, 0.5
    %v3496 = vmul.f32 %v3457, 0.5
    %v3497 = vmul.f32 %v3460, 0.5
    %v3498 = vmul.f32 %v3463, 0.5
    %v3499 = vmul.f32 %v3466, 0.5
    %v3500 = vmul.f32 %v3469, 0.5
    %v3501 = vmul.f32 %v3472, 0.5
    %v3502 = vmul.f32 %v3475, 0.5
    %v3503 = vmul.f32 %v3478, 0.5
    %v3504 = vmul.f32 %v3481, 0.5
    %v3505 = vmul.f32 %v3484, 0.5
    %v3506 = vmul.f32 %v3487, 0.5
    %v3507 = vmul.f32 %v3490, 0.5
    %v3508 = vmul.f32 %v3445, 0.70710677
    %v3509 = vmul.f32 %v3448, 0.70710677
    %v3510 = vmul.f32 %v3451, 0.70710677
    %v3511 = vmul.f32 %v3454, 0.70710677
    %v3512 = vmul.f32 %v3457, 0.70710677
    %v3513 = vmul.f32 %v3460, 0.70710677
    %v3514 = vmul.f32 %v3463, 0.70710677
    %v3515 = vmul.f32 %v3466, 0.70710677
    %v3516 = vmul.f32 %v3469, 0.70710677
    %v3517 = vmul.f32 %v3472, 0.70710677
    %v3518 = vmul.f32 %v3475, 0.70710677
    %v3519 = vmul.f32 %v3478, 0.70710677
    %v3520 = vmul.f32 %v3481, 0.70710677
    %v3521 = vmul.f32 %v3484, 0.70710677
    %v3522 = vmul.f32 %v3487, 0.70710677
    %v3523 = vmul.f32 %v3490, 0.70710677
    %v3524 = vmul.f32 %v3508, %v3508
    %v3525 = vmin.f32 16.0, %v3524
    %v3526 = vmul.f32 %v3525, 2.1237322e-06
    %v3527 = vadd.f32 %v3526, 0.00028619796
    %v3528 = vmul.f32 %v3525, %v3527
    %v3529 = vadd.f32 %v3528, 0.0036580483
    %v3530 = vmul.f32 %v3525, %v3529
    %v3531 = vadd.f32 %v3530, 0.05243302
    %v3532 = vmul.f32 %v3525, %v3531
    %v3533 = vadd.f32 %v3532, 0.18741608
    %v3534 = vmul.f32 %v3525, %v3533
    %v3535 = vadd.f32 %v3534, 1.1283791
    %v3536 = vmul.f32 %v3508, %v3535
    %v3537 = vmul.f32 %v3525, 3.8918573e-05
    %v3538 = vadd.f32 %v3537, 0.001143296
    %v3539 = vmul.f32 %v3525, %v3538
    %v3540 = vadd.f32 %v3539, 0.014752088
    %v3541 = vmul.f32 %v3525, %v3540
    %v3542 = vadd.f32 %v3541, 0.112945676
    %v3543 = vmul.f32 %v3525, %v3542
    %v3544 = vadd.f32 %v3543, 0.4994258
    %v3545 = vmul.f32 %v3525, %v3544
    %v3546 = vadd.f32 %v3545, 1.0
    %v3547 = vrcp.pop %v3546
    %v3548 = vmul.f32 %v3546, %v3547
    %v3549 = vsub.f32 1.0, %v3548
    %v3550 = vmul.f32 %v3547, %v3549
    %v3551 = vadd.f32 %v3547, %v3550
    %vm3552 = vweird.f32 %v3546
    %vm3553 = vweird.f32 %v3547
    %vm3554 = vmor %vm3552, %vm3553
    %v3555 = vsel %vm3554, %v3547, %v3551
    %v3556 = vand.u32 2147483647, %v3546
    %vm3557 = vcmp.eq.f32.partialorder %v3556, 8.507059e+37
    %v3558 = vand.u32 %v3546, 2147483648
    %v3559 = vor.u32 1.1754944e-38, %v3558
    %v3560 = vsel %vm3557, %v3559, %v3555
    %v3561 = vmul.f32 %v3536, %v3560
    %v3562 = vmin.f32 %v3561, 1.0
    %v3563 = vmax.f32 %v3562, -1.0
    %v3564 = vmul.f32 %v3509, %v3509
    %v3565 = vmin.f32 16.0, %v3564
    %v3566 = vmul.f32 %v3565, 2.1237322e-06
    %v3567 = vadd.f32 %v3566, 0.00028619796
    %v3568 = vmul.f32 %v3565, %v3567
    %v3569 = vadd.f32 %v3568, 0.0036580483
    %v3570 = vmul.f32 %v3565, %v3569
    %v3571 = vadd.f32 %v3570, 0.05243302
    %v3572 = vmul.f32 %v3565, %v3571
    %v3573 = vadd.f32 %v3572, 0.18741608
    %v3574 = vmul.f32 %v3565, %v3573
    %v3575 = vadd.f32 %v3574, 1.1283791
    %v3576 = vmul.f32 %v3509, %v3575
    %v3577 = vmul.f32 %v3565, 3.8918573e-05
    %v3578 = vadd.f32 %v3577, 0.001143296
    %v3579 = vmul.f32 %v3565, %v3578
    %v3580 = vadd.f32 %v3579, 0.014752088
    %v3581 = vmul.f32 %v3565, %v3580
    %v3582 = vadd.f32 %v3581, 0.112945676
    %v3583 = vmul.f32 %v3565, %v3582
    %v3584 = vadd.f32 %v3583, 0.4994258
    %v3585 = vmul.f32 %v3565, %v3584
    %v3586 = vadd.f32 %v3585, 1.0
    %v3587 = vrcp.pop %v3586
    %v3588 = vmul.f32 %v3586, %v3587
    %v3589 = vsub.f32 1.0, %v3588
    %v3590 = vmul.f32 %v3587, %v3589
    %v3591 = vadd.f32 %v3587, %v3590
    %vm3592 = vweird.f32 %v3586
    %vm3593 = vweird.f32 %v3587
    %vm3594 = vmor %vm3592, %vm3593
    %v3595 = vsel %vm3594, %v3587, %v3591
    %v3596 = vand.u32 2147483647, %v3586
    %vm3597 = vcmp.eq.f32.partialorder %v3596, 8.507059e+37
    %v3598 = vand.u32 %v3586, 2147483648
    %v3599 = vor.u32 1.1754944e-38, %v3598
    %v3600 = vsel %vm3597, %v3599, %v3595
    %v3601 = vmul.f32 %v3576, %v3600
    %v3602 = vmin.f32 %v3601, 1.0
    %v3603 = vmax.f32 %v3602, -1.0
    %v3604 = vmul.f32 %v3510, %v3510
    %v3605 = vmin.f32 16.0, %v3604
    %v3606 = vmul.f32 %v3605, 2.1237322e-06
    %v3607 = vadd.f32 %v3606, 0.00028619796
    %v3608 = vmul.f32 %v3605, %v3607
    %v3609 = vadd.f32 %v3608, 0.0036580483
    %v3610 = vmul.f32 %v3605, %v3609
    %v3611 = vadd.f32 %v3610, 0.05243302
    %v3612 = vmul.f32 %v3605, %v3611
    %v3613 = vadd.f32 %v3612, 0.18741608
    %v3614 = vmul.f32 %v3605, %v3613
    %v3615 = vadd.f32 %v3614, 1.1283791
    %v3616 = vmul.f32 %v3510, %v3615
    %v3617 = vmul.f32 %v3605, 3.8918573e-05
    %v3618 = vadd.f32 %v3617, 0.001143296
    %v3619 = vmul.f32 %v3605, %v3618
    %v3620 = vadd.f32 %v3619, 0.014752088
    %v3621 = vmul.f32 %v3605, %v3620
    %v3622 = vadd.f32 %v3621, 0.112945676
    %v3623 = vmul.f32 %v3605, %v3622
    %v3624 = vadd.f32 %v3623, 0.4994258
    %v3625 = vmul.f32 %v3605, %v3624
    %v3626 = vadd.f32 %v3625, 1.0
    %v3627 = vrcp.pop %v3626
    %v3628 = vmul.f32 %v3626, %v3627
    %v3629 = vsub.f32 1.0, %v3628
    %v3630 = vmul.f32 %v3627, %v3629
    %v3631 = vadd.f32 %v3627, %v3630
    %vm3632 = vweird.f32 %v3626
    %vm3633 = vweird.f32 %v3627
    %vm3634 = vmor %vm3632, %vm3633
    %v3635 = vsel %vm3634, %v3627, %v3631
    %v3636 = vand.u32 2147483647, %v3626
    %vm3637 = vcmp.eq.f32.partialorder %v3636, 8.507059e+37
    %v3638 = vand.u32 %v3626, 2147483648
    %v3639 = vor.u32 1.1754944e-38, %v3638
    %v3640 = vsel %vm3637, %v3639, %v3635
    %v3641 = vmul.f32 %v3616, %v3640
    %v3642 = vmin.f32 %v3641, 1.0
    %v3643 = vmax.f32 %v3642, -1.0
    %v3644 = vmul.f32 %v3511, %v3511
    %v3645 = vmin.f32 16.0, %v3644
    %v3646 = vmul.f32 %v3645, 2.1237322e-06
    %v3647 = vadd.f32 %v3646, 0.00028619796
    %v3648 = vmul.f32 %v3645, %v3647
    %v3649 = vadd.f32 %v3648, 0.0036580483
    %v3650 = vmul.f32 %v3645, %v3649
    %v3651 = vadd.f32 %v3650, 0.05243302
    %v3652 = vmul.f32 %v3645, %v3651
    %v3653 = vadd.f32 %v3652, 0.18741608
    %v3654 = vmul.f32 %v3645, %v3653
    %v3655 = vadd.f32 %v3654, 1.1283791
    %v3656 = vmul.f32 %v3511, %v3655
    %v3657 = vmul.f32 %v3645, 3.8918573e-05
    %v3658 = vadd.f32 %v3657, 0.001143296
    %v3659 = vmul.f32 %v3645, %v3658
    %v3660 = vadd.f32 %v3659, 0.014752088
    %v3661 = vmul.f32 %v3645, %v3660
    %v3662 = vadd.f32 %v3661, 0.112945676
    %v3663 = vmul.f32 %v3645, %v3662
    %v3664 = vadd.f32 %v3663, 0.4994258
    %v3665 = vmul.f32 %v3645, %v3664
    %v3666 = vadd.f32 %v3665, 1.0
    %v3667 = vrcp.pop %v3666
    %v3668 = vmul.f32 %v3666, %v3667
    %v3669 = vsub.f32 1.0, %v3668
    %v3670 = vmul.f32 %v3667, %v3669
    %v3671 = vadd.f32 %v3667, %v3670
    %vm3672 = vweird.f32 %v3666
    %vm3673 = vweird.f32 %v3667
    %vm3674 = vmor %vm3672, %vm3673
    %v3675 = vsel %vm3674, %v3667, %v3671
    %v3676 = vand.u32 2147483647, %v3666
    %vm3677 = vcmp.eq.f32.partialorder %v3676, 8.507059e+37
    %v3678 = vand.u32 %v3666, 2147483648
    %v3679 = vor.u32 1.1754944e-38, %v3678
    %v3680 = vsel %vm3677, %v3679, %v3675
    %v3681 = vmul.f32 %v3656, %v3680
    %v3682 = vmin.f32 %v3681, 1.0
    %v3683 = vmax.f32 %v3682, -1.0
    %v3684 = vmul.f32 %v3512, %v3512
    %v3685 = vmin.f32 16.0, %v3684
    %v3686 = vmul.f32 %v3685, 2.1237322e-06
    %v3687 = vadd.f32 %v3686, 0.00028619796
    %v3688 = vmul.f32 %v3685, %v3687
    %v3689 = vadd.f32 %v3688, 0.0036580483
    %v3690 = vmul.f32 %v3685, %v3689
    %v3691 = vadd.f32 %v3690, 0.05243302
    %v3692 = vmul.f32 %v3685, %v3691
    %v3693 = vadd.f32 %v3692, 0.18741608
    %v3694 = vmul.f32 %v3685, %v3693
    %v3695 = vadd.f32 %v3694, 1.1283791
    %v3696 = vmul.f32 %v3512, %v3695
    %v3697 = vmul.f32 %v3685, 3.8918573e-05
    %v3698 = vadd.f32 %v3697, 0.001143296
    %v3699 = vmul.f32 %v3685, %v3698
    %v3700 = vadd.f32 %v3699, 0.014752088
    %v3701 = vmul.f32 %v3685, %v3700
    %v3702 = vadd.f32 %v3701, 0.112945676
    %v3703 = vmul.f32 %v3685, %v3702
    %v3704 = vadd.f32 %v3703, 0.4994258
    %v3705 = vmul.f32 %v3685, %v3704
    %v3706 = vadd.f32 %v3705, 1.0
    %v3707 = vrcp.pop %v3706
    %v3708 = vmul.f32 %v3706, %v3707
    %v3709 = vsub.f32 1.0, %v3708
    %v3710 = vmul.f32 %v3707, %v3709
    %v3711 = vadd.f32 %v3707, %v3710
    %vm3712 = vweird.f32 %v3706
    %vm3713 = vweird.f32 %v3707
    %vm3714 = vmor %vm3712, %vm3713
    %v3715 = vsel %vm3714, %v3707, %v3711
    %v3716 = vand.u32 2147483647, %v3706
    %vm3717 = vcmp.eq.f32.partialorder %v3716, 8.507059e+37
    %v3718 = vand.u32 %v3706, 2147483648
    %v3719 = vor.u32 1.1754944e-38, %v3718
    %v3720 = vsel %vm3717, %v3719, %v3715
    %v3721 = vmul.f32 %v3696, %v3720
    %v3722 = vmin.f32 %v3721, 1.0
    %v3723 = vmax.f32 %v3722, -1.0
    %v3724 = vmul.f32 %v3513, %v3513
    %v3725 = vmin.f32 16.0, %v3724
    %v3726 = vmul.f32 %v3725, 2.1237322e-06
    %v3727 = vadd.f32 %v3726, 0.00028619796
    %v3728 = vmul.f32 %v3725, %v3727
    %v3729 = vadd.f32 %v3728, 0.0036580483
    %v3730 = vmul.f32 %v3725, %v3729
    %v3731 = vadd.f32 %v3730, 0.05243302
    %v3732 = vmul.f32 %v3725, %v3731
    %v3733 = vadd.f32 %v3732, 0.18741608
    %v3734 = vmul.f32 %v3725, %v3733
    %v3735 = vadd.f32 %v3734, 1.1283791
    %v3736 = vmul.f32 %v3513, %v3735
    %v3737 = vmul.f32 %v3725, 3.8918573e-05
    %v3738 = vadd.f32 %v3737, 0.001143296
    %v3739 = vmul.f32 %v3725, %v3738
    %v3740 = vadd.f32 %v3739, 0.014752088
    %v3741 = vmul.f32 %v3725, %v3740
    %v3742 = vadd.f32 %v3741, 0.112945676
    %v3743 = vmul.f32 %v3725, %v3742
    %v3744 = vadd.f32 %v3743, 0.4994258
    %v3745 = vmul.f32 %v3725, %v3744
    %v3746 = vadd.f32 %v3745, 1.0
    %v3747 = vrcp.pop %v3746
    %v3748 = vmul.f32 %v3746, %v3747
    %v3749 = vsub.f32 1.0, %v3748
    %v3750 = vmul.f32 %v3747, %v3749
    %v3751 = vadd.f32 %v3747, %v3750
    %vm3752 = vweird.f32 %v3746
    %vm3753 = vweird.f32 %v3747
    %vm3754 = vmor %vm3752, %vm3753
    %v3755 = vsel %vm3754, %v3747, %v3751
    %v3756 = vand.u32 2147483647, %v3746
    %vm3757 = vcmp.eq.f32.partialorder %v3756, 8.507059e+37
    %v3758 = vand.u32 %v3746, 2147483648
    %v3759 = vor.u32 1.1754944e-38, %v3758
    %v3760 = vsel %vm3757, %v3759, %v3755
    %v3761 = vmul.f32 %v3736, %v3760
    %v3762 = vmin.f32 %v3761, 1.0
    %v3763 = vmax.f32 %v3762, -1.0
    %v3764 = vmul.f32 %v3514, %v3514
    %v3765 = vmin.f32 16.0, %v3764
    %v3766 = vmul.f32 %v3765, 2.1237322e-06
    %v3767 = vadd.f32 %v3766, 0.00028619796
    %v3768 = vmul.f32 %v3765, %v3767
    %v3769 = vadd.f32 %v3768, 0.0036580483
    %v3770 = vmul.f32 %v3765, %v3769
    %v3771 = vadd.f32 %v3770, 0.05243302
    %v3772 = vmul.f32 %v3765, %v3771
    %v3773 = vadd.f32 %v3772, 0.18741608
    %v3774 = vmul.f32 %v3765, %v3773
    %v3775 = vadd.f32 %v3774, 1.1283791
    %v3776 = vmul.f32 %v3514, %v3775
    %v3777 = vmul.f32 %v3765, 3.8918573e-05
    %v3778 = vadd.f32 %v3777, 0.001143296
    %v3779 = vmul.f32 %v3765, %v3778
    %v3780 = vadd.f32 %v3779, 0.014752088
    %v3781 = vmul.f32 %v3765, %v3780
    %v3782 = vadd.f32 %v3781, 0.112945676
    %v3783 = vmul.f32 %v3765, %v3782
    %v3784 = vadd.f32 %v3783, 0.4994258
    %v3785 = vmul.f32 %v3765, %v3784
    %v3786 = vadd.f32 %v3785, 1.0
    %v3787 = vrcp.pop %v3786
    %v3788 = vmul.f32 %v3786, %v3787
    %v3789 = vsub.f32 1.0, %v3788
    %v3790 = vmul.f32 %v3787, %v3789
    %v3791 = vadd.f32 %v3787, %v3790
    %vm3792 = vweird.f32 %v3786
    %vm3793 = vweird.f32 %v3787
    %vm3794 = vmor %vm3792, %vm3793
    %v3795 = vsel %vm3794, %v3787, %v3791
    %v3796 = vand.u32 2147483647, %v3786
    %vm3797 = vcmp.eq.f32.partialorder %v3796, 8.507059e+37
    %v3798 = vand.u32 %v3786, 2147483648
    %v3799 = vor.u32 1.1754944e-38, %v3798
    %v3800 = vsel %vm3797, %v3799, %v3795
    %v3801 = vmul.f32 %v3776, %v3800
    %v3802 = vmin.f32 %v3801, 1.0
    %v3803 = vmax.f32 %v3802, -1.0
    %v3804 = vmul.f32 %v3515, %v3515
    %v3805 = vmin.f32 16.0, %v3804
    %v3806 = vmul.f32 %v3805, 2.1237322e-06
    %v3807 = vadd.f32 %v3806, 0.00028619796
    %v3808 = vmul.f32 %v3805, %v3807
    %v3809 = vadd.f32 %v3808, 0.0036580483
    %v3810 = vmul.f32 %v3805, %v3809
    %v3811 = vadd.f32 %v3810, 0.05243302
    %v3812 = vmul.f32 %v3805, %v3811
    %v3813 = vadd.f32 %v3812, 0.18741608
    %v3814 = vmul.f32 %v3805, %v3813
    %v3815 = vadd.f32 %v3814, 1.1283791
    %v3816 = vmul.f32 %v3515, %v3815
    %v3817 = vmul.f32 %v3805, 3.8918573e-05
    %v3818 = vadd.f32 %v3817, 0.001143296
    %v3819 = vmul.f32 %v3805, %v3818
    %v3820 = vadd.f32 %v3819, 0.014752088
    %v3821 = vmul.f32 %v3805, %v3820
    %v3822 = vadd.f32 %v3821, 0.112945676
    %v3823 = vmul.f32 %v3805, %v3822
    %v3824 = vadd.f32 %v3823, 0.4994258
    %v3825 = vmul.f32 %v3805, %v3824
    %v3826 = vadd.f32 %v3825, 1.0
    %v3827 = vrcp.pop %v3826
    %v3828 = vmul.f32 %v3826, %v3827
    %v3829 = vsub.f32 1.0, %v3828
    %v3830 = vmul.f32 %v3827, %v3829
    %v3831 = vadd.f32 %v3827, %v3830
    %vm3832 = vweird.f32 %v3826
    %vm3833 = vweird.f32 %v3827
    %vm3834 = vmor %vm3832, %vm3833
    %v3835 = vsel %vm3834, %v3827, %v3831
    %v3836 = vand.u32 2147483647, %v3826
    %vm3837 = vcmp.eq.f32.partialorder %v3836, 8.507059e+37
    %v3838 = vand.u32 %v3826, 2147483648
    %v3839 = vor.u32 1.1754944e-38, %v3838
    %v3840 = vsel %vm3837, %v3839, %v3835
    %v3841 = vmul.f32 %v3816, %v3840
    %v3842 = vmin.f32 %v3841, 1.0
    %v3843 = vmax.f32 %v3842, -1.0
    %v3844 = vmul.f32 %v3516, %v3516
    %v3845 = vmin.f32 16.0, %v3844
    %v3846 = vmul.f32 %v3845, 2.1237322e-06
    %v3847 = vadd.f32 %v3846, 0.00028619796
    %v3848 = vmul.f32 %v3845, %v3847
    %v3849 = vadd.f32 %v3848, 0.0036580483
    %v3850 = vmul.f32 %v3845, %v3849
    %v3851 = vadd.f32 %v3850, 0.05243302
    %v3852 = vmul.f32 %v3845, %v3851
    %v3853 = vadd.f32 %v3852, 0.18741608
    %v3854 = vmul.f32 %v3845, %v3853
    %v3855 = vadd.f32 %v3854, 1.1283791
    %v3856 = vmul.f32 %v3516, %v3855
    %v3857 = vmul.f32 %v3845, 3.8918573e-05
    %v3858 = vadd.f32 %v3857, 0.001143296
    %v3859 = vmul.f32 %v3845, %v3858
    %v3860 = vadd.f32 %v3859, 0.014752088
    %v3861 = vmul.f32 %v3845, %v3860
    %v3862 = vadd.f32 %v3861, 0.112945676
    %v3863 = vmul.f32 %v3845, %v3862
    %v3864 = vadd.f32 %v3863, 0.4994258
    %v3865 = vmul.f32 %v3845, %v3864
    %v3866 = vadd.f32 %v3865, 1.0
    %v3867 = vrcp.pop %v3866
    %v3868 = vmul.f32 %v3866, %v3867
    %v3869 = vsub.f32 1.0, %v3868
    %v3870 = vmul.f32 %v3867, %v3869
    %v3871 = vadd.f32 %v3867, %v3870
    %vm3872 = vweird.f32 %v3866
    %vm3873 = vweird.f32 %v3867
    %vm3874 = vmor %vm3872, %vm3873
    %v3875 = vsel %vm3874, %v3867, %v3871
    %v3876 = vand.u32 2147483647, %v3866
    %vm3877 = vcmp.eq.f32.partialorder %v3876, 8.507059e+37
    %v3878 = vand.u32 %v3866, 2147483648
    %v3879 = vor.u32 1.1754944e-38, %v3878
    %v3880 = vsel %vm3877, %v3879, %v3875
    %v3881 = vmul.f32 %v3856, %v3880
    %v3882 = vmin.f32 %v3881, 1.0
    %v3883 = vmax.f32 %v3882, -1.0
    %v3884 = vmul.f32 %v3517, %v3517
    %v3885 = vmin.f32 16.0, %v3884
    %v3886 = vmul.f32 %v3885, 2.1237322e-06
    %v3887 = vadd.f32 %v3886, 0.00028619796
    %v3888 = vmul.f32 %v3885, %v3887
    %v3889 = vadd.f32 %v3888, 0.0036580483
    %v3890 = vmul.f32 %v3885, %v3889
    %v3891 = vadd.f32 %v3890, 0.05243302
    %v3892 = vmul.f32 %v3885, %v3891
    %v3893 = vadd.f32 %v3892, 0.18741608
    %v3894 = vmul.f32 %v3885, %v3893
    %v3895 = vadd.f32 %v3894, 1.1283791
    %v3896 = vmul.f32 %v3517, %v3895
    %v3897 = vmul.f32 %v3885, 3.8918573e-05
    %v3898 = vadd.f32 %v3897, 0.001143296
    %v3899 = vmul.f32 %v3885, %v3898
    %v3900 = vadd.f32 %v3899, 0.014752088
    %v3901 = vmul.f32 %v3885, %v3900
    %v3902 = vadd.f32 %v3901, 0.112945676
    %v3903 = vmul.f32 %v3885, %v3902
    %v3904 = vadd.f32 %v3903, 0.4994258
    %v3905 = vmul.f32 %v3885, %v3904
    %v3906 = vadd.f32 %v3905, 1.0
    %v3907 = vrcp.pop %v3906
    %v3908 = vmul.f32 %v3906, %v3907
    %v3909 = vsub.f32 1.0, %v3908
    %v3910 = vmul.f32 %v3907, %v3909
    %v3911 = vadd.f32 %v3907, %v3910
    %vm3912 = vweird.f32 %v3906
    %vm3913 = vweird.f32 %v3907
    %vm3914 = vmor %vm3912, %vm3913
    %v3915 = vsel %vm3914, %v3907, %v3911
    %v3916 = vand.u32 2147483647, %v3906
    %vm3917 = vcmp.eq.f32.partialorder %v3916, 8.507059e+37
    %v3918 = vand.u32 %v3906, 2147483648
    %v3919 = vor.u32 1.1754944e-38, %v3918
    %v3920 = vsel %vm3917, %v3919, %v3915
    %v3921 = vmul.f32 %v3896, %v3920
    %v3922 = vmin.f32 %v3921, 1.0
    %v3923 = vmax.f32 %v3922, -1.0
    %v3924 = vmul.f32 %v3518, %v3518
    %v3925 = vmin.f32 16.0, %v3924
    %v3926 = vmul.f32 %v3925, 2.1237322e-06
    %v3927 = vadd.f32 %v3926, 0.00028619796
    %v3928 = vmul.f32 %v3925, %v3927
    %v3929 = vadd.f32 %v3928, 0.0036580483
    %v3930 = vmul.f32 %v3925, %v3929
    %v3931 = vadd.f32 %v3930, 0.05243302
    %v3932 = vmul.f32 %v3925, %v3931
    %v3933 = vadd.f32 %v3932, 0.18741608
    %v3934 = vmul.f32 %v3925, %v3933
    %v3935 = vadd.f32 %v3934, 1.1283791
    %v3936 = vmul.f32 %v3518, %v3935
    %v3937 = vmul.f32 %v3925, 3.8918573e-05
    %v3938 = vadd.f32 %v3937, 0.001143296
    %v3939 = vmul.f32 %v3925, %v3938
    %v3940 = vadd.f32 %v3939, 0.014752088
    %v3941 = vmul.f32 %v3925, %v3940
    %v3942 = vadd.f32 %v3941, 0.112945676
    %v3943 = vmul.f32 %v3925, %v3942
    %v3944 = vadd.f32 %v3943, 0.4994258
    %v3945 = vmul.f32 %v3925, %v3944
    %v3946 = vadd.f32 %v3945, 1.0
    %v3947 = vrcp.pop %v3946
    %v3948 = vmul.f32 %v3946, %v3947
    %v3949 = vsub.f32 1.0, %v3948
    %v3950 = vmul.f32 %v3947, %v3949
    %v3951 = vadd.f32 %v3947, %v3950
    %vm3952 = vweird.f32 %v3946
    %vm3953 = vweird.f32 %v3947
    %vm3954 = vmor %vm3952, %vm3953
    %v3955 = vsel %vm3954, %v3947, %v3951
    %v3956 = vand.u32 2147483647, %v3946
    %vm3957 = vcmp.eq.f32.partialorder %v3956, 8.507059e+37
    %v3958 = vand.u32 %v3946, 2147483648
    %v3959 = vor.u32 1.1754944e-38, %v3958
    %v3960 = vsel %vm3957, %v3959, %v3955
    %v3961 = vmul.f32 %v3936, %v3960
    %v3962 = vmin.f32 %v3961, 1.0
    %v3963 = vmax.f32 %v3962, -1.0
    %v3964 = vmul.f32 %v3519, %v3519
    %v3965 = vmin.f32 16.0, %v3964
    %v3966 = vmul.f32 %v3965, 2.1237322e-06
    %v3967 = vadd.f32 %v3966, 0.00028619796
    %v3968 = vmul.f32 %v3965, %v3967
    %v3969 = vadd.f32 %v3968, 0.0036580483
    %v3970 = vmul.f32 %v3965, %v3969
    %v3971 = vadd.f32 %v3970, 0.05243302
    %v3972 = vmul.f32 %v3965, %v3971
    %v3973 = vadd.f32 %v3972, 0.18741608
    %v3974 = vmul.f32 %v3965, %v3973
    %v3975 = vadd.f32 %v3974, 1.1283791
    %v3976 = vmul.f32 %v3519, %v3975
    %v3977 = vmul.f32 %v3965, 3.8918573e-05
    %v3978 = vadd.f32 %v3977, 0.001143296
    %v3979 = vmul.f32 %v3965, %v3978
    %v3980 = vadd.f32 %v3979, 0.014752088
    %v3981 = vmul.f32 %v3965, %v3980
    %v3982 = vadd.f32 %v3981, 0.112945676
    %v3983 = vmul.f32 %v3965, %v3982
    %v3984 = vadd.f32 %v3983, 0.4994258
    %v3985 = vmul.f32 %v3965, %v3984
    %v3986 = vadd.f32 %v3985, 1.0
    %v3987 = vrcp.pop %v3986
    %v3988 = vmul.f32 %v3986, %v3987
    %v3989 = vsub.f32 1.0, %v3988
    %v3990 = vmul.f32 %v3987, %v3989
    %v3991 = vadd.f32 %v3987, %v3990
    %vm3992 = vweird.f32 %v3986
    %vm3993 = vweird.f32 %v3987
    %vm3994 = vmor %vm3992, %vm3993
    %v3995 = vsel %vm3994, %v3987, %v3991
    %v3996 = vand.u32 2147483647, %v3986
    %vm3997 = vcmp.eq.f32.partialorder %v3996, 8.507059e+37
    %v3998 = vand.u32 %v3986, 2147483648
    %v3999 = vor.u32 1.1754944e-38, %v3998
    %v4000 = vsel %vm3997, %v3999, %v3995
    %v4001 = vmul.f32 %v3976, %v4000
    %v4002 = vmin.f32 %v4001, 1.0
    %v4003 = vmax.f32 %v4002, -1.0
    %v4004 = vmul.f32 %v3520, %v3520
    %v4005 = vmin.f32 16.0, %v4004
    %v4006 = vmul.f32 %v4005, 2.1237322e-06
    %v4007 = vadd.f32 %v4006, 0.00028619796
    %v4008 = vmul.f32 %v4005, %v4007
    %v4009 = vadd.f32 %v4008, 0.0036580483
    %v4010 = vmul.f32 %v4005, %v4009
    %v4011 = vadd.f32 %v4010, 0.05243302
    %v4012 = vmul.f32 %v4005, %v4011
    %v4013 = vadd.f32 %v4012, 0.18741608
    %v4014 = vmul.f32 %v4005, %v4013
    %v4015 = vadd.f32 %v4014, 1.1283791
    %v4016 = vmul.f32 %v3520, %v4015
    %v4017 = vmul.f32 %v4005, 3.8918573e-05
    %v4018 = vadd.f32 %v4017, 0.001143296
    %v4019 = vmul.f32 %v4005, %v4018
    %v4020 = vadd.f32 %v4019, 0.014752088
    %v4021 = vmul.f32 %v4005, %v4020
    %v4022 = vadd.f32 %v4021, 0.112945676
    %v4023 = vmul.f32 %v4005, %v4022
    %v4024 = vadd.f32 %v4023, 0.4994258
    %v4025 = vmul.f32 %v4005, %v4024
    %v4026 = vadd.f32 %v4025, 1.0
    %v4027 = vrcp.pop %v4026
    %v4028 = vmul.f32 %v4026, %v4027
    %v4029 = vsub.f32 1.0, %v4028
    %v4030 = vmul.f32 %v4027, %v4029
    %v4031 = vadd.f32 %v4027, %v4030
    %vm4032 = vweird.f32 %v4026
    %vm4033 = vweird.f32 %v4027
    %vm4034 = vmor %vm4032, %vm4033
    %v4035 = vsel %vm4034, %v4027, %v4031
    %v4036 = vand.u32 2147483647, %v4026
    %vm4037 = vcmp.eq.f32.partialorder %v4036, 8.507059e+37
    %v4038 = vand.u32 %v4026, 2147483648
    %v4039 = vor.u32 1.1754944e-38, %v4038
    %v4040 = vsel %vm4037, %v4039, %v4035
    %v4041 = vmul.f32 %v4016, %v4040
    %v4042 = vmin.f32 %v4041, 1.0
    %v4043 = vmax.f32 %v4042, -1.0
    %v4044 = vmul.f32 %v3521, %v3521
    %v4045 = vmin.f32 16.0, %v4044
    %v4046 = vmul.f32 %v4045, 2.1237322e-06
    %v4047 = vadd.f32 %v4046, 0.00028619796
    %v4048 = vmul.f32 %v4045, %v4047
    %v4049 = vadd.f32 %v4048, 0.0036580483
    %v4050 = vmul.f32 %v4045, %v4049
    %v4051 = vadd.f32 %v4050, 0.05243302
    %v4052 = vmul.f32 %v4045, %v4051
    %v4053 = vadd.f32 %v4052, 0.18741608
    %v4054 = vmul.f32 %v4045, %v4053
    %v4055 = vadd.f32 %v4054, 1.1283791
    %v4056 = vmul.f32 %v3521, %v4055
    %v4057 = vmul.f32 %v4045, 3.8918573e-05
    %v4058 = vadd.f32 %v4057, 0.001143296
    %v4059 = vmul.f32 %v4045, %v4058
    %v4060 = vadd.f32 %v4059, 0.014752088
    %v4061 = vmul.f32 %v4045, %v4060
    %v4062 = vadd.f32 %v4061, 0.112945676
    %v4063 = vmul.f32 %v4045, %v4062
    %v4064 = vadd.f32 %v4063, 0.4994258
    %v4065 = vmul.f32 %v4045, %v4064
    %v4066 = vadd.f32 %v4065, 1.0
    %v4067 = vrcp.pop %v4066
    %v4068 = vmul.f32 %v4066, %v4067
    %v4069 = vsub.f32 1.0, %v4068
    %v4070 = vmul.f32 %v4067, %v4069
    %v4071 = vadd.f32 %v4067, %v4070
    %vm4072 = vweird.f32 %v4066
    %vm4073 = vweird.f32 %v4067
    %vm4074 = vmor %vm4072, %vm4073
    %v4075 = vsel %vm4074, %v4067, %v4071
    %v4076 = vand.u32 2147483647, %v4066
    %vm4077 = vcmp.eq.f32.partialorder %v4076, 8.507059e+37
    %v4078 = vand.u32 %v4066, 2147483648
    %v4079 = vor.u32 1.1754944e-38, %v4078
    %v4080 = vsel %vm4077, %v4079, %v4075
    %v4081 = vmul.f32 %v4056, %v4080
    %v4082 = vmin.f32 %v4081, 1.0
    %v4083 = vmax.f32 %v4082, -1.0
    %v4084 = vmul.f32 %v3522, %v3522
    %v4085 = vmin.f32 16.0, %v4084
    %v4086 = vmul.f32 %v4085, 2.1237322e-06
    %v4087 = vadd.f32 %v4086, 0.00028619796
    %v4088 = vmul.f32 %v4085, %v4087
    %v4089 = vadd.f32 %v4088, 0.0036580483
    %v4090 = vmul.f32 %v4085, %v4089
    %v4091 = vadd.f32 %v4090, 0.05243302
    %v4092 = vmul.f32 %v4085, %v4091
    %v4093 = vadd.f32 %v4092, 0.18741608
    %v4094 = vmul.f32 %v4085, %v4093
    %v4095 = vadd.f32 %v4094, 1.1283791
    %v4096 = vmul.f32 %v3522, %v4095
    %v4097 = vmul.f32 %v4085, 3.8918573e-05
    %v4098 = vadd.f32 %v4097, 0.001143296
    %v4099 = vmul.f32 %v4085, %v4098
    %v4100 = vadd.f32 %v4099, 0.014752088
    %v4101 = vmul.f32 %v4085, %v4100
    %v4102 = vadd.f32 %v4101, 0.112945676
    %v4103 = vmul.f32 %v4085, %v4102
    %v4104 = vadd.f32 %v4103, 0.4994258
    %v4105 = vmul.f32 %v4085, %v4104
    %v4106 = vadd.f32 %v4105, 1.0
    %v4107 = vrcp.pop %v4106
    %v4108 = vmul.f32 %v4106, %v4107
    %v4109 = vsub.f32 1.0, %v4108
    %v4110 = vmul.f32 %v4107, %v4109
    %v4111 = vadd.f32 %v4107, %v4110
    %vm4112 = vweird.f32 %v4106
    %vm4113 = vweird.f32 %v4107
    %vm4114 = vmor %vm4112, %vm4113
    %v4115 = vsel %vm4114, %v4107, %v4111
    %v4116 = vand.u32 2147483647, %v4106
    %vm4117 = vcmp.eq.f32.partialorder %v4116, 8.507059e+37
    %v4118 = vand.u32 %v4106, 2147483648
    %v4119 = vor.u32 1.1754944e-38, %v4118
    %v4120 = vsel %vm4117, %v4119, %v4115
    %v4121 = vmul.f32 %v4096, %v4120
    %v4122 = vmin.f32 %v4121, 1.0
    %v4123 = vmax.f32 %v4122, -1.0
    %v4124 = vmul.f32 %v3523, %v3523
    %v4125 = vmin.f32 16.0, %v4124
    %v4126 = vmul.f32 %v4125, 2.1237322e-06
    %v4127 = vadd.f32 %v4126, 0.00028619796
    %v4128 = vmul.f32 %v4125, %v4127
    %v4129 = vadd.f32 %v4128, 0.0036580483
    %v4130 = vmul.f32 %v4125, %v4129
    %v4131 = vadd.f32 %v4130, 0.05243302
    %v4132 = vmul.f32 %v4125, %v4131
    %v4133 = vadd.f32 %v4132, 0.18741608
    %v4134 = vmul.f32 %v4125, %v4133
    %v4135 = vadd.f32 %v4134, 1.1283791
    %v4136 = vmul.f32 %v3523, %v4135
    %v4137 = vmul.f32 %v4125, 3.8918573e-05
    %v4138 = vadd.f32 %v4137, 0.001143296
    %v4139 = vmul.f32 %v4125, %v4138
    %v4140 = vadd.f32 %v4139, 0.014752088
    %v4141 = vmul.f32 %v4125, %v4140
    %v4142 = vadd.f32 %v4141, 0.112945676
    %v4143 = vmul.f32 %v4125, %v4142
    %v4144 = vadd.f32 %v4143, 0.4994258
    %v4145 = vmul.f32 %v4125, %v4144
    %v4146 = vadd.f32 %v4145, 1.0
    %v4147 = vrcp.pop %v4146
    %v4148 = vmul.f32 %v4146, %v4147
    %v4149 = vsub.f32 1.0, %v4148
    %v4150 = vmul.f32 %v4147, %v4149
    %v4151 = vadd.f32 %v4147, %v4150
    %vm4152 = vweird.f32 %v4146
    %vm4153 = vweird.f32 %v4147
    %vm4154 = vmor %vm4152, %vm4153
    %v4155 = vsel %vm4154, %v4147, %v4151
    %v4156 = vand.u32 2147483647, %v4146
    %vm4157 = vcmp.eq.f32.partialorder %v4156, 8.507059e+37
    %v4158 = vand.u32 %v4146, 2147483648
    %v4159 = vor.u32 1.1754944e-38, %v4158
    %v4160 = vsel %vm4157, %v4159, %v4155
    %v4161 = vmul.f32 %v4136, %v4160
    %v4162 = vmin.f32 %v4161, 1.0
    %v4163 = vmax.f32 %v4162, -1.0
    %v4164 = vadd.f32 %v3563, 1.0
    %v4165 = vadd.f32 %v3603, 1.0
    %v4166 = vadd.f32 %v3643, 1.0
    %v4167 = vadd.f32 %v3683, 1.0
    %v4168 = vadd.f32 %v3723, 1.0
    %v4169 = vadd.f32 %v3763, 1.0
    %v4170 = vadd.f32 %v3803, 1.0
    %v4171 = vadd.f32 %v3843, 1.0
    %v4172 = vadd.f32 %v3883, 1.0
    %v4173 = vadd.f32 %v3923, 1.0
    %v4174 = vadd.f32 %v3963, 1.0
    %v4175 = vadd.f32 %v4003, 1.0
    %v4176 = vadd.f32 %v4043, 1.0
    %v4177 = vadd.f32 %v4083, 1.0
    %v4178 = vadd.f32 %v4123, 1.0
    %v4179 = vadd.f32 %v4163, 1.0
    %v4180 = vmul.f32 %v3492, %v4164
    %v4181 = vmul.f32 %v3493, %v4165
    %v4182 = vmul.f32 %v3494, %v4166
    %v4183 = vmul.f32 %v3495, %v4167
    %v4184 = vmul.f32 %v3496, %v4168
    %v4185 = vmul.f32 %v3497, %v4169
    %v4186 = vmul.f32 %v3498, %v4170
    %v4187 = vmul.f32 %v3499, %v4171
    %v4188 = vmul.f32 %v3500, %v4172
    %v4189 = vmul.f32 %v3501, %v4173
    %v4190 = vmul.f32 %v3502, %v4174
    %v4191 = vmul.f32 %v3503, %v4175
    %v4192 = vmul.f32 %v3504, %v4176
    %v4193 = vmul.f32 %v3505, %v4177
    %v4194 = vmul.f32 %v3506, %v4178
    %v4195 = vmul.f32 %v3507, %v4179
    %v4196 = vld [vmem:[#allocation13] sm:$0xff]
    %v4197 = vld [vmem:[#allocation13 + $0x8] sm:$0xff]
    %v4198 = vld [vmem:[#allocation13 + $0x10] sm:$0xff]
    %v4199 = vld [vmem:[#allocation13 + $0x18] sm:$0xff]
    %v4200 = vld [vmem:[#allocation13 + $0x20] sm:$0xff]
    %v4201 = vld [vmem:[#allocation13 + $0x28] sm:$0xff]
    %v4202 = vld [vmem:[#allocation13 + $0x30] sm:$0xff]
    %v4203 = vld [vmem:[#allocation13 + $0x38] sm:$0xff]
    %v4204 = vld [vmem:[#allocation13 + $0x40] sm:$0xff]
    %v4205 = vld [vmem:[#allocation13 + $0x48] sm:$0xff]
    %v4206 = vld [vmem:[#allocation13 + $0x50] sm:$0xff]
    %v4207 = vld [vmem:[#allocation13 + $0x58] sm:$0xff]
    %v4208 = vld [vmem:[#allocation13 + $0x60] sm:$0xff]
    %v4209 = vld [vmem:[#allocation13 + $0x68] sm:$0xff]
    %v4210 = vld [vmem:[#allocation13 + $0x70] sm:$0xff]
    %v4211 = vld [vmem:[#allocation13 + $0x78] sm:$0xff]
    %v4212 = vld [vmem:[%s12] sm:$0x1]
    %v4214 = vperm.slane %v4212, 0
    %4216 = vmatpush.msra.mxu0 %v4211
    %4217 = vmatpush.msra.mxu0 %v4210
    %4218 = vmatpush.msra.mxu0 %v4209
    %4219 = vmatpush.msra.mxu0 %v4208
    %4220 = vmatpush.msra.mxu0 %v4207
    %4221 = vmatpush.msra.mxu0 %v4206
    %4222 = vmatpush.msra.mxu0 %v4205
    %4223 = vmatpush.msra.mxu0 %v4204
    %4224 = vmatpush.msra.mxu0 %v4203
    %4225 = vmatpush.msra.mxu0 %v4202
    %4226 = vmatpush.msra.mxu0 %v4201
    %4227 = vmatpush.msra.mxu0 %v4200
    %4228 = vmatpush.msra.mxu0 %v4199
    %4229 = vmatpush.msra.mxu0 %v4198
    %4230 = vmatpush.msra.mxu0 %v4197
    %4231 = vmatpush.msra.mxu0 %v4196
    %4232 = vmatmul.f32.gmra.mxu0 %v4180
    %v4233 = vpop.f32.mrf.mxu0
    %v4234 = vadd.f32 %v4214, %v4233
    %4235 = vmatmul.f32.gmra.mxu0 %v4181
    %v4236 = vpop.f32.mrf.mxu0
    %v4237 = vadd.f32 %v4214, %v4236
    %4238 = vmatmul.f32.gmra.mxu0 %v4182
    %v4239 = vpop.f32.mrf.mxu0
    %v4240 = vadd.f32 %v4214, %v4239
    %4241 = vmatmul.f32.gmra.mxu0 %v4183
    %v4242 = vpop.f32.mrf.mxu0
    %v4243 = vadd.f32 %v4214, %v4242
    %4244 = vmatmul.f32.gmra.mxu0 %v4184
    %v4245 = vpop.f32.mrf.mxu0
    %v4246 = vadd.f32 %v4214, %v4245
    %4247 = vmatmul.f32.gmra.mxu0 %v4185
    %v4248 = vpop.f32.mrf.mxu0
    %v4249 = vadd.f32 %v4214, %v4248
    %4250 = vmatmul.f32.gmra.mxu0 %v4186
    %v4251 = vpop.f32.mrf.mxu0
    %v4252 = vadd.f32 %v4214, %v4251
    %4253 = vmatmul.f32.gmra.mxu0 %v4187
    %v4254 = vpop.f32.mrf.mxu0
    %v4255 = vadd.f32 %v4214, %v4254
    %4256 = vmatmul.f32.gmra.mxu0 %v4188
    %v4257 = vpop.f32.mrf.mxu0
    %v4258 = vadd.f32 %v4214, %v4257
    %4259 = vmatmul.f32.gmra.mxu0 %v4189
    %v4260 = vpop.f32.mrf.mxu0
    %v4261 = vadd.f32 %v4214, %v4260
    %4262 = vmatmul.f32.gmra.mxu0 %v4190
    %v4263 = vpop.f32.mrf.mxu0
    %v4264 = vadd.f32 %v4214, %v4263
    %4265 = vmatmul.f32.gmra.mxu0 %v4191
    %v4266 = vpop.f32.mrf.mxu0
    %v4267 = vadd.f32 %v4214, %v4266
    %4268 = vmatmul.f32.gmra.mxu0 %v4192
    %v4269 = vpop.f32.mrf.mxu0
    %v4270 = vadd.f32 %v4214, %v4269
    %4271 = vmatmul.f32.gmra.mxu0 %v4193
    %v4272 = vpop.f32.mrf.mxu0
    %v4273 = vadd.f32 %v4214, %v4272
    %4274 = vmatmul.f32.gmra.mxu0 %v4194
    %v4275 = vpop.f32.mrf.mxu0
    %v4276 = vadd.f32 %v4214, %v4275
    %4277 = vmatmul.f32.gmra.mxu0 %v4195
    %v4278 = vpop.f32.mrf.mxu0
    %v4279 = vadd.f32 %v4214, %v4278
    %4280 = vdwg.mxu0
    %v4281 = vmul.f32 %v4234, 0.5
    %v4282 = vmul.f32 %v4237, 0.5
    %v4283 = vmul.f32 %v4240, 0.5
    %v4284 = vmul.f32 %v4243, 0.5
    %v4285 = vmul.f32 %v4246, 0.5
    %v4286 = vmul.f32 %v4249, 0.5
    %v4287 = vmul.f32 %v4252, 0.5
    %v4288 = vmul.f32 %v4255, 0.5
    %v4289 = vmul.f32 %v4258, 0.5
    %v4290 = vmul.f32 %v4261, 0.5
    %v4291 = vmul.f32 %v4264, 0.5
    %v4292 = vmul.f32 %v4267, 0.5
    %v4293 = vmul.f32 %v4270, 0.5
    %v4294 = vmul.f32 %v4273, 0.5
    %v4295 = vmul.f32 %v4276, 0.5
    %v4296 = vmul.f32 %v4279, 0.5
    %v4297 = vmul.f32 %v4234, 0.70710677
    %v4298 = vmul.f32 %v4237, 0.70710677
    %v4299 = vmul.f32 %v4240, 0.70710677
    %v4300 = vmul.f32 %v4243, 0.70710677
    %v4301 = vmul.f32 %v4246, 0.70710677
    %v4302 = vmul.f32 %v4249, 0.70710677
    %v4303 = vmul.f32 %v4252, 0.70710677
    %v4304 = vmul.f32 %v4255, 0.70710677
    %v4305 = vmul.f32 %v4258, 0.70710677
    %v4306 = vmul.f32 %v4261, 0.70710677
    %v4307 = vmul.f32 %v4264, 0.70710677
    %v4308 = vmul.f32 %v4267, 0.70710677
    %v4309 = vmul.f32 %v4270, 0.70710677
    %v4310 = vmul.f32 %v4273, 0.70710677
    %v4311 = vmul.f32 %v4276, 0.70710677
    %v4312 = vmul.f32 %v4279, 0.70710677
    %v4313 = vmul.f32 %v4297, %v4297
    %v4314 = vmin.f32 16.0, %v4313
    %v4315 = vmul.f32 %v4314, 2.1237322e-06
    %v4316 = vadd.f32 %v4315, 0.00028619796
    %v4317 = vmul.f32 %v4314, %v4316
    %v4318 = vadd.f32 %v4317, 0.0036580483
    %v4319 = vmul.f32 %v4314, %v4318
    %v4320 = vadd.f32 %v4319, 0.05243302
    %v4321 = vmul.f32 %v4314, %v4320
    %v4322 = vadd.f32 %v4321, 0.18741608
    %v4323 = vmul.f32 %v4314, %v4322
    %v4324 = vadd.f32 %v4323, 1.1283791
    %v4325 = vmul.f32 %v4297, %v4324
    %v4326 = vmul.f32 %v4314, 3.8918573e-05
    %v4327 = vadd.f32 %v4326, 0.001143296
    %v4328 = vmul.f32 %v4314, %v4327
    %v4329 = vadd.f32 %v4328, 0.014752088
    %v4330 = vmul.f32 %v4314, %v4329
    %v4331 = vadd.f32 %v4330, 0.112945676
    %v4332 = vmul.f32 %v4314, %v4331
    %v4333 = vadd.f32 %v4332, 0.4994258
    %v4334 = vmul.f32 %v4314, %v4333
    %v4335 = vadd.f32 %v4334, 1.0
    %v4336 = vrcp.pop %v4335
    %v4337 = vmul.f32 %v4335, %v4336
    %v4338 = vsub.f32 1.0, %v4337
    %v4339 = vmul.f32 %v4336, %v4338
    %v4340 = vadd.f32 %v4336, %v4339
    %vm4341 = vweird.f32 %v4335
    %vm4342 = vweird.f32 %v4336
    %vm4343 = vmor %vm4341, %vm4342
    %v4344 = vsel %vm4343, %v4336, %v4340
    %v4345 = vand.u32 2147483647, %v4335
    %vm4346 = vcmp.eq.f32.partialorder %v4345, 8.507059e+37
    %v4347 = vand.u32 %v4335, 2147483648
    %v4348 = vor.u32 1.1754944e-38, %v4347
    %v4349 = vsel %vm4346, %v4348, %v4344
    %v4350 = vmul.f32 %v4325, %v4349
    %v4351 = vmin.f32 %v4350, 1.0
    %v4352 = vmax.f32 %v4351, -1.0
    %v4353 = vmul.f32 %v4298, %v4298
    %v4354 = vmin.f32 16.0, %v4353
    %v4355 = vmul.f32 %v4354, 2.1237322e-06
    %v4356 = vadd.f32 %v4355, 0.00028619796
    %v4357 = vmul.f32 %v4354, %v4356
    %v4358 = vadd.f32 %v4357, 0.0036580483
    %v4359 = vmul.f32 %v4354, %v4358
    %v4360 = vadd.f32 %v4359, 0.05243302
    %v4361 = vmul.f32 %v4354, %v4360
    %v4362 = vadd.f32 %v4361, 0.18741608
    %v4363 = vmul.f32 %v4354, %v4362
    %v4364 = vadd.f32 %v4363, 1.1283791
    %v4365 = vmul.f32 %v4298, %v4364
    %v4366 = vmul.f32 %v4354, 3.8918573e-05
    %v4367 = vadd.f32 %v4366, 0.001143296
    %v4368 = vmul.f32 %v4354, %v4367
    %v4369 = vadd.f32 %v4368, 0.014752088
    %v4370 = vmul.f32 %v4354, %v4369
    %v4371 = vadd.f32 %v4370, 0.112945676
    %v4372 = vmul.f32 %v4354, %v4371
    %v4373 = vadd.f32 %v4372, 0.4994258
    %v4374 = vmul.f32 %v4354, %v4373
    %v4375 = vadd.f32 %v4374, 1.0
    %v4376 = vrcp.pop %v4375
    %v4377 = vmul.f32 %v4375, %v4376
    %v4378 = vsub.f32 1.0, %v4377
    %v4379 = vmul.f32 %v4376, %v4378
    %v4380 = vadd.f32 %v4376, %v4379
    %vm4381 = vweird.f32 %v4375
    %vm4382 = vweird.f32 %v4376
    %vm4383 = vmor %vm4381, %vm4382
    %v4384 = vsel %vm4383, %v4376, %v4380
    %v4385 = vand.u32 2147483647, %v4375
    %vm4386 = vcmp.eq.f32.partialorder %v4385, 8.507059e+37
    %v4387 = vand.u32 %v4375, 2147483648
    %v4388 = vor.u32 1.1754944e-38, %v4387
    %v4389 = vsel %vm4386, %v4388, %v4384
    %v4390 = vmul.f32 %v4365, %v4389
    %v4391 = vmin.f32 %v4390, 1.0
    %v4392 = vmax.f32 %v4391, -1.0
    %v4393 = vmul.f32 %v4299, %v4299
    %v4394 = vmin.f32 16.0, %v4393
    %v4395 = vmul.f32 %v4394, 2.1237322e-06
    %v4396 = vadd.f32 %v4395, 0.00028619796
    %v4397 = vmul.f32 %v4394, %v4396
    %v4398 = vadd.f32 %v4397, 0.0036580483
    %v4399 = vmul.f32 %v4394, %v4398
    %v4400 = vadd.f32 %v4399, 0.05243302
    %v4401 = vmul.f32 %v4394, %v4400
    %v4402 = vadd.f32 %v4401, 0.18741608
    %v4403 = vmul.f32 %v4394, %v4402
    %v4404 = vadd.f32 %v4403, 1.1283791
    %v4405 = vmul.f32 %v4299, %v4404
    %v4406 = vmul.f32 %v4394, 3.8918573e-05
    %v4407 = vadd.f32 %v4406, 0.001143296
    %v4408 = vmul.f32 %v4394, %v4407
    %v4409 = vadd.f32 %v4408, 0.014752088
    %v4410 = vmul.f32 %v4394, %v4409
    %v4411 = vadd.f32 %v4410, 0.112945676
    %v4412 = vmul.f32 %v4394, %v4411
    %v4413 = vadd.f32 %v4412, 0.4994258
    %v4414 = vmul.f32 %v4394, %v4413
    %v4415 = vadd.f32 %v4414, 1.0
    %v4416 = vrcp.pop %v4415
    %v4417 = vmul.f32 %v4415, %v4416
    %v4418 = vsub.f32 1.0, %v4417
    %v4419 = vmul.f32 %v4416, %v4418
    %v4420 = vadd.f32 %v4416, %v4419
    %vm4421 = vweird.f32 %v4415
    %vm4422 = vweird.f32 %v4416
    %vm4423 = vmor %vm4421, %vm4422
    %v4424 = vsel %vm4423, %v4416, %v4420
    %v4425 = vand.u32 2147483647, %v4415
    %vm4426 = vcmp.eq.f32.partialorder %v4425, 8.507059e+37
    %v4427 = vand.u32 %v4415, 2147483648
    %v4428 = vor.u32 1.1754944e-38, %v4427
    %v4429 = vsel %vm4426, %v4428, %v4424
    %v4430 = vmul.f32 %v4405, %v4429
    %v4431 = vmin.f32 %v4430, 1.0
    %v4432 = vmax.f32 %v4431, -1.0
    %v4433 = vmul.f32 %v4300, %v4300
    %v4434 = vmin.f32 16.0, %v4433
    %v4435 = vmul.f32 %v4434, 2.1237322e-06
    %v4436 = vadd.f32 %v4435, 0.00028619796
    %v4437 = vmul.f32 %v4434, %v4436
    %v4438 = vadd.f32 %v4437, 0.0036580483
    %v4439 = vmul.f32 %v4434, %v4438
    %v4440 = vadd.f32 %v4439, 0.05243302
    %v4441 = vmul.f32 %v4434, %v4440
    %v4442 = vadd.f32 %v4441, 0.18741608
    %v4443 = vmul.f32 %v4434, %v4442
    %v4444 = vadd.f32 %v4443, 1.1283791
    %v4445 = vmul.f32 %v4300, %v4444
    %v4446 = vmul.f32 %v4434, 3.8918573e-05
    %v4447 = vadd.f32 %v4446, 0.001143296
    %v4448 = vmul.f32 %v4434, %v4447
    %v4449 = vadd.f32 %v4448, 0.014752088
    %v4450 = vmul.f32 %v4434, %v4449
    %v4451 = vadd.f32 %v4450, 0.112945676
    %v4452 = vmul.f32 %v4434, %v4451
    %v4453 = vadd.f32 %v4452, 0.4994258
    %v4454 = vmul.f32 %v4434, %v4453
    %v4455 = vadd.f32 %v4454, 1.0
    %v4456 = vrcp.pop %v4455
    %v4457 = vmul.f32 %v4455, %v4456
    %v4458 = vsub.f32 1.0, %v4457
    %v4459 = vmul.f32 %v4456, %v4458
    %v4460 = vadd.f32 %v4456, %v4459
    %vm4461 = vweird.f32 %v4455
    %vm4462 = vweird.f32 %v4456
    %vm4463 = vmor %vm4461, %vm4462
    %v4464 = vsel %vm4463, %v4456, %v4460
    %v4465 = vand.u32 2147483647, %v4455
    %vm4466 = vcmp.eq.f32.partialorder %v4465, 8.507059e+37
    %v4467 = vand.u32 %v4455, 2147483648
    %v4468 = vor.u32 1.1754944e-38, %v4467
    %v4469 = vsel %vm4466, %v4468, %v4464
    %v4470 = vmul.f32 %v4445, %v4469
    %v4471 = vmin.f32 %v4470, 1.0
    %v4472 = vmax.f32 %v4471, -1.0
    %v4473 = vmul.f32 %v4301, %v4301
    %v4474 = vmin.f32 16.0, %v4473
    %v4475 = vmul.f32 %v4474, 2.1237322e-06
    %v4476 = vadd.f32 %v4475, 0.00028619796
    %v4477 = vmul.f32 %v4474, %v4476
    %v4478 = vadd.f32 %v4477, 0.0036580483
    %v4479 = vmul.f32 %v4474, %v4478
    %v4480 = vadd.f32 %v4479, 0.05243302
    %v4481 = vmul.f32 %v4474, %v4480
    %v4482 = vadd.f32 %v4481, 0.18741608
    %v4483 = vmul.f32 %v4474, %v4482
    %v4484 = vadd.f32 %v4483, 1.1283791
    %v4485 = vmul.f32 %v4301, %v4484
    %v4486 = vmul.f32 %v4474, 3.8918573e-05
    %v4487 = vadd.f32 %v4486, 0.001143296
    %v4488 = vmul.f32 %v4474, %v4487
    %v4489 = vadd.f32 %v4488, 0.014752088
    %v4490 = vmul.f32 %v4474, %v4489
    %v4491 = vadd.f32 %v4490, 0.112945676
    %v4492 = vmul.f32 %v4474, %v4491
    %v4493 = vadd.f32 %v4492, 0.4994258
    %v4494 = vmul.f32 %v4474, %v4493
    %v4495 = vadd.f32 %v4494, 1.0
    %v4496 = vrcp.pop %v4495
    %v4497 = vmul.f32 %v4495, %v4496
    %v4498 = vsub.f32 1.0, %v4497
    %v4499 = vmul.f32 %v4496, %v4498
    %v4500 = vadd.f32 %v4496, %v4499
    %vm4501 = vweird.f32 %v4495
    %vm4502 = vweird.f32 %v4496
    %vm4503 = vmor %vm4501, %vm4502
    %v4504 = vsel %vm4503, %v4496, %v4500
    %v4505 = vand.u32 2147483647, %v4495
    %vm4506 = vcmp.eq.f32.partialorder %v4505, 8.507059e+37
    %v4507 = vand.u32 %v4495, 2147483648
    %v4508 = vor.u32 1.1754944e-38, %v4507
    %v4509 = vsel %vm4506, %v4508, %v4504
    %v4510 = vmul.f32 %v4485, %v4509
    %v4511 = vmin.f32 %v4510, 1.0
    %v4512 = vmax.f32 %v4511, -1.0
    %v4513 = vmul.f32 %v4302, %v4302
    %v4514 = vmin.f32 16.0, %v4513
    %v4515 = vmul.f32 %v4514, 2.1237322e-06
    %v4516 = vadd.f32 %v4515, 0.00028619796
    %v4517 = vmul.f32 %v4514, %v4516
    %v4518 = vadd.f32 %v4517, 0.0036580483
    %v4519 = vmul.f32 %v4514, %v4518
    %v4520 = vadd.f32 %v4519, 0.05243302
    %v4521 = vmul.f32 %v4514, %v4520
    %v4522 = vadd.f32 %v4521, 0.18741608
    %v4523 = vmul.f32 %v4514, %v4522
    %v4524 = vadd.f32 %v4523, 1.1283791
    %v4525 = vmul.f32 %v4302, %v4524
    %v4526 = vmul.f32 %v4514, 3.8918573e-05
    %v4527 = vadd.f32 %v4526, 0.001143296
    %v4528 = vmul.f32 %v4514, %v4527
    %v4529 = vadd.f32 %v4528, 0.014752088
    %v4530 = vmul.f32 %v4514, %v4529
    %v4531 = vadd.f32 %v4530, 0.112945676
    %v4532 = vmul.f32 %v4514, %v4531
    %v4533 = vadd.f32 %v4532, 0.4994258
    %v4534 = vmul.f32 %v4514, %v4533
    %v4535 = vadd.f32 %v4534, 1.0
    %v4536 = vrcp.pop %v4535
    %v4537 = vmul.f32 %v4535, %v4536
    %v4538 = vsub.f32 1.0, %v4537
    %v4539 = vmul.f32 %v4536, %v4538
    %v4540 = vadd.f32 %v4536, %v4539
    %vm4541 = vweird.f32 %v4535
    %vm4542 = vweird.f32 %v4536
    %vm4543 = vmor %vm4541, %vm4542
    %v4544 = vsel %vm4543, %v4536, %v4540
    %v4545 = vand.u32 2147483647, %v4535
    %vm4546 = vcmp.eq.f32.partialorder %v4545, 8.507059e+37
    %v4547 = vand.u32 %v4535, 2147483648
    %v4548 = vor.u32 1.1754944e-38, %v4547
    %v4549 = vsel %vm4546, %v4548, %v4544
    %v4550 = vmul.f32 %v4525, %v4549
    %v4551 = vmin.f32 %v4550, 1.0
    %v4552 = vmax.f32 %v4551, -1.0
    %v4553 = vmul.f32 %v4303, %v4303
    %v4554 = vmin.f32 16.0, %v4553
    %v4555 = vmul.f32 %v4554, 2.1237322e-06
    %v4556 = vadd.f32 %v4555, 0.00028619796
    %v4557 = vmul.f32 %v4554, %v4556
    %v4558 = vadd.f32 %v4557, 0.0036580483
    %v4559 = vmul.f32 %v4554, %v4558
    %v4560 = vadd.f32 %v4559, 0.05243302
    %v4561 = vmul.f32 %v4554, %v4560
    %v4562 = vadd.f32 %v4561, 0.18741608
    %v4563 = vmul.f32 %v4554, %v4562
    %v4564 = vadd.f32 %v4563, 1.1283791
    %v4565 = vmul.f32 %v4303, %v4564
    %v4566 = vmul.f32 %v4554, 3.8918573e-05
    %v4567 = vadd.f32 %v4566, 0.001143296
    %v4568 = vmul.f32 %v4554, %v4567
    %v4569 = vadd.f32 %v4568, 0.014752088
    %v4570 = vmul.f32 %v4554, %v4569
    %v4571 = vadd.f32 %v4570, 0.112945676
    %v4572 = vmul.f32 %v4554, %v4571
    %v4573 = vadd.f32 %v4572, 0.4994258
    %v4574 = vmul.f32 %v4554, %v4573
    %v4575 = vadd.f32 %v4574, 1.0
    %v4576 = vrcp.pop %v4575
    %v4577 = vmul.f32 %v4575, %v4576
    %v4578 = vsub.f32 1.0, %v4577
    %v4579 = vmul.f32 %v4576, %v4578
    %v4580 = vadd.f32 %v4576, %v4579
    %vm4581 = vweird.f32 %v4575
    %vm4582 = vweird.f32 %v4576
    %vm4583 = vmor %vm4581, %vm4582
    %v4584 = vsel %vm4583, %v4576, %v4580
    %v4585 = vand.u32 2147483647, %v4575
    %vm4586 = vcmp.eq.f32.partialorder %v4585, 8.507059e+37
    %v4587 = vand.u32 %v4575, 2147483648
    %v4588 = vor.u32 1.1754944e-38, %v4587
    %v4589 = vsel %vm4586, %v4588, %v4584
    %v4590 = vmul.f32 %v4565, %v4589
    %v4591 = vmin.f32 %v4590, 1.0
    %v4592 = vmax.f32 %v4591, -1.0
    %v4593 = vmul.f32 %v4304, %v4304
    %v4594 = vmin.f32 16.0, %v4593
    %v4595 = vmul.f32 %v4594, 2.1237322e-06
    %v4596 = vadd.f32 %v4595, 0.00028619796
    %v4597 = vmul.f32 %v4594, %v4596
    %v4598 = vadd.f32 %v4597, 0.0036580483
    %v4599 = vmul.f32 %v4594, %v4598
    %v4600 = vadd.f32 %v4599, 0.05243302
    %v4601 = vmul.f32 %v4594, %v4600
    %v4602 = vadd.f32 %v4601, 0.18741608
    %v4603 = vmul.f32 %v4594, %v4602
    %v4604 = vadd.f32 %v4603, 1.1283791
    %v4605 = vmul.f32 %v4304, %v4604
    %v4606 = vmul.f32 %v4594, 3.8918573e-05
    %v4607 = vadd.f32 %v4606, 0.001143296
    %v4608 = vmul.f32 %v4594, %v4607
    %v4609 = vadd.f32 %v4608, 0.014752088
    %v4610 = vmul.f32 %v4594, %v4609
    %v4611 = vadd.f32 %v4610, 0.112945676
    %v4612 = vmul.f32 %v4594, %v4611
    %v4613 = vadd.f32 %v4612, 0.4994258
    %v4614 = vmul.f32 %v4594, %v4613
    %v4615 = vadd.f32 %v4614, 1.0
    %v4616 = vrcp.pop %v4615
    %v4617 = vmul.f32 %v4615, %v4616
    %v4618 = vsub.f32 1.0, %v4617
    %v4619 = vmul.f32 %v4616, %v4618
    %v4620 = vadd.f32 %v4616, %v4619
    %vm4621 = vweird.f32 %v4615
    %vm4622 = vweird.f32 %v4616
    %vm4623 = vmor %vm4621, %vm4622
    %v4624 = vsel %vm4623, %v4616, %v4620
    %v4625 = vand.u32 2147483647, %v4615
    %vm4626 = vcmp.eq.f32.partialorder %v4625, 8.507059e+37
    %v4627 = vand.u32 %v4615, 2147483648
    %v4628 = vor.u32 1.1754944e-38, %v4627
    %v4629 = vsel %vm4626, %v4628, %v4624
    %v4630 = vmul.f32 %v4605, %v4629
    %v4631 = vmin.f32 %v4630, 1.0
    %v4632 = vmax.f32 %v4631, -1.0
    %v4633 = vmul.f32 %v4305, %v4305
    %v4634 = vmin.f32 16.0, %v4633
    %v4635 = vmul.f32 %v4634, 2.1237322e-06
    %v4636 = vadd.f32 %v4635, 0.00028619796
    %v4637 = vmul.f32 %v4634, %v4636
    %v4638 = vadd.f32 %v4637, 0.0036580483
    %v4639 = vmul.f32 %v4634, %v4638
    %v4640 = vadd.f32 %v4639, 0.05243302
    %v4641 = vmul.f32 %v4634, %v4640
    %v4642 = vadd.f32 %v4641, 0.18741608
    %v4643 = vmul.f32 %v4634, %v4642
    %v4644 = vadd.f32 %v4643, 1.1283791
    %v4645 = vmul.f32 %v4305, %v4644
    %v4646 = vmul.f32 %v4634, 3.8918573e-05
    %v4647 = vadd.f32 %v4646, 0.001143296
    %v4648 = vmul.f32 %v4634, %v4647
    %v4649 = vadd.f32 %v4648, 0.014752088
    %v4650 = vmul.f32 %v4634, %v4649
    %v4651 = vadd.f32 %v4650, 0.112945676
    %v4652 = vmul.f32 %v4634, %v4651
    %v4653 = vadd.f32 %v4652, 0.4994258
    %v4654 = vmul.f32 %v4634, %v4653
    %v4655 = vadd.f32 %v4654, 1.0
    %v4656 = vrcp.pop %v4655
    %v4657 = vmul.f32 %v4655, %v4656
    %v4658 = vsub.f32 1.0, %v4657
    %v4659 = vmul.f32 %v4656, %v4658
    %v4660 = vadd.f32 %v4656, %v4659
    %vm4661 = vweird.f32 %v4655
    %vm4662 = vweird.f32 %v4656
    %vm4663 = vmor %vm4661, %vm4662
    %v4664 = vsel %vm4663, %v4656, %v4660
    %v4665 = vand.u32 2147483647, %v4655
    %vm4666 = vcmp.eq.f32.partialorder %v4665, 8.507059e+37
    %v4667 = vand.u32 %v4655, 2147483648
    %v4668 = vor.u32 1.1754944e-38, %v4667
    %v4669 = vsel %vm4666, %v4668, %v4664
    %v4670 = vmul.f32 %v4645, %v4669
    %v4671 = vmin.f32 %v4670, 1.0
    %v4672 = vmax.f32 %v4671, -1.0
    %v4673 = vmul.f32 %v4306, %v4306
    %v4674 = vmin.f32 16.0, %v4673
    %v4675 = vmul.f32 %v4674, 2.1237322e-06
    %v4676 = vadd.f32 %v4675, 0.00028619796
    %v4677 = vmul.f32 %v4674, %v4676
    %v4678 = vadd.f32 %v4677, 0.0036580483
    %v4679 = vmul.f32 %v4674, %v4678
    %v4680 = vadd.f32 %v4679, 0.05243302
    %v4681 = vmul.f32 %v4674, %v4680
    %v4682 = vadd.f32 %v4681, 0.18741608
    %v4683 = vmul.f32 %v4674, %v4682
    %v4684 = vadd.f32 %v4683, 1.1283791
    %v4685 = vmul.f32 %v4306, %v4684
    %v4686 = vmul.f32 %v4674, 3.8918573e-05
    %v4687 = vadd.f32 %v4686, 0.001143296
    %v4688 = vmul.f32 %v4674, %v4687
    %v4689 = vadd.f32 %v4688, 0.014752088
    %v4690 = vmul.f32 %v4674, %v4689
    %v4691 = vadd.f32 %v4690, 0.112945676
    %v4692 = vmul.f32 %v4674, %v4691
    %v4693 = vadd.f32 %v4692, 0.4994258
    %v4694 = vmul.f32 %v4674, %v4693
    %v4695 = vadd.f32 %v4694, 1.0
    %v4696 = vrcp.pop %v4695
    %v4697 = vmul.f32 %v4695, %v4696
    %v4698 = vsub.f32 1.0, %v4697
    %v4699 = vmul.f32 %v4696, %v4698
    %v4700 = vadd.f32 %v4696, %v4699
    %vm4701 = vweird.f32 %v4695
    %vm4702 = vweird.f32 %v4696
    %vm4703 = vmor %vm4701, %vm4702
    %v4704 = vsel %vm4703, %v4696, %v4700
    %v4705 = vand.u32 2147483647, %v4695
    %vm4706 = vcmp.eq.f32.partialorder %v4705, 8.507059e+37
    %v4707 = vand.u32 %v4695, 2147483648
    %v4708 = vor.u32 1.1754944e-38, %v4707
    %v4709 = vsel %vm4706, %v4708, %v4704
    %v4710 = vmul.f32 %v4685, %v4709
    %v4711 = vmin.f32 %v4710, 1.0
    %v4712 = vmax.f32 %v4711, -1.0
    %v4713 = vmul.f32 %v4307, %v4307
    %v4714 = vmin.f32 16.0, %v4713
    %v4715 = vmul.f32 %v4714, 2.1237322e-06
    %v4716 = vadd.f32 %v4715, 0.00028619796
    %v4717 = vmul.f32 %v4714, %v4716
    %v4718 = vadd.f32 %v4717, 0.0036580483
    %v4719 = vmul.f32 %v4714, %v4718
    %v4720 = vadd.f32 %v4719, 0.05243302
    %v4721 = vmul.f32 %v4714, %v4720
    %v4722 = vadd.f32 %v4721, 0.18741608
    %v4723 = vmul.f32 %v4714, %v4722
    %v4724 = vadd.f32 %v4723, 1.1283791
    %v4725 = vmul.f32 %v4307, %v4724
    %v4726 = vmul.f32 %v4714, 3.8918573e-05
    %v4727 = vadd.f32 %v4726, 0.001143296
    %v4728 = vmul.f32 %v4714, %v4727
    %v4729 = vadd.f32 %v4728, 0.014752088
    %v4730 = vmul.f32 %v4714, %v4729
    %v4731 = vadd.f32 %v4730, 0.112945676
    %v4732 = vmul.f32 %v4714, %v4731
    %v4733 = vadd.f32 %v4732, 0.4994258
    %v4734 = vmul.f32 %v4714, %v4733
    %v4735 = vadd.f32 %v4734, 1.0
    %v4736 = vrcp.pop %v4735
    %v4737 = vmul.f32 %v4735, %v4736
    %v4738 = vsub.f32 1.0, %v4737
    %v4739 = vmul.f32 %v4736, %v4738
    %v4740 = vadd.f32 %v4736, %v4739
    %vm4741 = vweird.f32 %v4735
    %vm4742 = vweird.f32 %v4736
    %vm4743 = vmor %vm4741, %vm4742
    %v4744 = vsel %vm4743, %v4736, %v4740
    %v4745 = vand.u32 2147483647, %v4735
    %vm4746 = vcmp.eq.f32.partialorder %v4745, 8.507059e+37
    %v4747 = vand.u32 %v4735, 2147483648
    %v4748 = vor.u32 1.1754944e-38, %v4747
    %v4749 = vsel %vm4746, %v4748, %v4744
    %v4750 = vmul.f32 %v4725, %v4749
    %v4751 = vmin.f32 %v4750, 1.0
    %v4752 = vmax.f32 %v4751, -1.0
    %v4753 = vmul.f32 %v4308, %v4308
    %v4754 = vmin.f32 16.0, %v4753
    %v4755 = vmul.f32 %v4754, 2.1237322e-06
    %v4756 = vadd.f32 %v4755, 0.00028619796
    %v4757 = vmul.f32 %v4754, %v4756
    %v4758 = vadd.f32 %v4757, 0.0036580483
    %v4759 = vmul.f32 %v4754, %v4758
    %v4760 = vadd.f32 %v4759, 0.05243302
    %v4761 = vmul.f32 %v4754, %v4760
    %v4762 = vadd.f32 %v4761, 0.18741608
    %v4763 = vmul.f32 %v4754, %v4762
    %v4764 = vadd.f32 %v4763, 1.1283791
    %v4765 = vmul.f32 %v4308, %v4764
    %v4766 = vmul.f32 %v4754, 3.8918573e-05
    %v4767 = vadd.f32 %v4766, 0.001143296
    %v4768 = vmul.f32 %v4754, %v4767
    %v4769 = vadd.f32 %v4768, 0.014752088
    %v4770 = vmul.f32 %v4754, %v4769
    %v4771 = vadd.f32 %v4770, 0.112945676
    %v4772 = vmul.f32 %v4754, %v4771
    %v4773 = vadd.f32 %v4772, 0.4994258
    %v4774 = vmul.f32 %v4754, %v4773
    %v4775 = vadd.f32 %v4774, 1.0
    %v4776 = vrcp.pop %v4775
    %v4777 = vmul.f32 %v4775, %v4776
    %v4778 = vsub.f32 1.0, %v4777
    %v4779 = vmul.f32 %v4776, %v4778
    %v4780 = vadd.f32 %v4776, %v4779
    %vm4781 = vweird.f32 %v4775
    %vm4782 = vweird.f32 %v4776
    %vm4783 = vmor %vm4781, %vm4782
    %v4784 = vsel %vm4783, %v4776, %v4780
    %v4785 = vand.u32 2147483647, %v4775
    %vm4786 = vcmp.eq.f32.partialorder %v4785, 8.507059e+37
    %v4787 = vand.u32 %v4775, 2147483648
    %v4788 = vor.u32 1.1754944e-38, %v4787
    %v4789 = vsel %vm4786, %v4788, %v4784
    %v4790 = vmul.f32 %v4765, %v4789
    %v4791 = vmin.f32 %v4790, 1.0
    %v4792 = vmax.f32 %v4791, -1.0
    %v4793 = vmul.f32 %v4309, %v4309
    %v4794 = vmin.f32 16.0, %v4793
    %v4795 = vmul.f32 %v4794, 2.1237322e-06
    %v4796 = vadd.f32 %v4795, 0.00028619796
    %v4797 = vmul.f32 %v4794, %v4796
    %v4798 = vadd.f32 %v4797, 0.0036580483
    %v4799 = vmul.f32 %v4794, %v4798
    %v4800 = vadd.f32 %v4799, 0.05243302
    %v4801 = vmul.f32 %v4794, %v4800
    %v4802 = vadd.f32 %v4801, 0.18741608
    %v4803 = vmul.f32 %v4794, %v4802
    %v4804 = vadd.f32 %v4803, 1.1283791
    %v4805 = vmul.f32 %v4309, %v4804
    %v4806 = vmul.f32 %v4794, 3.8918573e-05
    %v4807 = vadd.f32 %v4806, 0.001143296
    %v4808 = vmul.f32 %v4794, %v4807
    %v4809 = vadd.f32 %v4808, 0.014752088
    %v4810 = vmul.f32 %v4794, %v4809
    %v4811 = vadd.f32 %v4810, 0.112945676
    %v4812 = vmul.f32 %v4794, %v4811
    %v4813 = vadd.f32 %v4812, 0.4994258
    %v4814 = vmul.f32 %v4794, %v4813
    %v4815 = vadd.f32 %v4814, 1.0
    %v4816 = vrcp.pop %v4815
    %v4817 = vmul.f32 %v4815, %v4816
    %v4818 = vsub.f32 1.0, %v4817
    %v4819 = vmul.f32 %v4816, %v4818
    %v4820 = vadd.f32 %v4816, %v4819
    %vm4821 = vweird.f32 %v4815
    %vm4822 = vweird.f32 %v4816
    %vm4823 = vmor %vm4821, %vm4822
    %v4824 = vsel %vm4823, %v4816, %v4820
    %v4825 = vand.u32 2147483647, %v4815
    %vm4826 = vcmp.eq.f32.partialorder %v4825, 8.507059e+37
    %v4827 = vand.u32 %v4815, 2147483648
    %v4828 = vor.u32 1.1754944e-38, %v4827
    %v4829 = vsel %vm4826, %v4828, %v4824
    %v4830 = vmul.f32 %v4805, %v4829
    %v4831 = vmin.f32 %v4830, 1.0
    %v4832 = vmax.f32 %v4831, -1.0
    %v4833 = vmul.f32 %v4310, %v4310
    %v4834 = vmin.f32 16.0, %v4833
    %v4835 = vmul.f32 %v4834, 2.1237322e-06
    %v4836 = vadd.f32 %v4835, 0.00028619796
    %v4837 = vmul.f32 %v4834, %v4836
    %v4838 = vadd.f32 %v4837, 0.0036580483
    %v4839 = vmul.f32 %v4834, %v4838
    %v4840 = vadd.f32 %v4839, 0.05243302
    %v4841 = vmul.f32 %v4834, %v4840
    %v4842 = vadd.f32 %v4841, 0.18741608
    %v4843 = vmul.f32 %v4834, %v4842
    %v4844 = vadd.f32 %v4843, 1.1283791
    %v4845 = vmul.f32 %v4310, %v4844
    %v4846 = vmul.f32 %v4834, 3.8918573e-05
    %v4847 = vadd.f32 %v4846, 0.001143296
    %v4848 = vmul.f32 %v4834, %v4847
    %v4849 = vadd.f32 %v4848, 0.014752088
    %v4850 = vmul.f32 %v4834, %v4849
    %v4851 = vadd.f32 %v4850, 0.112945676
    %v4852 = vmul.f32 %v4834, %v4851
    %v4853 = vadd.f32 %v4852, 0.4994258
    %v4854 = vmul.f32 %v4834, %v4853
    %v4855 = vadd.f32 %v4854, 1.0
    %v4856 = vrcp.pop %v4855
    %v4857 = vmul.f32 %v4855, %v4856
    %v4858 = vsub.f32 1.0, %v4857
    %v4859 = vmul.f32 %v4856, %v4858
    %v4860 = vadd.f32 %v4856, %v4859
    %vm4861 = vweird.f32 %v4855
    %vm4862 = vweird.f32 %v4856
    %vm4863 = vmor %vm4861, %vm4862
    %v4864 = vsel %vm4863, %v4856, %v4860
    %v4865 = vand.u32 2147483647, %v4855
    %vm4866 = vcmp.eq.f32.partialorder %v4865, 8.507059e+37
    %v4867 = vand.u32 %v4855, 2147483648
    %v4868 = vor.u32 1.1754944e-38, %v4867
    %v4869 = vsel %vm4866, %v4868, %v4864
    %v4870 = vmul.f32 %v4845, %v4869
    %v4871 = vmin.f32 %v4870, 1.0
    %v4872 = vmax.f32 %v4871, -1.0
    %v4873 = vmul.f32 %v4311, %v4311
    %v4874 = vmin.f32 16.0, %v4873
    %v4875 = vmul.f32 %v4874, 2.1237322e-06
    %v4876 = vadd.f32 %v4875, 0.00028619796
    %v4877 = vmul.f32 %v4874, %v4876
    %v4878 = vadd.f32 %v4877, 0.0036580483
    %v4879 = vmul.f32 %v4874, %v4878
    %v4880 = vadd.f32 %v4879, 0.05243302
    %v4881 = vmul.f32 %v4874, %v4880
    %v4882 = vadd.f32 %v4881, 0.18741608
    %v4883 = vmul.f32 %v4874, %v4882
    %v4884 = vadd.f32 %v4883, 1.1283791
    %v4885 = vmul.f32 %v4311, %v4884
    %v4886 = vmul.f32 %v4874, 3.8918573e-05
    %v4887 = vadd.f32 %v4886, 0.001143296
    %v4888 = vmul.f32 %v4874, %v4887
    %v4889 = vadd.f32 %v4888, 0.014752088
    %v4890 = vmul.f32 %v4874, %v4889
    %v4891 = vadd.f32 %v4890, 0.112945676
    %v4892 = vmul.f32 %v4874, %v4891
    %v4893 = vadd.f32 %v4892, 0.4994258
    %v4894 = vmul.f32 %v4874, %v4893
    %v4895 = vadd.f32 %v4894, 1.0
    %v4896 = vrcp.pop %v4895
    %v4897 = vmul.f32 %v4895, %v4896
    %v4898 = vsub.f32 1.0, %v4897
    %v4899 = vmul.f32 %v4896, %v4898
    %v4900 = vadd.f32 %v4896, %v4899
    %vm4901 = vweird.f32 %v4895
    %vm4902 = vweird.f32 %v4896
    %vm4903 = vmor %vm4901, %vm4902
    %v4904 = vsel %vm4903, %v4896, %v4900
    %v4905 = vand.u32 2147483647, %v4895
    %vm4906 = vcmp.eq.f32.partialorder %v4905, 8.507059e+37
    %v4907 = vand.u32 %v4895, 2147483648
    %v4908 = vor.u32 1.1754944e-38, %v4907
    %v4909 = vsel %vm4906, %v4908, %v4904
    %v4910 = vmul.f32 %v4885, %v4909
    %v4911 = vmin.f32 %v4910, 1.0
    %v4912 = vmax.f32 %v4911, -1.0
    %v4913 = vmul.f32 %v4312, %v4312
    %v4914 = vmin.f32 16.0, %v4913
    %v4915 = vmul.f32 %v4914, 2.1237322e-06
    %v4916 = vadd.f32 %v4915, 0.00028619796
    %v4917 = vmul.f32 %v4914, %v4916
    %v4918 = vadd.f32 %v4917, 0.0036580483
    %v4919 = vmul.f32 %v4914, %v4918
    %v4920 = vadd.f32 %v4919, 0.05243302
    %v4921 = vmul.f32 %v4914, %v4920
    %v4922 = vadd.f32 %v4921, 0.18741608
    %v4923 = vmul.f32 %v4914, %v4922
    %v4924 = vadd.f32 %v4923, 1.1283791
    %v4925 = vmul.f32 %v4312, %v4924
    %v4926 = vmul.f32 %v4914, 3.8918573e-05
    %v4927 = vadd.f32 %v4926, 0.001143296
    %v4928 = vmul.f32 %v4914, %v4927
    %v4929 = vadd.f32 %v4928, 0.014752088
    %v4930 = vmul.f32 %v4914, %v4929
    %v4931 = vadd.f32 %v4930, 0.112945676
    %v4932 = vmul.f32 %v4914, %v4931
    %v4933 = vadd.f32 %v4932, 0.4994258
    %v4934 = vmul.f32 %v4914, %v4933
    %v4935 = vadd.f32 %v4934, 1.0
    %v4936 = vrcp.pop %v4935
    %v4937 = vmul.f32 %v4935, %v4936
    %v4938 = vsub.f32 1.0, %v4937
    %v4939 = vmul.f32 %v4936, %v4938
    %v4940 = vadd.f32 %v4936, %v4939
    %vm4941 = vweird.f32 %v4935
    %vm4942 = vweird.f32 %v4936
    %vm4943 = vmor %vm4941, %vm4942
    %v4944 = vsel %vm4943, %v4936, %v4940
    %v4945 = vand.u32 2147483647, %v4935
    %vm4946 = vcmp.eq.f32.partialorder %v4945, 8.507059e+37
    %v4947 = vand.u32 %v4935, 2147483648
    %v4948 = vor.u32 1.1754944e-38, %v4947
    %v4949 = vsel %vm4946, %v4948, %v4944
    %v4950 = vmul.f32 %v4925, %v4949
    %v4951 = vmin.f32 %v4950, 1.0
    %v4952 = vmax.f32 %v4951, -1.0
    %v4953 = vadd.f32 %v4352, 1.0
    %v4954 = vadd.f32 %v4392, 1.0
    %v4955 = vadd.f32 %v4432, 1.0
    %v4956 = vadd.f32 %v4472, 1.0
    %v4957 = vadd.f32 %v4512, 1.0
    %v4958 = vadd.f32 %v4552, 1.0
    %v4959 = vadd.f32 %v4592, 1.0
    %v4960 = vadd.f32 %v4632, 1.0
    %v4961 = vadd.f32 %v4672, 1.0
    %v4962 = vadd.f32 %v4712, 1.0
    %v4963 = vadd.f32 %v4752, 1.0
    %v4964 = vadd.f32 %v4792, 1.0
    %v4965 = vadd.f32 %v4832, 1.0
    %v4966 = vadd.f32 %v4872, 1.0
    %v4967 = vadd.f32 %v4912, 1.0
    %v4968 = vadd.f32 %v4952, 1.0
    %v4969 = vmul.f32 %v4281, %v4953
    %v4970 = vmul.f32 %v4282, %v4954
    %v4971 = vmul.f32 %v4283, %v4955
    %v4972 = vmul.f32 %v4284, %v4956
    %v4973 = vmul.f32 %v4285, %v4957
    %v4974 = vmul.f32 %v4286, %v4958
    %v4975 = vmul.f32 %v4287, %v4959
    %v4976 = vmul.f32 %v4288, %v4960
    %v4977 = vmul.f32 %v4289, %v4961
    %v4978 = vmul.f32 %v4290, %v4962
    %v4979 = vmul.f32 %v4291, %v4963
    %v4980 = vmul.f32 %v4292, %v4964
    %v4981 = vmul.f32 %v4293, %v4965
    %v4982 = vmul.f32 %v4294, %v4966
    %v4983 = vmul.f32 %v4295, %v4967
    %v4984 = vmul.f32 %v4296, %v4968
    %v4985 = vld [vmem:[#allocation14] sm:$0xff]
    %v4986 = vld [vmem:[#allocation14 + $0x8] sm:$0xff]
    %v4987 = vld [vmem:[#allocation14 + $0x10] sm:$0xff]
    %v4988 = vld [vmem:[#allocation14 + $0x18] sm:$0xff]
    %v4989 = vld [vmem:[#allocation14 + $0x20] sm:$0xff]
    %v4990 = vld [vmem:[#allocation14 + $0x28] sm:$0xff]
    %v4991 = vld [vmem:[#allocation14 + $0x30] sm:$0xff]
    %v4992 = vld [vmem:[#allocation14 + $0x38] sm:$0xff]
    %v4993 = vld [vmem:[#allocation14 + $0x40] sm:$0xff]
    %v4994 = vld [vmem:[#allocation14 + $0x48] sm:$0xff]
    %v4995 = vld [vmem:[#allocation14 + $0x50] sm:$0xff]
    %v4996 = vld [vmem:[#allocation14 + $0x58] sm:$0xff]
    %v4997 = vld [vmem:[#allocation14 + $0x60] sm:$0xff]
    %v4998 = vld [vmem:[#allocation14 + $0x68] sm:$0xff]
    %v4999 = vld [vmem:[#allocation14 + $0x70] sm:$0xff]
    %v5000 = vld [vmem:[#allocation14 + $0x78] sm:$0xff]
    %v5001 = vld [vmem:[%s14] sm:$0x1]
    %v5003 = vperm.slane %v5001, 0
    %5005 = vmatpush.msra.mxu0 %v5000
    %5006 = vmatpush.msra.mxu0 %v4999
    %5007 = vmatpush.msra.mxu0 %v4998
    %5008 = vmatpush.msra.mxu0 %v4997
    %5009 = vmatpush.msra.mxu0 %v4996
    %5010 = vmatpush.msra.mxu0 %v4995
    %5011 = vmatpush.msra.mxu0 %v4994
    %5012 = vmatpush.msra.mxu0 %v4993
    %5013 = vmatpush.msra.mxu0 %v4992
    %5014 = vmatpush.msra.mxu0 %v4991
    %5015 = vmatpush.msra.mxu0 %v4990
    %5016 = vmatpush.msra.mxu0 %v4989
    %5017 = vmatpush.msra.mxu0 %v4988
    %5018 = vmatpush.msra.mxu0 %v4987
    %5019 = vmatpush.msra.mxu0 %v4986
    %5020 = vmatpush.msra.mxu0 %v4985
    %5021 = vmatmul.f32.gmra.mxu0 %v4969
    %v5022 = vpop.f32.mrf.mxu0
    %v5023 = vadd.f32 %v5003, %v5022
    %5024 = vmatmul.f32.gmra.mxu0 %v4970
    %v5025 = vpop.f32.mrf.mxu0
    %v5026 = vadd.f32 %v5003, %v5025
    %5027 = vmatmul.f32.gmra.mxu0 %v4971
    %v5028 = vpop.f32.mrf.mxu0
    %v5029 = vadd.f32 %v5003, %v5028
    %5030 = vmatmul.f32.gmra.mxu0 %v4972
    %v5031 = vpop.f32.mrf.mxu0
    %v5032 = vadd.f32 %v5003, %v5031
    %5033 = vmatmul.f32.gmra.mxu0 %v4973
    %v5034 = vpop.f32.mrf.mxu0
    %v5035 = vadd.f32 %v5003, %v5034
    %5036 = vmatmul.f32.gmra.mxu0 %v4974
    %v5037 = vpop.f32.mrf.mxu0
    %v5038 = vadd.f32 %v5003, %v5037
    %5039 = vmatmul.f32.gmra.mxu0 %v4975
    %v5040 = vpop.f32.mrf.mxu0
    %v5041 = vadd.f32 %v5003, %v5040
    %5042 = vmatmul.f32.gmra.mxu0 %v4976
    %v5043 = vpop.f32.mrf.mxu0
    %v5044 = vadd.f32 %v5003, %v5043
    %5045 = vmatmul.f32.gmra.mxu0 %v4977
    %v5046 = vpop.f32.mrf.mxu0
    %v5047 = vadd.f32 %v5003, %v5046
    %5048 = vmatmul.f32.gmra.mxu0 %v4978
    %v5049 = vpop.f32.mrf.mxu0
    %v5050 = vadd.f32 %v5003, %v5049
    %5051 = vmatmul.f32.gmra.mxu0 %v4979
    %v5052 = vpop.f32.mrf.mxu0
    %v5053 = vadd.f32 %v5003, %v5052
    %5054 = vmatmul.f32.gmra.mxu0 %v4980
    %v5055 = vpop.f32.mrf.mxu0
    %v5056 = vadd.f32 %v5003, %v5055
    %5057 = vmatmul.f32.gmra.mxu0 %v4981
    %v5058 = vpop.f32.mrf.mxu0
    %v5059 = vadd.f32 %v5003, %v5058
    %5060 = vmatmul.f32.gmra.mxu0 %v4982
    %v5061 = vpop.f32.mrf.mxu0
    %v5062 = vadd.f32 %v5003, %v5061
    %5063 = vmatmul.f32.gmra.mxu0 %v4983
    %v5064 = vpop.f32.mrf.mxu0
    %v5065 = vadd.f32 %v5003, %v5064
    %5066 = vmatmul.f32.gmra.mxu0 %v4984
    %v5067 = vpop.f32.mrf.mxu0
    %v5068 = vadd.f32 %v5003, %v5067
    %5069 = vdwg.mxu0
    %v5070 = vmul.f32 %v5023, 0.5
    %v5071 = vmul.f32 %v5026, 0.5
    %v5072 = vmul.f32 %v5029, 0.5
    %v5073 = vmul.f32 %v5032, 0.5
    %v5074 = vmul.f32 %v5035, 0.5
    %v5075 = vmul.f32 %v5038, 0.5
    %v5076 = vmul.f32 %v5041, 0.5
    %v5077 = vmul.f32 %v5044, 0.5
    %v5078 = vmul.f32 %v5047, 0.5
    %v5079 = vmul.f32 %v5050, 0.5
    %v5080 = vmul.f32 %v5053, 0.5
    %v5081 = vmul.f32 %v5056, 0.5
    %v5082 = vmul.f32 %v5059, 0.5
    %v5083 = vmul.f32 %v5062, 0.5
    %v5084 = vmul.f32 %v5065, 0.5
    %v5085 = vmul.f32 %v5068, 0.5
    %v5086 = vmul.f32 %v5023, 0.70710677
    %v5087 = vmul.f32 %v5026, 0.70710677
    %v5088 = vmul.f32 %v5029, 0.70710677
    %v5089 = vmul.f32 %v5032, 0.70710677
    %v5090 = vmul.f32 %v5035, 0.70710677
    %v5091 = vmul.f32 %v5038, 0.70710677
    %v5092 = vmul.f32 %v5041, 0.70710677
    %v5093 = vmul.f32 %v5044, 0.70710677
    %v5094 = vmul.f32 %v5047, 0.70710677
    %v5095 = vmul.f32 %v5050, 0.70710677
    %v5096 = vmul.f32 %v5053, 0.70710677
    %v5097 = vmul.f32 %v5056, 0.70710677
    %v5098 = vmul.f32 %v5059, 0.70710677
    %v5099 = vmul.f32 %v5062, 0.70710677
    %v5100 = vmul.f32 %v5065, 0.70710677
    %v5101 = vmul.f32 %v5068, 0.70710677
    %v5102 = vmul.f32 %v5086, %v5086
    %v5103 = vmin.f32 16.0, %v5102
    %v5104 = vmul.f32 %v5103, 2.1237322e-06
    %v5105 = vadd.f32 %v5104, 0.00028619796
    %v5106 = vmul.f32 %v5103, %v5105
    %v5107 = vadd.f32 %v5106, 0.0036580483
    %v5108 = vmul.f32 %v5103, %v5107
    %v5109 = vadd.f32 %v5108, 0.05243302
    %v5110 = vmul.f32 %v5103, %v5109
    %v5111 = vadd.f32 %v5110, 0.18741608
    %v5112 = vmul.f32 %v5103, %v5111
    %v5113 = vadd.f32 %v5112, 1.1283791
    %v5114 = vmul.f32 %v5086, %v5113
    %v5115 = vmul.f32 %v5103, 3.8918573e-05
    %v5116 = vadd.f32 %v5115, 0.001143296
    %v5117 = vmul.f32 %v5103, %v5116
    %v5118 = vadd.f32 %v5117, 0.014752088
    %v5119 = vmul.f32 %v5103, %v5118
    %v5120 = vadd.f32 %v5119, 0.112945676
    %v5121 = vmul.f32 %v5103, %v5120
    %v5122 = vadd.f32 %v5121, 0.4994258
    %v5123 = vmul.f32 %v5103, %v5122
    %v5124 = vadd.f32 %v5123, 1.0
    %v5125 = vrcp.pop %v5124
    %v5126 = vmul.f32 %v5124, %v5125
    %v5127 = vsub.f32 1.0, %v5126
    %v5128 = vmul.f32 %v5125, %v5127
    %v5129 = vadd.f32 %v5125, %v5128
    %vm5130 = vweird.f32 %v5124
    %vm5131 = vweird.f32 %v5125
    %vm5132 = vmor %vm5130, %vm5131
    %v5133 = vsel %vm5132, %v5125, %v5129
    %v5134 = vand.u32 2147483647, %v5124
    %vm5135 = vcmp.eq.f32.partialorder %v5134, 8.507059e+37
    %v5136 = vand.u32 %v5124, 2147483648
    %v5137 = vor.u32 1.1754944e-38, %v5136
    %v5138 = vsel %vm5135, %v5137, %v5133
    %v5139 = vmul.f32 %v5114, %v5138
    %v5140 = vmin.f32 %v5139, 1.0
    %v5141 = vmax.f32 %v5140, -1.0
    %v5142 = vmul.f32 %v5087, %v5087
    %v5143 = vmin.f32 16.0, %v5142
    %v5144 = vmul.f32 %v5143, 2.1237322e-06
    %v5145 = vadd.f32 %v5144, 0.00028619796
    %v5146 = vmul.f32 %v5143, %v5145
    %v5147 = vadd.f32 %v5146, 0.0036580483
    %v5148 = vmul.f32 %v5143, %v5147
    %v5149 = vadd.f32 %v5148, 0.05243302
    %v5150 = vmul.f32 %v5143, %v5149
    %v5151 = vadd.f32 %v5150, 0.18741608
    %v5152 = vmul.f32 %v5143, %v5151
    %v5153 = vadd.f32 %v5152, 1.1283791
    %v5154 = vmul.f32 %v5087, %v5153
    %v5155 = vmul.f32 %v5143, 3.8918573e-05
    %v5156 = vadd.f32 %v5155, 0.001143296
    %v5157 = vmul.f32 %v5143, %v5156
    %v5158 = vadd.f32 %v5157, 0.014752088
    %v5159 = vmul.f32 %v5143, %v5158
    %v5160 = vadd.f32 %v5159, 0.112945676
    %v5161 = vmul.f32 %v5143, %v5160
    %v5162 = vadd.f32 %v5161, 0.4994258
    %v5163 = vmul.f32 %v5143, %v5162
    %v5164 = vadd.f32 %v5163, 1.0
    %v5165 = vrcp.pop %v5164
    %v5166 = vmul.f32 %v5164, %v5165
    %v5167 = vsub.f32 1.0, %v5166
    %v5168 = vmul.f32 %v5165, %v5167
    %v5169 = vadd.f32 %v5165, %v5168
    %vm5170 = vweird.f32 %v5164
    %vm5171 = vweird.f32 %v5165
    %vm5172 = vmor %vm5170, %vm5171
    %v5173 = vsel %vm5172, %v5165, %v5169
    %v5174 = vand.u32 2147483647, %v5164
    %vm5175 = vcmp.eq.f32.partialorder %v5174, 8.507059e+37
    %v5176 = vand.u32 %v5164, 2147483648
    %v5177 = vor.u32 1.1754944e-38, %v5176
    %v5178 = vsel %vm5175, %v5177, %v5173
    %v5179 = vmul.f32 %v5154, %v5178
    %v5180 = vmin.f32 %v5179, 1.0
    %v5181 = vmax.f32 %v5180, -1.0
    %v5182 = vmul.f32 %v5088, %v5088
    %v5183 = vmin.f32 16.0, %v5182
    %v5184 = vmul.f32 %v5183, 2.1237322e-06
    %v5185 = vadd.f32 %v5184, 0.00028619796
    %v5186 = vmul.f32 %v5183, %v5185
    %v5187 = vadd.f32 %v5186, 0.0036580483
    %v5188 = vmul.f32 %v5183, %v5187
    %v5189 = vadd.f32 %v5188, 0.05243302
    %v5190 = vmul.f32 %v5183, %v5189
    %v5191 = vadd.f32 %v5190, 0.18741608
    %v5192 = vmul.f32 %v5183, %v5191
    %v5193 = vadd.f32 %v5192, 1.1283791
    %v5194 = vmul.f32 %v5088, %v5193
    %v5195 = vmul.f32 %v5183, 3.8918573e-05
    %v5196 = vadd.f32 %v5195, 0.001143296
    %v5197 = vmul.f32 %v5183, %v5196
    %v5198 = vadd.f32 %v5197, 0.014752088
    %v5199 = vmul.f32 %v5183, %v5198
    %v5200 = vadd.f32 %v5199, 0.112945676
    %v5201 = vmul.f32 %v5183, %v5200
    %v5202 = vadd.f32 %v5201, 0.4994258
    %v5203 = vmul.f32 %v5183, %v5202
    %v5204 = vadd.f32 %v5203, 1.0
    %v5205 = vrcp.pop %v5204
    %v5206 = vmul.f32 %v5204, %v5205
    %v5207 = vsub.f32 1.0, %v5206
    %v5208 = vmul.f32 %v5205, %v5207
    %v5209 = vadd.f32 %v5205, %v5208
    %vm5210 = vweird.f32 %v5204
    %vm5211 = vweird.f32 %v5205
    %vm5212 = vmor %vm5210, %vm5211
    %v5213 = vsel %vm5212, %v5205, %v5209
    %v5214 = vand.u32 2147483647, %v5204
    %vm5215 = vcmp.eq.f32.partialorder %v5214, 8.507059e+37
    %v5216 = vand.u32 %v5204, 2147483648
    %v5217 = vor.u32 1.1754944e-38, %v5216
    %v5218 = vsel %vm5215, %v5217, %v5213
    %v5219 = vmul.f32 %v5194, %v5218
    %v5220 = vmin.f32 %v5219, 1.0
    %v5221 = vmax.f32 %v5220, -1.0
    %v5222 = vmul.f32 %v5089, %v5089
    %v5223 = vmin.f32 16.0, %v5222
    %v5224 = vmul.f32 %v5223, 2.1237322e-06
    %v5225 = vadd.f32 %v5224, 0.00028619796
    %v5226 = vmul.f32 %v5223, %v5225
    %v5227 = vadd.f32 %v5226, 0.0036580483
    %v5228 = vmul.f32 %v5223, %v5227
    %v5229 = vadd.f32 %v5228, 0.05243302
    %v5230 = vmul.f32 %v5223, %v5229
    %v5231 = vadd.f32 %v5230, 0.18741608
    %v5232 = vmul.f32 %v5223, %v5231
    %v5233 = vadd.f32 %v5232, 1.1283791
    %v5234 = vmul.f32 %v5089, %v5233
    %v5235 = vmul.f32 %v5223, 3.8918573e-05
    %v5236 = vadd.f32 %v5235, 0.001143296
    %v5237 = vmul.f32 %v5223, %v5236
    %v5238 = vadd.f32 %v5237, 0.014752088
    %v5239 = vmul.f32 %v5223, %v5238
    %v5240 = vadd.f32 %v5239, 0.112945676
    %v5241 = vmul.f32 %v5223, %v5240
    %v5242 = vadd.f32 %v5241, 0.4994258
    %v5243 = vmul.f32 %v5223, %v5242
    %v5244 = vadd.f32 %v5243, 1.0
    %v5245 = vrcp.pop %v5244
    %v5246 = vmul.f32 %v5244, %v5245
    %v5247 = vsub.f32 1.0, %v5246
    %v5248 = vmul.f32 %v5245, %v5247
    %v5249 = vadd.f32 %v5245, %v5248
    %vm5250 = vweird.f32 %v5244
    %vm5251 = vweird.f32 %v5245
    %vm5252 = vmor %vm5250, %vm5251
    %v5253 = vsel %vm5252, %v5245, %v5249
    %v5254 = vand.u32 2147483647, %v5244
    %vm5255 = vcmp.eq.f32.partialorder %v5254, 8.507059e+37
    %v5256 = vand.u32 %v5244, 2147483648
    %v5257 = vor.u32 1.1754944e-38, %v5256
    %v5258 = vsel %vm5255, %v5257, %v5253
    %v5259 = vmul.f32 %v5234, %v5258
    %v5260 = vmin.f32 %v5259, 1.0
    %v5261 = vmax.f32 %v5260, -1.0
    %v5262 = vmul.f32 %v5090, %v5090
    %v5263 = vmin.f32 16.0, %v5262
    %v5264 = vmul.f32 %v5263, 2.1237322e-06
    %v5265 = vadd.f32 %v5264, 0.00028619796
    %v5266 = vmul.f32 %v5263, %v5265
    %v5267 = vadd.f32 %v5266, 0.0036580483
    %v5268 = vmul.f32 %v5263, %v5267
    %v5269 = vadd.f32 %v5268, 0.05243302
    %v5270 = vmul.f32 %v5263, %v5269
    %v5271 = vadd.f32 %v5270, 0.18741608
    %v5272 = vmul.f32 %v5263, %v5271
    %v5273 = vadd.f32 %v5272, 1.1283791
    %v5274 = vmul.f32 %v5090, %v5273
    %v5275 = vmul.f32 %v5263, 3.8918573e-05
    %v5276 = vadd.f32 %v5275, 0.001143296
    %v5277 = vmul.f32 %v5263, %v5276
    %v5278 = vadd.f32 %v5277, 0.014752088
    %v5279 = vmul.f32 %v5263, %v5278
    %v5280 = vadd.f32 %v5279, 0.112945676
    %v5281 = vmul.f32 %v5263, %v5280
    %v5282 = vadd.f32 %v5281, 0.4994258
    %v5283 = vmul.f32 %v5263, %v5282
    %v5284 = vadd.f32 %v5283, 1.0
    %v5285 = vrcp.pop %v5284
    %v5286 = vmul.f32 %v5284, %v5285
    %v5287 = vsub.f32 1.0, %v5286
    %v5288 = vmul.f32 %v5285, %v5287
    %v5289 = vadd.f32 %v5285, %v5288
    %vm5290 = vweird.f32 %v5284
    %vm5291 = vweird.f32 %v5285
    %vm5292 = vmor %vm5290, %vm5291
    %v5293 = vsel %vm5292, %v5285, %v5289
    %v5294 = vand.u32 2147483647, %v5284
    %vm5295 = vcmp.eq.f32.partialorder %v5294, 8.507059e+37
    %v5296 = vand.u32 %v5284, 2147483648
    %v5297 = vor.u32 1.1754944e-38, %v5296
    %v5298 = vsel %vm5295, %v5297, %v5293
    %v5299 = vmul.f32 %v5274, %v5298
    %v5300 = vmin.f32 %v5299, 1.0
    %v5301 = vmax.f32 %v5300, -1.0
    %v5302 = vmul.f32 %v5091, %v5091
    %v5303 = vmin.f32 16.0, %v5302
    %v5304 = vmul.f32 %v5303, 2.1237322e-06
    %v5305 = vadd.f32 %v5304, 0.00028619796
    %v5306 = vmul.f32 %v5303, %v5305
    %v5307 = vadd.f32 %v5306, 0.0036580483
    %v5308 = vmul.f32 %v5303, %v5307
    %v5309 = vadd.f32 %v5308, 0.05243302
    %v5310 = vmul.f32 %v5303, %v5309
    %v5311 = vadd.f32 %v5310, 0.18741608
    %v5312 = vmul.f32 %v5303, %v5311
    %v5313 = vadd.f32 %v5312, 1.1283791
    %v5314 = vmul.f32 %v5091, %v5313
    %v5315 = vmul.f32 %v5303, 3.8918573e-05
    %v5316 = vadd.f32 %v5315, 0.001143296
    %v5317 = vmul.f32 %v5303, %v5316
    %v5318 = vadd.f32 %v5317, 0.014752088
    %v5319 = vmul.f32 %v5303, %v5318
    %v5320 = vadd.f32 %v5319, 0.112945676
    %v5321 = vmul.f32 %v5303, %v5320
    %v5322 = vadd.f32 %v5321, 0.4994258
    %v5323 = vmul.f32 %v5303, %v5322
    %v5324 = vadd.f32 %v5323, 1.0
    %v5325 = vrcp.pop %v5324
    %v5326 = vmul.f32 %v5324, %v5325
    %v5327 = vsub.f32 1.0, %v5326
    %v5328 = vmul.f32 %v5325, %v5327
    %v5329 = vadd.f32 %v5325, %v5328
    %vm5330 = vweird.f32 %v5324
    %vm5331 = vweird.f32 %v5325
    %vm5332 = vmor %vm5330, %vm5331
    %v5333 = vsel %vm5332, %v5325, %v5329
    %v5334 = vand.u32 2147483647, %v5324
    %vm5335 = vcmp.eq.f32.partialorder %v5334, 8.507059e+37
    %v5336 = vand.u32 %v5324, 2147483648
    %v5337 = vor.u32 1.1754944e-38, %v5336
    %v5338 = vsel %vm5335, %v5337, %v5333
    %v5339 = vmul.f32 %v5314, %v5338
    %v5340 = vmin.f32 %v5339, 1.0
    %v5341 = vmax.f32 %v5340, -1.0
    %v5342 = vmul.f32 %v5092, %v5092
    %v5343 = vmin.f32 16.0, %v5342
    %v5344 = vmul.f32 %v5343, 2.1237322e-06
    %v5345 = vadd.f32 %v5344, 0.00028619796
    %v5346 = vmul.f32 %v5343, %v5345
    %v5347 = vadd.f32 %v5346, 0.0036580483
    %v5348 = vmul.f32 %v5343, %v5347
    %v5349 = vadd.f32 %v5348, 0.05243302
    %v5350 = vmul.f32 %v5343, %v5349
    %v5351 = vadd.f32 %v5350, 0.18741608
    %v5352 = vmul.f32 %v5343, %v5351
    %v5353 = vadd.f32 %v5352, 1.1283791
    %v5354 = vmul.f32 %v5092, %v5353
    %v5355 = vmul.f32 %v5343, 3.8918573e-05
    %v5356 = vadd.f32 %v5355, 0.001143296
    %v5357 = vmul.f32 %v5343, %v5356
    %v5358 = vadd.f32 %v5357, 0.014752088
    %v5359 = vmul.f32 %v5343, %v5358
    %v5360 = vadd.f32 %v5359, 0.112945676
    %v5361 = vmul.f32 %v5343, %v5360
    %v5362 = vadd.f32 %v5361, 0.4994258
    %v5363 = vmul.f32 %v5343, %v5362
    %v5364 = vadd.f32 %v5363, 1.0
    %v5365 = vrcp.pop %v5364
    %v5366 = vmul.f32 %v5364, %v5365
    %v5367 = vsub.f32 1.0, %v5366
    %v5368 = vmul.f32 %v5365, %v5367
    %v5369 = vadd.f32 %v5365, %v5368
    %vm5370 = vweird.f32 %v5364
    %vm5371 = vweird.f32 %v5365
    %vm5372 = vmor %vm5370, %vm5371
    %v5373 = vsel %vm5372, %v5365, %v5369
    %v5374 = vand.u32 2147483647, %v5364
    %vm5375 = vcmp.eq.f32.partialorder %v5374, 8.507059e+37
    %v5376 = vand.u32 %v5364, 2147483648
    %v5377 = vor.u32 1.1754944e-38, %v5376
    %v5378 = vsel %vm5375, %v5377, %v5373
    %v5379 = vmul.f32 %v5354, %v5378
    %v5380 = vmin.f32 %v5379, 1.0
    %v5381 = vmax.f32 %v5380, -1.0
    %v5382 = vmul.f32 %v5093, %v5093
    %v5383 = vmin.f32 16.0, %v5382
    %v5384 = vmul.f32 %v5383, 2.1237322e-06
    %v5385 = vadd.f32 %v5384, 0.00028619796
    %v5386 = vmul.f32 %v5383, %v5385
    %v5387 = vadd.f32 %v5386, 0.0036580483
    %v5388 = vmul.f32 %v5383, %v5387
    %v5389 = vadd.f32 %v5388, 0.05243302
    %v5390 = vmul.f32 %v5383, %v5389
    %v5391 = vadd.f32 %v5390, 0.18741608
    %v5392 = vmul.f32 %v5383, %v5391
    %v5393 = vadd.f32 %v5392, 1.1283791
    %v5394 = vmul.f32 %v5093, %v5393
    %v5395 = vmul.f32 %v5383, 3.8918573e-05
    %v5396 = vadd.f32 %v5395, 0.001143296
    %v5397 = vmul.f32 %v5383, %v5396
    %v5398 = vadd.f32 %v5397, 0.014752088
    %v5399 = vmul.f32 %v5383, %v5398
    %v5400 = vadd.f32 %v5399, 0.112945676
    %v5401 = vmul.f32 %v5383, %v5400
    %v5402 = vadd.f32 %v5401, 0.4994258
    %v5403 = vmul.f32 %v5383, %v5402
    %v5404 = vadd.f32 %v5403, 1.0
    %v5405 = vrcp.pop %v5404
    %v5406 = vmul.f32 %v5404, %v5405
    %v5407 = vsub.f32 1.0, %v5406
    %v5408 = vmul.f32 %v5405, %v5407
    %v5409 = vadd.f32 %v5405, %v5408
    %vm5410 = vweird.f32 %v5404
    %vm5411 = vweird.f32 %v5405
    %vm5412 = vmor %vm5410, %vm5411
    %v5413 = vsel %vm5412, %v5405, %v5409
    %v5414 = vand.u32 2147483647, %v5404
    %vm5415 = vcmp.eq.f32.partialorder %v5414, 8.507059e+37
    %v5416 = vand.u32 %v5404, 2147483648
    %v5417 = vor.u32 1.1754944e-38, %v5416
    %v5418 = vsel %vm5415, %v5417, %v5413
    %v5419 = vmul.f32 %v5394, %v5418
    %v5420 = vmin.f32 %v5419, 1.0
    %v5421 = vmax.f32 %v5420, -1.0
    %v5422 = vmul.f32 %v5094, %v5094
    %v5423 = vmin.f32 16.0, %v5422
    %v5424 = vmul.f32 %v5423, 2.1237322e-06
    %v5425 = vadd.f32 %v5424, 0.00028619796
    %v5426 = vmul.f32 %v5423, %v5425
    %v5427 = vadd.f32 %v5426, 0.0036580483
    %v5428 = vmul.f32 %v5423, %v5427
    %v5429 = vadd.f32 %v5428, 0.05243302
    %v5430 = vmul.f32 %v5423, %v5429
    %v5431 = vadd.f32 %v5430, 0.18741608
    %v5432 = vmul.f32 %v5423, %v5431
    %v5433 = vadd.f32 %v5432, 1.1283791
    %v5434 = vmul.f32 %v5094, %v5433
    %v5435 = vmul.f32 %v5423, 3.8918573e-05
    %v5436 = vadd.f32 %v5435, 0.001143296
    %v5437 = vmul.f32 %v5423, %v5436
    %v5438 = vadd.f32 %v5437, 0.014752088
    %v5439 = vmul.f32 %v5423, %v5438
    %v5440 = vadd.f32 %v5439, 0.112945676
    %v5441 = vmul.f32 %v5423, %v5440
    %v5442 = vadd.f32 %v5441, 0.4994258
    %v5443 = vmul.f32 %v5423, %v5442
    %v5444 = vadd.f32 %v5443, 1.0
    %v5445 = vrcp.pop %v5444
    %v5446 = vmul.f32 %v5444, %v5445
    %v5447 = vsub.f32 1.0, %v5446
    %v5448 = vmul.f32 %v5445, %v5447
    %v5449 = vadd.f32 %v5445, %v5448
    %vm5450 = vweird.f32 %v5444
    %vm5451 = vweird.f32 %v5445
    %vm5452 = vmor %vm5450, %vm5451
    %v5453 = vsel %vm5452, %v5445, %v5449
    %v5454 = vand.u32 2147483647, %v5444
    %vm5455 = vcmp.eq.f32.partialorder %v5454, 8.507059e+37
    %v5456 = vand.u32 %v5444, 2147483648
    %v5457 = vor.u32 1.1754944e-38, %v5456
    %v5458 = vsel %vm5455, %v5457, %v5453
    %v5459 = vmul.f32 %v5434, %v5458
    %v5460 = vmin.f32 %v5459, 1.0
    %v5461 = vmax.f32 %v5460, -1.0
    %v5462 = vmul.f32 %v5095, %v5095
    %v5463 = vmin.f32 16.0, %v5462
    %v5464 = vmul.f32 %v5463, 2.1237322e-06
    %v5465 = vadd.f32 %v5464, 0.00028619796
    %v5466 = vmul.f32 %v5463, %v5465
    %v5467 = vadd.f32 %v5466, 0.0036580483
    %v5468 = vmul.f32 %v5463, %v5467
    %v5469 = vadd.f32 %v5468, 0.05243302
    %v5470 = vmul.f32 %v5463, %v5469
    %v5471 = vadd.f32 %v5470, 0.18741608
    %v5472 = vmul.f32 %v5463, %v5471
    %v5473 = vadd.f32 %v5472, 1.1283791
    %v5474 = vmul.f32 %v5095, %v5473
    %v5475 = vmul.f32 %v5463, 3.8918573e-05
    %v5476 = vadd.f32 %v5475, 0.001143296
    %v5477 = vmul.f32 %v5463, %v5476
    %v5478 = vadd.f32 %v5477, 0.014752088
    %v5479 = vmul.f32 %v5463, %v5478
    %v5480 = vadd.f32 %v5479, 0.112945676
    %v5481 = vmul.f32 %v5463, %v5480
    %v5482 = vadd.f32 %v5481, 0.4994258
    %v5483 = vmul.f32 %v5463, %v5482
    %v5484 = vadd.f32 %v5483, 1.0
    %v5485 = vrcp.pop %v5484
    %v5486 = vmul.f32 %v5484, %v5485
    %v5487 = vsub.f32 1.0, %v5486
    %v5488 = vmul.f32 %v5485, %v5487
    %v5489 = vadd.f32 %v5485, %v5488
    %vm5490 = vweird.f32 %v5484
    %vm5491 = vweird.f32 %v5485
    %vm5492 = vmor %vm5490, %vm5491
    %v5493 = vsel %vm5492, %v5485, %v5489
    %v5494 = vand.u32 2147483647, %v5484
    %vm5495 = vcmp.eq.f32.partialorder %v5494, 8.507059e+37
    %v5496 = vand.u32 %v5484, 2147483648
    %v5497 = vor.u32 1.1754944e-38, %v5496
    %v5498 = vsel %vm5495, %v5497, %v5493
    %v5499 = vmul.f32 %v5474, %v5498
    %v5500 = vmin.f32 %v5499, 1.0
    %v5501 = vmax.f32 %v5500, -1.0
    %v5502 = vmul.f32 %v5096, %v5096
    %v5503 = vmin.f32 16.0, %v5502
    %v5504 = vmul.f32 %v5503, 2.1237322e-06
    %v5505 = vadd.f32 %v5504, 0.00028619796
    %v5506 = vmul.f32 %v5503, %v5505
    %v5507 = vadd.f32 %v5506, 0.0036580483
    %v5508 = vmul.f32 %v5503, %v5507
    %v5509 = vadd.f32 %v5508, 0.05243302
    %v5510 = vmul.f32 %v5503, %v5509
    %v5511 = vadd.f32 %v5510, 0.18741608
    %v5512 = vmul.f32 %v5503, %v5511
    %v5513 = vadd.f32 %v5512, 1.1283791
    %v5514 = vmul.f32 %v5096, %v5513
    %v5515 = vmul.f32 %v5503, 3.8918573e-05
    %v5516 = vadd.f32 %v5515, 0.001143296
    %v5517 = vmul.f32 %v5503, %v5516
    %v5518 = vadd.f32 %v5517, 0.014752088
    %v5519 = vmul.f32 %v5503, %v5518
    %v5520 = vadd.f32 %v5519, 0.112945676
    %v5521 = vmul.f32 %v5503, %v5520
    %v5522 = vadd.f32 %v5521, 0.4994258
    %v5523 = vmul.f32 %v5503, %v5522
    %v5524 = vadd.f32 %v5523, 1.0
    %v5525 = vrcp.pop %v5524
    %v5526 = vmul.f32 %v5524, %v5525
    %v5527 = vsub.f32 1.0, %v5526
    %v5528 = vmul.f32 %v5525, %v5527
    %v5529 = vadd.f32 %v5525, %v5528
    %vm5530 = vweird.f32 %v5524
    %vm5531 = vweird.f32 %v5525
    %vm5532 = vmor %vm5530, %vm5531
    %v5533 = vsel %vm5532, %v5525, %v5529
    %v5534 = vand.u32 2147483647, %v5524
    %vm5535 = vcmp.eq.f32.partialorder %v5534, 8.507059e+37
    %v5536 = vand.u32 %v5524, 2147483648
    %v5537 = vor.u32 1.1754944e-38, %v5536
    %v5538 = vsel %vm5535, %v5537, %v5533
    %v5539 = vmul.f32 %v5514, %v5538
    %v5540 = vmin.f32 %v5539, 1.0
    %v5541 = vmax.f32 %v5540, -1.0
    %v5542 = vmul.f32 %v5097, %v5097
    %v5543 = vmin.f32 16.0, %v5542
    %v5544 = vmul.f32 %v5543, 2.1237322e-06
    %v5545 = vadd.f32 %v5544, 0.00028619796
    %v5546 = vmul.f32 %v5543, %v5545
    %v5547 = vadd.f32 %v5546, 0.0036580483
    %v5548 = vmul.f32 %v5543, %v5547
    %v5549 = vadd.f32 %v5548, 0.05243302
    %v5550 = vmul.f32 %v5543, %v5549
    %v5551 = vadd.f32 %v5550, 0.18741608
    %v5552 = vmul.f32 %v5543, %v5551
    %v5553 = vadd.f32 %v5552, 1.1283791
    %v5554 = vmul.f32 %v5097, %v5553
    %v5555 = vmul.f32 %v5543, 3.8918573e-05
    %v5556 = vadd.f32 %v5555, 0.001143296
    %v5557 = vmul.f32 %v5543, %v5556
    %v5558 = vadd.f32 %v5557, 0.014752088
    %v5559 = vmul.f32 %v5543, %v5558
    %v5560 = vadd.f32 %v5559, 0.112945676
    %v5561 = vmul.f32 %v5543, %v5560
    %v5562 = vadd.f32 %v5561, 0.4994258
    %v5563 = vmul.f32 %v5543, %v5562
    %v5564 = vadd.f32 %v5563, 1.0
    %v5565 = vrcp.pop %v5564
    %v5566 = vmul.f32 %v5564, %v5565
    %v5567 = vsub.f32 1.0, %v5566
    %v5568 = vmul.f32 %v5565, %v5567
    %v5569 = vadd.f32 %v5565, %v5568
    %vm5570 = vweird.f32 %v5564
    %vm5571 = vweird.f32 %v5565
    %vm5572 = vmor %vm5570, %vm5571
    %v5573 = vsel %vm5572, %v5565, %v5569
    %v5574 = vand.u32 2147483647, %v5564
    %vm5575 = vcmp.eq.f32.partialorder %v5574, 8.507059e+37
    %v5576 = vand.u32 %v5564, 2147483648
    %v5577 = vor.u32 1.1754944e-38, %v5576
    %v5578 = vsel %vm5575, %v5577, %v5573
    %v5579 = vmul.f32 %v5554, %v5578
    %v5580 = vmin.f32 %v5579, 1.0
    %v5581 = vmax.f32 %v5580, -1.0
    %v5582 = vmul.f32 %v5098, %v5098
    %v5583 = vmin.f32 16.0, %v5582
    %v5584 = vmul.f32 %v5583, 2.1237322e-06
    %v5585 = vadd.f32 %v5584, 0.00028619796
    %v5586 = vmul.f32 %v5583, %v5585
    %v5587 = vadd.f32 %v5586, 0.0036580483
    %v5588 = vmul.f32 %v5583, %v5587
    %v5589 = vadd.f32 %v5588, 0.05243302
    %v5590 = vmul.f32 %v5583, %v5589
    %v5591 = vadd.f32 %v5590, 0.18741608
    %v5592 = vmul.f32 %v5583, %v5591
    %v5593 = vadd.f32 %v5592, 1.1283791
    %v5594 = vmul.f32 %v5098, %v5593
    %v5595 = vmul.f32 %v5583, 3.8918573e-05
    %v5596 = vadd.f32 %v5595, 0.001143296
    %v5597 = vmul.f32 %v5583, %v5596
    %v5598 = vadd.f32 %v5597, 0.014752088
    %v5599 = vmul.f32 %v5583, %v5598
    %v5600 = vadd.f32 %v5599, 0.112945676
    %v5601 = vmul.f32 %v5583, %v5600
    %v5602 = vadd.f32 %v5601, 0.4994258
    %v5603 = vmul.f32 %v5583, %v5602
    %v5604 = vadd.f32 %v5603, 1.0
    %v5605 = vrcp.pop %v5604
    %v5606 = vmul.f32 %v5604, %v5605
    %v5607 = vsub.f32 1.0, %v5606
    %v5608 = vmul.f32 %v5605, %v5607
    %v5609 = vadd.f32 %v5605, %v5608
    %vm5610 = vweird.f32 %v5604
    %vm5611 = vweird.f32 %v5605
    %vm5612 = vmor %vm5610, %vm5611
    %v5613 = vsel %vm5612, %v5605, %v5609
    %v5614 = vand.u32 2147483647, %v5604
    %vm5615 = vcmp.eq.f32.partialorder %v5614, 8.507059e+37
    %v5616 = vand.u32 %v5604, 2147483648
    %v5617 = vor.u32 1.1754944e-38, %v5616
    %v5618 = vsel %vm5615, %v5617, %v5613
    %v5619 = vmul.f32 %v5594, %v5618
    %v5620 = vmin.f32 %v5619, 1.0
    %v5621 = vmax.f32 %v5620, -1.0
    %v5622 = vmul.f32 %v5099, %v5099
    %v5623 = vmin.f32 16.0, %v5622
    %v5624 = vmul.f32 %v5623, 2.1237322e-06
    %v5625 = vadd.f32 %v5624, 0.00028619796
    %v5626 = vmul.f32 %v5623, %v5625
    %v5627 = vadd.f32 %v5626, 0.0036580483
    %v5628 = vmul.f32 %v5623, %v5627
    %v5629 = vadd.f32 %v5628, 0.05243302
    %v5630 = vmul.f32 %v5623, %v5629
    %v5631 = vadd.f32 %v5630, 0.18741608
    %v5632 = vmul.f32 %v5623, %v5631
    %v5633 = vadd.f32 %v5632, 1.1283791
    %v5634 = vmul.f32 %v5099, %v5633
    %v5635 = vmul.f32 %v5623, 3.8918573e-05
    %v5636 = vadd.f32 %v5635, 0.001143296
    %v5637 = vmul.f32 %v5623, %v5636
    %v5638 = vadd.f32 %v5637, 0.014752088
    %v5639 = vmul.f32 %v5623, %v5638
    %v5640 = vadd.f32 %v5639, 0.112945676
    %v5641 = vmul.f32 %v5623, %v5640
    %v5642 = vadd.f32 %v5641, 0.4994258
    %v5643 = vmul.f32 %v5623, %v5642
    %v5644 = vadd.f32 %v5643, 1.0
    %v5645 = vrcp.pop %v5644
    %v5646 = vmul.f32 %v5644, %v5645
    %v5647 = vsub.f32 1.0, %v5646
    %v5648 = vmul.f32 %v5645, %v5647
    %v5649 = vadd.f32 %v5645, %v5648
    %vm5650 = vweird.f32 %v5644
    %vm5651 = vweird.f32 %v5645
    %vm5652 = vmor %vm5650, %vm5651
    %v5653 = vsel %vm5652, %v5645, %v5649
    %v5654 = vand.u32 2147483647, %v5644
    %vm5655 = vcmp.eq.f32.partialorder %v5654, 8.507059e+37
    %v5656 = vand.u32 %v5644, 2147483648
    %v5657 = vor.u32 1.1754944e-38, %v5656
    %v5658 = vsel %vm5655, %v5657, %v5653
    %v5659 = vmul.f32 %v5634, %v5658
    %v5660 = vmin.f32 %v5659, 1.0
    %v5661 = vmax.f32 %v5660, -1.0
    %v5662 = vmul.f32 %v5100, %v5100
    %v5663 = vmin.f32 16.0, %v5662
    %v5664 = vmul.f32 %v5663, 2.1237322e-06
    %v5665 = vadd.f32 %v5664, 0.00028619796
    %v5666 = vmul.f32 %v5663, %v5665
    %v5667 = vadd.f32 %v5666, 0.0036580483
    %v5668 = vmul.f32 %v5663, %v5667
    %v5669 = vadd.f32 %v5668, 0.05243302
    %v5670 = vmul.f32 %v5663, %v5669
    %v5671 = vadd.f32 %v5670, 0.18741608
    %v5672 = vmul.f32 %v5663, %v5671
    %v5673 = vadd.f32 %v5672, 1.1283791
    %v5674 = vmul.f32 %v5100, %v5673
    %v5675 = vmul.f32 %v5663, 3.8918573e-05
    %v5676 = vadd.f32 %v5675, 0.001143296
    %v5677 = vmul.f32 %v5663, %v5676
    %v5678 = vadd.f32 %v5677, 0.014752088
    %v5679 = vmul.f32 %v5663, %v5678
    %v5680 = vadd.f32 %v5679, 0.112945676
    %v5681 = vmul.f32 %v5663, %v5680
    %v5682 = vadd.f32 %v5681, 0.4994258
    %v5683 = vmul.f32 %v5663, %v5682
    %v5684 = vadd.f32 %v5683, 1.0
    %v5685 = vrcp.pop %v5684
    %v5686 = vmul.f32 %v5684, %v5685
    %v5687 = vsub.f32 1.0, %v5686
    %v5688 = vmul.f32 %v5685, %v5687
    %v5689 = vadd.f32 %v5685, %v5688
    %vm5690 = vweird.f32 %v5684
    %vm5691 = vweird.f32 %v5685
    %vm5692 = vmor %vm5690, %vm5691
    %v5693 = vsel %vm5692, %v5685, %v5689
    %v5694 = vand.u32 2147483647, %v5684
    %vm5695 = vcmp.eq.f32.partialorder %v5694, 8.507059e+37
    %v5696 = vand.u32 %v5684, 2147483648
    %v5697 = vor.u32 1.1754944e-38, %v5696
    %v5698 = vsel %vm5695, %v5697, %v5693
    %v5699 = vmul.f32 %v5674, %v5698
    %v5700 = vmin.f32 %v5699, 1.0
    %v5701 = vmax.f32 %v5700, -1.0
    %v5702 = vmul.f32 %v5101, %v5101
    %v5703 = vmin.f32 16.0, %v5702
    %v5704 = vmul.f32 %v5703, 2.1237322e-06
    %v5705 = vadd.f32 %v5704, 0.00028619796
    %v5706 = vmul.f32 %v5703, %v5705
    %v5707 = vadd.f32 %v5706, 0.0036580483
    %v5708 = vmul.f32 %v5703, %v5707
    %v5709 = vadd.f32 %v5708, 0.05243302
    %v5710 = vmul.f32 %v5703, %v5709
    %v5711 = vadd.f32 %v5710, 0.18741608
    %v5712 = vmul.f32 %v5703, %v5711
    %v5713 = vadd.f32 %v5712, 1.1283791
    %v5714 = vmul.f32 %v5101, %v5713
    %v5715 = vmul.f32 %v5703, 3.8918573e-05
    %v5716 = vadd.f32 %v5715, 0.001143296
    %v5717 = vmul.f32 %v5703, %v5716
    %v5718 = vadd.f32 %v5717, 0.014752088
    %v5719 = vmul.f32 %v5703, %v5718
    %v5720 = vadd.f32 %v5719, 0.112945676
    %v5721 = vmul.f32 %v5703, %v5720
    %v5722 = vadd.f32 %v5721, 0.4994258
    %v5723 = vmul.f32 %v5703, %v5722
    %v5724 = vadd.f32 %v5723, 1.0
    %v5725 = vrcp.pop %v5724
    %v5726 = vmul.f32 %v5724, %v5725
    %v5727 = vsub.f32 1.0, %v5726
    %v5728 = vmul.f32 %v5725, %v5727
    %v5729 = vadd.f32 %v5725, %v5728
    %vm5730 = vweird.f32 %v5724
    %vm5731 = vweird.f32 %v5725
    %vm5732 = vmor %vm5730, %vm5731
    %v5733 = vsel %vm5732, %v5725, %v5729
    %v5734 = vand.u32 2147483647, %v5724
    %vm5735 = vcmp.eq.f32.partialorder %v5734, 8.507059e+37
    %v5736 = vand.u32 %v5724, 2147483648
    %v5737 = vor.u32 1.1754944e-38, %v5736
    %v5738 = vsel %vm5735, %v5737, %v5733
    %v5739 = vmul.f32 %v5714, %v5738
    %v5740 = vmin.f32 %v5739, 1.0
    %v5741 = vmax.f32 %v5740, -1.0
    %v5742 = vadd.f32 %v5141, 1.0
    %v5743 = vadd.f32 %v5181, 1.0
    %v5744 = vadd.f32 %v5221, 1.0
    %v5745 = vadd.f32 %v5261, 1.0
    %v5746 = vadd.f32 %v5301, 1.0
    %v5747 = vadd.f32 %v5341, 1.0
    %v5748 = vadd.f32 %v5381, 1.0
    %v5749 = vadd.f32 %v5421, 1.0
    %v5750 = vadd.f32 %v5461, 1.0
    %v5751 = vadd.f32 %v5501, 1.0
    %v5752 = vadd.f32 %v5541, 1.0
    %v5753 = vadd.f32 %v5581, 1.0
    %v5754 = vadd.f32 %v5621, 1.0
    %v5755 = vadd.f32 %v5661, 1.0
    %v5756 = vadd.f32 %v5701, 1.0
    %v5757 = vadd.f32 %v5741, 1.0
    %v5758 = vmul.f32 %v5070, %v5742
    %v5759 = vmul.f32 %v5071, %v5743
    %v5760 = vmul.f32 %v5072, %v5744
    %v5761 = vmul.f32 %v5073, %v5745
    %v5762 = vmul.f32 %v5074, %v5746
    %v5763 = vmul.f32 %v5075, %v5747
    %v5764 = vmul.f32 %v5076, %v5748
    %v5765 = vmul.f32 %v5077, %v5749
    %v5766 = vmul.f32 %v5078, %v5750
    %v5767 = vmul.f32 %v5079, %v5751
    %v5768 = vmul.f32 %v5080, %v5752
    %v5769 = vmul.f32 %v5081, %v5753
    %v5770 = vmul.f32 %v5082, %v5754
    %v5771 = vmul.f32 %v5083, %v5755
    %v5772 = vmul.f32 %v5084, %v5756
    %v5773 = vmul.f32 %v5085, %v5757
    %v5774 = vld [vmem:[#allocation16] sm:$0xff]
    %v5775 = vld [vmem:[#allocation16 + $0x8] sm:$0xff]
    %v5776 = vld [vmem:[#allocation16 + $0x10] sm:$0xff]
    %v5777 = vld [vmem:[#allocation16 + $0x18] sm:$0xff]
    %v5778 = vld [vmem:[#allocation16 + $0x20] sm:$0xff]
    %v5779 = vld [vmem:[#allocation16 + $0x28] sm:$0xff]
    %v5780 = vld [vmem:[#allocation16 + $0x30] sm:$0xff]
    %v5781 = vld [vmem:[#allocation16 + $0x38] sm:$0xff]
    %v5782 = vld [vmem:[#allocation16 + $0x40] sm:$0xff]
    %v5783 = vld [vmem:[#allocation16 + $0x48] sm:$0xff]
    %v5784 = vld [vmem:[#allocation16 + $0x50] sm:$0xff]
    %v5785 = vld [vmem:[#allocation16 + $0x58] sm:$0xff]
    %v5786 = vld [vmem:[#allocation16 + $0x60] sm:$0xff]
    %v5787 = vld [vmem:[#allocation16 + $0x68] sm:$0xff]
    %v5788 = vld [vmem:[#allocation16 + $0x70] sm:$0xff]
    %v5789 = vld [vmem:[#allocation16 + $0x78] sm:$0xff]
    %v5790 = vld [vmem:[%s16] sm:$0x1]
    %v5792 = vperm.slane %v5790, 0
    %5794 = vmatpush.msra.mxu0 %v5789
    %5795 = vmatpush.msra.mxu0 %v5788
    %5796 = vmatpush.msra.mxu0 %v5787
    %5797 = vmatpush.msra.mxu0 %v5786
    %5798 = vmatpush.msra.mxu0 %v5785
    %5799 = vmatpush.msra.mxu0 %v5784
    %5800 = vmatpush.msra.mxu0 %v5783
    %5801 = vmatpush.msra.mxu0 %v5782
    %5802 = vmatpush.msra.mxu0 %v5781
    %5803 = vmatpush.msra.mxu0 %v5780
    %5804 = vmatpush.msra.mxu0 %v5779
    %5805 = vmatpush.msra.mxu0 %v5778
    %5806 = vmatpush.msra.mxu0 %v5777
    %5807 = vmatpush.msra.mxu0 %v5776
    %5808 = vmatpush.msra.mxu0 %v5775
    %5809 = vmatpush.msra.mxu0 %v5774
    %5810 = vmatmul.f32.gmra.mxu0 %v5758
    %v5811 = vpop.f32.mrf.mxu0
    %v5812 = vadd.f32 %v5792, %v5811
    %5813 = vmatmul.f32.gmra.mxu0 %v5759
    %v5814 = vpop.f32.mrf.mxu0
    %v5815 = vadd.f32 %v5792, %v5814
    %5816 = vmatmul.f32.gmra.mxu0 %v5760
    %v5817 = vpop.f32.mrf.mxu0
    %v5818 = vadd.f32 %v5792, %v5817
    %5819 = vmatmul.f32.gmra.mxu0 %v5761
    %v5820 = vpop.f32.mrf.mxu0
    %v5821 = vadd.f32 %v5792, %v5820
    %5822 = vmatmul.f32.gmra.mxu0 %v5762
    %v5823 = vpop.f32.mrf.mxu0
    %v5824 = vadd.f32 %v5792, %v5823
    %5825 = vmatmul.f32.gmra.mxu0 %v5763
    %v5826 = vpop.f32.mrf.mxu0
    %v5827 = vadd.f32 %v5792, %v5826
    %5828 = vmatmul.f32.gmra.mxu0 %v5764
    %v5829 = vpop.f32.mrf.mxu0
    %v5830 = vadd.f32 %v5792, %v5829
    %5831 = vmatmul.f32.gmra.mxu0 %v5765
    %v5832 = vpop.f32.mrf.mxu0
    %v5833 = vadd.f32 %v5792, %v5832
    %5834 = vmatmul.f32.gmra.mxu0 %v5766
    %v5835 = vpop.f32.mrf.mxu0
    %v5836 = vadd.f32 %v5792, %v5835
    %5837 = vmatmul.f32.gmra.mxu0 %v5767
    %v5838 = vpop.f32.mrf.mxu0
    %v5839 = vadd.f32 %v5792, %v5838
    %5840 = vmatmul.f32.gmra.mxu0 %v5768
    %v5841 = vpop.f32.mrf.mxu0
    %v5842 = vadd.f32 %v5792, %v5841
    %5843 = vmatmul.f32.gmra.mxu0 %v5769
    %v5844 = vpop.f32.mrf.mxu0
    %v5845 = vadd.f32 %v5792, %v5844
    %5846 = vmatmul.f32.gmra.mxu0 %v5770
    %v5847 = vpop.f32.mrf.mxu0
    %v5848 = vadd.f32 %v5792, %v5847
    %5849 = vmatmul.f32.gmra.mxu0 %v5771
    %v5850 = vpop.f32.mrf.mxu0
    %v5851 = vadd.f32 %v5792, %v5850
    %5852 = vmatmul.f32.gmra.mxu0 %v5772
    %v5853 = vpop.f32.mrf.mxu0
    %v5854 = vadd.f32 %v5792, %v5853
    %5855 = vmatmul.f32.gmra.mxu0 %v5773
    %v5856 = vpop.f32.mrf.mxu0
    %v5857 = vadd.f32 %v5792, %v5856
    %5858 = vdwg.mxu0
    %v5859 = vadd.f32 %v3445, %v5812
    %v5860 = vadd.f32 %v3448, %v5815
    %v5861 = vadd.f32 %v3451, %v5818
    %v5862 = vadd.f32 %v3454, %v5821
    %v5863 = vadd.f32 %v3457, %v5824
    %v5864 = vadd.f32 %v3460, %v5827
    %v5865 = vadd.f32 %v3463, %v5830
    %v5866 = vadd.f32 %v3466, %v5833
    %v5867 = vadd.f32 %v3469, %v5836
    %v5868 = vadd.f32 %v3472, %v5839
    %v5869 = vadd.f32 %v3475, %v5842
    %v5870 = vadd.f32 %v3478, %v5845
    %v5871 = vadd.f32 %v3481, %v5848
    %v5872 = vadd.f32 %v3484, %v5851
    %v5873 = vadd.f32 %v3487, %v5854
    %v5874 = vadd.f32 %v3490, %v5857
    %v5875 = vmul.f32 %v5859, 0.5
    %v5876 = vmul.f32 %v5860, 0.5
    %v5877 = vmul.f32 %v5861, 0.5
    %v5878 = vmul.f32 %v5862, 0.5
    %v5879 = vmul.f32 %v5863, 0.5
    %v5880 = vmul.f32 %v5864, 0.5
    %v5881 = vmul.f32 %v5865, 0.5
    %v5882 = vmul.f32 %v5866, 0.5
    %v5883 = vmul.f32 %v5867, 0.5
    %v5884 = vmul.f32 %v5868, 0.5
    %v5885 = vmul.f32 %v5869, 0.5
    %v5886 = vmul.f32 %v5870, 0.5
    %v5887 = vmul.f32 %v5871, 0.5
    %v5888 = vmul.f32 %v5872, 0.5
    %v5889 = vmul.f32 %v5873, 0.5
    %v5890 = vmul.f32 %v5874, 0.5
    %v5891 = vmul.f32 %v5859, 0.70710677
    %v5892 = vmul.f32 %v5860, 0.70710677
    %v5893 = vmul.f32 %v5861, 0.70710677
    %v5894 = vmul.f32 %v5862, 0.70710677
    %v5895 = vmul.f32 %v5863, 0.70710677
    %v5896 = vmul.f32 %v5864, 0.70710677
    %v5897 = vmul.f32 %v5865, 0.70710677
    %v5898 = vmul.f32 %v5866, 0.70710677
    %v5899 = vmul.f32 %v5867, 0.70710677
    %v5900 = vmul.f32 %v5868, 0.70710677
    %v5901 = vmul.f32 %v5869, 0.70710677
    %v5902 = vmul.f32 %v5870, 0.70710677
    %v5903 = vmul.f32 %v5871, 0.70710677
    %v5904 = vmul.f32 %v5872, 0.70710677
    %v5905 = vmul.f32 %v5873, 0.70710677
    %v5906 = vmul.f32 %v5874, 0.70710677
    %v5907 = vmul.f32 %v5891, %v5891
    %v5908 = vmin.f32 16.0, %v5907
    %v5909 = vmul.f32 %v5908, 2.1237322e-06
    %v5910 = vadd.f32 %v5909, 0.00028619796
    %v5911 = vmul.f32 %v5908, %v5910
    %v5912 = vadd.f32 %v5911, 0.0036580483
    %v5913 = vmul.f32 %v5908, %v5912
    %v5914 = vadd.f32 %v5913, 0.05243302
    %v5915 = vmul.f32 %v5908, %v5914
    %v5916 = vadd.f32 %v5915, 0.18741608
    %v5917 = vmul.f32 %v5908, %v5916
    %v5918 = vadd.f32 %v5917, 1.1283791
    %v5919 = vmul.f32 %v5891, %v5918
    %v5920 = vmul.f32 %v5908, 3.8918573e-05
    %v5921 = vadd.f32 %v5920, 0.001143296
    %v5922 = vmul.f32 %v5908, %v5921
    %v5923 = vadd.f32 %v5922, 0.014752088
    %v5924 = vmul.f32 %v5908, %v5923
    %v5925 = vadd.f32 %v5924, 0.112945676
    %v5926 = vmul.f32 %v5908, %v5925
    %v5927 = vadd.f32 %v5926, 0.4994258
    %v5928 = vmul.f32 %v5908, %v5927
    %v5929 = vadd.f32 %v5928, 1.0
    %v5930 = vrcp.pop %v5929
    %v5931 = vmul.f32 %v5929, %v5930
    %v5932 = vsub.f32 1.0, %v5931
    %v5933 = vmul.f32 %v5930, %v5932
    %v5934 = vadd.f32 %v5930, %v5933
    %vm5935 = vweird.f32 %v5929
    %vm5936 = vweird.f32 %v5930
    %vm5937 = vmor %vm5935, %vm5936
    %v5938 = vsel %vm5937, %v5930, %v5934
    %v5939 = vand.u32 2147483647, %v5929
    %vm5940 = vcmp.eq.f32.partialorder %v5939, 8.507059e+37
    %v5941 = vand.u32 %v5929, 2147483648
    %v5942 = vor.u32 1.1754944e-38, %v5941
    %v5943 = vsel %vm5940, %v5942, %v5938
    %v5944 = vmul.f32 %v5919, %v5943
    %v5945 = vmin.f32 %v5944, 1.0
    %v5946 = vmax.f32 %v5945, -1.0
    %v5947 = vmul.f32 %v5892, %v5892
    %v5948 = vmin.f32 16.0, %v5947
    %v5949 = vmul.f32 %v5948, 2.1237322e-06
    %v5950 = vadd.f32 %v5949, 0.00028619796
    %v5951 = vmul.f32 %v5948, %v5950
    %v5952 = vadd.f32 %v5951, 0.0036580483
    %v5953 = vmul.f32 %v5948, %v5952
    %v5954 = vadd.f32 %v5953, 0.05243302
    %v5955 = vmul.f32 %v5948, %v5954
    %v5956 = vadd.f32 %v5955, 0.18741608
    %v5957 = vmul.f32 %v5948, %v5956
    %v5958 = vadd.f32 %v5957, 1.1283791
    %v5959 = vmul.f32 %v5892, %v5958
    %v5960 = vmul.f32 %v5948, 3.8918573e-05
    %v5961 = vadd.f32 %v5960, 0.001143296
    %v5962 = vmul.f32 %v5948, %v5961
    %v5963 = vadd.f32 %v5962, 0.014752088
    %v5964 = vmul.f32 %v5948, %v5963
    %v5965 = vadd.f32 %v5964, 0.112945676
    %v5966 = vmul.f32 %v5948, %v5965
    %v5967 = vadd.f32 %v5966, 0.4994258
    %v5968 = vmul.f32 %v5948, %v5967
    %v5969 = vadd.f32 %v5968, 1.0
    %v5970 = vrcp.pop %v5969
    %v5971 = vmul.f32 %v5969, %v5970
    %v5972 = vsub.f32 1.0, %v5971
    %v5973 = vmul.f32 %v5970, %v5972
    %v5974 = vadd.f32 %v5970, %v5973
    %vm5975 = vweird.f32 %v5969
    %vm5976 = vweird.f32 %v5970
    %vm5977 = vmor %vm5975, %vm5976
    %v5978 = vsel %vm5977, %v5970, %v5974
    %v5979 = vand.u32 2147483647, %v5969
    %vm5980 = vcmp.eq.f32.partialorder %v5979, 8.507059e+37
    %v5981 = vand.u32 %v5969, 2147483648
    %v5982 = vor.u32 1.1754944e-38, %v5981
    %v5983 = vsel %vm5980, %v5982, %v5978
    %v5984 = vmul.f32 %v5959, %v5983
    %v5985 = vmin.f32 %v5984, 1.0
    %v5986 = vmax.f32 %v5985, -1.0
    %v5987 = vmul.f32 %v5893, %v5893
    %v5988 = vmin.f32 16.0, %v5987
    %v5989 = vmul.f32 %v5988, 2.1237322e-06
    %v5990 = vadd.f32 %v5989, 0.00028619796
    %v5991 = vmul.f32 %v5988, %v5990
    %v5992 = vadd.f32 %v5991, 0.0036580483
    %v5993 = vmul.f32 %v5988, %v5992
    %v5994 = vadd.f32 %v5993, 0.05243302
    %v5995 = vmul.f32 %v5988, %v5994
    %v5996 = vadd.f32 %v5995, 0.18741608
    %v5997 = vmul.f32 %v5988, %v5996
    %v5998 = vadd.f32 %v5997, 1.1283791
    %v5999 = vmul.f32 %v5893, %v5998
    %v6000 = vmul.f32 %v5988, 3.8918573e-05
    %v6001 = vadd.f32 %v6000, 0.001143296
    %v6002 = vmul.f32 %v5988, %v6001
    %v6003 = vadd.f32 %v6002, 0.014752088
    %v6004 = vmul.f32 %v5988, %v6003
    %v6005 = vadd.f32 %v6004, 0.112945676
    %v6006 = vmul.f32 %v5988, %v6005
    %v6007 = vadd.f32 %v6006, 0.4994258
    %v6008 = vmul.f32 %v5988, %v6007
    %v6009 = vadd.f32 %v6008, 1.0
    %v6010 = vrcp.pop %v6009
    %v6011 = vmul.f32 %v6009, %v6010
    %v6012 = vsub.f32 1.0, %v6011
    %v6013 = vmul.f32 %v6010, %v6012
    %v6014 = vadd.f32 %v6010, %v6013
    %vm6015 = vweird.f32 %v6009
    %vm6016 = vweird.f32 %v6010
    %vm6017 = vmor %vm6015, %vm6016
    %v6018 = vsel %vm6017, %v6010, %v6014
    %v6019 = vand.u32 2147483647, %v6009
    %vm6020 = vcmp.eq.f32.partialorder %v6019, 8.507059e+37
    %v6021 = vand.u32 %v6009, 2147483648
    %v6022 = vor.u32 1.1754944e-38, %v6021
    %v6023 = vsel %vm6020, %v6022, %v6018
    %v6024 = vmul.f32 %v5999, %v6023
    %v6025 = vmin.f32 %v6024, 1.0
    %v6026 = vmax.f32 %v6025, -1.0
    %v6027 = vmul.f32 %v5894, %v5894
    %v6028 = vmin.f32 16.0, %v6027
    %v6029 = vmul.f32 %v6028, 2.1237322e-06
    %v6030 = vadd.f32 %v6029, 0.00028619796
    %v6031 = vmul.f32 %v6028, %v6030
    %v6032 = vadd.f32 %v6031, 0.0036580483
    %v6033 = vmul.f32 %v6028, %v6032
    %v6034 = vadd.f32 %v6033, 0.05243302
    %v6035 = vmul.f32 %v6028, %v6034
    %v6036 = vadd.f32 %v6035, 0.18741608
    %v6037 = vmul.f32 %v6028, %v6036
    %v6038 = vadd.f32 %v6037, 1.1283791
    %v6039 = vmul.f32 %v5894, %v6038
    %v6040 = vmul.f32 %v6028, 3.8918573e-05
    %v6041 = vadd.f32 %v6040, 0.001143296
    %v6042 = vmul.f32 %v6028, %v6041
    %v6043 = vadd.f32 %v6042, 0.014752088
    %v6044 = vmul.f32 %v6028, %v6043
    %v6045 = vadd.f32 %v6044, 0.112945676
    %v6046 = vmul.f32 %v6028, %v6045
    %v6047 = vadd.f32 %v6046, 0.4994258
    %v6048 = vmul.f32 %v6028, %v6047
    %v6049 = vadd.f32 %v6048, 1.0
    %v6050 = vrcp.pop %v6049
    %v6051 = vmul.f32 %v6049, %v6050
    %v6052 = vsub.f32 1.0, %v6051
    %v6053 = vmul.f32 %v6050, %v6052
    %v6054 = vadd.f32 %v6050, %v6053
    %vm6055 = vweird.f32 %v6049
    %vm6056 = vweird.f32 %v6050
    %vm6057 = vmor %vm6055, %vm6056
    %v6058 = vsel %vm6057, %v6050, %v6054
    %v6059 = vand.u32 2147483647, %v6049
    %vm6060 = vcmp.eq.f32.partialorder %v6059, 8.507059e+37
    %v6061 = vand.u32 %v6049, 2147483648
    %v6062 = vor.u32 1.1754944e-38, %v6061
    %v6063 = vsel %vm6060, %v6062, %v6058
    %v6064 = vmul.f32 %v6039, %v6063
    %v6065 = vmin.f32 %v6064, 1.0
    %v6066 = vmax.f32 %v6065, -1.0
    %v6067 = vmul.f32 %v5895, %v5895
    %v6068 = vmin.f32 16.0, %v6067
    %v6069 = vmul.f32 %v6068, 2.1237322e-06
    %v6070 = vadd.f32 %v6069, 0.00028619796
    %v6071 = vmul.f32 %v6068, %v6070
    %v6072 = vadd.f32 %v6071, 0.0036580483
    %v6073 = vmul.f32 %v6068, %v6072
    %v6074 = vadd.f32 %v6073, 0.05243302
    %v6075 = vmul.f32 %v6068, %v6074
    %v6076 = vadd.f32 %v6075, 0.18741608
    %v6077 = vmul.f32 %v6068, %v6076
    %v6078 = vadd.f32 %v6077, 1.1283791
    %v6079 = vmul.f32 %v5895, %v6078
    %v6080 = vmul.f32 %v6068, 3.8918573e-05
    %v6081 = vadd.f32 %v6080, 0.001143296
    %v6082 = vmul.f32 %v6068, %v6081
    %v6083 = vadd.f32 %v6082, 0.014752088
    %v6084 = vmul.f32 %v6068, %v6083
    %v6085 = vadd.f32 %v6084, 0.112945676
    %v6086 = vmul.f32 %v6068, %v6085
    %v6087 = vadd.f32 %v6086, 0.4994258
    %v6088 = vmul.f32 %v6068, %v6087
    %v6089 = vadd.f32 %v6088, 1.0
    %v6090 = vrcp.pop %v6089
    %v6091 = vmul.f32 %v6089, %v6090
    %v6092 = vsub.f32 1.0, %v6091
    %v6093 = vmul.f32 %v6090, %v6092
    %v6094 = vadd.f32 %v6090, %v6093
    %vm6095 = vweird.f32 %v6089
    %vm6096 = vweird.f32 %v6090
    %vm6097 = vmor %vm6095, %vm6096
    %v6098 = vsel %vm6097, %v6090, %v6094
    %v6099 = vand.u32 2147483647, %v6089
    %vm6100 = vcmp.eq.f32.partialorder %v6099, 8.507059e+37
    %v6101 = vand.u32 %v6089, 2147483648
    %v6102 = vor.u32 1.1754944e-38, %v6101
    %v6103 = vsel %vm6100, %v6102, %v6098
    %v6104 = vmul.f32 %v6079, %v6103
    %v6105 = vmin.f32 %v6104, 1.0
    %v6106 = vmax.f32 %v6105, -1.0
    %v6107 = vmul.f32 %v5896, %v5896
    %v6108 = vmin.f32 16.0, %v6107
    %v6109 = vmul.f32 %v6108, 2.1237322e-06
    %v6110 = vadd.f32 %v6109, 0.00028619796
    %v6111 = vmul.f32 %v6108, %v6110
    %v6112 = vadd.f32 %v6111, 0.0036580483
    %v6113 = vmul.f32 %v6108, %v6112
    %v6114 = vadd.f32 %v6113, 0.05243302
    %v6115 = vmul.f32 %v6108, %v6114
    %v6116 = vadd.f32 %v6115, 0.18741608
    %v6117 = vmul.f32 %v6108, %v6116
    %v6118 = vadd.f32 %v6117, 1.1283791
    %v6119 = vmul.f32 %v5896, %v6118
    %v6120 = vmul.f32 %v6108, 3.8918573e-05
    %v6121 = vadd.f32 %v6120, 0.001143296
    %v6122 = vmul.f32 %v6108, %v6121
    %v6123 = vadd.f32 %v6122, 0.014752088
    %v6124 = vmul.f32 %v6108, %v6123
    %v6125 = vadd.f32 %v6124, 0.112945676
    %v6126 = vmul.f32 %v6108, %v6125
    %v6127 = vadd.f32 %v6126, 0.4994258
    %v6128 = vmul.f32 %v6108, %v6127
    %v6129 = vadd.f32 %v6128, 1.0
    %v6130 = vrcp.pop %v6129
    %v6131 = vmul.f32 %v6129, %v6130
    %v6132 = vsub.f32 1.0, %v6131
    %v6133 = vmul.f32 %v6130, %v6132
    %v6134 = vadd.f32 %v6130, %v6133
    %vm6135 = vweird.f32 %v6129
    %vm6136 = vweird.f32 %v6130
    %vm6137 = vmor %vm6135, %vm6136
    %v6138 = vsel %vm6137, %v6130, %v6134
    %v6139 = vand.u32 2147483647, %v6129
    %vm6140 = vcmp.eq.f32.partialorder %v6139, 8.507059e+37
    %v6141 = vand.u32 %v6129, 2147483648
    %v6142 = vor.u32 1.1754944e-38, %v6141
    %v6143 = vsel %vm6140, %v6142, %v6138
    %v6144 = vmul.f32 %v6119, %v6143
    %v6145 = vmin.f32 %v6144, 1.0
    %v6146 = vmax.f32 %v6145, -1.0
    %v6147 = vmul.f32 %v5897, %v5897
    %v6148 = vmin.f32 16.0, %v6147
    %v6149 = vmul.f32 %v6148, 2.1237322e-06
    %v6150 = vadd.f32 %v6149, 0.00028619796
    %v6151 = vmul.f32 %v6148, %v6150
    %v6152 = vadd.f32 %v6151, 0.0036580483
    %v6153 = vmul.f32 %v6148, %v6152
    %v6154 = vadd.f32 %v6153, 0.05243302
    %v6155 = vmul.f32 %v6148, %v6154
    %v6156 = vadd.f32 %v6155, 0.18741608
    %v6157 = vmul.f32 %v6148, %v6156
    %v6158 = vadd.f32 %v6157, 1.1283791
    %v6159 = vmul.f32 %v5897, %v6158
    %v6160 = vmul.f32 %v6148, 3.8918573e-05
    %v6161 = vadd.f32 %v6160, 0.001143296
    %v6162 = vmul.f32 %v6148, %v6161
    %v6163 = vadd.f32 %v6162, 0.014752088
    %v6164 = vmul.f32 %v6148, %v6163
    %v6165 = vadd.f32 %v6164, 0.112945676
    %v6166 = vmul.f32 %v6148, %v6165
    %v6167 = vadd.f32 %v6166, 0.4994258
    %v6168 = vmul.f32 %v6148, %v6167
    %v6169 = vadd.f32 %v6168, 1.0
    %v6170 = vrcp.pop %v6169
    %v6171 = vmul.f32 %v6169, %v6170
    %v6172 = vsub.f32 1.0, %v6171
    %v6173 = vmul.f32 %v6170, %v6172
    %v6174 = vadd.f32 %v6170, %v6173
    %vm6175 = vweird.f32 %v6169
    %vm6176 = vweird.f32 %v6170
    %vm6177 = vmor %vm6175, %vm6176
    %v6178 = vsel %vm6177, %v6170, %v6174
    %v6179 = vand.u32 2147483647, %v6169
    %vm6180 = vcmp.eq.f32.partialorder %v6179, 8.507059e+37
    %v6181 = vand.u32 %v6169, 2147483648
    %v6182 = vor.u32 1.1754944e-38, %v6181
    %v6183 = vsel %vm6180, %v6182, %v6178
    %v6184 = vmul.f32 %v6159, %v6183
    %v6185 = vmin.f32 %v6184, 1.0
    %v6186 = vmax.f32 %v6185, -1.0
    %v6187 = vmul.f32 %v5898, %v5898
    %v6188 = vmin.f32 16.0, %v6187
    %v6189 = vmul.f32 %v6188, 2.1237322e-06
    %v6190 = vadd.f32 %v6189, 0.00028619796
    %v6191 = vmul.f32 %v6188, %v6190
    %v6192 = vadd.f32 %v6191, 0.0036580483
    %v6193 = vmul.f32 %v6188, %v6192
    %v6194 = vadd.f32 %v6193, 0.05243302
    %v6195 = vmul.f32 %v6188, %v6194
    %v6196 = vadd.f32 %v6195, 0.18741608
    %v6197 = vmul.f32 %v6188, %v6196
    %v6198 = vadd.f32 %v6197, 1.1283791
    %v6199 = vmul.f32 %v5898, %v6198
    %v6200 = vmul.f32 %v6188, 3.8918573e-05
    %v6201 = vadd.f32 %v6200, 0.001143296
    %v6202 = vmul.f32 %v6188, %v6201
    %v6203 = vadd.f32 %v6202, 0.014752088
    %v6204 = vmul.f32 %v6188, %v6203
    %v6205 = vadd.f32 %v6204, 0.112945676
    %v6206 = vmul.f32 %v6188, %v6205
    %v6207 = vadd.f32 %v6206, 0.4994258
    %v6208 = vmul.f32 %v6188, %v6207
    %v6209 = vadd.f32 %v6208, 1.0
    %v6210 = vrcp.pop %v6209
    %v6211 = vmul.f32 %v6209, %v6210
    %v6212 = vsub.f32 1.0, %v6211
    %v6213 = vmul.f32 %v6210, %v6212
    %v6214 = vadd.f32 %v6210, %v6213
    %vm6215 = vweird.f32 %v6209
    %vm6216 = vweird.f32 %v6210
    %vm6217 = vmor %vm6215, %vm6216
    %v6218 = vsel %vm6217, %v6210, %v6214
    %v6219 = vand.u32 2147483647, %v6209
    %vm6220 = vcmp.eq.f32.partialorder %v6219, 8.507059e+37
    %v6221 = vand.u32 %v6209, 2147483648
    %v6222 = vor.u32 1.1754944e-38, %v6221
    %v6223 = vsel %vm6220, %v6222, %v6218
    %v6224 = vmul.f32 %v6199, %v6223
    %v6225 = vmin.f32 %v6224, 1.0
    %v6226 = vmax.f32 %v6225, -1.0
    %v6227 = vmul.f32 %v5899, %v5899
    %v6228 = vmin.f32 16.0, %v6227
    %v6229 = vmul.f32 %v6228, 2.1237322e-06
    %v6230 = vadd.f32 %v6229, 0.00028619796
    %v6231 = vmul.f32 %v6228, %v6230
    %v6232 = vadd.f32 %v6231, 0.0036580483
    %v6233 = vmul.f32 %v6228, %v6232
    %v6234 = vadd.f32 %v6233, 0.05243302
    %v6235 = vmul.f32 %v6228, %v6234
    %v6236 = vadd.f32 %v6235, 0.18741608
    %v6237 = vmul.f32 %v6228, %v6236
    %v6238 = vadd.f32 %v6237, 1.1283791
    %v6239 = vmul.f32 %v5899, %v6238
    %v6240 = vmul.f32 %v6228, 3.8918573e-05
    %v6241 = vadd.f32 %v6240, 0.001143296
    %v6242 = vmul.f32 %v6228, %v6241
    %v6243 = vadd.f32 %v6242, 0.014752088
    %v6244 = vmul.f32 %v6228, %v6243
    %v6245 = vadd.f32 %v6244, 0.112945676
    %v6246 = vmul.f32 %v6228, %v6245
    %v6247 = vadd.f32 %v6246, 0.4994258
    %v6248 = vmul.f32 %v6228, %v6247
    %v6249 = vadd.f32 %v6248, 1.0
    %v6250 = vrcp.pop %v6249
    %v6251 = vmul.f32 %v6249, %v6250
    %v6252 = vsub.f32 1.0, %v6251
    %v6253 = vmul.f32 %v6250, %v6252
    %v6254 = vadd.f32 %v6250, %v6253
    %vm6255 = vweird.f32 %v6249
    %vm6256 = vweird.f32 %v6250
    %vm6257 = vmor %vm6255, %vm6256
    %v6258 = vsel %vm6257, %v6250, %v6254
    %v6259 = vand.u32 2147483647, %v6249
    %vm6260 = vcmp.eq.f32.partialorder %v6259, 8.507059e+37
    %v6261 = vand.u32 %v6249, 2147483648
    %v6262 = vor.u32 1.1754944e-38, %v6261
    %v6263 = vsel %vm6260, %v6262, %v6258
    %v6264 = vmul.f32 %v6239, %v6263
    %v6265 = vmin.f32 %v6264, 1.0
    %v6266 = vmax.f32 %v6265, -1.0
    %v6267 = vmul.f32 %v5900, %v5900
    %v6268 = vmin.f32 16.0, %v6267
    %v6269 = vmul.f32 %v6268, 2.1237322e-06
    %v6270 = vadd.f32 %v6269, 0.00028619796
    %v6271 = vmul.f32 %v6268, %v6270
    %v6272 = vadd.f32 %v6271, 0.0036580483
    %v6273 = vmul.f32 %v6268, %v6272
    %v6274 = vadd.f32 %v6273, 0.05243302
    %v6275 = vmul.f32 %v6268, %v6274
    %v6276 = vadd.f32 %v6275, 0.18741608
    %v6277 = vmul.f32 %v6268, %v6276
    %v6278 = vadd.f32 %v6277, 1.1283791
    %v6279 = vmul.f32 %v5900, %v6278
    %v6280 = vmul.f32 %v6268, 3.8918573e-05
    %v6281 = vadd.f32 %v6280, 0.001143296
    %v6282 = vmul.f32 %v6268, %v6281
    %v6283 = vadd.f32 %v6282, 0.014752088
    %v6284 = vmul.f32 %v6268, %v6283
    %v6285 = vadd.f32 %v6284, 0.112945676
    %v6286 = vmul.f32 %v6268, %v6285
    %v6287 = vadd.f32 %v6286, 0.4994258
    %v6288 = vmul.f32 %v6268, %v6287
    %v6289 = vadd.f32 %v6288, 1.0
    %v6290 = vrcp.pop %v6289
    %v6291 = vmul.f32 %v6289, %v6290
    %v6292 = vsub.f32 1.0, %v6291
    %v6293 = vmul.f32 %v6290, %v6292
    %v6294 = vadd.f32 %v6290, %v6293
    %vm6295 = vweird.f32 %v6289
    %vm6296 = vweird.f32 %v6290
    %vm6297 = vmor %vm6295, %vm6296
    %v6298 = vsel %vm6297, %v6290, %v6294
    %v6299 = vand.u32 2147483647, %v6289
    %vm6300 = vcmp.eq.f32.partialorder %v6299, 8.507059e+37
    %v6301 = vand.u32 %v6289, 2147483648
    %v6302 = vor.u32 1.1754944e-38, %v6301
    %v6303 = vsel %vm6300, %v6302, %v6298
    %v6304 = vmul.f32 %v6279, %v6303
    %v6305 = vmin.f32 %v6304, 1.0
    %v6306 = vmax.f32 %v6305, -1.0
    %v6307 = vmul.f32 %v5901, %v5901
    %v6308 = vmin.f32 16.0, %v6307
    %v6309 = vmul.f32 %v6308, 2.1237322e-06
    %v6310 = vadd.f32 %v6309, 0.00028619796
    %v6311 = vmul.f32 %v6308, %v6310
    %v6312 = vadd.f32 %v6311, 0.0036580483
    %v6313 = vmul.f32 %v6308, %v6312
    %v6314 = vadd.f32 %v6313, 0.05243302
    %v6315 = vmul.f32 %v6308, %v6314
    %v6316 = vadd.f32 %v6315, 0.18741608
    %v6317 = vmul.f32 %v6308, %v6316
    %v6318 = vadd.f32 %v6317, 1.1283791
    %v6319 = vmul.f32 %v5901, %v6318
    %v6320 = vmul.f32 %v6308, 3.8918573e-05
    %v6321 = vadd.f32 %v6320, 0.001143296
    %v6322 = vmul.f32 %v6308, %v6321
    %v6323 = vadd.f32 %v6322, 0.014752088
    %v6324 = vmul.f32 %v6308, %v6323
    %v6325 = vadd.f32 %v6324, 0.112945676
    %v6326 = vmul.f32 %v6308, %v6325
    %v6327 = vadd.f32 %v6326, 0.4994258
    %v6328 = vmul.f32 %v6308, %v6327
    %v6329 = vadd.f32 %v6328, 1.0
    %v6330 = vrcp.pop %v6329
    %v6331 = vmul.f32 %v6329, %v6330
    %v6332 = vsub.f32 1.0, %v6331
    %v6333 = vmul.f32 %v6330, %v6332
    %v6334 = vadd.f32 %v6330, %v6333
    %vm6335 = vweird.f32 %v6329
    %vm6336 = vweird.f32 %v6330
    %vm6337 = vmor %vm6335, %vm6336
    %v6338 = vsel %vm6337, %v6330, %v6334
    %v6339 = vand.u32 2147483647, %v6329
    %vm6340 = vcmp.eq.f32.partialorder %v6339, 8.507059e+37
    %v6341 = vand.u32 %v6329, 2147483648
    %v6342 = vor.u32 1.1754944e-38, %v6341
    %v6343 = vsel %vm6340, %v6342, %v6338
    %v6344 = vmul.f32 %v6319, %v6343
    %v6345 = vmin.f32 %v6344, 1.0
    %v6346 = vmax.f32 %v6345, -1.0
    %v6347 = vmul.f32 %v5902, %v5902
    %v6348 = vmin.f32 16.0, %v6347
    %v6349 = vmul.f32 %v6348, 2.1237322e-06
    %v6350 = vadd.f32 %v6349, 0.00028619796
    %v6351 = vmul.f32 %v6348, %v6350
    %v6352 = vadd.f32 %v6351, 0.0036580483
    %v6353 = vmul.f32 %v6348, %v6352
    %v6354 = vadd.f32 %v6353, 0.05243302
    %v6355 = vmul.f32 %v6348, %v6354
    %v6356 = vadd.f32 %v6355, 0.18741608
    %v6357 = vmul.f32 %v6348, %v6356
    %v6358 = vadd.f32 %v6357, 1.1283791
    %v6359 = vmul.f32 %v5902, %v6358
    %v6360 = vmul.f32 %v6348, 3.8918573e-05
    %v6361 = vadd.f32 %v6360, 0.001143296
    %v6362 = vmul.f32 %v6348, %v6361
    %v6363 = vadd.f32 %v6362, 0.014752088
    %v6364 = vmul.f32 %v6348, %v6363
    %v6365 = vadd.f32 %v6364, 0.112945676
    %v6366 = vmul.f32 %v6348, %v6365
    %v6367 = vadd.f32 %v6366, 0.4994258
    %v6368 = vmul.f32 %v6348, %v6367
    %v6369 = vadd.f32 %v6368, 1.0
    %v6370 = vrcp.pop %v6369
    %v6371 = vmul.f32 %v6369, %v6370
    %v6372 = vsub.f32 1.0, %v6371
    %v6373 = vmul.f32 %v6370, %v6372
    %v6374 = vadd.f32 %v6370, %v6373
    %vm6375 = vweird.f32 %v6369
    %vm6376 = vweird.f32 %v6370
    %vm6377 = vmor %vm6375, %vm6376
    %v6378 = vsel %vm6377, %v6370, %v6374
    %v6379 = vand.u32 2147483647, %v6369
    %vm6380 = vcmp.eq.f32.partialorder %v6379, 8.507059e+37
    %v6381 = vand.u32 %v6369, 2147483648
    %v6382 = vor.u32 1.1754944e-38, %v6381
    %v6383 = vsel %vm6380, %v6382, %v6378
    %v6384 = vmul.f32 %v6359, %v6383
    %v6385 = vmin.f32 %v6384, 1.0
    %v6386 = vmax.f32 %v6385, -1.0
    %v6387 = vmul.f32 %v5903, %v5903
    %v6388 = vmin.f32 16.0, %v6387
    %v6389 = vmul.f32 %v6388, 2.1237322e-06
    %v6390 = vadd.f32 %v6389, 0.00028619796
    %v6391 = vmul.f32 %v6388, %v6390
    %v6392 = vadd.f32 %v6391, 0.0036580483
    %v6393 = vmul.f32 %v6388, %v6392
    %v6394 = vadd.f32 %v6393, 0.05243302
    %v6395 = vmul.f32 %v6388, %v6394
    %v6396 = vadd.f32 %v6395, 0.18741608
    %v6397 = vmul.f32 %v6388, %v6396
    %v6398 = vadd.f32 %v6397, 1.1283791
    %v6399 = vmul.f32 %v5903, %v6398
    %v6400 = vmul.f32 %v6388, 3.8918573e-05
    %v6401 = vadd.f32 %v6400, 0.001143296
    %v6402 = vmul.f32 %v6388, %v6401
    %v6403 = vadd.f32 %v6402, 0.014752088
    %v6404 = vmul.f32 %v6388, %v6403
    %v6405 = vadd.f32 %v6404, 0.112945676
    %v6406 = vmul.f32 %v6388, %v6405
    %v6407 = vadd.f32 %v6406, 0.4994258
    %v6408 = vmul.f32 %v6388, %v6407
    %v6409 = vadd.f32 %v6408, 1.0
    %v6410 = vrcp.pop %v6409
    %v6411 = vmul.f32 %v6409, %v6410
    %v6412 = vsub.f32 1.0, %v6411
    %v6413 = vmul.f32 %v6410, %v6412
    %v6414 = vadd.f32 %v6410, %v6413
    %vm6415 = vweird.f32 %v6409
    %vm6416 = vweird.f32 %v6410
    %vm6417 = vmor %vm6415, %vm6416
    %v6418 = vsel %vm6417, %v6410, %v6414
    %v6419 = vand.u32 2147483647, %v6409
    %vm6420 = vcmp.eq.f32.partialorder %v6419, 8.507059e+37
    %v6421 = vand.u32 %v6409, 2147483648
    %v6422 = vor.u32 1.1754944e-38, %v6421
    %v6423 = vsel %vm6420, %v6422, %v6418
    %v6424 = vmul.f32 %v6399, %v6423
    %v6425 = vmin.f32 %v6424, 1.0
    %v6426 = vmax.f32 %v6425, -1.0
    %v6427 = vmul.f32 %v5904, %v5904
    %v6428 = vmin.f32 16.0, %v6427
    %v6429 = vmul.f32 %v6428, 2.1237322e-06
    %v6430 = vadd.f32 %v6429, 0.00028619796
    %v6431 = vmul.f32 %v6428, %v6430
    %v6432 = vadd.f32 %v6431, 0.0036580483
    %v6433 = vmul.f32 %v6428, %v6432
    %v6434 = vadd.f32 %v6433, 0.05243302
    %v6435 = vmul.f32 %v6428, %v6434
    %v6436 = vadd.f32 %v6435, 0.18741608
    %v6437 = vmul.f32 %v6428, %v6436
    %v6438 = vadd.f32 %v6437, 1.1283791
    %v6439 = vmul.f32 %v5904, %v6438
    %v6440 = vmul.f32 %v6428, 3.8918573e-05
    %v6441 = vadd.f32 %v6440, 0.001143296
    %v6442 = vmul.f32 %v6428, %v6441
    %v6443 = vadd.f32 %v6442, 0.014752088
    %v6444 = vmul.f32 %v6428, %v6443
    %v6445 = vadd.f32 %v6444, 0.112945676
    %v6446 = vmul.f32 %v6428, %v6445
    %v6447 = vadd.f32 %v6446, 0.4994258
    %v6448 = vmul.f32 %v6428, %v6447
    %v6449 = vadd.f32 %v6448, 1.0
    %v6450 = vrcp.pop %v6449
    %v6451 = vmul.f32 %v6449, %v6450
    %v6452 = vsub.f32 1.0, %v6451
    %v6453 = vmul.f32 %v6450, %v6452
    %v6454 = vadd.f32 %v6450, %v6453
    %vm6455 = vweird.f32 %v6449
    %vm6456 = vweird.f32 %v6450
    %vm6457 = vmor %vm6455, %vm6456
    %v6458 = vsel %vm6457, %v6450, %v6454
    %v6459 = vand.u32 2147483647, %v6449
    %vm6460 = vcmp.eq.f32.partialorder %v6459, 8.507059e+37
    %v6461 = vand.u32 %v6449, 2147483648
    %v6462 = vor.u32 1.1754944e-38, %v6461
    %v6463 = vsel %vm6460, %v6462, %v6458
    %v6464 = vmul.f32 %v6439, %v6463
    %v6465 = vmin.f32 %v6464, 1.0
    %v6466 = vmax.f32 %v6465, -1.0
    %v6467 = vmul.f32 %v5905, %v5905
    %v6468 = vmin.f32 16.0, %v6467
    %v6469 = vmul.f32 %v6468, 2.1237322e-06
    %v6470 = vadd.f32 %v6469, 0.00028619796
    %v6471 = vmul.f32 %v6468, %v6470
    %v6472 = vadd.f32 %v6471, 0.0036580483
    %v6473 = vmul.f32 %v6468, %v6472
    %v6474 = vadd.f32 %v6473, 0.05243302
    %v6475 = vmul.f32 %v6468, %v6474
    %v6476 = vadd.f32 %v6475, 0.18741608
    %v6477 = vmul.f32 %v6468, %v6476
    %v6478 = vadd.f32 %v6477, 1.1283791
    %v6479 = vmul.f32 %v5905, %v6478
    %v6480 = vmul.f32 %v6468, 3.8918573e-05
    %v6481 = vadd.f32 %v6480, 0.001143296
    %v6482 = vmul.f32 %v6468, %v6481
    %v6483 = vadd.f32 %v6482, 0.014752088
    %v6484 = vmul.f32 %v6468, %v6483
    %v6485 = vadd.f32 %v6484, 0.112945676
    %v6486 = vmul.f32 %v6468, %v6485
    %v6487 = vadd.f32 %v6486, 0.4994258
    %v6488 = vmul.f32 %v6468, %v6487
    %v6489 = vadd.f32 %v6488, 1.0
    %v6490 = vrcp.pop %v6489
    %v6491 = vmul.f32 %v6489, %v6490
    %v6492 = vsub.f32 1.0, %v6491
    %v6493 = vmul.f32 %v6490, %v6492
    %v6494 = vadd.f32 %v6490, %v6493
    %vm6495 = vweird.f32 %v6489
    %vm6496 = vweird.f32 %v6490
    %vm6497 = vmor %vm6495, %vm6496
    %v6498 = vsel %vm6497, %v6490, %v6494
    %v6499 = vand.u32 2147483647, %v6489
    %vm6500 = vcmp.eq.f32.partialorder %v6499, 8.507059e+37
    %v6501 = vand.u32 %v6489, 2147483648
    %v6502 = vor.u32 1.1754944e-38, %v6501
    %v6503 = vsel %vm6500, %v6502, %v6498
    %v6504 = vmul.f32 %v6479, %v6503
    %v6505 = vmin.f32 %v6504, 1.0
    %v6506 = vmax.f32 %v6505, -1.0
    %v6507 = vmul.f32 %v5906, %v5906
    %v6508 = vmin.f32 16.0, %v6507
    %v6509 = vmul.f32 %v6508, 2.1237322e-06
    %v6510 = vadd.f32 %v6509, 0.00028619796
    %v6511 = vmul.f32 %v6508, %v6510
    %v6512 = vadd.f32 %v6511, 0.0036580483
    %v6513 = vmul.f32 %v6508, %v6512
    %v6514 = vadd.f32 %v6513, 0.05243302
    %v6515 = vmul.f32 %v6508, %v6514
    %v6516 = vadd.f32 %v6515, 0.18741608
    %v6517 = vmul.f32 %v6508, %v6516
    %v6518 = vadd.f32 %v6517, 1.1283791
    %v6519 = vmul.f32 %v5906, %v6518
    %v6520 = vmul.f32 %v6508, 3.8918573e-05
    %v6521 = vadd.f32 %v6520, 0.001143296
    %v6522 = vmul.f32 %v6508, %v6521
    %v6523 = vadd.f32 %v6522, 0.014752088
    %v6524 = vmul.f32 %v6508, %v6523
    %v6525 = vadd.f32 %v6524, 0.112945676
    %v6526 = vmul.f32 %v6508, %v6525
    %v6527 = vadd.f32 %v6526, 0.4994258
    %v6528 = vmul.f32 %v6508, %v6527
    %v6529 = vadd.f32 %v6528, 1.0
    %v6530 = vrcp.pop %v6529
    %v6531 = vmul.f32 %v6529, %v6530
    %v6532 = vsub.f32 1.0, %v6531
    %v6533 = vmul.f32 %v6530, %v6532
    %v6534 = vadd.f32 %v6530, %v6533
    %vm6535 = vweird.f32 %v6529
    %vm6536 = vweird.f32 %v6530
    %vm6537 = vmor %vm6535, %vm6536
    %v6538 = vsel %vm6537, %v6530, %v6534
    %v6539 = vand.u32 2147483647, %v6529
    %vm6540 = vcmp.eq.f32.partialorder %v6539, 8.507059e+37
    %v6541 = vand.u32 %v6529, 2147483648
    %v6542 = vor.u32 1.1754944e-38, %v6541
    %v6543 = vsel %vm6540, %v6542, %v6538
    %v6544 = vmul.f32 %v6519, %v6543
    %v6545 = vmin.f32 %v6544, 1.0
    %v6546 = vmax.f32 %v6545, -1.0
    %v6547 = vadd.f32 %v5946, 1.0
    %v6548 = vadd.f32 %v5986, 1.0
    %v6549 = vadd.f32 %v6026, 1.0
    %v6550 = vadd.f32 %v6066, 1.0
    %v6551 = vadd.f32 %v6106, 1.0
    %v6552 = vadd.f32 %v6146, 1.0
    %v6553 = vadd.f32 %v6186, 1.0
    %v6554 = vadd.f32 %v6226, 1.0
    %v6555 = vadd.f32 %v6266, 1.0
    %v6556 = vadd.f32 %v6306, 1.0
    %v6557 = vadd.f32 %v6346, 1.0
    %v6558 = vadd.f32 %v6386, 1.0
    %v6559 = vadd.f32 %v6426, 1.0
    %v6560 = vadd.f32 %v6466, 1.0
    %v6561 = vadd.f32 %v6506, 1.0
    %v6562 = vadd.f32 %v6546, 1.0
    %v6563 = vmul.f32 %v5875, %v6547
    %v6564 = vmul.f32 %v5876, %v6548
    %v6565 = vmul.f32 %v5877, %v6549
    %v6566 = vmul.f32 %v5878, %v6550
    %v6567 = vmul.f32 %v5879, %v6551
    %v6568 = vmul.f32 %v5880, %v6552
    %v6569 = vmul.f32 %v5881, %v6553
    %v6570 = vmul.f32 %v5882, %v6554
    %v6571 = vmul.f32 %v5883, %v6555
    %v6572 = vmul.f32 %v5884, %v6556
    %v6573 = vmul.f32 %v5885, %v6557
    %v6574 = vmul.f32 %v5886, %v6558
    %v6575 = vmul.f32 %v5887, %v6559
    %v6576 = vmul.f32 %v5888, %v6560
    %v6577 = vmul.f32 %v5889, %v6561
    %v6578 = vmul.f32 %v5890, %v6562
    %v6579 = vld [vmem:[#allocation17] sm:$0xff]
    %v6580 = vld [vmem:[#allocation17 + $0x8] sm:$0xff]
    %v6581 = vld [vmem:[#allocation17 + $0x10] sm:$0xff]
    %v6582 = vld [vmem:[#allocation17 + $0x18] sm:$0xff]
    %v6583 = vld [vmem:[#allocation17 + $0x20] sm:$0xff]
    %v6584 = vld [vmem:[#allocation17 + $0x28] sm:$0xff]
    %v6585 = vld [vmem:[#allocation17 + $0x30] sm:$0xff]
    %v6586 = vld [vmem:[#allocation17 + $0x38] sm:$0xff]
    %v6587 = vld [vmem:[#allocation17 + $0x40] sm:$0xff]
    %v6588 = vld [vmem:[#allocation17 + $0x48] sm:$0xff]
    %v6589 = vld [vmem:[#allocation17 + $0x50] sm:$0xff]
    %v6590 = vld [vmem:[#allocation17 + $0x58] sm:$0xff]
    %v6591 = vld [vmem:[#allocation17 + $0x60] sm:$0xff]
    %v6592 = vld [vmem:[#allocation17 + $0x68] sm:$0xff]
    %v6593 = vld [vmem:[#allocation17 + $0x70] sm:$0xff]
    %v6594 = vld [vmem:[#allocation17 + $0x78] sm:$0xff]
    %v6595 = vld [vmem:[%s18] sm:$0x1]
    %v6597 = vperm.slane %v6595, 0
    %6599 = vmatpush.msra.mxu0 %v6594
    %6600 = vmatpush.msra.mxu0 %v6593
    %6601 = vmatpush.msra.mxu0 %v6592
    %6602 = vmatpush.msra.mxu0 %v6591
    %6603 = vmatpush.msra.mxu0 %v6590
    %6604 = vmatpush.msra.mxu0 %v6589
    %6605 = vmatpush.msra.mxu0 %v6588
    %6606 = vmatpush.msra.mxu0 %v6587
    %6607 = vmatpush.msra.mxu0 %v6586
    %6608 = vmatpush.msra.mxu0 %v6585
    %6609 = vmatpush.msra.mxu0 %v6584
    %6610 = vmatpush.msra.mxu0 %v6583
    %6611 = vmatpush.msra.mxu0 %v6582
    %6612 = vmatpush.msra.mxu0 %v6581
    %6613 = vmatpush.msra.mxu0 %v6580
    %6614 = vmatpush.msra.mxu0 %v6579
    %6615 = vmatmul.f32.gmra.mxu0 %v6563
    %v6616 = vpop.f32.mrf.mxu0
    %v6617 = vadd.f32 %v6597, %v6616
    %6618 = vmatmul.f32.gmra.mxu0 %v6564
    %v6619 = vpop.f32.mrf.mxu0
    %v6620 = vadd.f32 %v6597, %v6619
    %6621 = vmatmul.f32.gmra.mxu0 %v6565
    %v6622 = vpop.f32.mrf.mxu0
    %v6623 = vadd.f32 %v6597, %v6622
    %6624 = vmatmul.f32.gmra.mxu0 %v6566
    %v6625 = vpop.f32.mrf.mxu0
    %v6626 = vadd.f32 %v6597, %v6625
    %6627 = vmatmul.f32.gmra.mxu0 %v6567
    %v6628 = vpop.f32.mrf.mxu0
    %v6629 = vadd.f32 %v6597, %v6628
    %6630 = vmatmul.f32.gmra.mxu0 %v6568
    %v6631 = vpop.f32.mrf.mxu0
    %v6632 = vadd.f32 %v6597, %v6631
    %6633 = vmatmul.f32.gmra.mxu0 %v6569
    %v6634 = vpop.f32.mrf.mxu0
    %v6635 = vadd.f32 %v6597, %v6634
    %6636 = vmatmul.f32.gmra.mxu0 %v6570
    %v6637 = vpop.f32.mrf.mxu0
    %v6638 = vadd.f32 %v6597, %v6637
    %6639 = vmatmul.f32.gmra.mxu0 %v6571
    %v6640 = vpop.f32.mrf.mxu0
    %v6641 = vadd.f32 %v6597, %v6640
    %6642 = vmatmul.f32.gmra.mxu0 %v6572
    %v6643 = vpop.f32.mrf.mxu0
    %v6644 = vadd.f32 %v6597, %v6643
    %6645 = vmatmul.f32.gmra.mxu0 %v6573
    %v6646 = vpop.f32.mrf.mxu0
    %v6647 = vadd.f32 %v6597, %v6646
    %6648 = vmatmul.f32.gmra.mxu0 %v6574
    %v6649 = vpop.f32.mrf.mxu0
    %v6650 = vadd.f32 %v6597, %v6649
    %6651 = vmatmul.f32.gmra.mxu0 %v6575
    %v6652 = vpop.f32.mrf.mxu0
    %v6653 = vadd.f32 %v6597, %v6652
    %6654 = vmatmul.f32.gmra.mxu0 %v6576
    %v6655 = vpop.f32.mrf.mxu0
    %v6656 = vadd.f32 %v6597, %v6655
    %6657 = vmatmul.f32.gmra.mxu0 %v6577
    %v6658 = vpop.f32.mrf.mxu0
    %v6659 = vadd.f32 %v6597, %v6658
    %6660 = vmatmul.f32.gmra.mxu0 %v6578
    %v6661 = vpop.f32.mrf.mxu0
    %v6662 = vadd.f32 %v6597, %v6661
    %6663 = vdwg.mxu0
    %6664 = vst [vmem:[#allocation19] sm:$0xff] %v6617
    %6665 = vst [vmem:[#allocation19 + $0x8] sm:$0xff] %v6620
    %6666 = vst [vmem:[#allocation19 + $0x10] sm:$0xff] %v6623
    %6667 = vst [vmem:[#allocation19 + $0x18] sm:$0xff] %v6626
    %6668 = vst [vmem:[#allocation19 + $0x20] sm:$0xff] %v6629
    %6669 = vst [vmem:[#allocation19 + $0x28] sm:$0xff] %v6632
    %6670 = vst [vmem:[#allocation19 + $0x30] sm:$0xff] %v6635
    %6671 = vst [vmem:[#allocation19 + $0x38] sm:$0xff] %v6638
    %6672 = vst [vmem:[#allocation19 + $0x40] sm:$0xff] %v6641
    %6673 = vst [vmem:[#allocation19 + $0x48] sm:$0xff] %v6644
    %6674 = vst [vmem:[#allocation19 + $0x50] sm:$0xff] %v6647
    %6675 = vst [vmem:[#allocation19 + $0x58] sm:$0xff] %v6650
    %6676 = vst [vmem:[#allocation19 + $0x60] sm:$0xff] %v6653
    %6677 = vst [vmem:[#allocation19 + $0x68] sm:$0xff] %v6656
    %6678 = vst [vmem:[#allocation19 + $0x70] sm:$0xff] %v6659
    %6679 = vst [vmem:[#allocation19 + $0x78] sm:$0xff] %v6662
    // Predicated region
    $region118: #{tpu_custom_call.1} parent=1 // pred_check
      _
    $region119: #{tpu_custom_call.1} parent=1 // pred_check_branch
      %6681 = sbr.rel (0) target = $region121
    $region120: #{tpu_custom_call.1} parent=1 // pred_region
      %6683 = vsyncadd [#allocation4], 0
      %s6684 = sshll.u32 [#allocation19], 4
      %s6685 = int_to_ptr.vmem [resolvable:$true] %s6684
      %s6686 = sshll.u32 %s19, 4
      %s6687 = int_to_ptr.hbm [resolvable:$true] %s6686
      %6692 = dma.vmem_to_hbm [thread:$0]  %s6685, 2048, %s6687, [#allocation4], 128, 128, 8
    $region121: #{tpu_custom_call.1} parent=1 // pred_fallthru
      _
    // Predicated region
    $region122: #{tpu_custom_call.1} parent=1 // pred_check
      _
    $region123: #{tpu_custom_call.1} parent=1 // pred_check_branch
      %6694 = sbr.rel (0) target = $region125
    $region124: #{tpu_custom_call.1} parent=1 // pred_region
      %6696 = dma.done [#allocation4], 2048
    $region125: #{tpu_custom_call.1} parent=1 // pred_fallthru
      _
    %6697 = vsyncpa [#allocation3], 1
    %6698 = vsyncpa [#allocation6], 1
    %6699 = vsyncpa [#allocation9], 1
    %6700 = vsyncpa [#allocation12], 1
    %6701 = vsyncpa [#allocation15], 1
    %6702 = vsyncpa [#allocation18], 1
    %6703 = vsyncpa [#allocation4], 1

</llo_original>
